<compile_context>
chip_gen: v6e
topology: v6e:2x2x1
jax: 0.10.0
libtpu: 0.0.40
codegen_flags: <defaults>
</compile_context>

<pallas_src>
import functools

import numpy as np
import jax
import jax.numpy as jnp
from jax.experimental import pallas as pl
from jax.experimental.pallas import tpu as pltpu


# =============================================================================
# Host-side one-time weight re-packing
# =============================================================================
def _round_up(x, m):
    return -(-x // m) * m


def _padded_block(w, c, align=128):
    """Smallest lane-block >= w*c that is a multiple of `align` and of `c`."""
    target = _round_up(w * c, align)
    if target % c == 0:
        return target // c, target
    return w, w * c          # fall back to unpadded if c does not divide 128


def _col_zero_pad(width, kw, pad):
    """col_of_tap for a 'same' conv with zero padding folded into the weights."""
    w = np.arange(width)[:, None]
    k = np.arange(kw)[None, :]
    col = w + k - pad
    return np.where((col >= 0) & (col < width), col, -1)


def _col_reflect_pad1(width, kw):
    """col_of_tap for ReflectionPad2d(1) + VALID conv (width reflection folded)."""
    wout = width + 2 - (kw - 1)
    w = np.arange(wout)[:, None]
    k = np.arange(kw)[None, :]
    p = w + k                                    # padded column in [0, width+1]
    col = p - 1
    col = np.where(p == 0, 1, col)
    col = np.where(p == width + 1, width - 2, col)
    return col


def _toeplitz_folded(w_oihw, col_of_tap, win_store):
    """PyTorch OIHW conv weight -> per-kh width-Toeplitz with width-pad folded.

    Returns g of shape (KH, win_store, Cin, Wout, Cout) such that
      out[h, w, co] = sum_{kh, ws, ci} x[h+kh, ws, ci] * g[kh, ws, ci, w, co]
    where x rows are the (explicitly) height-padded rows.
    """
    cout, cin, k_h, k_w = w_oihw.shape
    wout = col_of_tap.shape[0]
    g = np.zeros((k_h, win_store, cin, wout, cout), np.float32)
    for w in range(wout):
        for kw in range(k_w):
            c = int(col_of_tap[w, kw])
            if c >= 0:
                g[:, c, :, w, :] += np.transpose(w_oihw[:, :, :, kw], (2, 1, 0))
    return g


def _layout_shuffled(g, r, nf, w_next_pad):
    """Order output lanes as (i, w_next, c) so PixelShuffle(r) == r lane blocks,
    padding each block's width to w_next_pad (multiple of 128 lanes)."""
    k_h, ws, cin, wout, cout = g.shape
    assert cout == nf * r * r
    g = g.reshape(k_h, ws, cin, wout, nf, r, r)               # co = c*r*r + i*r + j
    g = np.transpose(g, (0, 1, 2, 5, 3, 6, 4))                # (kh, ws, ci, i, w, j, c)
    g = g.reshape(k_h, ws * cin, r, wout * r * nf)
    g = np.pad(g, ((0, 0), (0, 0), (0, 0), (0, w_next_pad * nf - wout * r * nf)))
    return g.reshape(k_h, ws * cin, r * w_next_pad * nf)


def _bias_shuffled(b, r, nf, wout, w_next_pad):
    bb = np.asarray(b, np.float32).reshape(nf, r, r)          # (c, i, j)
    bb = np.transpose(bb, (1, 2, 0))                          # (i, j, c)
    bb = np.broadcast_to(bb[:, None, :, :], (r, wout, r, nf)) # (i, w, j, c)
    bb = bb.reshape(r, wout * r * nf)
    return np.pad(bb, ((0, 0), (0, w_next_pad * nf - wout * r * nf)))


def _layout_natural(g, pad_to):
    k_h, ws, cin, wout, cout = g.shape
    g = g.reshape(k_h, ws * cin, wout * cout)
    return np.pad(g, ((0, 0), (0, 0), (0, pad_to - wout * cout)))


def _make_scatter_mats(cb, S, nf):
    """0/1 row-scatter matrices (junk rows dropped via zero columns)."""
    H2, H3 = 4 * S, 8 * S
    R1o, R1p = cb * (S + 2), cb * (S + 2) + 2
    R2o, R2p = cb * (H2 + 2), cb * (H2 + 2) + 2
    R3p = cb * (H3 + 2) + 6
    e0 = np.zeros((S, R1p, cb), np.float32)
    e1 = np.zeros((4, R2p, R1o), np.float32)
    e2 = np.zeros((2, R3p, R2o), np.float32)
    for e in range(cb):
        for h in range(S):
            e0[h, e * (S + 2) + 1 + h, e] = 1.0
            for i in range(4):
                e1[i, e * (H2 + 2) + 1 + 4 * h + i, e * (S + 2) + h] = 1.0
        for h2 in range(H2):
            for i in range(2):
                h3 = 2 * h2 + i
                e2[i, e * (H3 + 2) + 1 + h3, e * (H2 + 2) + h2] = 1.0
                if h3 == 1:                       # top row reflection
                    e2[i, e * (H3 + 2) + 0, e * (H2 + 2) + h2] = 1.0
                if h3 == H3 - 2:                  # bottom row reflection
                    e2[i, e * (H3 + 2) + H3 + 1, e * (H2 + 2) + h2] = 1.0
    return e0, e1, e2


def prepare_kernel_params(pt, nf, S, cb, compute_dtype=jnp.bfloat16):
    """Convert PyTorch-layout parameters into the fused-kernel layouts."""
    H2, H3 = 4 * S, 8 * S
    Ho = H3 - 4
    w2pad, _ = _padded_block(H2, nf)          # stage-2 stored width (blk1 lanes)
    w3pad, _ = _padded_block(H3, nf)          # stage-3 stored width (blk2 lanes)
    n3pad = _round_up(Ho * 9, 128)            # output lane width

    # fc: permute columns so the linear output rows are (h, w, c)-ordered.
    hh, ww, cc = np.meshgrid(np.arange(S), np.arange(S), np.arange(nf),
                             indexing="ij")
    perm = (cc * S * S + hh * S + ww).reshape(-1)
    fcw = np.asarray(pt["fc_w"], np.float32).T[:, perm]
    fcb = np.asarray(pt["fc_b"], np.float32)[perm][None, :]

    g1 = _layout_shuffled(
        _toeplitz_folded(np.asarray(pt["w1"], np.float32), _col_zero_pad(S, 3, 1), S),
        4, nf, w2pad)
    b1 = _bias_shuffled(pt["b1"], 4, nf, S, w2pad)
    g2 = _layout_shuffled(
        _toeplitz_folded(np.asarray(pt["w2"], np.float32), _col_zero_pad(H2, 3, 1), w2pad),
        2, nf, w3pad)
    b2 = _bias_shuffled(pt["b2"], 2, nf, H2, w3pad)
    g3 = _layout_natural(
        _toeplitz_folded(np.asarray(pt["w3"], np.float32), _col_reflect_pad1(H3, 7), w3pad),
        n3pad)
    b3 = np.pad(np.tile(np.asarray(pt["b3"], np.float32), Ho),
                (0, n3pad - Ho * 9))[None, :]
    e0, e1, e2 = _make_scatter_mats(cb, S, nf)

    cd = compute_dtype
    f32 = jnp.float32
    return dict(
        fcw=jnp.asarray(fcw, cd), fcb=jnp.asarray(fcb, f32),
        e0=jnp.asarray(e0, cd), g1=jnp.asarray(g1, cd), b1=jnp.asarray(b1, f32),
        e1=jnp.asarray(e1, cd), g2=jnp.asarray(g2, cd), b2=jnp.asarray(b2, f32),
        e2=jnp.asarray(e2, cd), g3=jnp.asarray(g3, cd), b3=jnp.asarray(b3, f32))


# =============================================================================
# Fused decoder kernel (one grid step == one chunk of batch elements)
# =============================================================================
def _decoder_kernel(x_ref, fcw_ref, fcb_ref, e0_ref, g1_ref, b1_ref,
                    e1_ref, g2_ref, b2_ref, e2_ref, g3_ref, b3_ref,
                    out_ref, x1_ref, x2_ref, x3_ref, y_ref, *, nf, S, cb):
    f32 = jnp.float32
    cdt = g1_ref.dtype
    H2, H3 = 4 * S, 8 * S
    Ho = H3 - 4
    K1 = S * nf
    blk1 = b1_ref.shape[1]
    blk2 = b2_ref.shape[1]
    R1o = e1_ref.shape[2]           # cb*(S+2)  conv1 output rows (incl. junk)
    R2o = e2_ref.shape[2]           # cb*(H2+2) conv2 output rows (incl. junk)
    R3o = y_ref.shape[0]            # cb*(H3+2) conv3 output rows (incl. junk)

    # ---- fc_expand: (cb, F) @ (F, S*S*nf); rows already (h, w, c)-ordered ----
    y0 = jnp.dot(x_ref[...].astype(cdt), fcw_ref[...],
                 preferred_element_type=f32) + fcb_ref[...]
    y0 = y0.astype(cdt)

    # ---- scatter fc rows into the height-padded stage-1 slab (matmul scatter)
    x1 = jnp.zeros((x1_ref.shape[0], K1), f32)
    for h in range(S):
        x1 += jnp.dot(e0_ref[h], y0[:, h * K1:(h + 1) * K1],
                      preferred_element_type=f32)
    x1_ref[...] = x1

    # ---- conv1 3x3 (zero width-pad folded into g1) --------------------------
    acc1 = jnp.zeros((R1o, 4 * blk1), f32)
    for kh in range(3):
        acc1 += jnp.dot(x1_ref[kh:kh + R1o, :].astype(cdt), g1_ref[kh],
                        preferred_element_type=f32)

    # ---- bias + ReLU, PixelShuffle(4) + zero height-pad (matmul scatter) ----
    x2 = jnp.zeros((x2_ref.shape[0], blk1), f32)
    for i in range(4):
        a_i = jnp.maximum(acc1[:, i * blk1:(i + 1) * blk1] + b1_ref[i:i + 1, :],
                          0.0)
        x2 += jnp.dot(e1_ref[i], a_i.astype(cdt), preferred_element_type=f32)
    x2_ref[...] = x2

    # ---- conv2 3x3 -----------------------------------------------------------
    acc2 = jnp.zeros((R2o, 2 * blk2), f32)
    for kh in range(3):
        acc2 += jnp.dot(x2_ref[kh:kh + R2o, :].astype(cdt), g2_ref[kh],
                        preferred_element_type=f32)

    # ---- bias + ReLU, PixelShuffle(2) + row reflection (matmul scatter) -----
    x3 = jnp.zeros((x3_ref.shape[0], blk2), f32)
    for i in range(2):
        b_i = jnp.maximum(acc2[:, i * blk2:(i + 1) * blk2] + b2_ref[i:i + 1, :],
                          0.0)
        x3 += jnp.dot(e2_ref[i], b_i.astype(cdt), preferred_element_type=f32)
    x3_ref[...] = x3

    # ---- conv3 7x7 (width reflection folded into g3), tanh tail -------------
    acc3 = jnp.zeros((R3o, g3_ref.shape[-1]), f32)
    for kh in range(7):
        acc3 += jnp.dot(x3_ref[kh:kh + R3o, :].astype(cdt), g3_ref[kh],
                        preferred_element_type=f32)
    y_ref[...] = (jnp.tanh(acc3 + b3_ref[...]) + 1.0) * 0.5

    # ---- drop per-element junk rows and write the lane-dense output ---------
    for e in range(cb):
        out_ref[e, :, :] = y_ref[e * (H3 + 2):e * (H3 + 2) + Ho, :].astype(
            out_ref.dtype)


def decoder_forward(x, kp, nf, S, cb):
    B, F = x.shape
    H2, H3 = 4 * S, 8 * S
    Ho = H3 - 4
    blk1 = kp["b1"].shape[1]
    blk2 = kp["b2"].shape[1]
    n3 = kp["g3"].shape[-1]
    assert B % cb == 0

    kernel = functools.partial(_decoder_kernel, nf=nf, S=S, cb=cb)
    out = pl.pallas_call(
        kernel,
        out_shape=jax.ShapeDtypeStruct((B, Ho, n3), x.dtype),
        grid_spec=pltpu.PrefetchScalarGridSpec(
            num_scalar_prefetch=0,
            grid=(B // cb,),
            in_specs=[
                pl.BlockSpec((cb, F), lambda b: (b, 0)),
                pl.BlockSpec(kp["fcw"].shape, lambda b: (0, 0)),
                pl.BlockSpec(kp["fcb"].shape, lambda b: (0, 0)),
                pl.BlockSpec(kp["e0"].shape, lambda b: (0, 0, 0)),
                pl.BlockSpec(kp["g1"].shape, lambda b: (0, 0, 0)),
                pl.BlockSpec(kp["b1"].shape, lambda b: (0, 0)),
                pl.BlockSpec(kp["e1"].shape, lambda b: (0, 0, 0)),
                pl.BlockSpec(kp["g2"].shape, lambda b: (0, 0, 0)),
                pl.BlockSpec(kp["b2"].shape, lambda b: (0, 0)),
                pl.BlockSpec(kp["e2"].shape, lambda b: (0, 0, 0)),
                pl.BlockSpec(kp["g3"].shape, lambda b: (0, 0, 0)),
                pl.BlockSpec(kp["b3"].shape, lambda b: (0, 0)),
            ],
            out_specs=pl.BlockSpec((cb, Ho, n3), lambda b: (b, 0, 0)),
            scratch_shapes=[
                pltpu.VMEM((cb * (S + 2) + 2, S * nf), jnp.float32),   # stage-1 slab
                pltpu.VMEM((cb * (H2 + 2) + 2, blk1), jnp.float32),    # stage-2 slab
                pltpu.VMEM((cb * (H3 + 2) + 6, blk2), jnp.float32),    # stage-3 slab
                pltpu.VMEM((cb * (H3 + 2), n3), jnp.float32),          # final rows
            ],
        ),
        compiler_params=pltpu.CompilerParams(
            dimension_semantics=("parallel",),
            vmem_limit_bytes=32 * 1024 * 1024),
    )(x, kp["fcw"], kp["fcb"], kp["e0"], kp["g1"], kp["b1"],
      kp["e1"], kp["g2"], kp["b2"], kp["e2"], kp["g3"], kp["b3"])

    # kernel rows are image rows h, lanes are (w, channel)  ->  NCHW
    return out[:, :, :Ho * 9].reshape(B, Ho, Ho, 9).transpose(0, 3, 1, 2)


# =============================================================================
# Pure-JAX reference (PyTorch-layout weights) for the correctness check
# =============================================================================
def _pixel_shuffle_nchw(z, r):
    B, C, H, W = z.shape
    c = C // (r * r)
    z = z.reshape(B, c, r, r, H, W)
    z = z.transpose(0, 1, 4, 2, 5, 3)
    return z.reshape(B, c, H * r, W * r)


def ref_forward(x, pt, nf, S):
    hi = jax.lax.Precision.HIGHEST
    B = x.shape[0]
    y = jnp.dot(x, pt["fc_w"].T, precision=hi) + pt["fc_b"]
    y = y.reshape(B, nf, S, S)

    def conv(z, w, b, pad, mode="constant"):
        if pad:
            z = jnp.pad(z, ((0, 0), (0, 0), (pad, pad), (pad, pad)), mode=mode)
        o = jax.lax.conv_general_dilated(
            z, w, (1, 1), "VALID",
            dimension_numbers=("NCHW", "OIHW", "NCHW"), precision=hi)
        return o + b[None, :, None, None]

    y = conv(y, pt["w1"], pt["b1"], 1)
    y = jnp.maximum(_pixel_shuffle_nchw(y, 4), 0.0)
    y = conv(y, pt["w2"], pt["b2"], 1)
    y = jnp.maximum(_pixel_shuffle_nchw(y, 2), 0.0)
    y = jnp.pad(y, ((0, 0), (0, 0), (1, 1), (1, 1)), mode="reflect")
    y = conv(y, pt["w3"], pt["b3"], 0)
    return (jnp.tanh(y) + 1.0) / 2.0


# =============================================================================
# Main
# =============================================================================
if __name__ == "__main__":
    B = 2
    feature_dim = 16
    num_filters = 4
    min_spat_size = 5
    nf, S = num_filters, min_spat_size

    key = jax.random.PRNGKey(0)
    ks = jax.random.split(key, 9)
    # PyTorch-layout parameters (Linear: (out, in); Conv: OIHW)
    pt = {
        "fc_w": 0.1 * jax.random.normal(ks[0], (nf * S * S, feature_dim), jnp.float32),
        "fc_b": 0.1 * jax.random.normal(ks[1], (nf * S * S,), jnp.float32),
        "w1": 0.1 * jax.random.normal(ks[2], (nf * 16, nf, 3, 3), jnp.float32),
        "b1": 0.1 * jax.random.normal(ks[3], (nf * 16,), jnp.float32),
        "w2": 0.1 * jax.random.normal(ks[4], (nf * 4, nf, 3, 3), jnp.float32),
        "b2": 0.1 * jax.random.normal(ks[5], (nf * 4,), jnp.float32),
        "w3": 0.1 * jax.random.normal(ks[6], (9, nf, 7, 7), jnp.float32),
        "b3": 0.1 * jax.random.normal(ks[7], (9,), jnp.float32),
    }
    x = jax.random.normal(ks[8], (B, feature_dim), jnp.float32)

    # Batch-chunk size: largest divisor of B that is <= 8.
    cb = max(d for d in range(1, min(B, 8) + 1) if B % d == 0)

    # One-time host-side repack into fused-kernel layouts (bf16 MXU operands).
    kparams = prepare_kernel_params(pt, nf, S, cb)

    fwd = jax.jit(functools.partial(decoder_forward, nf=nf, S=S, cb=cb))
    out = jax.block_until_ready(fwd(x, kparams))

    # Expected spatial size: 8*S + 2 (reflect pad) - 6 (7x7 valid) = 8*S - 4
    expected_shape = (B, 9, 8 * S - 4, 8 * S - 4)
    assert out.shape == expected_shape, (out.shape, expected_shape)

    ref = jax.block_until_ready(ref_forward(x, pt, nf, S))
    max_err = float(jnp.max(jnp.abs(out - ref)))
    # bf16 MXU operands with f32 accumulation: tolerance relaxed deliberately.
    assert jnp.allclose(out, ref, rtol=2e-2, atol=2e-2), max_err

    print("KERNEL_OK")
</pallas_src>

<mosaic_0001>
module attributes {stable_mosaic.version = 11 : i64} {
  func.func @_decoder_kernel(%arg0: i32, %arg1: memref<2x16xf32, #tpu.memory_space<vmem>>, %arg2: memref<16x100xbf16, #tpu.memory_space<vmem>>, %arg3: memref<1x100xf32, #tpu.memory_space<vmem>>, %arg4: memref<5x16x2xbf16, #tpu.memory_space<vmem>>, %arg5: memref<3x20x512xbf16, #tpu.memory_space<vmem>>, %arg6: memref<4x128xf32, #tpu.memory_space<vmem>>, %arg7: memref<4x46x14xbf16, #tpu.memory_space<vmem>>, %arg8: memref<3x128x512xbf16, #tpu.memory_space<vmem>>, %arg9: memref<2x256xf32, #tpu.memory_space<vmem>>, %arg10: memref<2x90x44xbf16, #tpu.memory_space<vmem>>, %arg11: memref<7x256x384xbf16, #tpu.memory_space<vmem>>, %arg12: memref<1x384xf32, #tpu.memory_space<vmem>>, %arg13: memref<2x36x384xf32, #tpu.memory_space<vmem>>, %arg14: memref<16x20xf32, #tpu.memory_space<vmem>>, %arg15: memref<46x128xf32, #tpu.memory_space<vmem>>, %arg16: memref<90x256xf32, #tpu.memory_space<vmem>>, %arg17: memref<84x384xf32, #tpu.memory_space<vmem>>) attributes {dimension_semantics = [#tpu.dimension_semantics<parallel>], iteration_bounds = array<i64: 1>, scalar_prefetch = 0 : i64, scratch_operands = 4 : i64, tpu.core_type = #tpu.core_type<tc>, window_params = [{transform_indices = @transform_0, window_bounds = array<i64: 2, 16>}, {pipeline_mode = #tpu.pipeline_mode<synchronous>, transform_indices = @transform_1, window_bounds = array<i64: 16, 100>}, {pipeline_mode = #tpu.pipeline_mode<synchronous>, transform_indices = @transform_2, window_bounds = array<i64: 1, 100>}, {pipeline_mode = #tpu.pipeline_mode<synchronous>, transform_indices = @transform_3, window_bounds = array<i64: 5, 16, 2>}, {pipeline_mode = #tpu.pipeline_mode<synchronous>, transform_indices = @transform_4, window_bounds = array<i64: 3, 20, 512>}, {pipeline_mode = #tpu.pipeline_mode<synchronous>, transform_indices = @transform_5, window_bounds = array<i64: 4, 128>}, {pipeline_mode = #tpu.pipeline_mode<synchronous>, transform_indices = @transform_6, window_bounds = array<i64: 4, 46, 14>}, {pipeline_mode = #tpu.pipeline_mode<synchronous>, transform_indices = @transform_7, window_bounds = array<i64: 3, 128, 512>}, {pipeline_mode = #tpu.pipeline_mode<synchronous>, transform_indices = @transform_8, window_bounds = array<i64: 2, 256>}, {pipeline_mode = #tpu.pipeline_mode<synchronous>, transform_indices = @transform_9, window_bounds = array<i64: 2, 90, 44>}, {pipeline_mode = #tpu.pipeline_mode<synchronous>, transform_indices = @transform_10, window_bounds = array<i64: 7, 256, 384>}, {pipeline_mode = #tpu.pipeline_mode<synchronous>, transform_indices = @transform_11, window_bounds = array<i64: 1, 384>}, {transform_indices = @transform_12, window_bounds = array<i64: 2, 36, 384>}]} {
    %c0 = arith.constant 0 : index
    %c0_0 = arith.constant 0 : index
    %0 = vector.load %arg1[%c0, %c0_0] : memref<2x16xf32, #tpu.memory_space<vmem>>, vector<2x16xf32>
    %1 = arith.truncf %0 : vector<2x16xf32> to vector<2x16xbf16>
    %c0_1 = arith.constant 0 : index
    %c0_2 = arith.constant 0 : index
    %2 = vector.load %arg2[%c0_1, %c0_2] : memref<16x100xbf16, #tpu.memory_space<vmem>>, vector<16x100xbf16>
    %cst = arith.constant dense<0.000000e+00> : vector<2x100xf32>
    %3 = tpu.matmul %1, %2, %cst {dimension_numbers = #tpu.dot_dimension_numbers<[1], [0], [0], [1], [0, 0, 1, 1], [], []>} : vector<2x16xbf16>, vector<16x100xbf16>, vector<2x100xf32> -> vector<2x100xf32>
    %c0_3 = arith.constant 0 : index
    %c0_4 = arith.constant 0 : index
    %4 = vector.load %arg3[%c0_3, %c0_4] : memref<1x100xf32, #tpu.memory_space<vmem>>, vector<1x100xf32>
    %5 = vector.broadcast %4 : vector<1x100xf32> to vector<2x100xf32>
    %6 = arith.addf %3, %5 : vector<2x100xf32>
    %7 = arith.truncf %6 : vector<2x100xf32> to vector<2x100xbf16>
    %cst_5 = arith.constant 0.000000e+00 : f32
    %8 = vector.broadcast %cst_5 : f32 to vector<16x20xf32>
    %c0_6 = arith.constant 0 : index
    %c0_7 = arith.constant 0 : index
    %c0_8 = arith.constant 0 : index
    %9 = vector.load %arg4[%c0_6, %c0_7, %c0_8] : memref<5x16x2xbf16, #tpu.memory_space<vmem>>, vector<1x16x2xbf16>
    %10 = vector.shape_cast %9 : vector<1x16x2xbf16> to vector<16x2xbf16>
    %11 = vector.extract_strided_slice %7 {offsets = [0, 0], sizes = [2, 20], strides = [1, 1]} : vector<2x100xbf16> to vector<2x20xbf16>
    %cst_9 = arith.constant dense<0.000000e+00> : vector<16x20xf32>
    %12 = tpu.matmul %10, %11, %cst_9 {dimension_numbers = #tpu.dot_dimension_numbers<[1], [0], [0], [1], [0, 0, 1, 1], [], []>} : vector<16x2xbf16>, vector<2x20xbf16>, vector<16x20xf32> -> vector<16x20xf32>
    %13 = arith.addf %8, %12 : vector<16x20xf32>
    %c1 = arith.constant 1 : index
    %c0_10 = arith.constant 0 : index
    %c0_11 = arith.constant 0 : index
    %14 = vector.load %arg4[%c1, %c0_10, %c0_11] : memref<5x16x2xbf16, #tpu.memory_space<vmem>>, vector<1x16x2xbf16>
    %15 = vector.shape_cast %14 : vector<1x16x2xbf16> to vector<16x2xbf16>
    %16 = vector.extract_strided_slice %7 {offsets = [0, 20], sizes = [2, 20], strides = [1, 1]} : vector<2x100xbf16> to vector<2x20xbf16>
    %cst_12 = arith.constant dense<0.000000e+00> : vector<16x20xf32>
    %17 = tpu.matmul %15, %16, %cst_12 {dimension_numbers = #tpu.dot_dimension_numbers<[1], [0], [0], [1], [0, 0, 1, 1], [], []>} : vector<16x2xbf16>, vector<2x20xbf16>, vector<16x20xf32> -> vector<16x20xf32>
    %18 = arith.addf %13, %17 : vector<16x20xf32>
    %c2 = arith.constant 2 : index
    %c0_13 = arith.constant 0 : index
    %c0_14 = arith.constant 0 : index
    %19 = vector.load %arg4[%c2, %c0_13, %c0_14] : memref<5x16x2xbf16, #tpu.memory_space<vmem>>, vector<1x16x2xbf16>
    %20 = vector.shape_cast %19 : vector<1x16x2xbf16> to vector<16x2xbf16>
    %21 = vector.extract_strided_slice %7 {offsets = [0, 40], sizes = [2, 20], strides = [1, 1]} : vector<2x100xbf16> to vector<2x20xbf16>
    %cst_15 = arith.constant dense<0.000000e+00> : vector<16x20xf32>
    %22 = tpu.matmul %20, %21, %cst_15 {dimension_numbers = #tpu.dot_dimension_numbers<[1], [0], [0], [1], [0, 0, 1, 1], [], []>} : vector<16x2xbf16>, vector<2x20xbf16>, vector<16x20xf32> -> vector<16x20xf32>
    %23 = arith.addf %18, %22 : vector<16x20xf32>
    %c3 = arith.constant 3 : index
    %c0_16 = arith.constant 0 : index
    %c0_17 = arith.constant 0 : index
    %24 = vector.load %arg4[%c3, %c0_16, %c0_17] : memref<5x16x2xbf16, #tpu.memory_space<vmem>>, vector<1x16x2xbf16>
    %25 = vector.shape_cast %24 : vector<1x16x2xbf16> to vector<16x2xbf16>
    %26 = vector.extract_strided_slice %7 {offsets = [0, 60], sizes = [2, 20], strides = [1, 1]} : vector<2x100xbf16> to vector<2x20xbf16>
    %cst_18 = arith.constant dense<0.000000e+00> : vector<16x20xf32>
    %27 = tpu.matmul %25, %26, %cst_18 {dimension_numbers = #tpu.dot_dimension_numbers<[1], [0], [0], [1], [0, 0, 1, 1], [], []>} : vector<16x2xbf16>, vector<2x20xbf16>, vector<16x20xf32> -> vector<16x20xf32>
    %28 = arith.addf %23, %27 : vector<16x20xf32>
    %c4 = arith.constant 4 : index
    %c0_19 = arith.constant 0 : index
    %c0_20 = arith.constant 0 : index
    %29 = vector.load %arg4[%c4, %c0_19, %c0_20] : memref<5x16x2xbf16, #tpu.memory_space<vmem>>, vector<1x16x2xbf16>
    %30 = vector.shape_cast %29 : vector<1x16x2xbf16> to vector<16x2xbf16>
    %31 = vector.extract_strided_slice %7 {offsets = [0, 80], sizes = [2, 20], strides = [1, 1]} : vector<2x100xbf16> to vector<2x20xbf16>
    %cst_21 = arith.constant dense<0.000000e+00> : vector<16x20xf32>
    %32 = tpu.matmul %30, %31, %cst_21 {dimension_numbers = #tpu.dot_dimension_numbers<[1], [0], [0], [1], [0, 0, 1, 1], [], []>} : vector<16x2xbf16>, vector<2x20xbf16>, vector<16x20xf32> -> vector<16x20xf32>
    %33 = arith.addf %28, %32 : vector<16x20xf32>
    %c0_22 = arith.constant 0 : index
    %c0_23 = arith.constant 0 : index
    %34 = vector.load %arg14[%c0_22, %c0_23] : memref<16x20xf32, #tpu.memory_space<vmem>>, vector<16x20xf32>
    tpu.vector_store %arg14[%c0_22, %c0_23], %33 {strides = array<i32>} : memref<16x20xf32, #tpu.memory_space<vmem>>, vector<16x20xf32>,
    %cst_24 = arith.constant 0.000000e+00 : f32
    %35 = vector.broadcast %cst_24 : f32 to vector<14x512xf32>
    %c0_25 = arith.constant 0 : index
    %c0_26 = arith.constant 0 : index
    %36 = vector.load %arg14[%c0_25, %c0_26] : memref<16x20xf32, #tpu.memory_space<vmem>>, vector<14x20xf32>
    %37 = arith.truncf %36 : vector<14x20xf32> to vector<14x20xbf16>
    %c0_27 = arith.constant 0 : index
    %c0_28 = arith.constant 0 : index
    %c0_29 = arith.constant 0 : index
    %38 = vector.load %arg5[%c0_27, %c0_28, %c0_29] : memref<3x20x512xbf16, #tpu.memory_space<vmem>>, vector<1x20x512xbf16>
    %39 = vector.shape_cast %38 : vector<1x20x512xbf16> to vector<20x512xbf16>
    %cst_30 = arith.constant dense<0.000000e+00> : vector<14x512xf32>
    %40 = tpu.matmul %37, %39, %cst_30 {dimension_numbers = #tpu.dot_dimension_numbers<[1], [0], [0], [1], [0, 0, 1, 1], [], []>} : vector<14x20xbf16>, vector<20x512xbf16>, vector<14x512xf32> -> vector<14x512xf32>
    %41 = arith.addf %35, %40 : vector<14x512xf32>
    %c1_31 = arith.constant 1 : index
    %c0_32 = arith.constant 0 : index
    %42 = vector.load %arg14[%c1_31, %c0_32] : memref<16x20xf32, #tpu.memory_space<vmem>>, vector<14x20xf32>
    %43 = arith.truncf %42 : vector<14x20xf32> to vector<14x20xbf16>
    %c1_33 = arith.constant 1 : index
    %c0_34 = arith.constant 0 : index
    %c0_35 = arith.constant 0 : index
    %44 = vector.load %arg5[%c1_33, %c0_34, %c0_35] : memref<3x20x512xbf16, #tpu.memory_space<vmem>>, vector<1x20x512xbf16>
    %45 = vector.shape_cast %44 : vector<1x20x512xbf16> to vector<20x512xbf16>
    %cst_36 = arith.constant dense<0.000000e+00> : vector<14x512xf32>
    %46 = tpu.matmul %43, %45, %cst_36 {dimension_numbers = #tpu.dot_dimension_numbers<[1], [0], [0], [1], [0, 0, 1, 1], [], []>} : vector<14x20xbf16>, vector<20x512xbf16>, vector<14x512xf32> -> vector<14x512xf32>
    %47 = arith.addf %41, %46 : vector<14x512xf32>
    %c2_37 = arith.constant 2 : index
    %c0_38 = arith.constant 0 : index
    %48 = vector.load %arg14[%c2_37, %c0_38] : memref<16x20xf32, #tpu.memory_space<vmem>>, vector<14x20xf32>
    %49 = arith.truncf %48 : vector<14x20xf32> to vector<14x20xbf16>
    %c2_39 = arith.constant 2 : index
    %c0_40 = arith.constant 0 : index
    %c0_41 = arith.constant 0 : index
    %50 = vector.load %arg5[%c2_39, %c0_40, %c0_41] : memref<3x20x512xbf16, #tpu.memory_space<vmem>>, vector<1x20x512xbf16>
    %51 = vector.shape_cast %50 : vector<1x20x512xbf16> to vector<20x512xbf16>
    %cst_42 = arith.constant dense<0.000000e+00> : vector<14x512xf32>
    %52 = tpu.matmul %49, %51, %cst_42 {dimension_numbers = #tpu.dot_dimension_numbers<[1], [0], [0], [1], [0, 0, 1, 1], [], []>} : vector<14x20xbf16>, vector<20x512xbf16>, vector<14x512xf32> -> vector<14x512xf32>
    %53 = arith.addf %47, %52 : vector<14x512xf32>
    %cst_43 = arith.constant 0.000000e+00 : f32
    %54 = vector.broadcast %cst_43 : f32 to vector<46x128xf32>
    %55 = vector.extract_strided_slice %53 {offsets = [0, 0], sizes = [14, 128], strides = [1, 1]} : vector<14x512xf32> to vector<14x128xf32>
    %c0_44 = arith.constant 0 : index
    %c0_45 = arith.constant 0 : index
    %56 = vector.load %arg6[%c0_44, %c0_45] : memref<4x128xf32, #tpu.memory_space<vmem>>, vector<1x128xf32>
    %57 = vector.broadcast %56 : vector<1x128xf32> to vector<14x128xf32>
    %58 = arith.addf %55, %57 : vector<14x128xf32>
    %cst_46 = arith.constant 0.000000e+00 : f32
    %59 = vector.broadcast %cst_46 : f32 to vector<14x128xf32>
    %60 = arith.maximumf %58, %59 : vector<14x128xf32>
    %c0_47 = arith.constant 0 : index
    %c0_48 = arith.constant 0 : index
    %c0_49 = arith.constant 0 : index
    %61 = vector.load %arg7[%c0_47, %c0_48, %c0_49] : memref<4x46x14xbf16, #tpu.memory_space<vmem>>, vector<1x46x14xbf16>
    %62 = vector.shape_cast %61 : vector<1x46x14xbf16> to vector<46x14xbf16>
    %63 = arith.truncf %60 : vector<14x128xf32> to vector<14x128xbf16>
    %cst_50 = arith.constant dense<0.000000e+00> : vector<46x128xf32>
    %64 = tpu.matmul %62, %63, %cst_50 {dimension_numbers = #tpu.dot_dimension_numbers<[1], [0], [0], [1], [0, 0, 1, 1], [], []>} : vector<46x14xbf16>, vector<14x128xbf16>, vector<46x128xf32> -> vector<46x128xf32>
    %65 = arith.addf %54, %64 : vector<46x128xf32>
    %66 = vector.extract_strided_slice %53 {offsets = [0, 128], sizes = [14, 128], strides = [1, 1]} : vector<14x512xf32> to vector<14x128xf32>
    %c1_51 = arith.constant 1 : index
    %c0_52 = arith.constant 0 : index
    %67 = vector.load %arg6[%c1_51, %c0_52] : memref<4x128xf32, #tpu.memory_space<vmem>>, vector<1x128xf32>
    %68 = vector.broadcast %67 : vector<1x128xf32> to vector<14x128xf32>
    %69 = arith.addf %66, %68 : vector<14x128xf32>
    %cst_53 = arith.constant 0.000000e+00 : f32
    %70 = vector.broadcast %cst_53 : f32 to vector<14x128xf32>
    %71 = arith.maximumf %69, %70 : vector<14x128xf32>
    %c1_54 = arith.constant 1 : index
    %c0_55 = arith.constant 0 : index
    %c0_56 = arith.constant 0 : index
    %72 = vector.load %arg7[%c1_54, %c0_55, %c0_56] : memref<4x46x14xbf16, #tpu.memory_space<vmem>>, vector<1x46x14xbf16>
    %73 = vector.shape_cast %72 : vector<1x46x14xbf16> to vector<46x14xbf16>
    %74 = arith.truncf %71 : vector<14x128xf32> to vector<14x128xbf16>
    %cst_57 = arith.constant dense<0.000000e+00> : vector<46x128xf32>
    %75 = tpu.matmul %73, %74, %cst_57 {dimension_numbers = #tpu.dot_dimension_numbers<[1], [0], [0], [1], [0, 0, 1, 1], [], []>} : vector<46x14xbf16>, vector<14x128xbf16>, vector<46x128xf32> -> vector<46x128xf32>
    %76 = arith.addf %65, %75 : vector<46x128xf32>
    %77 = vector.extract_strided_slice %53 {offsets = [0, 256], sizes = [14, 128], strides = [1, 1]} : vector<14x512xf32> to vector<14x128xf32>
    %c2_58 = arith.constant 2 : index
    %c0_59 = arith.constant 0 : index
    %78 = vector.load %arg6[%c2_58, %c0_59] : memref<4x128xf32, #tpu.memory_space<vmem>>, vector<1x128xf32>
    %79 = vector.broadcast %78 : vector<1x128xf32> to vector<14x128xf32>
    %80 = arith.addf %77, %79 : vector<14x128xf32>
    %cst_60 = arith.constant 0.000000e+00 : f32
    %81 = vector.broadcast %cst_60 : f32 to vector<14x128xf32>
    %82 = arith.maximumf %80, %81 : vector<14x128xf32>
    %c2_61 = arith.constant 2 : index
    %c0_62 = arith.constant 0 : index
    %c0_63 = arith.constant 0 : index
    %83 = vector.load %arg7[%c2_61, %c0_62, %c0_63] : memref<4x46x14xbf16, #tpu.memory_space<vmem>>, vector<1x46x14xbf16>
    %84 = vector.shape_cast %83 : vector<1x46x14xbf16> to vector<46x14xbf16>
    %85 = arith.truncf %82 : vector<14x128xf32> to vector<14x128xbf16>
    %cst_64 = arith.constant dense<0.000000e+00> : vector<46x128xf32>
    %86 = tpu.matmul %84, %85, %cst_64 {dimension_numbers = #tpu.dot_dimension_numbers<[1], [0], [0], [1], [0, 0, 1, 1], [], []>} : vector<46x14xbf16>, vector<14x128xbf16>, vector<46x128xf32> -> vector<46x128xf32>
    %87 = arith.addf %76, %86 : vector<46x128xf32>
    %88 = vector.extract_strided_slice %53 {offsets = [0, 384], sizes = [14, 128], strides = [1, 1]} : vector<14x512xf32> to vector<14x128xf32>
    %c3_65 = arith.constant 3 : index
    %c0_66 = arith.constant 0 : index
    %89 = vector.load %arg6[%c3_65, %c0_66] : memref<4x128xf32, #tpu.memory_space<vmem>>, vector<1x128xf32>
    %90 = vector.broadcast %89 : vector<1x128xf32> to vector<14x128xf32>
    %91 = arith.addf %88, %90 : vector<14x128xf32>
    %cst_67 = arith.constant 0.000000e+00 : f32
    %92 = vector.broadcast %cst_67 : f32 to vector<14x128xf32>
    %93 = arith.maximumf %91, %92 : vector<14x128xf32>
    %c3_68 = arith.constant 3 : index
    %c0_69 = arith.constant 0 : index
    %c0_70 = arith.constant 0 : index
    %94 = vector.load %arg7[%c3_68, %c0_69, %c0_70] : memref<4x46x14xbf16, #tpu.memory_space<vmem>>, vector<1x46x14xbf16>
    %95 = vector.shape_cast %94 : vector<1x46x14xbf16> to vector<46x14xbf16>
    %96 = arith.truncf %93 : vector<14x128xf32> to vector<14x128xbf16>
    %cst_71 = arith.constant dense<0.000000e+00> : vector<46x128xf32>
    %97 = tpu.matmul %95, %96, %cst_71 {dimension_numbers = #tpu.dot_dimension_numbers<[1], [0], [0], [1], [0, 0, 1, 1], [], []>} : vector<46x14xbf16>, vector<14x128xbf16>, vector<46x128xf32> -> vector<46x128xf32>
    %98 = arith.addf %87, %97 : vector<46x128xf32>
    %c0_72 = arith.constant 0 : index
    %c0_73 = arith.constant 0 : index
    %99 = vector.load %arg15[%c0_72, %c0_73] : memref<46x128xf32, #tpu.memory_space<vmem>>, vector<46x128xf32>
    tpu.vector_store %arg15[%c0_72, %c0_73], %98 {strides = array<i32>} : memref<46x128xf32, #tpu.memory_space<vmem>>, vector<46x128xf32>,
    %cst_74 = arith.constant 0.000000e+00 : f32
    %100 = vector.broadcast %cst_74 : f32 to vector<44x512xf32>
    %c0_75 = arith.constant 0 : index
    %c0_76 = arith.constant 0 : index
    %101 = vector.load %arg15[%c0_75, %c0_76] : memref<46x128xf32, #tpu.memory_space<vmem>>, vector<44x128xf32>
    %102 = arith.truncf %101 : vector<44x128xf32> to vector<44x128xbf16>
    %c0_77 = arith.constant 0 : index
    %c0_78 = arith.constant 0 : index
    %c0_79 = arith.constant 0 : index
    %103 = vector.load %arg8[%c0_77, %c0_78, %c0_79] : memref<3x128x512xbf16, #tpu.memory_space<vmem>>, vector<1x128x512xbf16>
    %104 = vector.shape_cast %103 : vector<1x128x512xbf16> to vector<128x512xbf16>
    %cst_80 = arith.constant dense<0.000000e+00> : vector<44x512xf32>
    %105 = tpu.matmul %102, %104, %cst_80 {dimension_numbers = #tpu.dot_dimension_numbers<[1], [0], [0], [1], [0, 0, 1, 1], [], []>} : vector<44x128xbf16>, vector<128x512xbf16>, vector<44x512xf32> -> vector<44x512xf32>
    %106 = arith.addf %100, %105 : vector<44x512xf32>
    %c1_81 = arith.constant 1 : index
    %c0_82 = arith.constant 0 : index
    %107 = vector.load %arg15[%c1_81, %c0_82] : memref<46x128xf32, #tpu.memory_space<vmem>>, vector<44x128xf32>
    %108 = arith.truncf %107 : vector<44x128xf32> to vector<44x128xbf16>
    %c1_83 = arith.constant 1 : index
    %c0_84 = arith.constant 0 : index
    %c0_85 = arith.constant 0 : index
    %109 = vector.load %arg8[%c1_83, %c0_84, %c0_85] : memref<3x128x512xbf16, #tpu.memory_space<vmem>>, vector<1x128x512xbf16>
    %110 = vector.shape_cast %109 : vector<1x128x512xbf16> to vector<128x512xbf16>
    %cst_86 = arith.constant dense<0.000000e+00> : vector<44x512xf32>
    %111 = tpu.matmul %108, %110, %cst_86 {dimension_numbers = #tpu.dot_dimension_numbers<[1], [0], [0], [1], [0, 0, 1, 1], [], []>} : vector<44x128xbf16>, vector<128x512xbf16>, vector<44x512xf32> -> vector<44x512xf32>
    %112 = arith.addf %106, %111 : vector<44x512xf32>
    %c2_87 = arith.constant 2 : index
    %c0_88 = arith.constant 0 : index
    %113 = vector.load %arg15[%c2_87, %c0_88] : memref<46x128xf32, #tpu.memory_space<vmem>>, vector<44x128xf32>
    %114 = arith.truncf %113 : vector<44x128xf32> to vector<44x128xbf16>
    %c2_89 = arith.constant 2 : index
    %c0_90 = arith.constant 0 : index
    %c0_91 = arith.constant 0 : index
    %115 = vector.load %arg8[%c2_89, %c0_90, %c0_91] : memref<3x128x512xbf16, #tpu.memory_space<vmem>>, vector<1x128x512xbf16>
    %116 = vector.shape_cast %115 : vector<1x128x512xbf16> to vector<128x512xbf16>
    %cst_92 = arith.constant dense<0.000000e+00> : vector<44x512xf32>
    %117 = tpu.matmul %114, %116, %cst_92 {dimension_numbers = #tpu.dot_dimension_numbers<[1], [0], [0], [1], [0, 0, 1, 1], [], []>} : vector<44x128xbf16>, vector<128x512xbf16>, vector<44x512xf32> -> vector<44x512xf32>
    %118 = arith.addf %112, %117 : vector<44x512xf32>
    %cst_93 = arith.constant 0.000000e+00 : f32
    %119 = vector.broadcast %cst_93 : f32 to vector<90x256xf32>
    %120 = vector.extract_strided_slice %118 {offsets = [0, 0], sizes = [44, 256], strides = [1, 1]} : vector<44x512xf32> to vector<44x256xf32>
    %c0_94 = arith.constant 0 : index
    %c0_95 = arith.constant 0 : index
    %121 = vector.load %arg9[%c0_94, %c0_95] : memref<2x256xf32, #tpu.memory_space<vmem>>, vector<1x256xf32>
    %122 = vector.broadcast %121 : vector<1x256xf32> to vector<44x256xf32>
    %123 = arith.addf %120, %122 : vector<44x256xf32>
    %cst_96 = arith.constant 0.000000e+00 : f32
    %124 = vector.broadcast %cst_96 : f32 to vector<44x256xf32>
    %125 = arith.maximumf %123, %124 : vector<44x256xf32>
    %c0_97 = arith.constant 0 : index
    %c0_98 = arith.constant 0 : index
    %c0_99 = arith.constant 0 : index
    %126 = vector.load %arg10[%c0_97, %c0_98, %c0_99] : memref<2x90x44xbf16, #tpu.memory_space<vmem>>, vector<1x90x44xbf16>
    %127 = vector.shape_cast %126 : vector<1x90x44xbf16> to vector<90x44xbf16>
    %128 = arith.truncf %125 : vector<44x256xf32> to vector<44x256xbf16>
    %cst_100 = arith.constant dense<0.000000e+00> : vector<90x256xf32>
    %129 = tpu.matmul %127, %128, %cst_100 {dimension_numbers = #tpu.dot_dimension_numbers<[1], [0], [0], [1], [0, 0, 1, 1], [], []>} : vector<90x44xbf16>, vector<44x256xbf16>, vector<90x256xf32> -> vector<90x256xf32>
    %130 = arith.addf %119, %129 : vector<90x256xf32>
    %131 = vector.extract_strided_slice %118 {offsets = [0, 256], sizes = [44, 256], strides = [1, 1]} : vector<44x512xf32> to vector<44x256xf32>
    %c1_101 = arith.constant 1 : index
    %c0_102 = arith.constant 0 : index
    %132 = vector.load %arg9[%c1_101, %c0_102] : memref<2x256xf32, #tpu.memory_space<vmem>>, vector<1x256xf32>
    %133 = vector.broadcast %132 : vector<1x256xf32> to vector<44x256xf32>
    %134 = arith.addf %131, %133 : vector<44x256xf32>
    %cst_103 = arith.constant 0.000000e+00 : f32
    %135 = vector.broadcast %cst_103 : f32 to vector<44x256xf32>
    %136 = arith.maximumf %134, %135 : vector<44x256xf32>
    %c1_104 = arith.constant 1 : index
    %c0_105 = arith.constant 0 : index
    %c0_106 = arith.constant 0 : index
    %137 = vector.load %arg10[%c1_104, %c0_105, %c0_106] : memref<2x90x44xbf16, #tpu.memory_space<vmem>>, vector<1x90x44xbf16>
    %138 = vector.shape_cast %137 : vector<1x90x44xbf16> to vector<90x44xbf16>
    %139 = arith.truncf %136 : vector<44x256xf32> to vector<44x256xbf16>
    %cst_107 = arith.constant dense<0.000000e+00> : vector<90x256xf32>
    %140 = tpu.matmul %138, %139, %cst_107 {dimension_numbers = #tpu.dot_dimension_numbers<[1], [0], [0], [1], [0, 0, 1, 1], [], []>} : vector<90x44xbf16>, vector<44x256xbf16>, vector<90x256xf32> -> vector<90x256xf32>
    %141 = arith.addf %130, %140 : vector<90x256xf32>
    %c0_108 = arith.constant 0 : index
    %c0_109 = arith.constant 0 : index
    %142 = vector.load %arg16[%c0_108, %c0_109] : memref<90x256xf32, #tpu.memory_space<vmem>>, vector<90x256xf32>
    tpu.vector_store %arg16[%c0_108, %c0_109], %141 {strides = array<i32>} : memref<90x256xf32, #tpu.memory_space<vmem>>, vector<90x256xf32>,
    %cst_110 = arith.constant 0.000000e+00 : f32
    %143 = vector.broadcast %cst_110 : f32 to vector<84x384xf32>
    %c0_111 = arith.constant 0 : index
    %c0_112 = arith.constant 0 : index
    %144 = vector.load %arg16[%c0_111, %c0_112] : memref<90x256xf32, #tpu.memory_space<vmem>>, vector<84x256xf32>
    %145 = arith.truncf %144 : vector<84x256xf32> to vector<84x256xbf16>
    %c0_113 = arith.constant 0 : index
    %c0_114 = arith.constant 0 : index
    %c0_115 = arith.constant 0 : index
    %146 = vector.load %arg11[%c0_113, %c0_114, %c0_115] : memref<7x256x384xbf16, #tpu.memory_space<vmem>>, vector<1x256x384xbf16>
    %147 = vector.shape_cast %146 : vector<1x256x384xbf16> to vector<256x384xbf16>
    %cst_116 = arith.constant dense<0.000000e+00> : vector<84x384xf32>
    %148 = tpu.matmul %145, %147, %cst_116 {dimension_numbers = #tpu.dot_dimension_numbers<[1], [0], [0], [1], [0, 0, 1, 1], [], []>} : vector<84x256xbf16>, vector<256x384xbf16>, vector<84x384xf32> -> vector<84x384xf32>
    %149 = arith.addf %143, %148 : vector<84x384xf32>
    %c1_117 = arith.constant 1 : index
    %c0_118 = arith.constant 0 : index
    %150 = vector.load %arg16[%c1_117, %c0_118] : memref<90x256xf32, #tpu.memory_space<vmem>>, vector<84x256xf32>
    %151 = arith.truncf %150 : vector<84x256xf32> to vector<84x256xbf16>
    %c1_119 = arith.constant 1 : index
    %c0_120 = arith.constant 0 : index
    %c0_121 = arith.constant 0 : index
    %152 = vector.load %arg11[%c1_119, %c0_120, %c0_121] : memref<7x256x384xbf16, #tpu.memory_space<vmem>>, vector<1x256x384xbf16>
    %153 = vector.shape_cast %152 : vector<1x256x384xbf16> to vector<256x384xbf16>
    %cst_122 = arith.constant dense<0.000000e+00> : vector<84x384xf32>
    %154 = tpu.matmul %151, %153, %cst_122 {dimension_numbers = #tpu.dot_dimension_numbers<[1], [0], [0], [1], [0, 0, 1, 1], [], []>} : vector<84x256xbf16>, vector<256x384xbf16>, vector<84x384xf32> -> vector<84x384xf32>
    %155 = arith.addf %149, %154 : vector<84x384xf32>
    %c2_123 = arith.constant 2 : index
    %c0_124 = arith.constant 0 : index
    %156 = vector.load %arg16[%c2_123, %c0_124] : memref<90x256xf32, #tpu.memory_space<vmem>>, vector<84x256xf32>
    %157 = arith.truncf %156 : vector<84x256xf32> to vector<84x256xbf16>
    %c2_125 = arith.constant 2 : index
    %c0_126 = arith.constant 0 : index
    %c0_127 = arith.constant 0 : index
    %158 = vector.load %arg11[%c2_125, %c0_126, %c0_127] : memref<7x256x384xbf16, #tpu.memory_space<vmem>>, vector<1x256x384xbf16>
    %159 = vector.shape_cast %158 : vector<1x256x384xbf16> to vector<256x384xbf16>
    %cst_128 = arith.constant dense<0.000000e+00> : vector<84x384xf32>
    %160 = tpu.matmul %157, %159, %cst_128 {dimension_numbers = #tpu.dot_dimension_numbers<[1], [0], [0], [1], [0, 0, 1, 1], [], []>} : vector<84x256xbf16>, vector<256x384xbf16>, vector<84x384xf32> -> vector<84x384xf32>
    %161 = arith.addf %155, %160 : vector<84x384xf32>
    %c3_129 = arith.constant 3 : index
    %c0_130 = arith.constant 0 : index
    %162 = vector.load %arg16[%c3_129, %c0_130] : memref<90x256xf32, #tpu.memory_space<vmem>>, vector<84x256xf32>
    %163 = arith.truncf %162 : vector<84x256xf32> to vector<84x256xbf16>
    %c3_131 = arith.constant 3 : index
    %c0_132 = arith.constant 0 : index
    %c0_133 = arith.constant 0 : index
    %164 = vector.load %arg11[%c3_131, %c0_132, %c0_133] : memref<7x256x384xbf16, #tpu.memory_space<vmem>>, vector<1x256x384xbf16>
    %165 = vector.shape_cast %164 : vector<1x256x384xbf16> to vector<256x384xbf16>
    %cst_134 = arith.constant dense<0.000000e+00> : vector<84x384xf32>
    %166 = tpu.matmul %163, %165, %cst_134 {dimension_numbers = #tpu.dot_dimension_numbers<[1], [0], [0], [1], [0, 0, 1, 1], [], []>} : vector<84x256xbf16>, vector<256x384xbf16>, vector<84x384xf32> -> vector<84x384xf32>
    %167 = arith.addf %161, %166 : vector<84x384xf32>
    %c4_135 = arith.constant 4 : index
    %c0_136 = arith.constant 0 : index
    %168 = vector.load %arg16[%c4_135, %c0_136] : memref<90x256xf32, #tpu.memory_space<vmem>>, vector<84x256xf32>
    %169 = arith.truncf %168 : vector<84x256xf32> to vector<84x256xbf16>
    %c4_137 = arith.constant 4 : index
    %c0_138 = arith.constant 0 : index
    %c0_139 = arith.constant 0 : index
    %170 = vector.load %arg11[%c4_137, %c0_138, %c0_139] : memref<7x256x384xbf16, #tpu.memory_space<vmem>>, vector<1x256x384xbf16>
    %171 = vector.shape_cast %170 : vector<1x256x384xbf16> to vector<256x384xbf16>
    %cst_140 = arith.constant dense<0.000000e+00> : vector<84x384xf32>
    %172 = tpu.matmul %169, %171, %cst_140 {dimension_numbers = #tpu.dot_dimension_numbers<[1], [0], [0], [1], [0, 0, 1, 1], [], []>} : vector<84x256xbf16>, vector<256x384xbf16>, vector<84x384xf32> -> vector<84x384xf32>
    %173 = arith.addf %167, %172 : vector<84x384xf32>
    %c5 = arith.constant 5 : index
    %c0_141 = arith.constant 0 : index
    %174 = vector.load %arg16[%c5, %c0_141] : memref<90x256xf32, #tpu.memory_space<vmem>>, vector<84x256xf32>
    %175 = arith.truncf %174 : vector<84x256xf32> to vector<84x256xbf16>
    %c5_142 = arith.constant 5 : index
    %c0_143 = arith.constant 0 : index
    %c0_144 = arith.constant 0 : index
    %176 = vector.load %arg11[%c5_142, %c0_143, %c0_144] : memref<7x256x384xbf16, #tpu.memory_space<vmem>>, vector<1x256x384xbf16>
    %177 = vector.shape_cast %176 : vector<1x256x384xbf16> to vector<256x384xbf16>
    %cst_145 = arith.constant dense<0.000000e+00> : vector<84x384xf32>
    %178 = tpu.matmul %175, %177, %cst_145 {dimension_numbers = #tpu.dot_dimension_numbers<[1], [0], [0], [1], [0, 0, 1, 1], [], []>} : vector<84x256xbf16>, vector<256x384xbf16>, vector<84x384xf32> -> vector<84x384xf32>
    %179 = arith.addf %173, %178 : vector<84x384xf32>
    %c6 = arith.constant 6 : index
    %c0_146 = arith.constant 0 : index
    %180 = vector.load %arg16[%c6, %c0_146] : memref<90x256xf32, #tpu.memory_space<vmem>>, vector<84x256xf32>
    %181 = arith.truncf %180 : vector<84x256xf32> to vector<84x256xbf16>
    %c6_147 = arith.constant 6 : index
    %c0_148 = arith.constant 0 : index
    %c0_149 = arith.constant 0 : index
    %182 = vector.load %arg11[%c6_147, %c0_148, %c0_149] : memref<7x256x384xbf16, #tpu.memory_space<vmem>>, vector<1x256x384xbf16>
    %183 = vector.shape_cast %182 : vector<1x256x384xbf16> to vector<256x384xbf16>
    %cst_150 = arith.constant dense<0.000000e+00> : vector<84x384xf32>
    %184 = tpu.matmul %181, %183, %cst_150 {dimension_numbers = #tpu.dot_dimension_numbers<[1], [0], [0], [1], [0, 0, 1, 1], [], []>} : vector<84x256xbf16>, vector<256x384xbf16>, vector<84x384xf32> -> vector<84x384xf32>
    %185 = arith.addf %179, %184 : vector<84x384xf32>
    %c0_151 = arith.constant 0 : index
    %c0_152 = arith.constant 0 : index
    %186 = vector.load %arg12[%c0_151, %c0_152] : memref<1x384xf32, #tpu.memory_space<vmem>>, vector<1x384xf32>
    %187 = vector.broadcast %186 : vector<1x384xf32> to vector<84x384xf32>
    %188 = arith.addf %185, %187 : vector<84x384xf32>
    %189 = math.tanh %188 : vector<84x384xf32>
    %cst_153 = arith.constant 1.000000e+00 : f32
    %190 = vector.broadcast %cst_153 : f32 to vector<84x384xf32>
    %191 = arith.addf %189, %190 : vector<84x384xf32>
    %cst_154 = arith.constant 5.000000e-01 : f32
    %192 = vector.broadcast %cst_154 : f32 to vector<84x384xf32>
    %193 = arith.mulf %191, %192 : vector<84x384xf32>
    %c0_155 = arith.constant 0 : index
    %c0_156 = arith.constant 0 : index
    %194 = vector.load %arg17[%c0_155, %c0_156] : memref<84x384xf32, #tpu.memory_space<vmem>>, vector<84x384xf32>
    tpu.vector_store %arg17[%c0_155, %c0_156], %193 {strides = array<i32>} : memref<84x384xf32, #tpu.memory_space<vmem>>, vector<84x384xf32>,
    %c0_157 = arith.constant 0 : index
    %c0_158 = arith.constant 0 : index
    %195 = vector.load %arg17[%c0_157, %c0_158] : memref<84x384xf32, #tpu.memory_space<vmem>>, vector<36x384xf32>
    %c0_159 = arith.constant 0 : index
    %c0_160 = arith.constant 0 : index
    %c0_161 = arith.constant 0 : index
    %196 = vector.load %arg13[%c0_159, %c0_160, %c0_161] : memref<2x36x384xf32, #tpu.memory_space<vmem>>, vector<1x36x384xf32>
    %197 = vector.shape_cast %196 : vector<1x36x384xf32> to vector<36x384xf32>
    %198 = vector.shape_cast %195 : vector<36x384xf32> to vector<1x36x384xf32>
    tpu.vector_store %arg13[%c0_159, %c0_160, %c0_161], %198 {strides = array<i32>} : memref<2x36x384xf32, #tpu.memory_space<vmem>>, vector<1x36x384xf32>,
    %c42 = arith.constant 42 : index
    %c0_162 = arith.constant 0 : index
    %199 = vector.load %arg17[%c42, %c0_162] : memref<84x384xf32, #tpu.memory_space<vmem>>, vector<36x384xf32>
    %c1_163 = arith.constant 1 : index
    %c0_164 = arith.constant 0 : index
    %c0_165 = arith.constant 0 : index
    %200 = vector.load %arg13[%c1_163, %c0_164, %c0_165] : memref<2x36x384xf32, #tpu.memory_space<vmem>>, vector<1x36x384xf32>
    %201 = vector.shape_cast %200 : vector<1x36x384xf32> to vector<36x384xf32>
    %202 = vector.shape_cast %199 : vector<36x384xf32> to vector<1x36x384xf32>
    tpu.vector_store %arg13[%c1_163, %c0_164, %c0_165], %202 {strides = array<i32>} : memref<2x36x384xf32, #tpu.memory_space<vmem>>, vector<1x36x384xf32>,
    return
  }
  func.func @transform_0(%arg0: i32) -> (i32, i32) {
    %c0_i32 = arith.constant 0 : i32
    %c0_i32_0 = arith.constant 0 : i32
    return %arg0, %c0_i32 : i32, i32
  }
  func.func @transform_1(%arg0: i32) -> (i32, i32) {
    %c0_i32 = arith.constant 0 : i32
    %c0_i32_0 = arith.constant 0 : i32
    %c0_i32_1 = arith.constant 0 : i32
    return %c0_i32, %c0_i32_0 : i32, i32
  }
  func.func @transform_2(%arg0: i32) -> (i32, i32) {
    %c0_i32 = arith.constant 0 : i32
    %c0_i32_0 = arith.constant 0 : i32
    %c0_i32_1 = arith.constant 0 : i32
    return %c0_i32, %c0_i32_0 : i32, i32
  }
  func.func @transform_3(%arg0: i32) -> (i32, i32, i32) {
    %c0_i32 = arith.constant 0 : i32
    %c0_i32_0 = arith.constant 0 : i32
    %c0_i32_1 = arith.constant 0 : i32
    %c0_i32_2 = arith.constant 0 : i32
    return %c0_i32, %c0_i32_0, %c0_i32_1 : i32, i32, i32
  }
  func.func @transform_4(%arg0: i32) -> (i32, i32, i32) {
    %c0_i32 = arith.constant 0 : i32
    %c0_i32_0 = arith.constant 0 : i32
    %c0_i32_1 = arith.constant 0 : i32
    %c0_i32_2 = arith.constant 0 : i32
    return %c0_i32, %c0_i32_0, %c0_i32_1 : i32, i32, i32
  }
  func.func @transform_5(%arg0: i32) -> (i32, i32) {
    %c0_i32 = arith.constant 0 : i32
    %c0_i32_0 = arith.constant 0 : i32
    %c0_i32_1 = arith.constant 0 : i32
    return %c0_i32, %c0_i32_0 : i32, i32
  }
  func.func @transform_6(%arg0: i32) -> (i32, i32, i32) {
    %c0_i32 = arith.constant 0 : i32
    %c0_i32_0 = arith.constant 0 : i32
    %c0_i32_1 = arith.constant 0 : i32
    %c0_i32_2 = arith.constant 0 : i32
    return %c0_i32, %c0_i32_0, %c0_i32_1 : i32, i32, i32
  }
  func.func @transform_7(%arg0: i32) -> (i32, i32, i32) {
    %c0_i32 = arith.constant 0 : i32
    %c0_i32_0 = arith.constant 0 : i32
    %c0_i32_1 = arith.constant 0 : i32
    %c0_i32_2 = arith.constant 0 : i32
    return %c0_i32, %c0_i32_0, %c0_i32_1 : i32, i32, i32
  }
  func.func @transform_8(%arg0: i32) -> (i32, i32) {
    %c0_i32 = arith.constant 0 : i32
    %c0_i32_0 = arith.constant 0 : i32
    %c0_i32_1 = arith.constant 0 : i32
    return %c0_i32, %c0_i32_0 : i32, i32
  }
  func.func @transform_9(%arg0: i32) -> (i32, i32, i32) {
    %c0_i32 = arith.constant 0 : i32
    %c0_i32_0 = arith.constant 0 : i32
    %c0_i32_1 = arith.constant 0 : i32
    %c0_i32_2 = arith.constant 0 : i32
    return %c0_i32, %c0_i32_0, %c0_i32_1 : i32, i32, i32
  }
  func.func @transform_10(%arg0: i32) -> (i32, i32, i32) {
    %c0_i32 = arith.constant 0 : i32
    %c0_i32_0 = arith.constant 0 : i32
    %c0_i32_1 = arith.constant 0 : i32
    %c0_i32_2 = arith.constant 0 : i32
    return %c0_i32, %c0_i32_0, %c0_i32_1 : i32, i32, i32
  }
  func.func @transform_11(%arg0: i32) -> (i32, i32) {
    %c0_i32 = arith.constant 0 : i32
    %c0_i32_0 = arith.constant 0 : i32
    %c0_i32_1 = arith.constant 0 : i32
    return %c0_i32, %c0_i32_0 : i32, i32
  }
  func.func @transform_12(%arg0: i32) -> (i32, i32, i32) {
    %c0_i32 = arith.constant 0 : i32
    %c0_i32_0 = arith.constant 0 : i32
    %c0_i32_1 = arith.constant 0 : i32
    return %arg0, %c0_i32, %c0_i32_0 : i32, i32, i32
  }
}

</mosaic_0001>

<llo_original>
// kernel: decoder_forward.1
$region0: #{decoder_forward.1}
  #allocation0 [shape = 'u32[]', space=smem, size = 0x4, offset = 0x4, fixed_abs, tag = 'smem constant byte address 0x4 - core index']
  #allocation1 [shape = 'u32[144,128]{1,0:T(1,128)}', space=vmem, size = 0x12000, scoped, tag = 'internal scratch']
  #allocation2 [shape = 'f32[16,20]{1,0:T(8,128)}', space=vmem, size = 0x2000, scoped, tag = 'scratch operand']
  #allocation3 [shape = 'f32[46,128]{1,0:T(8,128)}', space=vmem, size = 0x6000, scoped, tag = 'scratch operand']
  #allocation4 [shape = 'f32[90,256]{1,0:T(8,128)}', space=vmem, size = 0x18000, scoped, tag = 'scratch operand']
  #allocation5 [shape = 'f32[84,384]{1,0:T(8,128)}', space=vmem, size = 0x21000, scoped, tag = 'scratch operand']
  %s0 = inlined_call_operand.hbm [shape: f32[2,16], index: 0, kind: input, shape index: {}]
  %s1 = inlined_call_operand.hbm [shape: bf16[16,100], index: 1, kind: input, shape index: {}]
  %s2 = inlined_call_operand.hbm [shape: f32[1,100], index: 2, kind: input, shape index: {}]
  %s3 = inlined_call_operand.vmem [shape: bf16[5,16,2], index: 3, kind: input, shape index: {}]
  %s4 = inlined_call_operand.hbm [shape: bf16[3,20,512], index: 4, kind: input, shape index: {}]
  %s5 = inlined_call_operand.hbm [shape: f32[4,128], index: 5, kind: input, shape index: {}]
  %s6 = inlined_call_operand.vmem [shape: bf16[4,46,14], index: 6, kind: input, shape index: {}]
  %s7 = inlined_call_operand.hbm [shape: bf16[3,128,512], index: 7, kind: input, shape index: {}]
  %s8 = inlined_call_operand.hbm [shape: f32[2,256], index: 8, kind: input, shape index: {}]
  %s9 = inlined_call_operand.vmem [shape: bf16[2,90,44], index: 9, kind: input, shape index: {}]
  %s10 = inlined_call_operand.hbm [shape: bf16[7,256,384], index: 10, kind: input, shape index: {}]
  %s11 = inlined_call_operand.hbm [shape: f32[1,384], index: 11, kind: input, shape index: {}]
  %s12 = inlined_call_operand.vmem [shape: f32[2,36,384], index: 12, kind: output, shape index: {}]
  %s13 = sld [smem:[#allocation0]]
  $region94: #{decoder_forward.1} parent=0
    _
  %s15 = ssub.s32 1, %s13
  %s16 = scalar_select 0, %s15, %s13
  $region1: #{decoder_forward.1} parent=0
    #allocation6 [shape = 'u8[1024]{0}', space=vmem, size = 0x400, scoped, tag = 'input window, operand 0, single buffered']
    #allocation7 [shape = 's32[1]{0}', space=sflag, size = 0x4, scoped, tag = 'scoped memory for decoder_forward.1']
    #allocation8 [shape = 'u8[4096]{0}', space=vmem, size = 0x1000, scoped, tag = 'input window, operand 1, single buffered']
    #allocation9 [shape = 's32[1]{0}', space=sflag, size = 0x4, scoped, tag = 'scoped memory for decoder_forward.1']
    #allocation10 [shape = 'u8[512]{0}', space=vmem, size = 0x400, scoped, tag = 'input window, operand 2, single buffered']
    #allocation11 [shape = 'u8[73728]{0}', space=vmem, size = 0x12000, scoped, tag = 'input window, operand 4, single buffered']
    #allocation12 [shape = 's32[1]{0}', space=sflag, size = 0x4, scoped, tag = 'scoped memory for decoder_forward.1']
    #allocation13 [shape = 'u8[2048]{0}', space=vmem, size = 0x800, scoped, tag = 'input window, operand 5, single buffered']
    #allocation14 [shape = 'u8[393216]{0}', space=vmem, size = 0x60000, scoped, tag = 'input window, operand 7, single buffered']
    #allocation15 [shape = 's32[1]{0}', space=sflag, size = 0x4, scoped, tag = 'scoped memory for decoder_forward.1']
    #allocation16 [shape = 'u8[2048]{0}', space=vmem, size = 0x800, scoped, tag = 'input window, operand 8, single buffered']
    #allocation17 [shape = 'u8[1376256]{0}', space=vmem, size = 0x150000, scoped, tag = 'input window, operand 10, single buffered']
    #allocation18 [shape = 's32[1]{0}', space=sflag, size = 0x4, scoped, tag = 'scoped memory for decoder_forward.1']
    #allocation19 [shape = 'u8[1536]{0}', space=vmem, size = 0x800, scoped, tag = 'input window, operand 11, single buffered']
    %17 = vsyncpa [#allocation7], 0
    %18 = vsyncpa [#allocation9], 0
    %19 = vsyncpa [#allocation12], 0
    %20 = vsyncpa [#allocation15], 0
    %21 = vsyncpa [#allocation18], 0
    // Predicated region
    $region2: #{decoder_forward.1} parent=1 // pred_check
      _
    $region3: #{decoder_forward.1} parent=1 // pred_check_branch
      %23 = sbr.rel (0) target = $region5
    $region4: #{decoder_forward.1} parent=1 // pred_region
      %s25 = ssub.s32 32, 32
      %26 = vsyncadd [#allocation7], %s25
      %s28 = sshll.u32 [#allocation6], 4
      %s29 = int_to_ptr.vmem [resolvable:$true] %s28
      %31 = dma.hbm_to_vmem [thread:$0]  %s0, 32, %s29, [#allocation7]
    $region5: #{decoder_forward.1} parent=1 // pred_fallthru
      _
    // Predicated region
    $region6: #{decoder_forward.1} parent=1 // pred_check
      _
    $region7: #{decoder_forward.1} parent=1 // pred_check_branch
      %33 = sbr.rel (0) target = $region9
    $region8: #{decoder_forward.1} parent=1 // pred_region
      %s35 = ssub.s32 128, 128
      %36 = vsyncadd [#allocation9], %s35
      %s37 = sshll.u32 [#allocation8], 4
      %s38 = int_to_ptr.vmem [resolvable:$true] %s37
      %43 = dma.hbm_to_vmem [thread:$0]  %s1, 128, %s38, [#allocation9], 64, 64, 4
    $region9: #{decoder_forward.1} parent=1 // pred_fallthru
      _
    // Predicated region
    $region10: #{decoder_forward.1} parent=1 // pred_check
      _
    $region11: #{decoder_forward.1} parent=1 // pred_check_branch
      %45 = sbr.rel (0) target = $region13
    $region12: #{decoder_forward.1} parent=1 // pred_region
      %s47 = ssub.s32 16, 16
      %48 = vsyncadd [#allocation9], %s47
      %s50 = sshll.u32 [#allocation10], 4
      %s51 = int_to_ptr.vmem [resolvable:$true] %s50
      %53 = dma.hbm_to_vmem [thread:$0]  %s2, 16, %s51, [#allocation9]
    $region13: #{decoder_forward.1} parent=1 // pred_fallthru
      _
    // Predicated region
    $region14: #{decoder_forward.1} parent=1 // pred_check
      _
    $region15: #{decoder_forward.1} parent=1 // pred_check_branch
      %55 = sbr.rel (0) target = $region17
    $region16: #{decoder_forward.1} parent=1 // pred_region
      _
    $region17: #{decoder_forward.1} parent=1 // pred_fallthru
      _
    // Predicated region
    $region18: #{decoder_forward.1} parent=1 // pred_check
      _
    $region19: #{decoder_forward.1} parent=1 // pred_check_branch
      %57 = sbr.rel (0) target = $region21
    $region20: #{decoder_forward.1} parent=1 // pred_region
      %s59 = ssub.s32 2304, 2304
      %60 = vsyncadd [#allocation12], %s59
      %s61 = sshll.u32 [#allocation11], 4
      %s62 = int_to_ptr.vmem [resolvable:$true] %s61
      %67 = dma.hbm_to_vmem [thread:$0]  %s4, 2304, %s62, [#allocation12], 256, 256, 16
    $region21: #{decoder_forward.1} parent=1 // pred_fallthru
      _
    // Predicated region
    $region22: #{decoder_forward.1} parent=1 // pred_check
      _
    $region23: #{decoder_forward.1} parent=1 // pred_check_branch
      %69 = sbr.rel (0) target = $region25
    $region24: #{decoder_forward.1} parent=1 // pred_region
      %s71 = ssub.s32 64, 64
      %72 = vsyncadd [#allocation12], %s71
      %s74 = sshll.u32 [#allocation13], 4
      %s75 = int_to_ptr.vmem [resolvable:$true] %s74
      %77 = dma.hbm_to_vmem [thread:$0]  %s5, 64, %s75, [#allocation12]
    $region25: #{decoder_forward.1} parent=1 // pred_fallthru
      _
    // Predicated region
    $region26: #{decoder_forward.1} parent=1 // pred_check
      _
    $region27: #{decoder_forward.1} parent=1 // pred_check_branch
      %79 = sbr.rel (0) target = $region29
    $region28: #{decoder_forward.1} parent=1 // pred_region
      _
    $region29: #{decoder_forward.1} parent=1 // pred_fallthru
      _
    // Predicated region
    $region30: #{decoder_forward.1} parent=1 // pred_check
      _
    $region31: #{decoder_forward.1} parent=1 // pred_check_branch
      %81 = sbr.rel (0) target = $region33
    $region32: #{decoder_forward.1} parent=1 // pred_region
      %s83 = ssub.s32 12288, 12288
      %84 = vsyncadd [#allocation15], %s83
      %s85 = sshll.u32 [#allocation14], 4
      %s86 = int_to_ptr.vmem [resolvable:$true] %s85
      %91 = dma.hbm_to_vmem [thread:$0]  %s7, 12288, %s86, [#allocation15], 256, 256, 16
    $region33: #{decoder_forward.1} parent=1 // pred_fallthru
      _
    // Predicated region
    $region34: #{decoder_forward.1} parent=1 // pred_check
      _
    $region35: #{decoder_forward.1} parent=1 // pred_check_branch
      %93 = sbr.rel (0) target = $region37
    $region36: #{decoder_forward.1} parent=1 // pred_region
      %s95 = ssub.s32 64, 64
      %96 = vsyncadd [#allocation15], %s95
      %s98 = sshll.u32 [#allocation16], 4
      %s99 = int_to_ptr.vmem [resolvable:$true] %s98
      %101 = dma.hbm_to_vmem [thread:$0]  %s8, 64, %s99, [#allocation15]
    $region37: #{decoder_forward.1} parent=1 // pred_fallthru
      _
    // Predicated region
    $region38: #{decoder_forward.1} parent=1 // pred_check
      _
    $region39: #{decoder_forward.1} parent=1 // pred_check_branch
      %103 = sbr.rel (0) target = $region41
    $region40: #{decoder_forward.1} parent=1 // pred_region
      _
    $region41: #{decoder_forward.1} parent=1 // pred_fallthru
      _
    // Predicated region
    $region42: #{decoder_forward.1} parent=1 // pred_check
      _
    $region43: #{decoder_forward.1} parent=1 // pred_check_branch
      %105 = sbr.rel (0) target = $region45
    $region44: #{decoder_forward.1} parent=1 // pred_region
      %s107 = ssub.s32 43008, 43008
      %108 = vsyncadd [#allocation18], %s107
      %s109 = sshll.u32 [#allocation17], 4
      %s110 = int_to_ptr.vmem [resolvable:$true] %s109
      %115 = dma.hbm_to_vmem [thread:$0]  %s10, 43008, %s110, [#allocation18], 192, 192, 12
    $region45: #{decoder_forward.1} parent=1 // pred_fallthru
      _
    // Predicated region
    $region46: #{decoder_forward.1} parent=1 // pred_check
      _
    $region47: #{decoder_forward.1} parent=1 // pred_check_branch
      %117 = sbr.rel (0) target = $region49
    $region48: #{decoder_forward.1} parent=1 // pred_region
      %s119 = ssub.s32 48, 48
      %120 = vsyncadd [#allocation18], %s119
      %s122 = sshll.u32 [#allocation19], 4
      %s123 = int_to_ptr.vmem [resolvable:$true] %s122
      %125 = dma.hbm_to_vmem [thread:$0]  %s11, 48, %s123, [#allocation18]
    $region49: #{decoder_forward.1} parent=1 // pred_fallthru
      _
    // Predicated region
    $region50: #{decoder_forward.1} parent=1 // pred_check
      _
    $region51: #{decoder_forward.1} parent=1 // pred_check_branch
      %127 = sbr.rel (0) target = $region53
    $region52: #{decoder_forward.1} parent=1 // pred_region
      %128 = dma.done [#allocation7], 32
    $region53: #{decoder_forward.1} parent=1 // pred_fallthru
      _
    // Predicated region
    $region54: #{decoder_forward.1} parent=1 // pred_check
      _
    $region55: #{decoder_forward.1} parent=1 // pred_check_branch
      %130 = sbr.rel (0) target = $region57
    $region56: #{decoder_forward.1} parent=1 // pred_region
      %131 = dma.done [#allocation9], 128
    $region57: #{decoder_forward.1} parent=1 // pred_fallthru
      _
    // Predicated region
    $region58: #{decoder_forward.1} parent=1 // pred_check
      _
    $region59: #{decoder_forward.1} parent=1 // pred_check_branch
      %133 = sbr.rel (0) target = $region61
    $region60: #{decoder_forward.1} parent=1 // pred_region
      %134 = dma.done [#allocation9], 16
    $region61: #{decoder_forward.1} parent=1 // pred_fallthru
      _
    // Predicated region
    $region62: #{decoder_forward.1} parent=1 // pred_check
      _
    $region63: #{decoder_forward.1} parent=1 // pred_check_branch
      %136 = sbr.rel (0) target = $region65
    $region64: #{decoder_forward.1} parent=1 // pred_region
      %137 = dma.done [#allocation12], 2304
    $region65: #{decoder_forward.1} parent=1 // pred_fallthru
      _
    // Predicated region
    $region66: #{decoder_forward.1} parent=1 // pred_check
      _
    $region67: #{decoder_forward.1} parent=1 // pred_check_branch
      %139 = sbr.rel (0) target = $region69
    $region68: #{decoder_forward.1} parent=1 // pred_region
      %140 = dma.done [#allocation12], 64
    $region69: #{decoder_forward.1} parent=1 // pred_fallthru
      _
    // Predicated region
    $region70: #{decoder_forward.1} parent=1 // pred_check
      _
    $region71: #{decoder_forward.1} parent=1 // pred_check_branch
      %142 = sbr.rel (0) target = $region73
    $region72: #{decoder_forward.1} parent=1 // pred_region
      %143 = dma.done [#allocation15], 12288
    $region73: #{decoder_forward.1} parent=1 // pred_fallthru
      _
    // Predicated region
    $region74: #{decoder_forward.1} parent=1 // pred_check
      _
    $region75: #{decoder_forward.1} parent=1 // pred_check_branch
      %145 = sbr.rel (0) target = $region77
    $region76: #{decoder_forward.1} parent=1 // pred_region
      %146 = dma.done [#allocation15], 64
    $region77: #{decoder_forward.1} parent=1 // pred_fallthru
      _
    // Predicated region
    $region78: #{decoder_forward.1} parent=1 // pred_check
      _
    $region79: #{decoder_forward.1} parent=1 // pred_check_branch
      %148 = sbr.rel (0) target = $region81
    $region80: #{decoder_forward.1} parent=1 // pred_region
      %149 = dma.done [#allocation18], 43008
    $region81: #{decoder_forward.1} parent=1 // pred_fallthru
      _
    // Predicated region
    $region82: #{decoder_forward.1} parent=1 // pred_check
      _
    $region83: #{decoder_forward.1} parent=1 // pred_check_branch
      %151 = sbr.rel (0) target = $region85
    $region84: #{decoder_forward.1} parent=1 // pred_region
      %152 = dma.done [#allocation18], 48
    $region85: #{decoder_forward.1} parent=1 // pred_fallthru
      _
    %v154 = vld [vmem:[#allocation6] sm:$0x3]
    %v155 = vpack.c.bf16 %v154, %v154
    %v156 = vld [vmem:[#allocation8] sm:$0xf]
    %v157 = vld [vmem:[#allocation8 + $0x4] sm:$0xf]
    %v158 = vld [vmem:[#allocation10] sm:$0x1]
    %v160 = vlaneseq
    %v161 = vshrl.u32 %v160, 7
    %v162 = vsub.s32 0, %v161
    %v163 = vrot.slane %v158, %v162
    %v167 = vunpack.c.l.b16 %v156
    %v168 = vunpack.c.l.b16 %v157
    %v169 = vpack.c.b16 %v168, %v167
    %vm171 = vcmask 130048
    %v173 = vsel %vm171, %v155, 0
    %175 = vmatprep.subr.bf16.mxu0 0
    %176 = vmatpush1.bf16.msra.mxu0 0
    %177 = vmatprep.subr.bf16.mxu0 0
    %178 = vmatpush1.bf16.msra.mxu0 0
    %179 = vmatprep.subr.bf16.mxu0 0
    %180 = vmatpush1.bf16.msra.mxu0 0
    %181 = vmatprep.subr.bf16.mxu0 0
    %182 = vmatpush1.bf16.msra.mxu0 0
    %183 = vmatprep.subr.bf16.mxu0 0
    %184 = vmatpush1.bf16.msra.mxu0 0
    %185 = vmatprep.subr.bf16.mxu0 0
    %186 = vmatpush1.bf16.msra.mxu0 0
    %187 = vmatprep.subr.bf16.mxu0 0
    %188 = vmatpush1.bf16.msra.mxu0 0
    %189 = vmatprep.subr.bf16.mxu0 0
    %190 = vmatpush1.bf16.msra.mxu0 %v169
    %191 = vmatprep.subr.bf16.mxu0 0
    %192 = vmatpush2.bf16.msra.mxu0 0
    %193 = vmatprep.subr.bf16.mxu0 0
    %194 = vmatpush2.bf16.msra.mxu0 0
    %195 = vmatprep.subr.bf16.mxu0 0
    %196 = vmatpush2.bf16.msra.mxu0 0
    %197 = vmatprep.subr.bf16.mxu0 0
    %198 = vmatpush2.bf16.msra.mxu0 0
    %199 = vmatprep.subr.bf16.mxu0 0
    %200 = vmatpush2.bf16.msra.mxu0 0
    %201 = vmatprep.subr.bf16.mxu0 0
    %202 = vmatpush2.bf16.msra.mxu0 0
    %203 = vmatprep.subr.bf16.mxu0 0
    %204 = vmatpush2.bf16.msra.mxu0 0
    %205 = vmatprep.subr.bf16.mxu0 0
    %206 = vmatpush2.bf16.msra.mxu0 0
    %207 = vmatprep.mubr.bf16.mxu0 0
    %208 = vmatmul.mubr.bf16.gmra.mxu0 %v173
    %v209 = vpop.f32.mrf.mxu0
    %v210 = vadd.f32 %v163, %v209
    %v211 = vpop.f32.mrf.mxu0
    %v212 = vpop.f32.mrf.mxu0
    %v213 = vpop.f32.mrf.mxu0
    %214 = vdwg.mxu0
    %v215 = vpack.c.bf16 %v210, %v210
    %v216 = vld [vmem:[%s3] sm:$0xf]
    %v217 = vld [vmem:[%s3 + $0x4] sm:$0xf]
    %s218 = scalar_lea.vmem %s3, 8
    %v219 = vld [vmem:[%s218] sm:$0xf]
    %v220 = vld [vmem:[%s218 + $0x4] sm:$0xf]
    %v223 = vunpack.c.l.b16 %v219
    %v224 = vunpack.c.l.b16 %v220
    %v225 = vpack.c.b16 %v224, %v223
    %227 = vrot.lane.b32.xlu0 %v215, 108
    %v228 = vpop.permute.xlu0 %227
    %vm229 = vcmask 15360
    %v231 = vsel %vm229, %v225, 0
    %vm233 = vcmask 1040384
    %v235 = vsel %vm233, %v228, 0
    %237 = vmatprep.subr.bf16.mxu0 0
    %238 = vmatpush1.bf16.msra.mxu0 0
    %239 = vmatprep.subr.bf16.mxu0 0
    %240 = vmatpush1.bf16.msra.mxu0 0
    %241 = vmatprep.subr.bf16.mxu0 0
    %242 = vmatpush1.bf16.msra.mxu0 0
    %243 = vmatprep.subr.bf16.mxu0 0
    %244 = vmatpush1.bf16.msra.mxu0 0
    %245 = vmatprep.subr.bf16.mxu0 0
    %246 = vmatpush1.bf16.msra.mxu0 0
    %247 = vmatprep.subr.bf16.mxu0 0
    %248 = vmatpush1.bf16.msra.mxu0 0
    %249 = vmatprep.subr.bf16.mxu0 0
    %250 = vmatpush1.bf16.msra.mxu0 0
    %251 = vmatprep.subr.bf16.mxu0 0
    %252 = vmatpush1.bf16.msra.mxu0 %v235
    %253 = vmatprep.subr.bf16.mxu0 0
    %254 = vmatpush2.bf16.msra.mxu0 0
    %255 = vmatprep.subr.bf16.mxu0 0
    %256 = vmatpush2.bf16.msra.mxu0 0
    %257 = vmatprep.subr.bf16.mxu0 0
    %258 = vmatpush2.bf16.msra.mxu0 0
    %259 = vmatprep.subr.bf16.mxu0 0
    %260 = vmatpush2.bf16.msra.mxu0 0
    %261 = vmatprep.subr.bf16.mxu0 0
    %262 = vmatpush2.bf16.msra.mxu0 0
    %263 = vmatprep.subr.bf16.mxu0 0
    %264 = vmatpush2.bf16.msra.mxu0 0
    %265 = vmatprep.subr.bf16.mxu0 0
    %266 = vmatpush2.bf16.msra.mxu0 0
    %267 = vmatprep.subr.bf16.mxu0 0
    %268 = vmatpush2.bf16.msra.mxu0 0
    %269 = vmatprep.mubr.bf16.mxu0 0
    %270 = vmatmul.mubr.bf16.gmra.mxu0 %v231
    %v271 = vpop.f32.mrf.mxu0
    %v272 = vadd.f32 0.0, %v271
    %v273 = vpop.f32.mrf.mxu0
    %v274 = vpop.f32.mrf.mxu0
    %v275 = vadd.f32 0.0, %v274
    %v276 = vpop.f32.mrf.mxu0
    %277 = vdwg.mxu0
    %v280 = vunpack.c.l.b16 %v216
    %v281 = vunpack.c.l.b16 %v217
    %v282 = vpack.c.b16 %v281, %v280
    %v284 = vsel %vm229, %v282, 0
    %v287 = vsel %vm233, %v215, 0
    %289 = vmatprep.subr.bf16.mxu0 0
    %290 = vmatpush1.bf16.msra.mxu0 0
    %291 = vmatprep.subr.bf16.mxu0 0
    %292 = vmatpush1.bf16.msra.mxu0 0
    %293 = vmatprep.subr.bf16.mxu0 0
    %294 = vmatpush1.bf16.msra.mxu0 0
    %295 = vmatprep.subr.bf16.mxu0 0
    %296 = vmatpush1.bf16.msra.mxu0 0
    %297 = vmatprep.subr.bf16.mxu0 0
    %298 = vmatpush1.bf16.msra.mxu0 0
    %299 = vmatprep.subr.bf16.mxu0 0
    %300 = vmatpush1.bf16.msra.mxu0 0
    %301 = vmatprep.subr.bf16.mxu0 0
    %302 = vmatpush1.bf16.msra.mxu0 0
    %303 = vmatprep.subr.bf16.mxu0 0
    %304 = vmatpush1.bf16.msra.mxu0 %v287
    %305 = vmatprep.subr.bf16.mxu0 0
    %306 = vmatpush2.bf16.msra.mxu0 0
    %307 = vmatprep.subr.bf16.mxu0 0
    %308 = vmatpush2.bf16.msra.mxu0 0
    %309 = vmatprep.subr.bf16.mxu0 0
    %310 = vmatpush2.bf16.msra.mxu0 0
    %311 = vmatprep.subr.bf16.mxu0 0
    %312 = vmatpush2.bf16.msra.mxu0 0
    %313 = vmatprep.subr.bf16.mxu0 0
    %314 = vmatpush2.bf16.msra.mxu0 0
    %315 = vmatprep.subr.bf16.mxu0 0
    %316 = vmatpush2.bf16.msra.mxu0 0
    %317 = vmatprep.subr.bf16.mxu0 0
    %318 = vmatpush2.bf16.msra.mxu0 0
    %319 = vmatprep.subr.bf16.mxu0 0
    %320 = vmatpush2.bf16.msra.mxu0 0
    %321 = vmatprep.mubr.bf16.mxu0 0
    %322 = vmatmul.mubr.bf16.gmra.mxu0 %v284
    %v323 = vpop.f32.mrf.mxu0
    %v324 = vadd.f32 %v272, %v323
    %v325 = vpop.f32.mrf.mxu0
    %v326 = vpop.f32.mrf.mxu0
    %v327 = vadd.f32 %v275, %v326
    %v328 = vpop.f32.mrf.mxu0
    %329 = vdwg.mxu0
    %s330 = scalar_lea.vmem %s3, 16
    %v331 = vld [vmem:[%s330] sm:$0xf]
    %v332 = vld [vmem:[%s330 + $0x4] sm:$0xf]
    %v335 = vunpack.c.l.b16 %v331
    %v336 = vunpack.c.l.b16 %v332
    %v337 = vpack.c.b16 %v336, %v335
    %338 = vrot.lane.b32.xlu0 %v215, 88
    %v339 = vpop.permute.xlu0 %338
    %v341 = vsel %vm229, %v337, 0
    %v344 = vsel %vm233, %v339, 0
    %346 = vmatprep.subr.bf16.mxu0 0
    %347 = vmatpush1.bf16.msra.mxu0 0
    %348 = vmatprep.subr.bf16.mxu0 0
    %349 = vmatpush1.bf16.msra.mxu0 0
    %350 = vmatprep.subr.bf16.mxu0 0
    %351 = vmatpush1.bf16.msra.mxu0 0
    %352 = vmatprep.subr.bf16.mxu0 0
    %353 = vmatpush1.bf16.msra.mxu0 0
    %354 = vmatprep.subr.bf16.mxu0 0
    %355 = vmatpush1.bf16.msra.mxu0 0
    %356 = vmatprep.subr.bf16.mxu0 0
    %357 = vmatpush1.bf16.msra.mxu0 0
    %358 = vmatprep.subr.bf16.mxu0 0
    %359 = vmatpush1.bf16.msra.mxu0 0
    %360 = vmatprep.subr.bf16.mxu0 0
    %361 = vmatpush1.bf16.msra.mxu0 %v344
    %362 = vmatprep.subr.bf16.mxu0 0
    %363 = vmatpush2.bf16.msra.mxu0 0
    %364 = vmatprep.subr.bf16.mxu0 0
    %365 = vmatpush2.bf16.msra.mxu0 0
    %366 = vmatprep.subr.bf16.mxu0 0
    %367 = vmatpush2.bf16.msra.mxu0 0
    %368 = vmatprep.subr.bf16.mxu0 0
    %369 = vmatpush2.bf16.msra.mxu0 0
    %370 = vmatprep.subr.bf16.mxu0 0
    %371 = vmatpush2.bf16.msra.mxu0 0
    %372 = vmatprep.subr.bf16.mxu0 0
    %373 = vmatpush2.bf16.msra.mxu0 0
    %374 = vmatprep.subr.bf16.mxu0 0
    %375 = vmatpush2.bf16.msra.mxu0 0
    %376 = vmatprep.subr.bf16.mxu0 0
    %377 = vmatpush2.bf16.msra.mxu0 0
    %378 = vmatprep.mubr.bf16.mxu0 0
    %379 = vmatmul.mubr.bf16.gmra.mxu0 %v341
    %v380 = vpop.f32.mrf.mxu0
    %v381 = vadd.f32 0.0, %v380
    %v382 = vpop.f32.mrf.mxu0
    %v383 = vpop.f32.mrf.mxu0
    %v384 = vadd.f32 0.0, %v383
    %v385 = vpop.f32.mrf.mxu0
    %386 = vdwg.mxu0
    %v387 = vadd.f32 %v324, %v381
    %v388 = vadd.f32 %v327, %v384
    %s389 = scalar_lea.vmem %s3, 24
    %v390 = vld [vmem:[%s389] sm:$0xf]
    %v391 = vld [vmem:[%s389 + $0x4] sm:$0xf]
    %v394 = vunpack.c.l.b16 %v390
    %v395 = vunpack.c.l.b16 %v391
    %v396 = vpack.c.b16 %v395, %v394
    %397 = vrot.lane.b32.xlu0 %v215, 68
    %v398 = vpop.permute.xlu0 %397
    %v400 = vsel %vm229, %v396, 0
    %v403 = vsel %vm233, %v398, 0
    %405 = vmatprep.subr.bf16.mxu0 0
    %406 = vmatpush1.bf16.msra.mxu0 0
    %407 = vmatprep.subr.bf16.mxu0 0
    %408 = vmatpush1.bf16.msra.mxu0 0
    %409 = vmatprep.subr.bf16.mxu0 0
    %410 = vmatpush1.bf16.msra.mxu0 0
    %411 = vmatprep.subr.bf16.mxu0 0
    %412 = vmatpush1.bf16.msra.mxu0 0
    %413 = vmatprep.subr.bf16.mxu0 0
    %414 = vmatpush1.bf16.msra.mxu0 0
    %415 = vmatprep.subr.bf16.mxu0 0
    %416 = vmatpush1.bf16.msra.mxu0 0
    %417 = vmatprep.subr.bf16.mxu0 0
    %418 = vmatpush1.bf16.msra.mxu0 0
    %419 = vmatprep.subr.bf16.mxu0 0
    %420 = vmatpush1.bf16.msra.mxu0 %v403
    %421 = vmatprep.subr.bf16.mxu0 0
    %422 = vmatpush2.bf16.msra.mxu0 0
    %423 = vmatprep.subr.bf16.mxu0 0
    %424 = vmatpush2.bf16.msra.mxu0 0
    %425 = vmatprep.subr.bf16.mxu0 0
    %426 = vmatpush2.bf16.msra.mxu0 0
    %427 = vmatprep.subr.bf16.mxu0 0
    %428 = vmatpush2.bf16.msra.mxu0 0
    %429 = vmatprep.subr.bf16.mxu0 0
    %430 = vmatpush2.bf16.msra.mxu0 0
    %431 = vmatprep.subr.bf16.mxu0 0
    %432 = vmatpush2.bf16.msra.mxu0 0
    %433 = vmatprep.subr.bf16.mxu0 0
    %434 = vmatpush2.bf16.msra.mxu0 0
    %435 = vmatprep.subr.bf16.mxu0 0
    %436 = vmatpush2.bf16.msra.mxu0 0
    %437 = vmatprep.mubr.bf16.mxu0 0
    %438 = vmatmul.mubr.bf16.gmra.mxu0 %v400
    %v439 = vpop.f32.mrf.mxu0
    %v440 = vadd.f32 0.0, %v439
    %v441 = vpop.f32.mrf.mxu0
    %v442 = vpop.f32.mrf.mxu0
    %v443 = vadd.f32 0.0, %v442
    %v444 = vpop.f32.mrf.mxu0
    %445 = vdwg.mxu0
    %v446 = vadd.f32 %v387, %v440
    %v447 = vadd.f32 %v388, %v443
    %s448 = scalar_lea.vmem %s3, 32
    %v449 = vld [vmem:[%s448] sm:$0xf]
    %v450 = vld [vmem:[%s448 + $0x4] sm:$0xf]
    %v453 = vunpack.c.l.b16 %v449
    %v454 = vunpack.c.l.b16 %v450
    %v455 = vpack.c.b16 %v454, %v453
    %456 = vrot.lane.b32.xlu0 %v215, 48
    %v457 = vpop.permute.xlu0 %456
    %v459 = vsel %vm229, %v455, 0
    %v462 = vsel %vm233, %v457, 0
    %464 = vmatprep.subr.bf16.mxu0 0
    %465 = vmatpush1.bf16.msra.mxu0 0
    %466 = vmatprep.subr.bf16.mxu0 0
    %467 = vmatpush1.bf16.msra.mxu0 0
    %468 = vmatprep.subr.bf16.mxu0 0
    %469 = vmatpush1.bf16.msra.mxu0 0
    %470 = vmatprep.subr.bf16.mxu0 0
    %471 = vmatpush1.bf16.msra.mxu0 0
    %472 = vmatprep.subr.bf16.mxu0 0
    %473 = vmatpush1.bf16.msra.mxu0 0
    %474 = vmatprep.subr.bf16.mxu0 0
    %475 = vmatpush1.bf16.msra.mxu0 0
    %476 = vmatprep.subr.bf16.mxu0 0
    %477 = vmatpush1.bf16.msra.mxu0 0
    %478 = vmatprep.subr.bf16.mxu0 0
    %479 = vmatpush1.bf16.msra.mxu0 %v462
    %480 = vmatprep.subr.bf16.mxu0 0
    %481 = vmatpush2.bf16.msra.mxu0 0
    %482 = vmatprep.subr.bf16.mxu0 0
    %483 = vmatpush2.bf16.msra.mxu0 0
    %484 = vmatprep.subr.bf16.mxu0 0
    %485 = vmatpush2.bf16.msra.mxu0 0
    %486 = vmatprep.subr.bf16.mxu0 0
    %487 = vmatpush2.bf16.msra.mxu0 0
    %488 = vmatprep.subr.bf16.mxu0 0
    %489 = vmatpush2.bf16.msra.mxu0 0
    %490 = vmatprep.subr.bf16.mxu0 0
    %491 = vmatpush2.bf16.msra.mxu0 0
    %492 = vmatprep.subr.bf16.mxu0 0
    %493 = vmatpush2.bf16.msra.mxu0 0
    %494 = vmatprep.subr.bf16.mxu0 0
    %495 = vmatpush2.bf16.msra.mxu0 0
    %496 = vmatprep.mubr.bf16.mxu0 0
    %497 = vmatmul.mubr.bf16.gmra.mxu0 %v459
    %v498 = vpop.f32.mrf.mxu0
    %v499 = vadd.f32 0.0, %v498
    %v500 = vpop.f32.mrf.mxu0
    %v501 = vpop.f32.mrf.mxu0
    %v502 = vadd.f32 0.0, %v501
    %v503 = vpop.f32.mrf.mxu0
    %504 = vdwg.mxu0
    %v505 = vadd.f32 %v446, %v499
    %v506 = vadd.f32 %v447, %v502
    %vm507 = vcmask 162816
    %508 = vst.msk [vmem:[#allocation2] sm:$0xff] %vm507, %v505
    %509 = vst.msk [vmem:[#allocation2 + $0x8] sm:$0xff] %vm507, %v506
    %v510 = vld [vmem:[#allocation2] sm:$0xff]
    %v511 = vld [vmem:[#allocation2 + $0x8] sm:$0x3f]
    %v512 = vpack.c.bf16 %v511, %v510
    %v513 = vld [vmem:[#allocation11] sm:$0xff]
    %v514 = vld [vmem:[#allocation11 + $0x8] sm:$0xff]
    %v515 = vld [vmem:[#allocation11 + $0x10] sm:$0xff]
    %v516 = vld [vmem:[#allocation11 + $0x18] sm:$0xff]
    %v517 = vld [vmem:[#allocation11 + $0x20] sm:$0x33]
    %v518 = vld [vmem:[#allocation11 + $0x28] sm:$0x33]
    %v519 = vld [vmem:[#allocation2 + $0x1] sm:$0xff]
    %v520 = vld [vmem:[#allocation2 + $0x9] sm:$0x3f]
    %v521 = vpack.c.bf16 %v520, %v519
    %s522 = scalar_lea.vmem [#allocation11], 48
    %v523 = vld [vmem:[%s522] sm:$0xff]
    %v524 = vld [vmem:[%s522 + $0x8] sm:$0xff]
    %v525 = vld [vmem:[%s522 + $0x10] sm:$0xff]
    %v526 = vld [vmem:[%s522 + $0x18] sm:$0xff]
    %v527 = vld [vmem:[%s522 + $0x20] sm:$0x33]
    %v528 = vld [vmem:[%s522 + $0x28] sm:$0x33]
    %v535 = vunpack.c.l.b16 %v523
    %v536 = vunpack.c.h.b16 %v523
    %v537 = vunpack.c.l.b16 %v524
    %v538 = vunpack.c.h.b16 %v524
    %v539 = vunpack.c.l.b16 %v525
    %v540 = vunpack.c.h.b16 %v525
    %v541 = vunpack.c.l.b16 %v526
    %v542 = vunpack.c.h.b16 %v526
    %v543 = vunpack.c.l.b16 %v527
    %v544 = vunpack.c.h.b16 %v527
    %v545 = vunpack.c.l.b16 %v528
    %v546 = vunpack.c.h.b16 %v528
    %v547 = vpack.c.b16 %v539, %v535
    %v548 = vpack.c.b16 %v540, %v536
    %v549 = vpack.c.b16 %v541, %v537
    %v550 = vpack.c.b16 %v542, %v538
    %v551 = vpack.c.b16 %v543, %v543
    %v552 = vpack.c.b16 %v544, %v544
    %v553 = vpack.c.b16 %v545, %v545
    %v554 = vpack.c.b16 %v546, %v546
    %v560 = vsel %vm507, %v521, 0
    %vm562 = vcmask 1041408
    %v564 = vsel %vm562, %v551, 0
    %v567 = vsel %vm562, %v552, 0
    %v570 = vsel %vm562, %v553, 0
    %v573 = vsel %vm562, %v554, 0
    %575 = vmatprep.subr.bf16.mxu0 0
    %576 = vmatpush1.bf16.msra.mxu0 0
    %577 = vmatprep.subr.bf16.mxu0 0
    %578 = vmatpush1.bf16.msra.mxu0 0
    %579 = vmatprep.subr.bf16.mxu0 0
    %580 = vmatpush1.bf16.msra.mxu0 0
    %581 = vmatprep.subr.bf16.mxu0 0
    %582 = vmatpush1.bf16.msra.mxu0 0
    %583 = vmatprep.subr.bf16.mxu0 0
    %584 = vmatpush1.bf16.msra.mxu0 0
    %585 = vmatprep.subr.bf16.mxu0 0
    %586 = vmatpush1.bf16.msra.mxu0 0
    %587 = vmatprep.subr.bf16.mxu0 %v567
    %588 = vmatpush1.bf16.msra.mxu0 %v564
    %589 = vmatprep.subr.bf16.mxu0 %v548
    %590 = vmatpush1.bf16.msra.mxu0 %v547
    %591 = vmatprep.subr.bf16.mxu0 0
    %592 = vmatpush2.bf16.msra.mxu0 0
    %593 = vmatprep.subr.bf16.mxu0 0
    %594 = vmatpush2.bf16.msra.mxu0 0
    %595 = vmatprep.subr.bf16.mxu0 0
    %596 = vmatpush2.bf16.msra.mxu0 0
    %597 = vmatprep.subr.bf16.mxu0 0
    %598 = vmatpush2.bf16.msra.mxu0 0
    %599 = vmatprep.subr.bf16.mxu0 0
    %600 = vmatpush2.bf16.msra.mxu0 0
    %601 = vmatprep.subr.bf16.mxu0 0
    %602 = vmatpush2.bf16.msra.mxu0 0
    %603 = vmatprep.subr.bf16.mxu0 0
    %604 = vmatpush2.bf16.msra.mxu0 0
    %605 = vmatprep.subr.bf16.mxu0 0
    %606 = vmatpush2.bf16.msra.mxu0 0
    %607 = vmatprep.mubr.bf16.mxu0 0
    %608 = vmatmul.mubr.bf16.gmra.mxu0 %v560
    %v609 = vpop.f32.mrf.mxu0
    %v610 = vadd.f32 0.0, %v609
    %v611 = vpop.f32.mrf.mxu0
    %v612 = vadd.f32 0.0, %v611
    %v613 = vpop.f32.mrf.mxu0
    %v614 = vadd.f32 0.0, %v613
    %v615 = vpop.f32.mrf.mxu0
    %v616 = vadd.f32 0.0, %v615
    %617 = vdwg.mxu0
    %618 = vmatprep.subr.bf16.mxu0 0
    %619 = vmatpush1.bf16.msra.mxu0 0
    %620 = vmatprep.subr.bf16.mxu0 0
    %621 = vmatpush1.bf16.msra.mxu0 0
    %622 = vmatprep.subr.bf16.mxu0 0
    %623 = vmatpush1.bf16.msra.mxu0 0
    %624 = vmatprep.subr.bf16.mxu0 0
    %625 = vmatpush1.bf16.msra.mxu0 0
    %626 = vmatprep.subr.bf16.mxu0 0
    %627 = vmatpush1.bf16.msra.mxu0 0
    %628 = vmatprep.subr.bf16.mxu0 0
    %629 = vmatpush1.bf16.msra.mxu0 0
    %630 = vmatprep.subr.bf16.mxu0 %v573
    %631 = vmatpush1.bf16.msra.mxu0 %v570
    %632 = vmatprep.subr.bf16.mxu0 %v550
    %633 = vmatpush1.bf16.msra.mxu0 %v549
    %634 = vmatprep.subr.bf16.mxu0 0
    %635 = vmatpush2.bf16.msra.mxu0 0
    %636 = vmatprep.subr.bf16.mxu0 0
    %637 = vmatpush2.bf16.msra.mxu0 0
    %638 = vmatprep.subr.bf16.mxu0 0
    %639 = vmatpush2.bf16.msra.mxu0 0
    %640 = vmatprep.subr.bf16.mxu0 0
    %641 = vmatpush2.bf16.msra.mxu0 0
    %642 = vmatprep.subr.bf16.mxu0 0
    %643 = vmatpush2.bf16.msra.mxu0 0
    %644 = vmatprep.subr.bf16.mxu0 0
    %645 = vmatpush2.bf16.msra.mxu0 0
    %646 = vmatprep.subr.bf16.mxu0 0
    %647 = vmatpush2.bf16.msra.mxu0 0
    %648 = vmatprep.subr.bf16.mxu0 0
    %649 = vmatpush2.bf16.msra.mxu0 0
    %650 = vmatprep.mubr.bf16.mxu0 0
    %651 = vmatmul.mubr.bf16.gmra.mxu0 %v560
    %v652 = vpop.f32.mrf.mxu0
    %v653 = vadd.f32 0.0, %v652
    %v654 = vpop.f32.mrf.mxu0
    %v655 = vadd.f32 0.0, %v654
    %v656 = vpop.f32.mrf.mxu0
    %v657 = vadd.f32 0.0, %v656
    %v658 = vpop.f32.mrf.mxu0
    %v659 = vadd.f32 0.0, %v658
    %660 = vdwg.mxu0
    %v667 = vunpack.c.l.b16 %v513
    %v668 = vunpack.c.h.b16 %v513
    %v669 = vunpack.c.l.b16 %v514
    %v670 = vunpack.c.h.b16 %v514
    %v671 = vunpack.c.l.b16 %v515
    %v672 = vunpack.c.h.b16 %v515
    %v673 = vunpack.c.l.b16 %v516
    %v674 = vunpack.c.h.b16 %v516
    %v675 = vunpack.c.l.b16 %v517
    %v676 = vunpack.c.h.b16 %v517
    %v677 = vunpack.c.l.b16 %v518
    %v678 = vunpack.c.h.b16 %v518
    %v679 = vpack.c.b16 %v671, %v667
    %v680 = vpack.c.b16 %v672, %v668
    %v681 = vpack.c.b16 %v673, %v669
    %v682 = vpack.c.b16 %v674, %v670
    %v683 = vpack.c.b16 %v675, %v675
    %v684 = vpack.c.b16 %v676, %v676
    %v685 = vpack.c.b16 %v677, %v677
    %v686 = vpack.c.b16 %v678, %v678
    %v692 = vsel %vm507, %v512, 0
    %v695 = vsel %vm562, %v683, 0
    %v698 = vsel %vm562, %v684, 0
    %v701 = vsel %vm562, %v685, 0
    %v704 = vsel %vm562, %v686, 0
    %706 = vmatprep.subr.bf16.mxu0 0
    %707 = vmatpush1.bf16.msra.mxu0 0
    %708 = vmatprep.subr.bf16.mxu0 0
    %709 = vmatpush1.bf16.msra.mxu0 0
    %710 = vmatprep.subr.bf16.mxu0 0
    %711 = vmatpush1.bf16.msra.mxu0 0
    %712 = vmatprep.subr.bf16.mxu0 0
    %713 = vmatpush1.bf16.msra.mxu0 0
    %714 = vmatprep.subr.bf16.mxu0 0
    %715 = vmatpush1.bf16.msra.mxu0 0
    %716 = vmatprep.subr.bf16.mxu0 0
    %717 = vmatpush1.bf16.msra.mxu0 0
    %718 = vmatprep.subr.bf16.mxu0 %v698
    %719 = vmatpush1.bf16.msra.mxu0 %v695
    %720 = vmatprep.subr.bf16.mxu0 %v680
    %721 = vmatpush1.bf16.msra.mxu0 %v679
    %722 = vmatprep.subr.bf16.mxu0 0
    %723 = vmatpush2.bf16.msra.mxu0 0
    %724 = vmatprep.subr.bf16.mxu0 0
    %725 = vmatpush2.bf16.msra.mxu0 0
    %726 = vmatprep.subr.bf16.mxu0 0
    %727 = vmatpush2.bf16.msra.mxu0 0
    %728 = vmatprep.subr.bf16.mxu0 0
    %729 = vmatpush2.bf16.msra.mxu0 0
    %730 = vmatprep.subr.bf16.mxu0 0
    %731 = vmatpush2.bf16.msra.mxu0 0
    %732 = vmatprep.subr.bf16.mxu0 0
    %733 = vmatpush2.bf16.msra.mxu0 0
    %734 = vmatprep.subr.bf16.mxu0 0
    %735 = vmatpush2.bf16.msra.mxu0 0
    %736 = vmatprep.subr.bf16.mxu0 0
    %737 = vmatpush2.bf16.msra.mxu0 0
    %738 = vmatprep.mubr.bf16.mxu0 0
    %739 = vmatmul.mubr.bf16.gmra.mxu0 %v692
    %v740 = vpop.f32.mrf.mxu0
    %v741 = vadd.f32 %v610, %v740
    %v742 = vpop.f32.mrf.mxu0
    %v743 = vadd.f32 %v612, %v742
    %v744 = vpop.f32.mrf.mxu0
    %v745 = vadd.f32 %v614, %v744
    %v746 = vpop.f32.mrf.mxu0
    %v747 = vadd.f32 %v616, %v746
    %748 = vdwg.mxu0
    %749 = vmatprep.subr.bf16.mxu0 0
    %750 = vmatpush1.bf16.msra.mxu0 0
    %751 = vmatprep.subr.bf16.mxu0 0
    %752 = vmatpush1.bf16.msra.mxu0 0
    %753 = vmatprep.subr.bf16.mxu0 0
    %754 = vmatpush1.bf16.msra.mxu0 0
    %755 = vmatprep.subr.bf16.mxu0 0
    %756 = vmatpush1.bf16.msra.mxu0 0
    %757 = vmatprep.subr.bf16.mxu0 0
    %758 = vmatpush1.bf16.msra.mxu0 0
    %759 = vmatprep.subr.bf16.mxu0 0
    %760 = vmatpush1.bf16.msra.mxu0 0
    %761 = vmatprep.subr.bf16.mxu0 %v704
    %762 = vmatpush1.bf16.msra.mxu0 %v701
    %763 = vmatprep.subr.bf16.mxu0 %v682
    %764 = vmatpush1.bf16.msra.mxu0 %v681
    %765 = vmatprep.subr.bf16.mxu0 0
    %766 = vmatpush2.bf16.msra.mxu0 0
    %767 = vmatprep.subr.bf16.mxu0 0
    %768 = vmatpush2.bf16.msra.mxu0 0
    %769 = vmatprep.subr.bf16.mxu0 0
    %770 = vmatpush2.bf16.msra.mxu0 0
    %771 = vmatprep.subr.bf16.mxu0 0
    %772 = vmatpush2.bf16.msra.mxu0 0
    %773 = vmatprep.subr.bf16.mxu0 0
    %774 = vmatpush2.bf16.msra.mxu0 0
    %775 = vmatprep.subr.bf16.mxu0 0
    %776 = vmatpush2.bf16.msra.mxu0 0
    %777 = vmatprep.subr.bf16.mxu0 0
    %778 = vmatpush2.bf16.msra.mxu0 0
    %779 = vmatprep.subr.bf16.mxu0 0
    %780 = vmatpush2.bf16.msra.mxu0 0
    %781 = vmatprep.mubr.bf16.mxu0 0
    %782 = vmatmul.mubr.bf16.gmra.mxu0 %v692
    %v783 = vpop.f32.mrf.mxu0
    %v784 = vadd.f32 %v653, %v783
    %v785 = vpop.f32.mrf.mxu0
    %v786 = vadd.f32 %v655, %v785
    %v787 = vpop.f32.mrf.mxu0
    %v788 = vadd.f32 %v657, %v787
    %v789 = vpop.f32.mrf.mxu0
    %v790 = vadd.f32 %v659, %v789
    %791 = vdwg.mxu0
    %v792 = vld [vmem:[#allocation2 + $0x2] sm:$0xff]
    %v793 = vld [vmem:[#allocation2 + $0xa] sm:$0x3f]
    %v794 = vpack.c.bf16 %v793, %v792
    %s795 = scalar_lea.vmem [#allocation11], 96
    %v796 = vld [vmem:[%s795] sm:$0xff]
    %v797 = vld [vmem:[%s795 + $0x8] sm:$0xff]
    %v798 = vld [vmem:[%s795 + $0x10] sm:$0xff]
    %v799 = vld [vmem:[%s795 + $0x18] sm:$0xff]
    %v800 = vld [vmem:[%s795 + $0x20] sm:$0x33]
    %v801 = vld [vmem:[%s795 + $0x28] sm:$0x33]
    %v808 = vunpack.c.l.b16 %v796
    %v809 = vunpack.c.h.b16 %v796
    %v810 = vunpack.c.l.b16 %v797
    %v811 = vunpack.c.h.b16 %v797
    %v812 = vunpack.c.l.b16 %v798
    %v813 = vunpack.c.h.b16 %v798
    %v814 = vunpack.c.l.b16 %v799
    %v815 = vunpack.c.h.b16 %v799
    %v816 = vunpack.c.l.b16 %v800
    %v817 = vunpack.c.h.b16 %v800
    %v818 = vunpack.c.l.b16 %v801
    %v819 = vunpack.c.h.b16 %v801
    %v820 = vpack.c.b16 %v812, %v808
    %v821 = vpack.c.b16 %v813, %v809
    %v822 = vpack.c.b16 %v814, %v810
    %v823 = vpack.c.b16 %v815, %v811
    %v824 = vpack.c.b16 %v816, %v816
    %v825 = vpack.c.b16 %v817, %v817
    %v826 = vpack.c.b16 %v818, %v818
    %v827 = vpack.c.b16 %v819, %v819
    %v833 = vsel %vm507, %v794, 0
    %v836 = vsel %vm562, %v824, 0
    %v839 = vsel %vm562, %v825, 0
    %v842 = vsel %vm562, %v826, 0
    %v845 = vsel %vm562, %v827, 0
    %847 = vmatprep.subr.bf16.mxu0 0
    %848 = vmatpush1.bf16.msra.mxu0 0
    %849 = vmatprep.subr.bf16.mxu0 0
    %850 = vmatpush1.bf16.msra.mxu0 0
    %851 = vmatprep.subr.bf16.mxu0 0
    %852 = vmatpush1.bf16.msra.mxu0 0
    %853 = vmatprep.subr.bf16.mxu0 0
    %854 = vmatpush1.bf16.msra.mxu0 0
    %855 = vmatprep.subr.bf16.mxu0 0
    %856 = vmatpush1.bf16.msra.mxu0 0
    %857 = vmatprep.subr.bf16.mxu0 0
    %858 = vmatpush1.bf16.msra.mxu0 0
    %859 = vmatprep.subr.bf16.mxu0 %v839
    %860 = vmatpush1.bf16.msra.mxu0 %v836
    %861 = vmatprep.subr.bf16.mxu0 %v821
    %862 = vmatpush1.bf16.msra.mxu0 %v820
    %863 = vmatprep.subr.bf16.mxu0 0
    %864 = vmatpush2.bf16.msra.mxu0 0
    %865 = vmatprep.subr.bf16.mxu0 0
    %866 = vmatpush2.bf16.msra.mxu0 0
    %867 = vmatprep.subr.bf16.mxu0 0
    %868 = vmatpush2.bf16.msra.mxu0 0
    %869 = vmatprep.subr.bf16.mxu0 0
    %870 = vmatpush2.bf16.msra.mxu0 0
    %871 = vmatprep.subr.bf16.mxu0 0
    %872 = vmatpush2.bf16.msra.mxu0 0
    %873 = vmatprep.subr.bf16.mxu0 0
    %874 = vmatpush2.bf16.msra.mxu0 0
    %875 = vmatprep.subr.bf16.mxu0 0
    %876 = vmatpush2.bf16.msra.mxu0 0
    %877 = vmatprep.subr.bf16.mxu0 0
    %878 = vmatpush2.bf16.msra.mxu0 0
    %879 = vmatprep.mubr.bf16.mxu0 0
    %880 = vmatmul.mubr.bf16.gmra.mxu0 %v833
    %v881 = vpop.f32.mrf.mxu0
    %v882 = vadd.f32 0.0, %v881
    %v883 = vpop.f32.mrf.mxu0
    %v884 = vadd.f32 0.0, %v883
    %v885 = vpop.f32.mrf.mxu0
    %v886 = vadd.f32 0.0, %v885
    %v887 = vpop.f32.mrf.mxu0
    %v888 = vadd.f32 0.0, %v887
    %889 = vdwg.mxu0
    %890 = vmatprep.subr.bf16.mxu0 0
    %891 = vmatpush1.bf16.msra.mxu0 0
    %892 = vmatprep.subr.bf16.mxu0 0
    %893 = vmatpush1.bf16.msra.mxu0 0
    %894 = vmatprep.subr.bf16.mxu0 0
    %895 = vmatpush1.bf16.msra.mxu0 0
    %896 = vmatprep.subr.bf16.mxu0 0
    %897 = vmatpush1.bf16.msra.mxu0 0
    %898 = vmatprep.subr.bf16.mxu0 0
    %899 = vmatpush1.bf16.msra.mxu0 0
    %900 = vmatprep.subr.bf16.mxu0 0
    %901 = vmatpush1.bf16.msra.mxu0 0
    %902 = vmatprep.subr.bf16.mxu0 %v845
    %903 = vmatpush1.bf16.msra.mxu0 %v842
    %904 = vmatprep.subr.bf16.mxu0 %v823
    %905 = vmatpush1.bf16.msra.mxu0 %v822
    %906 = vmatprep.subr.bf16.mxu0 0
    %907 = vmatpush2.bf16.msra.mxu0 0
    %908 = vmatprep.subr.bf16.mxu0 0
    %909 = vmatpush2.bf16.msra.mxu0 0
    %910 = vmatprep.subr.bf16.mxu0 0
    %911 = vmatpush2.bf16.msra.mxu0 0
    %912 = vmatprep.subr.bf16.mxu0 0
    %913 = vmatpush2.bf16.msra.mxu0 0
    %914 = vmatprep.subr.bf16.mxu0 0
    %915 = vmatpush2.bf16.msra.mxu0 0
    %916 = vmatprep.subr.bf16.mxu0 0
    %917 = vmatpush2.bf16.msra.mxu0 0
    %918 = vmatprep.subr.bf16.mxu0 0
    %919 = vmatpush2.bf16.msra.mxu0 0
    %920 = vmatprep.subr.bf16.mxu0 0
    %921 = vmatpush2.bf16.msra.mxu0 0
    %922 = vmatprep.mubr.bf16.mxu0 0
    %923 = vmatmul.mubr.bf16.gmra.mxu0 %v833
    %v924 = vpop.f32.mrf.mxu0
    %v925 = vadd.f32 0.0, %v924
    %v926 = vpop.f32.mrf.mxu0
    %v927 = vadd.f32 0.0, %v926
    %v928 = vpop.f32.mrf.mxu0
    %v929 = vadd.f32 0.0, %v928
    %v930 = vpop.f32.mrf.mxu0
    %v931 = vadd.f32 0.0, %v930
    %932 = vdwg.mxu0
    %v933 = vadd.f32 %v741, %v882
    %v934 = vadd.f32 %v743, %v884
    %v935 = vadd.f32 %v784, %v925
    %v936 = vadd.f32 %v786, %v927
    %v937 = vadd.f32 %v745, %v886
    %v938 = vadd.f32 %v747, %v888
    %v939 = vadd.f32 %v788, %v929
    %v940 = vadd.f32 %v790, %v931
    %v941 = vld [vmem:[#allocation13] sm:$0x1]
    %v942 = vlaneseq
    %v943 = vshrl.u32 %v942, 7
    %v944 = vsub.s32 0, %v943
    %v945 = vrot.slane %v941, %v944
    %v946 = vadd.f32 %v933, %v945
    %v947 = vadd.f32 %v937, %v945
    %v948 = vmax.f32 %v946, 0.0
    %v949 = vmax.f32 %v947, 0.0
    %v950 = vld [vmem:[%s6] sm:$0xf]
    %v951 = vld [vmem:[%s6 + $0x4] sm:$0xf]
    %v952 = vld [vmem:[%s6 + $0x8] sm:$0xf]
    %v953 = vld [vmem:[%s6 + $0xc] sm:$0xf]
    %v954 = vld [vmem:[%s6 + $0x10] sm:$0xf]
    %v955 = vld [vmem:[%s6 + $0x14] sm:$0x7]
    %v956 = vpack.c.bf16 %v949, %v948
    %v957 = vld [vmem:[#allocation13 + $0x1] sm:$0x1]
    %v958 = vlaneseq
    %v959 = vshrl.u32 %v958, 7
    %v960 = vsub.s32 0, %v959
    %v961 = vrot.slane %v957, %v960
    %v962 = vadd.f32 %v934, %v961
    %v963 = vadd.f32 %v938, %v961
    %v964 = vmax.f32 %v962, 0.0
    %v965 = vmax.f32 %v963, 0.0
    %s966 = scalar_lea.vmem %s6, 24
    %v967 = vld [vmem:[%s966] sm:$0xf]
    %v968 = vld [vmem:[%s966 + $0x4] sm:$0xf]
    %v969 = vld [vmem:[%s966 + $0x8] sm:$0xf]
    %v970 = vld [vmem:[%s966 + $0xc] sm:$0xf]
    %v971 = vld [vmem:[%s966 + $0x10] sm:$0xf]
    %v972 = vld [vmem:[%s966 + $0x14] sm:$0x7]
    %v973 = vpack.c.bf16 %v965, %v964
    %v980 = vunpack.c.l.b16 %v967
    %v981 = vunpack.c.l.b16 %v968
    %v982 = vunpack.c.l.b16 %v969
    %v983 = vunpack.c.l.b16 %v970
    %v984 = vunpack.c.l.b16 %v971
    %v985 = vunpack.c.l.b16 %v972
    %v986 = vpack.c.b16 %v981, %v980
    %v987 = vpack.c.b16 %v983, %v982
    %v988 = vpack.c.b16 %v985, %v984
    %vm989 = vcmask 113664
    %v991 = vsel %vm989, %v986, 0
    %v994 = vsel %vm989, %v987, 0
    %v997 = vsel %vm989, %v988, 0
    %vm999 = vcmask 1046528
    %v1001 = vsel %vm999, %v973, 0
    %1003 = vmatprep.subr.bf16.mxu0 0
    %1004 = vmatpush1.bf16.msra.mxu0 0
    %1005 = vmatprep.subr.bf16.mxu0 0
    %1006 = vmatpush1.bf16.msra.mxu0 0
    %1007 = vmatprep.subr.bf16.mxu0 0
    %1008 = vmatpush1.bf16.msra.mxu0 0
    %1009 = vmatprep.subr.bf16.mxu0 0
    %1010 = vmatpush1.bf16.msra.mxu0 0
    %1011 = vmatprep.subr.bf16.mxu0 0
    %1012 = vmatpush1.bf16.msra.mxu0 0
    %1013 = vmatprep.subr.bf16.mxu0 0
    %1014 = vmatpush1.bf16.msra.mxu0 0
    %1015 = vmatprep.subr.bf16.mxu0 0
    %1016 = vmatpush1.bf16.msra.mxu0 0
    %1017 = vmatprep.subr.bf16.mxu0 0
    %1018 = vmatpush1.bf16.msra.mxu0 %v1001
    %1019 = vmatprep.subr.bf16.mxu0 0
    %1020 = vmatpush2.bf16.msra.mxu0 0
    %1021 = vmatprep.subr.bf16.mxu0 0
    %1022 = vmatpush2.bf16.msra.mxu0 0
    %1023 = vmatprep.subr.bf16.mxu0 0
    %1024 = vmatpush2.bf16.msra.mxu0 0
    %1025 = vmatprep.subr.bf16.mxu0 0
    %1026 = vmatpush2.bf16.msra.mxu0 0
    %1027 = vmatprep.subr.bf16.mxu0 0
    %1028 = vmatpush2.bf16.msra.mxu0 0
    %1029 = vmatprep.subr.bf16.mxu0 0
    %1030 = vmatpush2.bf16.msra.mxu0 0
    %1031 = vmatprep.subr.bf16.mxu0 0
    %1032 = vmatpush2.bf16.msra.mxu0 0
    %1033 = vmatprep.subr.bf16.mxu0 0
    %1034 = vmatpush2.bf16.msra.mxu0 0
    %1035 = vmatprep.mubr.bf16.mxu0 0
    %1036 = vmatmul.mubr.bf16.gmra.mxu0 %v991
    %v1037 = vpop.f32.mrf.mxu0
    %v1038 = vadd.f32 0.0, %v1037
    %v1039 = vpop.f32.mrf.mxu0
    %v1040 = vpop.f32.mrf.mxu0
    %v1041 = vadd.f32 0.0, %v1040
    %v1042 = vpop.f32.mrf.mxu0
    %1043 = vmatprep.mubr.bf16.mxu0 0
    %1044 = vmatmul.mubr.bf16.gmra.mxu0 %v994
    %v1045 = vpop.f32.mrf.mxu0
    %v1046 = vadd.f32 0.0, %v1045
    %v1047 = vpop.f32.mrf.mxu0
    %v1048 = vpop.f32.mrf.mxu0
    %v1049 = vadd.f32 0.0, %v1048
    %v1050 = vpop.f32.mrf.mxu0
    %1051 = vmatprep.mubr.bf16.mxu0 0
    %1052 = vmatmul.mubr.bf16.gmra.mxu0 %v997
    %v1053 = vpop.f32.mrf.mxu0
    %v1054 = vadd.f32 0.0, %v1053
    %v1055 = vpop.f32.mrf.mxu0
    %v1056 = vpop.f32.mrf.mxu0
    %v1057 = vadd.f32 0.0, %v1056
    %v1058 = vpop.f32.mrf.mxu0
    %1059 = vdwg.mxu0
    %v1066 = vunpack.c.l.b16 %v950
    %v1067 = vunpack.c.l.b16 %v951
    %v1068 = vunpack.c.l.b16 %v952
    %v1069 = vunpack.c.l.b16 %v953
    %v1070 = vunpack.c.l.b16 %v954
    %v1071 = vunpack.c.l.b16 %v955
    %v1072 = vpack.c.b16 %v1067, %v1066
    %v1073 = vpack.c.b16 %v1069, %v1068
    %v1074 = vpack.c.b16 %v1071, %v1070
    %v1076 = vsel %vm989, %v1072, 0
    %v1079 = vsel %vm989, %v1073, 0
    %v1082 = vsel %vm989, %v1074, 0
    %v1085 = vsel %vm999, %v956, 0
    %1087 = vmatprep.subr.bf16.mxu0 0
    %1088 = vmatpush1.bf16.msra.mxu0 0
    %1089 = vmatprep.subr.bf16.mxu0 0
    %1090 = vmatpush1.bf16.msra.mxu0 0
    %1091 = vmatprep.subr.bf16.mxu0 0
    %1092 = vmatpush1.bf16.msra.mxu0 0
    %1093 = vmatprep.subr.bf16.mxu0 0
    %1094 = vmatpush1.bf16.msra.mxu0 0
    %1095 = vmatprep.subr.bf16.mxu0 0
    %1096 = vmatpush1.bf16.msra.mxu0 0
    %1097 = vmatprep.subr.bf16.mxu0 0
    %1098 = vmatpush1.bf16.msra.mxu0 0
    %1099 = vmatprep.subr.bf16.mxu0 0
    %1100 = vmatpush1.bf16.msra.mxu0 0
    %1101 = vmatprep.subr.bf16.mxu0 0
    %1102 = vmatpush1.bf16.msra.mxu0 %v1085
    %1103 = vmatprep.subr.bf16.mxu0 0
    %1104 = vmatpush2.bf16.msra.mxu0 0
    %1105 = vmatprep.subr.bf16.mxu0 0
    %1106 = vmatpush2.bf16.msra.mxu0 0
    %1107 = vmatprep.subr.bf16.mxu0 0
    %1108 = vmatpush2.bf16.msra.mxu0 0
    %1109 = vmatprep.subr.bf16.mxu0 0
    %1110 = vmatpush2.bf16.msra.mxu0 0
    %1111 = vmatprep.subr.bf16.mxu0 0
    %1112 = vmatpush2.bf16.msra.mxu0 0
    %1113 = vmatprep.subr.bf16.mxu0 0
    %1114 = vmatpush2.bf16.msra.mxu0 0
    %1115 = vmatprep.subr.bf16.mxu0 0
    %1116 = vmatpush2.bf16.msra.mxu0 0
    %1117 = vmatprep.subr.bf16.mxu0 0
    %1118 = vmatpush2.bf16.msra.mxu0 0
    %1119 = vmatprep.mubr.bf16.mxu0 0
    %1120 = vmatmul.mubr.bf16.gmra.mxu0 %v1076
    %v1121 = vpop.f32.mrf.mxu0
    %v1122 = vadd.f32 %v1038, %v1121
    %v1123 = vpop.f32.mrf.mxu0
    %v1124 = vpop.f32.mrf.mxu0
    %v1125 = vadd.f32 %v1041, %v1124
    %v1126 = vpop.f32.mrf.mxu0
    %1127 = vmatprep.mubr.bf16.mxu0 0
    %1128 = vmatmul.mubr.bf16.gmra.mxu0 %v1079
    %v1129 = vpop.f32.mrf.mxu0
    %v1130 = vadd.f32 %v1046, %v1129
    %v1131 = vpop.f32.mrf.mxu0
    %v1132 = vpop.f32.mrf.mxu0
    %v1133 = vadd.f32 %v1049, %v1132
    %v1134 = vpop.f32.mrf.mxu0
    %1135 = vmatprep.mubr.bf16.mxu0 0
    %1136 = vmatmul.mubr.bf16.gmra.mxu0 %v1082
    %v1137 = vpop.f32.mrf.mxu0
    %v1138 = vadd.f32 %v1054, %v1137
    %v1139 = vpop.f32.mrf.mxu0
    %v1140 = vpop.f32.mrf.mxu0
    %v1141 = vadd.f32 %v1057, %v1140
    %v1142 = vpop.f32.mrf.mxu0
    %1143 = vdwg.mxu0
    %v1144 = vld [vmem:[#allocation13 + $0x2] sm:$0x1]
    %v1145 = vlaneseq
    %v1146 = vshrl.u32 %v1145, 7
    %v1147 = vsub.s32 0, %v1146
    %v1148 = vrot.slane %v1144, %v1147
    %v1149 = vadd.f32 %v935, %v1148
    %v1150 = vadd.f32 %v939, %v1148
    %v1151 = vmax.f32 %v1149, 0.0
    %v1152 = vmax.f32 %v1150, 0.0
    %s1153 = scalar_lea.vmem %s6, 48
    %v1154 = vld [vmem:[%s1153] sm:$0xf]
    %v1155 = vld [vmem:[%s1153 + $0x4] sm:$0xf]
    %v1156 = vld [vmem:[%s1153 + $0x8] sm:$0xf]
    %v1157 = vld [vmem:[%s1153 + $0xc] sm:$0xf]
    %v1158 = vld [vmem:[%s1153 + $0x10] sm:$0xf]
    %v1159 = vld [vmem:[%s1153 + $0x14] sm:$0x7]
    %v1160 = vpack.c.bf16 %v1152, %v1151
    %v1167 = vunpack.c.l.b16 %v1154
    %v1168 = vunpack.c.l.b16 %v1155
    %v1169 = vunpack.c.l.b16 %v1156
    %v1170 = vunpack.c.l.b16 %v1157
    %v1171 = vunpack.c.l.b16 %v1158
    %v1172 = vunpack.c.l.b16 %v1159
    %v1173 = vpack.c.b16 %v1168, %v1167
    %v1174 = vpack.c.b16 %v1170, %v1169
    %v1175 = vpack.c.b16 %v1172, %v1171
    %v1177 = vsel %vm989, %v1173, 0
    %v1180 = vsel %vm989, %v1174, 0
    %v1183 = vsel %vm989, %v1175, 0
    %v1186 = vsel %vm999, %v1160, 0
    %1188 = vmatprep.subr.bf16.mxu0 0
    %1189 = vmatpush1.bf16.msra.mxu0 0
    %1190 = vmatprep.subr.bf16.mxu0 0
    %1191 = vmatpush1.bf16.msra.mxu0 0
    %1192 = vmatprep.subr.bf16.mxu0 0
    %1193 = vmatpush1.bf16.msra.mxu0 0
    %1194 = vmatprep.subr.bf16.mxu0 0
    %1195 = vmatpush1.bf16.msra.mxu0 0
    %1196 = vmatprep.subr.bf16.mxu0 0
    %1197 = vmatpush1.bf16.msra.mxu0 0
    %1198 = vmatprep.subr.bf16.mxu0 0
    %1199 = vmatpush1.bf16.msra.mxu0 0
    %1200 = vmatprep.subr.bf16.mxu0 0
    %1201 = vmatpush1.bf16.msra.mxu0 0
    %1202 = vmatprep.subr.bf16.mxu0 0
    %1203 = vmatpush1.bf16.msra.mxu0 %v1186
    %1204 = vmatprep.subr.bf16.mxu0 0
    %1205 = vmatpush2.bf16.msra.mxu0 0
    %1206 = vmatprep.subr.bf16.mxu0 0
    %1207 = vmatpush2.bf16.msra.mxu0 0
    %1208 = vmatprep.subr.bf16.mxu0 0
    %1209 = vmatpush2.bf16.msra.mxu0 0
    %1210 = vmatprep.subr.bf16.mxu0 0
    %1211 = vmatpush2.bf16.msra.mxu0 0
    %1212 = vmatprep.subr.bf16.mxu0 0
    %1213 = vmatpush2.bf16.msra.mxu0 0
    %1214 = vmatprep.subr.bf16.mxu0 0
    %1215 = vmatpush2.bf16.msra.mxu0 0
    %1216 = vmatprep.subr.bf16.mxu0 0
    %1217 = vmatpush2.bf16.msra.mxu0 0
    %1218 = vmatprep.subr.bf16.mxu0 0
    %1219 = vmatpush2.bf16.msra.mxu0 0
    %1220 = vmatprep.mubr.bf16.mxu0 0
    %1221 = vmatmul.mubr.bf16.gmra.mxu0 %v1177
    %v1222 = vpop.f32.mrf.mxu0
    %v1223 = vadd.f32 0.0, %v1222
    %v1224 = vpop.f32.mrf.mxu0
    %v1225 = vpop.f32.mrf.mxu0
    %v1226 = vadd.f32 0.0, %v1225
    %v1227 = vpop.f32.mrf.mxu0
    %1228 = vmatprep.mubr.bf16.mxu0 0
    %1229 = vmatmul.mubr.bf16.gmra.mxu0 %v1180
    %v1230 = vpop.f32.mrf.mxu0
    %v1231 = vadd.f32 0.0, %v1230
    %v1232 = vpop.f32.mrf.mxu0
    %v1233 = vpop.f32.mrf.mxu0
    %v1234 = vadd.f32 0.0, %v1233
    %v1235 = vpop.f32.mrf.mxu0
    %1236 = vmatprep.mubr.bf16.mxu0 0
    %1237 = vmatmul.mubr.bf16.gmra.mxu0 %v1183
    %v1238 = vpop.f32.mrf.mxu0
    %v1239 = vadd.f32 0.0, %v1238
    %v1240 = vpop.f32.mrf.mxu0
    %v1241 = vpop.f32.mrf.mxu0
    %v1242 = vadd.f32 0.0, %v1241
    %v1243 = vpop.f32.mrf.mxu0
    %1244 = vdwg.mxu0
    %v1245 = vadd.f32 %v1122, %v1223
    %v1246 = vadd.f32 %v1125, %v1226
    %v1247 = vadd.f32 %v1130, %v1231
    %v1248 = vadd.f32 %v1133, %v1234
    %v1249 = vadd.f32 %v1138, %v1239
    %v1250 = vadd.f32 %v1141, %v1242
    %v1251 = vld [vmem:[#allocation13 + $0x3] sm:$0x1]
    %v1252 = vlaneseq
    %v1253 = vshrl.u32 %v1252, 7
    %v1254 = vsub.s32 0, %v1253
    %v1255 = vrot.slane %v1251, %v1254
    %v1256 = vadd.f32 %v936, %v1255
    %v1257 = vadd.f32 %v940, %v1255
    %v1258 = vmax.f32 %v1256, 0.0
    %v1259 = vmax.f32 %v1257, 0.0
    %s1260 = scalar_lea.vmem %s6, 72
    %v1261 = vld [vmem:[%s1260] sm:$0xf]
    %v1262 = vld [vmem:[%s1260 + $0x4] sm:$0xf]
    %v1263 = vld [vmem:[%s1260 + $0x8] sm:$0xf]
    %v1264 = vld [vmem:[%s1260 + $0xc] sm:$0xf]
    %v1265 = vld [vmem:[%s1260 + $0x10] sm:$0xf]
    %v1266 = vld [vmem:[%s1260 + $0x14] sm:$0x7]
    %v1267 = vpack.c.bf16 %v1259, %v1258
    %v1274 = vunpack.c.l.b16 %v1261
    %v1275 = vunpack.c.l.b16 %v1262
    %v1276 = vunpack.c.l.b16 %v1263
    %v1277 = vunpack.c.l.b16 %v1264
    %v1278 = vunpack.c.l.b16 %v1265
    %v1279 = vunpack.c.l.b16 %v1266
    %v1280 = vpack.c.b16 %v1275, %v1274
    %v1281 = vpack.c.b16 %v1277, %v1276
    %v1282 = vpack.c.b16 %v1279, %v1278
    %v1284 = vsel %vm989, %v1280, 0
    %v1287 = vsel %vm989, %v1281, 0
    %v1290 = vsel %vm989, %v1282, 0
    %v1293 = vsel %vm999, %v1267, 0
    %1295 = vmatprep.subr.bf16.mxu0 0
    %1296 = vmatpush1.bf16.msra.mxu0 0
    %1297 = vmatprep.subr.bf16.mxu0 0
    %1298 = vmatpush1.bf16.msra.mxu0 0
    %1299 = vmatprep.subr.bf16.mxu0 0
    %1300 = vmatpush1.bf16.msra.mxu0 0
    %1301 = vmatprep.subr.bf16.mxu0 0
    %1302 = vmatpush1.bf16.msra.mxu0 0
    %1303 = vmatprep.subr.bf16.mxu0 0
    %1304 = vmatpush1.bf16.msra.mxu0 0
    %1305 = vmatprep.subr.bf16.mxu0 0
    %1306 = vmatpush1.bf16.msra.mxu0 0
    %1307 = vmatprep.subr.bf16.mxu0 0
    %1308 = vmatpush1.bf16.msra.mxu0 0
    %1309 = vmatprep.subr.bf16.mxu0 0
    %1310 = vmatpush1.bf16.msra.mxu0 %v1293
    %1311 = vmatprep.subr.bf16.mxu0 0
    %1312 = vmatpush2.bf16.msra.mxu0 0
    %1313 = vmatprep.subr.bf16.mxu0 0
    %1314 = vmatpush2.bf16.msra.mxu0 0
    %1315 = vmatprep.subr.bf16.mxu0 0
    %1316 = vmatpush2.bf16.msra.mxu0 0
    %1317 = vmatprep.subr.bf16.mxu0 0
    %1318 = vmatpush2.bf16.msra.mxu0 0
    %1319 = vmatprep.subr.bf16.mxu0 0
    %1320 = vmatpush2.bf16.msra.mxu0 0
    %1321 = vmatprep.subr.bf16.mxu0 0
    %1322 = vmatpush2.bf16.msra.mxu0 0
    %1323 = vmatprep.subr.bf16.mxu0 0
    %1324 = vmatpush2.bf16.msra.mxu0 0
    %1325 = vmatprep.subr.bf16.mxu0 0
    %1326 = vmatpush2.bf16.msra.mxu0 0
    %1327 = vmatprep.mubr.bf16.mxu0 0
    %1328 = vmatmul.mubr.bf16.gmra.mxu0 %v1284
    %v1329 = vpop.f32.mrf.mxu0
    %v1330 = vadd.f32 0.0, %v1329
    %v1331 = vpop.f32.mrf.mxu0
    %v1332 = vpop.f32.mrf.mxu0
    %v1333 = vadd.f32 0.0, %v1332
    %v1334 = vpop.f32.mrf.mxu0
    %1335 = vmatprep.mubr.bf16.mxu0 0
    %1336 = vmatmul.mubr.bf16.gmra.mxu0 %v1287
    %v1337 = vpop.f32.mrf.mxu0
    %v1338 = vadd.f32 0.0, %v1337
    %v1339 = vpop.f32.mrf.mxu0
    %v1340 = vpop.f32.mrf.mxu0
    %v1341 = vadd.f32 0.0, %v1340
    %v1342 = vpop.f32.mrf.mxu0
    %1343 = vmatprep.mubr.bf16.mxu0 0
    %1344 = vmatmul.mubr.bf16.gmra.mxu0 %v1290
    %v1345 = vpop.f32.mrf.mxu0
    %v1346 = vadd.f32 0.0, %v1345
    %v1347 = vpop.f32.mrf.mxu0
    %v1348 = vpop.f32.mrf.mxu0
    %v1349 = vadd.f32 0.0, %v1348
    %v1350 = vpop.f32.mrf.mxu0
    %1351 = vdwg.mxu0
    %v1352 = vadd.f32 %v1245, %v1330
    %v1353 = vadd.f32 %v1246, %v1333
    %v1354 = vadd.f32 %v1247, %v1338
    %v1355 = vadd.f32 %v1248, %v1341
    %v1356 = vadd.f32 %v1249, %v1346
    %v1357 = vadd.f32 %v1250, %v1349
    %1358 = vst [vmem:[#allocation3] sm:$0xff] %v1352
    %1359 = vst [vmem:[#allocation3 + $0x8] sm:$0xff] %v1353
    %1360 = vst [vmem:[#allocation3 + $0x10] sm:$0xff] %v1354
    %1361 = vst [vmem:[#allocation3 + $0x18] sm:$0xff] %v1355
    %1362 = vst [vmem:[#allocation3 + $0x20] sm:$0xff] %v1356
    %1363 = vst [vmem:[#allocation3 + $0x28] sm:$0x3f] %v1357
    %v1364 = vld [vmem:[#allocation3] sm:$0xff]
    %v1365 = vld [vmem:[#allocation3 + $0x8] sm:$0xff]
    %v1366 = vld [vmem:[#allocation3 + $0x10] sm:$0xff]
    %v1367 = vld [vmem:[#allocation3 + $0x18] sm:$0xff]
    %v1368 = vld [vmem:[#allocation3 + $0x20] sm:$0xff]
    %v1369 = vld [vmem:[#allocation3 + $0x28] sm:$0xf]
    %v1370 = vpack.c.bf16 %v1365, %v1364
    %v1371 = vpack.c.bf16 %v1367, %v1366
    %v1372 = vpack.c.bf16 %v1369, %v1368
    %v1373 = vld [vmem:[#allocation14] sm:$0xff]
    %v1374 = vld [vmem:[#allocation14 + $0x8] sm:$0xff]
    %v1375 = vld [vmem:[#allocation14 + $0x10] sm:$0xff]
    %v1376 = vld [vmem:[#allocation14 + $0x18] sm:$0xff]
    %v1377 = vld [vmem:[#allocation14 + $0x20] sm:$0xff]
    %v1378 = vld [vmem:[#allocation14 + $0x28] sm:$0xff]
    %v1379 = vld [vmem:[#allocation14 + $0x30] sm:$0xff]
    %v1380 = vld [vmem:[#allocation14 + $0x38] sm:$0xff]
    %v1381 = vld [vmem:[#allocation14 + $0x40] sm:$0xff]
    %v1382 = vld [vmem:[#allocation14 + $0x48] sm:$0xff]
    %v1383 = vld [vmem:[#allocation14 + $0x50] sm:$0xff]
    %v1384 = vld [vmem:[#allocation14 + $0x58] sm:$0xff]
    %v1385 = vld [vmem:[#allocation14 + $0x60] sm:$0xff]
    %v1386 = vld [vmem:[#allocation14 + $0x68] sm:$0xff]
    %v1387 = vld [vmem:[#allocation14 + $0x70] sm:$0xff]
    %v1388 = vld [vmem:[#allocation14 + $0x78] sm:$0xff]
    %v1389 = vld [vmem:[#allocation14 + $0x80] sm:$0xff]
    %v1390 = vld [vmem:[#allocation14 + $0x88] sm:$0xff]
    %v1391 = vld [vmem:[#allocation14 + $0x90] sm:$0xff]
    %v1392 = vld [vmem:[#allocation14 + $0x98] sm:$0xff]
    %v1393 = vld [vmem:[#allocation14 + $0xa0] sm:$0xff]
    %v1394 = vld [vmem:[#allocation14 + $0xa8] sm:$0xff]
    %v1395 = vld [vmem:[#allocation14 + $0xb0] sm:$0xff]
    %v1396 = vld [vmem:[#allocation14 + $0xb8] sm:$0xff]
    %v1397 = vld [vmem:[#allocation14 + $0xc0] sm:$0xff]
    %v1398 = vld [vmem:[#allocation14 + $0xc8] sm:$0xff]
    %v1399 = vld [vmem:[#allocation14 + $0xd0] sm:$0xff]
    %v1400 = vld [vmem:[#allocation14 + $0xd8] sm:$0xff]
    %v1401 = vld [vmem:[#allocation14 + $0xe0] sm:$0xff]
    %v1402 = vld [vmem:[#allocation14 + $0xe8] sm:$0xff]
    %v1403 = vld [vmem:[#allocation14 + $0xf0] sm:$0xff]
    %v1404 = vld [vmem:[#allocation14 + $0xf8] sm:$0xff]
    %v1405 = vld [vmem:[#allocation3 + $0x1] sm:$0xff]
    %v1406 = vld [vmem:[#allocation3 + $0x9] sm:$0xff]
    %v1407 = vld [vmem:[#allocation3 + $0x11] sm:$0xff]
    %v1408 = vld [vmem:[#allocation3 + $0x19] sm:$0xff]
    %v1409 = vld [vmem:[#allocation3 + $0x21] sm:$0xff]
    %v1410 = vld [vmem:[#allocation3 + $0x29] sm:$0xf]
    %v1411 = vpack.c.bf16 %v1406, %v1405
    %v1412 = vpack.c.bf16 %v1408, %v1407
    %v1413 = vpack.c.bf16 %v1410, %v1409
    %s1414 = scalar_lea.vmem [#allocation14], 256
    %v1415 = vld [vmem:[%s1414] sm:$0xff]
    %v1416 = vld [vmem:[%s1414 + $0x8] sm:$0xff]
    %v1417 = vld [vmem:[%s1414 + $0x10] sm:$0xff]
    %v1418 = vld [vmem:[%s1414 + $0x18] sm:$0xff]
    %v1419 = vld [vmem:[%s1414 + $0x20] sm:$0xff]
    %v1420 = vld [vmem:[%s1414 + $0x28] sm:$0xff]
    %v1421 = vld [vmem:[%s1414 + $0x30] sm:$0xff]
    %v1422 = vld [vmem:[%s1414 + $0x38] sm:$0xff]
    %v1423 = vld [vmem:[%s1414 + $0x40] sm:$0xff]
    %v1424 = vld [vmem:[%s1414 + $0x48] sm:$0xff]
    %v1425 = vld [vmem:[%s1414 + $0x50] sm:$0xff]
    %v1426 = vld [vmem:[%s1414 + $0x58] sm:$0xff]
    %v1427 = vld [vmem:[%s1414 + $0x60] sm:$0xff]
    %v1428 = vld [vmem:[%s1414 + $0x68] sm:$0xff]
    %v1429 = vld [vmem:[%s1414 + $0x70] sm:$0xff]
    %v1430 = vld [vmem:[%s1414 + $0x78] sm:$0xff]
    %v1431 = vld [vmem:[%s1414 + $0x80] sm:$0xff]
    %v1432 = vld [vmem:[%s1414 + $0x88] sm:$0xff]
    %v1433 = vld [vmem:[%s1414 + $0x90] sm:$0xff]
    %v1434 = vld [vmem:[%s1414 + $0x98] sm:$0xff]
    %v1435 = vld [vmem:[%s1414 + $0xa0] sm:$0xff]
    %v1436 = vld [vmem:[%s1414 + $0xa8] sm:$0xff]
    %v1437 = vld [vmem:[%s1414 + $0xb0] sm:$0xff]
    %v1438 = vld [vmem:[%s1414 + $0xb8] sm:$0xff]
    %v1439 = vld [vmem:[%s1414 + $0xc0] sm:$0xff]
    %v1440 = vld [vmem:[%s1414 + $0xc8] sm:$0xff]
    %v1441 = vld [vmem:[%s1414 + $0xd0] sm:$0xff]
    %v1442 = vld [vmem:[%s1414 + $0xd8] sm:$0xff]
    %v1443 = vld [vmem:[%s1414 + $0xe0] sm:$0xff]
    %v1444 = vld [vmem:[%s1414 + $0xe8] sm:$0xff]
    %v1445 = vld [vmem:[%s1414 + $0xf0] sm:$0xff]
    %v1446 = vld [vmem:[%s1414 + $0xf8] sm:$0xff]
    %v1479 = vunpack.c.l.b16 %v1415
    %v1480 = vunpack.c.h.b16 %v1415
    %v1481 = vunpack.c.l.b16 %v1416
    %v1482 = vunpack.c.h.b16 %v1416
    %v1483 = vunpack.c.l.b16 %v1417
    %v1484 = vunpack.c.h.b16 %v1417
    %v1485 = vunpack.c.l.b16 %v1418
    %v1486 = vunpack.c.h.b16 %v1418
    %v1487 = vunpack.c.l.b16 %v1419
    %v1488 = vunpack.c.h.b16 %v1419
    %v1489 = vunpack.c.l.b16 %v1420
    %v1490 = vunpack.c.h.b16 %v1420
    %v1491 = vunpack.c.l.b16 %v1421
    %v1492 = vunpack.c.h.b16 %v1421
    %v1493 = vunpack.c.l.b16 %v1422
    %v1494 = vunpack.c.h.b16 %v1422
    %v1495 = vunpack.c.l.b16 %v1423
    %v1496 = vunpack.c.h.b16 %v1423
    %v1497 = vunpack.c.l.b16 %v1424
    %v1498 = vunpack.c.h.b16 %v1424
    %v1499 = vunpack.c.l.b16 %v1425
    %v1500 = vunpack.c.h.b16 %v1425
    %v1501 = vunpack.c.l.b16 %v1426
    %v1502 = vunpack.c.h.b16 %v1426
    %v1503 = vunpack.c.l.b16 %v1427
    %v1504 = vunpack.c.h.b16 %v1427
    %v1505 = vunpack.c.l.b16 %v1428
    %v1506 = vunpack.c.h.b16 %v1428
    %v1507 = vunpack.c.l.b16 %v1429
    %v1508 = vunpack.c.h.b16 %v1429
    %v1509 = vunpack.c.l.b16 %v1430
    %v1510 = vunpack.c.h.b16 %v1430
    %v1511 = vunpack.c.l.b16 %v1431
    %v1512 = vunpack.c.h.b16 %v1431
    %v1513 = vunpack.c.l.b16 %v1432
    %v1514 = vunpack.c.h.b16 %v1432
    %v1515 = vunpack.c.l.b16 %v1433
    %v1516 = vunpack.c.h.b16 %v1433
    %v1517 = vunpack.c.l.b16 %v1434
    %v1518 = vunpack.c.h.b16 %v1434
    %v1519 = vunpack.c.l.b16 %v1435
    %v1520 = vunpack.c.h.b16 %v1435
    %v1521 = vunpack.c.l.b16 %v1436
    %v1522 = vunpack.c.h.b16 %v1436
    %v1523 = vunpack.c.l.b16 %v1437
    %v1524 = vunpack.c.h.b16 %v1437
    %v1525 = vunpack.c.l.b16 %v1438
    %v1526 = vunpack.c.h.b16 %v1438
    %v1527 = vunpack.c.l.b16 %v1439
    %v1528 = vunpack.c.h.b16 %v1439
    %v1529 = vunpack.c.l.b16 %v1440
    %v1530 = vunpack.c.h.b16 %v1440
    %v1531 = vunpack.c.l.b16 %v1441
    %v1532 = vunpack.c.h.b16 %v1441
    %v1533 = vunpack.c.l.b16 %v1442
    %v1534 = vunpack.c.h.b16 %v1442
    %v1535 = vunpack.c.l.b16 %v1443
    %v1536 = vunpack.c.h.b16 %v1443
    %v1537 = vunpack.c.l.b16 %v1444
    %v1538 = vunpack.c.h.b16 %v1444
    %v1539 = vunpack.c.l.b16 %v1445
    %v1540 = vunpack.c.h.b16 %v1445
    %v1541 = vunpack.c.l.b16 %v1446
    %v1542 = vunpack.c.h.b16 %v1446
    %v1543 = vpack.c.b16 %v1483, %v1479
    %v1544 = vpack.c.b16 %v1484, %v1480
    %v1545 = vpack.c.b16 %v1485, %v1481
    %v1546 = vpack.c.b16 %v1486, %v1482
    %v1547 = vpack.c.b16 %v1491, %v1487
    %v1548 = vpack.c.b16 %v1492, %v1488
    %v1549 = vpack.c.b16 %v1493, %v1489
    %v1550 = vpack.c.b16 %v1494, %v1490
    %v1551 = vpack.c.b16 %v1499, %v1495
    %v1552 = vpack.c.b16 %v1500, %v1496
    %v1553 = vpack.c.b16 %v1501, %v1497
    %v1554 = vpack.c.b16 %v1502, %v1498
    %v1555 = vpack.c.b16 %v1507, %v1503
    %v1556 = vpack.c.b16 %v1508, %v1504
    %v1557 = vpack.c.b16 %v1509, %v1505
    %v1558 = vpack.c.b16 %v1510, %v1506
    %v1559 = vpack.c.b16 %v1515, %v1511
    %v1560 = vpack.c.b16 %v1516, %v1512
    %v1561 = vpack.c.b16 %v1517, %v1513
    %v1562 = vpack.c.b16 %v1518, %v1514
    %v1563 = vpack.c.b16 %v1523, %v1519
    %v1564 = vpack.c.b16 %v1524, %v1520
    %v1565 = vpack.c.b16 %v1525, %v1521
    %v1566 = vpack.c.b16 %v1526, %v1522
    %v1567 = vpack.c.b16 %v1531, %v1527
    %v1568 = vpack.c.b16 %v1532, %v1528
    %v1569 = vpack.c.b16 %v1533, %v1529
    %v1570 = vpack.c.b16 %v1534, %v1530
    %v1571 = vpack.c.b16 %v1539, %v1535
    %v1572 = vpack.c.b16 %v1540, %v1536
    %v1573 = vpack.c.b16 %v1541, %v1537
    %v1574 = vpack.c.b16 %v1542, %v1538
    %1607 = vmatprep.subr.bf16.mxu0 %v1572
    %1608 = vmatpush1.bf16.msra.mxu0 %v1571
    %1609 = vmatprep.subr.bf16.mxu0 %v1568
    %1610 = vmatpush1.bf16.msra.mxu0 %v1567
    %1611 = vmatprep.subr.bf16.mxu0 %v1564
    %1612 = vmatpush1.bf16.msra.mxu0 %v1563
    %1613 = vmatprep.subr.bf16.mxu0 %v1560
    %1614 = vmatpush1.bf16.msra.mxu0 %v1559
    %1615 = vmatprep.subr.bf16.mxu0 %v1556
    %1616 = vmatpush1.bf16.msra.mxu0 %v1555
    %1617 = vmatprep.subr.bf16.mxu0 %v1552
    %1618 = vmatpush1.bf16.msra.mxu0 %v1551
    %1619 = vmatprep.subr.bf16.mxu0 %v1548
    %1620 = vmatpush1.bf16.msra.mxu0 %v1547
    %1621 = vmatprep.subr.bf16.mxu0 %v1544
    %1622 = vmatpush1.bf16.msra.mxu0 %v1543
    %1623 = vmatprep.subr.bf16.mxu0 0
    %1624 = vmatpush2.bf16.msra.mxu0 0
    %1625 = vmatprep.subr.bf16.mxu0 0
    %1626 = vmatpush2.bf16.msra.mxu0 0
    %1627 = vmatprep.subr.bf16.mxu0 0
    %1628 = vmatpush2.bf16.msra.mxu0 0
    %1629 = vmatprep.subr.bf16.mxu0 0
    %1630 = vmatpush2.bf16.msra.mxu0 0
    %1631 = vmatprep.subr.bf16.mxu0 0
    %1632 = vmatpush2.bf16.msra.mxu0 0
    %1633 = vmatprep.subr.bf16.mxu0 0
    %1634 = vmatpush2.bf16.msra.mxu0 0
    %1635 = vmatprep.subr.bf16.mxu0 0
    %1636 = vmatpush2.bf16.msra.mxu0 0
    %1637 = vmatprep.subr.bf16.mxu0 0
    %1638 = vmatpush2.bf16.msra.mxu0 0
    %1639 = vmatprep.mubr.bf16.mxu0 0
    %1640 = vmatmul.mubr.bf16.gmra.mxu0 %v1411
    %v1641 = vpop.f32.mrf.mxu0
    %v1642 = vadd.f32 0.0, %v1641
    %v1643 = vpop.f32.mrf.mxu0
    %v1644 = vadd.f32 0.0, %v1643
    %v1645 = vpop.f32.mrf.mxu0
    %v1646 = vadd.f32 0.0, %v1645
    %v1647 = vpop.f32.mrf.mxu0
    %v1648 = vadd.f32 0.0, %v1647
    %1649 = vmatprep.mubr.bf16.mxu0 0
    %1650 = vmatmul.mubr.bf16.gmra.mxu0 %v1412
    %v1651 = vpop.f32.mrf.mxu0
    %v1652 = vadd.f32 0.0, %v1651
    %v1653 = vpop.f32.mrf.mxu0
    %v1654 = vadd.f32 0.0, %v1653
    %v1655 = vpop.f32.mrf.mxu0
    %v1656 = vadd.f32 0.0, %v1655
    %v1657 = vpop.f32.mrf.mxu0
    %v1658 = vadd.f32 0.0, %v1657
    %1659 = vmatprep.mubr.bf16.mxu0 0
    %1660 = vmatmul.mubr.bf16.gmra.mxu0 %v1413
    %v1661 = vpop.f32.mrf.mxu0
    %v1662 = vadd.f32 0.0, %v1661
    %v1663 = vpop.f32.mrf.mxu0
    %v1664 = vadd.f32 0.0, %v1663
    %v1665 = vpop.f32.mrf.mxu0
    %v1666 = vadd.f32 0.0, %v1665
    %v1667 = vpop.f32.mrf.mxu0
    %v1668 = vadd.f32 0.0, %v1667
    %1669 = vdwg.mxu0
    %1670 = vmatprep.subr.bf16.mxu0 %v1574
    %1671 = vmatpush1.bf16.msra.mxu0 %v1573
    %1672 = vmatprep.subr.bf16.mxu0 %v1570
    %1673 = vmatpush1.bf16.msra.mxu0 %v1569
    %1674 = vmatprep.subr.bf16.mxu0 %v1566
    %1675 = vmatpush1.bf16.msra.mxu0 %v1565
    %1676 = vmatprep.subr.bf16.mxu0 %v1562
    %1677 = vmatpush1.bf16.msra.mxu0 %v1561
    %1678 = vmatprep.subr.bf16.mxu0 %v1558
    %1679 = vmatpush1.bf16.msra.mxu0 %v1557
    %1680 = vmatprep.subr.bf16.mxu0 %v1554
    %1681 = vmatpush1.bf16.msra.mxu0 %v1553
    %1682 = vmatprep.subr.bf16.mxu0 %v1550
    %1683 = vmatpush1.bf16.msra.mxu0 %v1549
    %1684 = vmatprep.subr.bf16.mxu0 %v1546
    %1685 = vmatpush1.bf16.msra.mxu0 %v1545
    %1686 = vmatprep.subr.bf16.mxu0 0
    %1687 = vmatpush2.bf16.msra.mxu0 0
    %1688 = vmatprep.subr.bf16.mxu0 0
    %1689 = vmatpush2.bf16.msra.mxu0 0
    %1690 = vmatprep.subr.bf16.mxu0 0
    %1691 = vmatpush2.bf16.msra.mxu0 0
    %1692 = vmatprep.subr.bf16.mxu0 0
    %1693 = vmatpush2.bf16.msra.mxu0 0
    %1694 = vmatprep.subr.bf16.mxu0 0
    %1695 = vmatpush2.bf16.msra.mxu0 0
    %1696 = vmatprep.subr.bf16.mxu0 0
    %1697 = vmatpush2.bf16.msra.mxu0 0
    %1698 = vmatprep.subr.bf16.mxu0 0
    %1699 = vmatpush2.bf16.msra.mxu0 0
    %1700 = vmatprep.subr.bf16.mxu0 0
    %1701 = vmatpush2.bf16.msra.mxu0 0
    %1702 = vmatprep.mubr.bf16.mxu0 0
    %1703 = vmatmul.mubr.bf16.gmra.mxu0 %v1411
    %v1704 = vpop.f32.mrf.mxu0
    %v1705 = vadd.f32 0.0, %v1704
    %v1706 = vpop.f32.mrf.mxu0
    %v1707 = vadd.f32 0.0, %v1706
    %v1708 = vpop.f32.mrf.mxu0
    %v1709 = vadd.f32 0.0, %v1708
    %v1710 = vpop.f32.mrf.mxu0
    %v1711 = vadd.f32 0.0, %v1710
    %1712 = vmatprep.mubr.bf16.mxu0 0
    %1713 = vmatmul.mubr.bf16.gmra.mxu0 %v1412
    %v1714 = vpop.f32.mrf.mxu0
    %v1715 = vadd.f32 0.0, %v1714
    %v1716 = vpop.f32.mrf.mxu0
    %v1717 = vadd.f32 0.0, %v1716
    %v1718 = vpop.f32.mrf.mxu0
    %v1719 = vadd.f32 0.0, %v1718
    %v1720 = vpop.f32.mrf.mxu0
    %v1721 = vadd.f32 0.0, %v1720
    %1722 = vmatprep.mubr.bf16.mxu0 0
    %1723 = vmatmul.mubr.bf16.gmra.mxu0 %v1413
    %v1724 = vpop.f32.mrf.mxu0
    %v1725 = vadd.f32 0.0, %v1724
    %v1726 = vpop.f32.mrf.mxu0
    %v1727 = vadd.f32 0.0, %v1726
    %v1728 = vpop.f32.mrf.mxu0
    %v1729 = vadd.f32 0.0, %v1728
    %v1730 = vpop.f32.mrf.mxu0
    %v1731 = vadd.f32 0.0, %v1730
    %1732 = vdwg.mxu0
    %v1765 = vunpack.c.l.b16 %v1373
    %v1766 = vunpack.c.h.b16 %v1373
    %v1767 = vunpack.c.l.b16 %v1374
    %v1768 = vunpack.c.h.b16 %v1374
    %v1769 = vunpack.c.l.b16 %v1375
    %v1770 = vunpack.c.h.b16 %v1375
    %v1771 = vunpack.c.l.b16 %v1376
    %v1772 = vunpack.c.h.b16 %v1376
    %v1773 = vunpack.c.l.b16 %v1377
    %v1774 = vunpack.c.h.b16 %v1377
    %v1775 = vunpack.c.l.b16 %v1378
    %v1776 = vunpack.c.h.b16 %v1378
    %v1777 = vunpack.c.l.b16 %v1379
    %v1778 = vunpack.c.h.b16 %v1379
    %v1779 = vunpack.c.l.b16 %v1380
    %v1780 = vunpack.c.h.b16 %v1380
    %v1781 = vunpack.c.l.b16 %v1381
    %v1782 = vunpack.c.h.b16 %v1381
    %v1783 = vunpack.c.l.b16 %v1382
    %v1784 = vunpack.c.h.b16 %v1382
    %v1785 = vunpack.c.l.b16 %v1383
    %v1786 = vunpack.c.h.b16 %v1383
    %v1787 = vunpack.c.l.b16 %v1384
    %v1788 = vunpack.c.h.b16 %v1384
    %v1789 = vunpack.c.l.b16 %v1385
    %v1790 = vunpack.c.h.b16 %v1385
    %v1791 = vunpack.c.l.b16 %v1386
    %v1792 = vunpack.c.h.b16 %v1386
    %v1793 = vunpack.c.l.b16 %v1387
    %v1794 = vunpack.c.h.b16 %v1387
    %v1795 = vunpack.c.l.b16 %v1388
    %v1796 = vunpack.c.h.b16 %v1388
    %v1797 = vunpack.c.l.b16 %v1389
    %v1798 = vunpack.c.h.b16 %v1389
    %v1799 = vunpack.c.l.b16 %v1390
    %v1800 = vunpack.c.h.b16 %v1390
    %v1801 = vunpack.c.l.b16 %v1391
    %v1802 = vunpack.c.h.b16 %v1391
    %v1803 = vunpack.c.l.b16 %v1392
    %v1804 = vunpack.c.h.b16 %v1392
    %v1805 = vunpack.c.l.b16 %v1393
    %v1806 = vunpack.c.h.b16 %v1393
    %v1807 = vunpack.c.l.b16 %v1394
    %v1808 = vunpack.c.h.b16 %v1394
    %v1809 = vunpack.c.l.b16 %v1395
    %v1810 = vunpack.c.h.b16 %v1395
    %v1811 = vunpack.c.l.b16 %v1396
    %v1812 = vunpack.c.h.b16 %v1396
    %v1813 = vunpack.c.l.b16 %v1397
    %v1814 = vunpack.c.h.b16 %v1397
    %v1815 = vunpack.c.l.b16 %v1398
    %v1816 = vunpack.c.h.b16 %v1398
    %v1817 = vunpack.c.l.b16 %v1399
    %v1818 = vunpack.c.h.b16 %v1399
    %v1819 = vunpack.c.l.b16 %v1400
    %v1820 = vunpack.c.h.b16 %v1400
    %v1821 = vunpack.c.l.b16 %v1401
    %v1822 = vunpack.c.h.b16 %v1401
    %v1823 = vunpack.c.l.b16 %v1402
    %v1824 = vunpack.c.h.b16 %v1402
    %v1825 = vunpack.c.l.b16 %v1403
    %v1826 = vunpack.c.h.b16 %v1403
    %v1827 = vunpack.c.l.b16 %v1404
    %v1828 = vunpack.c.h.b16 %v1404
    %v1829 = vpack.c.b16 %v1769, %v1765
    %v1830 = vpack.c.b16 %v1770, %v1766
    %v1831 = vpack.c.b16 %v1771, %v1767
    %v1832 = vpack.c.b16 %v1772, %v1768
    %v1833 = vpack.c.b16 %v1777, %v1773
    %v1834 = vpack.c.b16 %v1778, %v1774
    %v1835 = vpack.c.b16 %v1779, %v1775
    %v1836 = vpack.c.b16 %v1780, %v1776
    %v1837 = vpack.c.b16 %v1785, %v1781
    %v1838 = vpack.c.b16 %v1786, %v1782
    %v1839 = vpack.c.b16 %v1787, %v1783
    %v1840 = vpack.c.b16 %v1788, %v1784
    %v1841 = vpack.c.b16 %v1793, %v1789
    %v1842 = vpack.c.b16 %v1794, %v1790
    %v1843 = vpack.c.b16 %v1795, %v1791
    %v1844 = vpack.c.b16 %v1796, %v1792
    %v1845 = vpack.c.b16 %v1801, %v1797
    %v1846 = vpack.c.b16 %v1802, %v1798
    %v1847 = vpack.c.b16 %v1803, %v1799
    %v1848 = vpack.c.b16 %v1804, %v1800
    %v1849 = vpack.c.b16 %v1809, %v1805
    %v1850 = vpack.c.b16 %v1810, %v1806
    %v1851 = vpack.c.b16 %v1811, %v1807
    %v1852 = vpack.c.b16 %v1812, %v1808
    %v1853 = vpack.c.b16 %v1817, %v1813
    %v1854 = vpack.c.b16 %v1818, %v1814
    %v1855 = vpack.c.b16 %v1819, %v1815
    %v1856 = vpack.c.b16 %v1820, %v1816
    %v1857 = vpack.c.b16 %v1825, %v1821
    %v1858 = vpack.c.b16 %v1826, %v1822
    %v1859 = vpack.c.b16 %v1827, %v1823
    %v1860 = vpack.c.b16 %v1828, %v1824
    %1893 = vmatprep.subr.bf16.mxu0 %v1858
    %1894 = vmatpush1.bf16.msra.mxu0 %v1857
    %1895 = vmatprep.subr.bf16.mxu0 %v1854
    %1896 = vmatpush1.bf16.msra.mxu0 %v1853
    %1897 = vmatprep.subr.bf16.mxu0 %v1850
    %1898 = vmatpush1.bf16.msra.mxu0 %v1849
    %1899 = vmatprep.subr.bf16.mxu0 %v1846
    %1900 = vmatpush1.bf16.msra.mxu0 %v1845
    %1901 = vmatprep.subr.bf16.mxu0 %v1842
    %1902 = vmatpush1.bf16.msra.mxu0 %v1841
    %1903 = vmatprep.subr.bf16.mxu0 %v1838
    %1904 = vmatpush1.bf16.msra.mxu0 %v1837
    %1905 = vmatprep.subr.bf16.mxu0 %v1834
    %1906 = vmatpush1.bf16.msra.mxu0 %v1833
    %1907 = vmatprep.subr.bf16.mxu0 %v1830
    %1908 = vmatpush1.bf16.msra.mxu0 %v1829
    %1909 = vmatprep.subr.bf16.mxu0 0
    %1910 = vmatpush2.bf16.msra.mxu0 0
    %1911 = vmatprep.subr.bf16.mxu0 0
    %1912 = vmatpush2.bf16.msra.mxu0 0
    %1913 = vmatprep.subr.bf16.mxu0 0
    %1914 = vmatpush2.bf16.msra.mxu0 0
    %1915 = vmatprep.subr.bf16.mxu0 0
    %1916 = vmatpush2.bf16.msra.mxu0 0
    %1917 = vmatprep.subr.bf16.mxu0 0
    %1918 = vmatpush2.bf16.msra.mxu0 0
    %1919 = vmatprep.subr.bf16.mxu0 0
    %1920 = vmatpush2.bf16.msra.mxu0 0
    %1921 = vmatprep.subr.bf16.mxu0 0
    %1922 = vmatpush2.bf16.msra.mxu0 0
    %1923 = vmatprep.subr.bf16.mxu0 0
    %1924 = vmatpush2.bf16.msra.mxu0 0
    %1925 = vmatprep.mubr.bf16.mxu0 0
    %1926 = vmatmul.mubr.bf16.gmra.mxu0 %v1370
    %v1927 = vpop.f32.mrf.mxu0
    %v1928 = vadd.f32 %v1642, %v1927
    %v1929 = vpop.f32.mrf.mxu0
    %v1930 = vadd.f32 %v1644, %v1929
    %v1931 = vpop.f32.mrf.mxu0
    %v1932 = vadd.f32 %v1646, %v1931
    %v1933 = vpop.f32.mrf.mxu0
    %v1934 = vadd.f32 %v1648, %v1933
    %1935 = vmatprep.mubr.bf16.mxu0 0
    %1936 = vmatmul.mubr.bf16.gmra.mxu0 %v1371
    %v1937 = vpop.f32.mrf.mxu0
    %v1938 = vadd.f32 %v1652, %v1937
    %v1939 = vpop.f32.mrf.mxu0
    %v1940 = vadd.f32 %v1654, %v1939
    %v1941 = vpop.f32.mrf.mxu0
    %v1942 = vadd.f32 %v1656, %v1941
    %v1943 = vpop.f32.mrf.mxu0
    %v1944 = vadd.f32 %v1658, %v1943
    %1945 = vmatprep.mubr.bf16.mxu0 0
    %1946 = vmatmul.mubr.bf16.gmra.mxu0 %v1372
    %v1947 = vpop.f32.mrf.mxu0
    %v1948 = vadd.f32 %v1662, %v1947
    %v1949 = vpop.f32.mrf.mxu0
    %v1950 = vadd.f32 %v1664, %v1949
    %v1951 = vpop.f32.mrf.mxu0
    %v1952 = vadd.f32 %v1666, %v1951
    %v1953 = vpop.f32.mrf.mxu0
    %v1954 = vadd.f32 %v1668, %v1953
    %1955 = vdwg.mxu0
    %1956 = vmatprep.subr.bf16.mxu0 %v1860
    %1957 = vmatpush1.bf16.msra.mxu0 %v1859
    %1958 = vmatprep.subr.bf16.mxu0 %v1856
    %1959 = vmatpush1.bf16.msra.mxu0 %v1855
    %1960 = vmatprep.subr.bf16.mxu0 %v1852
    %1961 = vmatpush1.bf16.msra.mxu0 %v1851
    %1962 = vmatprep.subr.bf16.mxu0 %v1848
    %1963 = vmatpush1.bf16.msra.mxu0 %v1847
    %1964 = vmatprep.subr.bf16.mxu0 %v1844
    %1965 = vmatpush1.bf16.msra.mxu0 %v1843
    %1966 = vmatprep.subr.bf16.mxu0 %v1840
    %1967 = vmatpush1.bf16.msra.mxu0 %v1839
    %1968 = vmatprep.subr.bf16.mxu0 %v1836
    %1969 = vmatpush1.bf16.msra.mxu0 %v1835
    %1970 = vmatprep.subr.bf16.mxu0 %v1832
    %1971 = vmatpush1.bf16.msra.mxu0 %v1831
    %1972 = vmatprep.subr.bf16.mxu0 0
    %1973 = vmatpush2.bf16.msra.mxu0 0
    %1974 = vmatprep.subr.bf16.mxu0 0
    %1975 = vmatpush2.bf16.msra.mxu0 0
    %1976 = vmatprep.subr.bf16.mxu0 0
    %1977 = vmatpush2.bf16.msra.mxu0 0
    %1978 = vmatprep.subr.bf16.mxu0 0
    %1979 = vmatpush2.bf16.msra.mxu0 0
    %1980 = vmatprep.subr.bf16.mxu0 0
    %1981 = vmatpush2.bf16.msra.mxu0 0
    %1982 = vmatprep.subr.bf16.mxu0 0
    %1983 = vmatpush2.bf16.msra.mxu0 0
    %1984 = vmatprep.subr.bf16.mxu0 0
    %1985 = vmatpush2.bf16.msra.mxu0 0
    %1986 = vmatprep.subr.bf16.mxu0 0
    %1987 = vmatpush2.bf16.msra.mxu0 0
    %1988 = vmatprep.mubr.bf16.mxu0 0
    %1989 = vmatmul.mubr.bf16.gmra.mxu0 %v1370
    %v1990 = vpop.f32.mrf.mxu0
    %v1991 = vadd.f32 %v1705, %v1990
    %v1992 = vpop.f32.mrf.mxu0
    %v1993 = vadd.f32 %v1707, %v1992
    %v1994 = vpop.f32.mrf.mxu0
    %v1995 = vadd.f32 %v1709, %v1994
    %v1996 = vpop.f32.mrf.mxu0
    %v1997 = vadd.f32 %v1711, %v1996
    %1998 = vmatprep.mubr.bf16.mxu0 0
    %1999 = vmatmul.mubr.bf16.gmra.mxu0 %v1371
    %v2000 = vpop.f32.mrf.mxu0
    %v2001 = vadd.f32 %v1715, %v2000
    %v2002 = vpop.f32.mrf.mxu0
    %v2003 = vadd.f32 %v1717, %v2002
    %v2004 = vpop.f32.mrf.mxu0
    %v2005 = vadd.f32 %v1719, %v2004
    %v2006 = vpop.f32.mrf.mxu0
    %v2007 = vadd.f32 %v1721, %v2006
    %2008 = vmatprep.mubr.bf16.mxu0 0
    %2009 = vmatmul.mubr.bf16.gmra.mxu0 %v1372
    %v2010 = vpop.f32.mrf.mxu0
    %v2011 = vadd.f32 %v1725, %v2010
    %v2012 = vpop.f32.mrf.mxu0
    %v2013 = vadd.f32 %v1727, %v2012
    %v2014 = vpop.f32.mrf.mxu0
    %v2015 = vadd.f32 %v1729, %v2014
    %v2016 = vpop.f32.mrf.mxu0
    %v2017 = vadd.f32 %v1731, %v2016
    %2018 = vdwg.mxu0
    %v2019 = vld [vmem:[#allocation3 + $0x2] sm:$0xff]
    %v2020 = vld [vmem:[#allocation3 + $0xa] sm:$0xff]
    %v2021 = vld [vmem:[#allocation3 + $0x12] sm:$0xff]
    %v2022 = vld [vmem:[#allocation3 + $0x1a] sm:$0xff]
    %v2023 = vld [vmem:[#allocation3 + $0x22] sm:$0xff]
    %v2024 = vld [vmem:[#allocation3 + $0x2a] sm:$0xf]
    %v2025 = vpack.c.bf16 %v2020, %v2019
    %v2026 = vpack.c.bf16 %v2022, %v2021
    %v2027 = vpack.c.bf16 %v2024, %v2023
    %s2028 = scalar_lea.vmem [#allocation14], 512
    %v2029 = vld [vmem:[%s2028] sm:$0xff]
    %v2030 = vld [vmem:[%s2028 + $0x8] sm:$0xff]
    %v2031 = vld [vmem:[%s2028 + $0x10] sm:$0xff]
    %v2032 = vld [vmem:[%s2028 + $0x18] sm:$0xff]
    %v2033 = vld [vmem:[%s2028 + $0x20] sm:$0xff]
    %v2034 = vld [vmem:[%s2028 + $0x28] sm:$0xff]
    %v2035 = vld [vmem:[%s2028 + $0x30] sm:$0xff]
    %v2036 = vld [vmem:[%s2028 + $0x38] sm:$0xff]
    %v2037 = vld [vmem:[%s2028 + $0x40] sm:$0xff]
    %v2038 = vld [vmem:[%s2028 + $0x48] sm:$0xff]
    %v2039 = vld [vmem:[%s2028 + $0x50] sm:$0xff]
    %v2040 = vld [vmem:[%s2028 + $0x58] sm:$0xff]
    %v2041 = vld [vmem:[%s2028 + $0x60] sm:$0xff]
    %v2042 = vld [vmem:[%s2028 + $0x68] sm:$0xff]
    %v2043 = vld [vmem:[%s2028 + $0x70] sm:$0xff]
    %v2044 = vld [vmem:[%s2028 + $0x78] sm:$0xff]
    %v2045 = vld [vmem:[%s2028 + $0x80] sm:$0xff]
    %v2046 = vld [vmem:[%s2028 + $0x88] sm:$0xff]
    %v2047 = vld [vmem:[%s2028 + $0x90] sm:$0xff]
    %v2048 = vld [vmem:[%s2028 + $0x98] sm:$0xff]
    %v2049 = vld [vmem:[%s2028 + $0xa0] sm:$0xff]
    %v2050 = vld [vmem:[%s2028 + $0xa8] sm:$0xff]
    %v2051 = vld [vmem:[%s2028 + $0xb0] sm:$0xff]
    %v2052 = vld [vmem:[%s2028 + $0xb8] sm:$0xff]
    %v2053 = vld [vmem:[%s2028 + $0xc0] sm:$0xff]
    %v2054 = vld [vmem:[%s2028 + $0xc8] sm:$0xff]
    %v2055 = vld [vmem:[%s2028 + $0xd0] sm:$0xff]
    %v2056 = vld [vmem:[%s2028 + $0xd8] sm:$0xff]
    %v2057 = vld [vmem:[%s2028 + $0xe0] sm:$0xff]
    %v2058 = vld [vmem:[%s2028 + $0xe8] sm:$0xff]
    %v2059 = vld [vmem:[%s2028 + $0xf0] sm:$0xff]
    %v2060 = vld [vmem:[%s2028 + $0xf8] sm:$0xff]
    %v2093 = vunpack.c.l.b16 %v2029
    %v2094 = vunpack.c.h.b16 %v2029
    %v2095 = vunpack.c.l.b16 %v2030
    %v2096 = vunpack.c.h.b16 %v2030
    %v2097 = vunpack.c.l.b16 %v2031
    %v2098 = vunpack.c.h.b16 %v2031
    %v2099 = vunpack.c.l.b16 %v2032
    %v2100 = vunpack.c.h.b16 %v2032
    %v2101 = vunpack.c.l.b16 %v2033
    %v2102 = vunpack.c.h.b16 %v2033
    %v2103 = vunpack.c.l.b16 %v2034
    %v2104 = vunpack.c.h.b16 %v2034
    %v2105 = vunpack.c.l.b16 %v2035
    %v2106 = vunpack.c.h.b16 %v2035
    %v2107 = vunpack.c.l.b16 %v2036
    %v2108 = vunpack.c.h.b16 %v2036
    %v2109 = vunpack.c.l.b16 %v2037
    %v2110 = vunpack.c.h.b16 %v2037
    %v2111 = vunpack.c.l.b16 %v2038
    %v2112 = vunpack.c.h.b16 %v2038
    %v2113 = vunpack.c.l.b16 %v2039
    %v2114 = vunpack.c.h.b16 %v2039
    %v2115 = vunpack.c.l.b16 %v2040
    %v2116 = vunpack.c.h.b16 %v2040
    %v2117 = vunpack.c.l.b16 %v2041
    %v2118 = vunpack.c.h.b16 %v2041
    %v2119 = vunpack.c.l.b16 %v2042
    %v2120 = vunpack.c.h.b16 %v2042
    %v2121 = vunpack.c.l.b16 %v2043
    %v2122 = vunpack.c.h.b16 %v2043
    %v2123 = vunpack.c.l.b16 %v2044
    %v2124 = vunpack.c.h.b16 %v2044
    %v2125 = vunpack.c.l.b16 %v2045
    %v2126 = vunpack.c.h.b16 %v2045
    %v2127 = vunpack.c.l.b16 %v2046
    %v2128 = vunpack.c.h.b16 %v2046
    %v2129 = vunpack.c.l.b16 %v2047
    %v2130 = vunpack.c.h.b16 %v2047
    %v2131 = vunpack.c.l.b16 %v2048
    %v2132 = vunpack.c.h.b16 %v2048
    %v2133 = vunpack.c.l.b16 %v2049
    %v2134 = vunpack.c.h.b16 %v2049
    %v2135 = vunpack.c.l.b16 %v2050
    %v2136 = vunpack.c.h.b16 %v2050
    %v2137 = vunpack.c.l.b16 %v2051
    %v2138 = vunpack.c.h.b16 %v2051
    %v2139 = vunpack.c.l.b16 %v2052
    %v2140 = vunpack.c.h.b16 %v2052
    %v2141 = vunpack.c.l.b16 %v2053
    %v2142 = vunpack.c.h.b16 %v2053
    %v2143 = vunpack.c.l.b16 %v2054
    %v2144 = vunpack.c.h.b16 %v2054
    %v2145 = vunpack.c.l.b16 %v2055
    %v2146 = vunpack.c.h.b16 %v2055
    %v2147 = vunpack.c.l.b16 %v2056
    %v2148 = vunpack.c.h.b16 %v2056
    %v2149 = vunpack.c.l.b16 %v2057
    %v2150 = vunpack.c.h.b16 %v2057
    %v2151 = vunpack.c.l.b16 %v2058
    %v2152 = vunpack.c.h.b16 %v2058
    %v2153 = vunpack.c.l.b16 %v2059
    %v2154 = vunpack.c.h.b16 %v2059
    %v2155 = vunpack.c.l.b16 %v2060
    %v2156 = vunpack.c.h.b16 %v2060
    %v2157 = vpack.c.b16 %v2097, %v2093
    %v2158 = vpack.c.b16 %v2098, %v2094
    %v2159 = vpack.c.b16 %v2099, %v2095
    %v2160 = vpack.c.b16 %v2100, %v2096
    %v2161 = vpack.c.b16 %v2105, %v2101
    %v2162 = vpack.c.b16 %v2106, %v2102
    %v2163 = vpack.c.b16 %v2107, %v2103
    %v2164 = vpack.c.b16 %v2108, %v2104
    %v2165 = vpack.c.b16 %v2113, %v2109
    %v2166 = vpack.c.b16 %v2114, %v2110
    %v2167 = vpack.c.b16 %v2115, %v2111
    %v2168 = vpack.c.b16 %v2116, %v2112
    %v2169 = vpack.c.b16 %v2121, %v2117
    %v2170 = vpack.c.b16 %v2122, %v2118
    %v2171 = vpack.c.b16 %v2123, %v2119
    %v2172 = vpack.c.b16 %v2124, %v2120
    %v2173 = vpack.c.b16 %v2129, %v2125
    %v2174 = vpack.c.b16 %v2130, %v2126
    %v2175 = vpack.c.b16 %v2131, %v2127
    %v2176 = vpack.c.b16 %v2132, %v2128
    %v2177 = vpack.c.b16 %v2137, %v2133
    %v2178 = vpack.c.b16 %v2138, %v2134
    %v2179 = vpack.c.b16 %v2139, %v2135
    %v2180 = vpack.c.b16 %v2140, %v2136
    %v2181 = vpack.c.b16 %v2145, %v2141
    %v2182 = vpack.c.b16 %v2146, %v2142
    %v2183 = vpack.c.b16 %v2147, %v2143
    %v2184 = vpack.c.b16 %v2148, %v2144
    %v2185 = vpack.c.b16 %v2153, %v2149
    %v2186 = vpack.c.b16 %v2154, %v2150
    %v2187 = vpack.c.b16 %v2155, %v2151
    %v2188 = vpack.c.b16 %v2156, %v2152
    %2221 = vmatprep.subr.bf16.mxu0 %v2186
    %2222 = vmatpush1.bf16.msra.mxu0 %v2185
    %2223 = vmatprep.subr.bf16.mxu0 %v2182
    %2224 = vmatpush1.bf16.msra.mxu0 %v2181
    %2225 = vmatprep.subr.bf16.mxu0 %v2178
    %2226 = vmatpush1.bf16.msra.mxu0 %v2177
    %2227 = vmatprep.subr.bf16.mxu0 %v2174
    %2228 = vmatpush1.bf16.msra.mxu0 %v2173
    %2229 = vmatprep.subr.bf16.mxu0 %v2170
    %2230 = vmatpush1.bf16.msra.mxu0 %v2169
    %2231 = vmatprep.subr.bf16.mxu0 %v2166
    %2232 = vmatpush1.bf16.msra.mxu0 %v2165
    %2233 = vmatprep.subr.bf16.mxu0 %v2162
    %2234 = vmatpush1.bf16.msra.mxu0 %v2161
    %2235 = vmatprep.subr.bf16.mxu0 %v2158
    %2236 = vmatpush1.bf16.msra.mxu0 %v2157
    %2237 = vmatprep.subr.bf16.mxu0 0
    %2238 = vmatpush2.bf16.msra.mxu0 0
    %2239 = vmatprep.subr.bf16.mxu0 0
    %2240 = vmatpush2.bf16.msra.mxu0 0
    %2241 = vmatprep.subr.bf16.mxu0 0
    %2242 = vmatpush2.bf16.msra.mxu0 0
    %2243 = vmatprep.subr.bf16.mxu0 0
    %2244 = vmatpush2.bf16.msra.mxu0 0
    %2245 = vmatprep.subr.bf16.mxu0 0
    %2246 = vmatpush2.bf16.msra.mxu0 0
    %2247 = vmatprep.subr.bf16.mxu0 0
    %2248 = vmatpush2.bf16.msra.mxu0 0
    %2249 = vmatprep.subr.bf16.mxu0 0
    %2250 = vmatpush2.bf16.msra.mxu0 0
    %2251 = vmatprep.subr.bf16.mxu0 0
    %2252 = vmatpush2.bf16.msra.mxu0 0
    %2253 = vmatprep.mubr.bf16.mxu0 0
    %2254 = vmatmul.mubr.bf16.gmra.mxu0 %v2025
    %v2255 = vpop.f32.mrf.mxu0
    %v2256 = vadd.f32 0.0, %v2255
    %v2257 = vpop.f32.mrf.mxu0
    %v2258 = vadd.f32 0.0, %v2257
    %v2259 = vpop.f32.mrf.mxu0
    %v2260 = vadd.f32 0.0, %v2259
    %v2261 = vpop.f32.mrf.mxu0
    %v2262 = vadd.f32 0.0, %v2261
    %2263 = vmatprep.mubr.bf16.mxu0 0
    %2264 = vmatmul.mubr.bf16.gmra.mxu0 %v2026
    %v2265 = vpop.f32.mrf.mxu0
    %v2266 = vadd.f32 0.0, %v2265
    %v2267 = vpop.f32.mrf.mxu0
    %v2268 = vadd.f32 0.0, %v2267
    %v2269 = vpop.f32.mrf.mxu0
    %v2270 = vadd.f32 0.0, %v2269
    %v2271 = vpop.f32.mrf.mxu0
    %v2272 = vadd.f32 0.0, %v2271
    %2273 = vmatprep.mubr.bf16.mxu0 0
    %2274 = vmatmul.mubr.bf16.gmra.mxu0 %v2027
    %v2275 = vpop.f32.mrf.mxu0
    %v2276 = vadd.f32 0.0, %v2275
    %v2277 = vpop.f32.mrf.mxu0
    %v2278 = vadd.f32 0.0, %v2277
    %v2279 = vpop.f32.mrf.mxu0
    %v2280 = vadd.f32 0.0, %v2279
    %v2281 = vpop.f32.mrf.mxu0
    %v2282 = vadd.f32 0.0, %v2281
    %2283 = vdwg.mxu0
    %2284 = vmatprep.subr.bf16.mxu0 %v2188
    %2285 = vmatpush1.bf16.msra.mxu0 %v2187
    %2286 = vmatprep.subr.bf16.mxu0 %v2184
    %2287 = vmatpush1.bf16.msra.mxu0 %v2183
    %2288 = vmatprep.subr.bf16.mxu0 %v2180
    %2289 = vmatpush1.bf16.msra.mxu0 %v2179
    %2290 = vmatprep.subr.bf16.mxu0 %v2176
    %2291 = vmatpush1.bf16.msra.mxu0 %v2175
    %2292 = vmatprep.subr.bf16.mxu0 %v2172
    %2293 = vmatpush1.bf16.msra.mxu0 %v2171
    %2294 = vmatprep.subr.bf16.mxu0 %v2168
    %2295 = vmatpush1.bf16.msra.mxu0 %v2167
    %2296 = vmatprep.subr.bf16.mxu0 %v2164
    %2297 = vmatpush1.bf16.msra.mxu0 %v2163
    %2298 = vmatprep.subr.bf16.mxu0 %v2160
    %2299 = vmatpush1.bf16.msra.mxu0 %v2159
    %2300 = vmatprep.subr.bf16.mxu0 0
    %2301 = vmatpush2.bf16.msra.mxu0 0
    %2302 = vmatprep.subr.bf16.mxu0 0
    %2303 = vmatpush2.bf16.msra.mxu0 0
    %2304 = vmatprep.subr.bf16.mxu0 0
    %2305 = vmatpush2.bf16.msra.mxu0 0
    %2306 = vmatprep.subr.bf16.mxu0 0
    %2307 = vmatpush2.bf16.msra.mxu0 0
    %2308 = vmatprep.subr.bf16.mxu0 0
    %2309 = vmatpush2.bf16.msra.mxu0 0
    %2310 = vmatprep.subr.bf16.mxu0 0
    %2311 = vmatpush2.bf16.msra.mxu0 0
    %2312 = vmatprep.subr.bf16.mxu0 0
    %2313 = vmatpush2.bf16.msra.mxu0 0
    %2314 = vmatprep.subr.bf16.mxu0 0
    %2315 = vmatpush2.bf16.msra.mxu0 0
    %2316 = vmatprep.mubr.bf16.mxu0 0
    %2317 = vmatmul.mubr.bf16.gmra.mxu0 %v2025
    %v2318 = vpop.f32.mrf.mxu0
    %v2319 = vadd.f32 0.0, %v2318
    %v2320 = vpop.f32.mrf.mxu0
    %v2321 = vadd.f32 0.0, %v2320
    %v2322 = vpop.f32.mrf.mxu0
    %v2323 = vadd.f32 0.0, %v2322
    %v2324 = vpop.f32.mrf.mxu0
    %v2325 = vadd.f32 0.0, %v2324
    %2326 = vmatprep.mubr.bf16.mxu0 0
    %2327 = vmatmul.mubr.bf16.gmra.mxu0 %v2026
    %v2328 = vpop.f32.mrf.mxu0
    %v2329 = vadd.f32 0.0, %v2328
    %v2330 = vpop.f32.mrf.mxu0
    %v2331 = vadd.f32 0.0, %v2330
    %v2332 = vpop.f32.mrf.mxu0
    %v2333 = vadd.f32 0.0, %v2332
    %v2334 = vpop.f32.mrf.mxu0
    %v2335 = vadd.f32 0.0, %v2334
    %2336 = vmatprep.mubr.bf16.mxu0 0
    %2337 = vmatmul.mubr.bf16.gmra.mxu0 %v2027
    %v2338 = vpop.f32.mrf.mxu0
    %v2339 = vadd.f32 0.0, %v2338
    %v2340 = vpop.f32.mrf.mxu0
    %v2341 = vadd.f32 0.0, %v2340
    %v2342 = vpop.f32.mrf.mxu0
    %v2343 = vadd.f32 0.0, %v2342
    %v2344 = vpop.f32.mrf.mxu0
    %v2345 = vadd.f32 0.0, %v2344
    %2346 = vdwg.mxu0
    %v2347 = vadd.f32 %v1928, %v2256
    %v2348 = vadd.f32 %v1930, %v2258
    %v2349 = vadd.f32 %v1991, %v2319
    %v2350 = vadd.f32 %v1993, %v2321
    %v2351 = vadd.f32 %v1932, %v2260
    %v2352 = vadd.f32 %v1934, %v2262
    %v2353 = vadd.f32 %v1995, %v2323
    %v2354 = vadd.f32 %v1997, %v2325
    %v2355 = vadd.f32 %v1938, %v2266
    %v2356 = vadd.f32 %v1940, %v2268
    %v2357 = vadd.f32 %v2001, %v2329
    %v2358 = vadd.f32 %v2003, %v2331
    %v2359 = vadd.f32 %v1942, %v2270
    %v2360 = vadd.f32 %v1944, %v2272
    %v2361 = vadd.f32 %v2005, %v2333
    %v2362 = vadd.f32 %v2007, %v2335
    %v2363 = vadd.f32 %v1948, %v2276
    %v2364 = vadd.f32 %v1950, %v2278
    %v2365 = vadd.f32 %v2011, %v2339
    %v2366 = vadd.f32 %v2013, %v2341
    %v2367 = vadd.f32 %v1952, %v2280
    %v2368 = vadd.f32 %v1954, %v2282
    %v2369 = vadd.f32 %v2015, %v2343
    %v2370 = vadd.f32 %v2017, %v2345
    %v2371 = vld [vmem:[#allocation16] ss:$2 sm:$0x3]
    %v2373 = vlaneseq
    %v2374 = vshrl.u32 %v2373, 7
    %v2375 = vsub.s32 0, %v2374
    %v2376 = vrot.slane %v2371, %v2375
    %v2377 = vlaneseq
    %v2378 = vshrl.u32 %v2377, 7
    %v2379 = vsub.s32 1, %v2378
    %v2380 = vrot.slane %v2371, %v2379
    %v2383 = vadd.f32 %v2347, %v2376
    %v2384 = vadd.f32 %v2348, %v2380
    %v2385 = vadd.f32 %v2351, %v2376
    %v2386 = vadd.f32 %v2352, %v2380
    %v2387 = vadd.f32 %v2355, %v2376
    %v2388 = vadd.f32 %v2356, %v2380
    %v2389 = vadd.f32 %v2359, %v2376
    %v2390 = vadd.f32 %v2360, %v2380
    %v2391 = vadd.f32 %v2363, %v2376
    %v2392 = vadd.f32 %v2364, %v2380
    %v2393 = vadd.f32 %v2367, %v2376
    %v2394 = vadd.f32 %v2368, %v2380
    %v2395 = vmax.f32 %v2383, 0.0
    %v2396 = vmax.f32 %v2384, 0.0
    %v2397 = vmax.f32 %v2385, 0.0
    %v2398 = vmax.f32 %v2386, 0.0
    %v2399 = vmax.f32 %v2387, 0.0
    %v2400 = vmax.f32 %v2388, 0.0
    %v2401 = vmax.f32 %v2389, 0.0
    %v2402 = vmax.f32 %v2390, 0.0
    %v2403 = vmax.f32 %v2391, 0.0
    %v2404 = vmax.f32 %v2392, 0.0
    %v2405 = vmax.f32 %v2393, 0.0
    %v2406 = vmax.f32 %v2394, 0.0
    %v2407 = vld [vmem:[%s9] sm:$0xf]
    %v2408 = vld [vmem:[%s9 + $0x4] sm:$0xf]
    %v2409 = vld [vmem:[%s9 + $0x8] sm:$0xf]
    %v2410 = vld [vmem:[%s9 + $0xc] sm:$0xf]
    %v2411 = vld [vmem:[%s9 + $0x10] sm:$0xf]
    %v2412 = vld [vmem:[%s9 + $0x14] sm:$0xf]
    %v2413 = vld [vmem:[%s9 + $0x18] sm:$0xf]
    %v2414 = vld [vmem:[%s9 + $0x1c] sm:$0xf]
    %v2415 = vld [vmem:[%s9 + $0x20] sm:$0xf]
    %v2416 = vld [vmem:[%s9 + $0x24] sm:$0xf]
    %v2417 = vld [vmem:[%s9 + $0x28] sm:$0xf]
    %v2418 = vld [vmem:[%s9 + $0x2c] sm:$0x1]
    %v2419 = vpack.c.bf16 %v2397, %v2395
    %v2420 = vpack.c.bf16 %v2398, %v2396
    %v2421 = vpack.c.bf16 %v2401, %v2399
    %v2422 = vpack.c.bf16 %v2402, %v2400
    %v2423 = vpack.c.bf16 %v2405, %v2403
    %v2424 = vpack.c.bf16 %v2406, %v2404
    %s2425 = scalar_lea.vmem [#allocation16], 1
    %v2426 = vld [vmem:[%s2425] ss:$2 sm:$0x3]
    %v2428 = vlaneseq
    %v2429 = vshrl.u32 %v2428, 7
    %v2430 = vsub.s32 0, %v2429
    %v2431 = vrot.slane %v2426, %v2430
    %v2432 = vlaneseq
    %v2433 = vshrl.u32 %v2432, 7
    %v2434 = vsub.s32 1, %v2433
    %v2435 = vrot.slane %v2426, %v2434
    %v2438 = vadd.f32 %v2349, %v2431
    %v2439 = vadd.f32 %v2350, %v2435
    %v2440 = vadd.f32 %v2353, %v2431
    %v2441 = vadd.f32 %v2354, %v2435
    %v2442 = vadd.f32 %v2357, %v2431
    %v2443 = vadd.f32 %v2358, %v2435
    %v2444 = vadd.f32 %v2361, %v2431
    %v2445 = vadd.f32 %v2362, %v2435
    %v2446 = vadd.f32 %v2365, %v2431
    %v2447 = vadd.f32 %v2366, %v2435
    %v2448 = vadd.f32 %v2369, %v2431
    %v2449 = vadd.f32 %v2370, %v2435
    %v2450 = vmax.f32 %v2438, 0.0
    %v2451 = vmax.f32 %v2439, 0.0
    %v2452 = vmax.f32 %v2440, 0.0
    %v2453 = vmax.f32 %v2441, 0.0
    %v2454 = vmax.f32 %v2442, 0.0
    %v2455 = vmax.f32 %v2443, 0.0
    %v2456 = vmax.f32 %v2444, 0.0
    %v2457 = vmax.f32 %v2445, 0.0
    %v2458 = vmax.f32 %v2446, 0.0
    %v2459 = vmax.f32 %v2447, 0.0
    %v2460 = vmax.f32 %v2448, 0.0
    %v2461 = vmax.f32 %v2449, 0.0
    %s2462 = scalar_lea.vmem %s9, 48
    %v2463 = vld [vmem:[%s2462] sm:$0xf]
    %v2464 = vld [vmem:[%s2462 + $0x4] sm:$0xf]
    %v2465 = vld [vmem:[%s2462 + $0x8] sm:$0xf]
    %v2466 = vld [vmem:[%s2462 + $0xc] sm:$0xf]
    %v2467 = vld [vmem:[%s2462 + $0x10] sm:$0xf]
    %v2468 = vld [vmem:[%s2462 + $0x14] sm:$0xf]
    %v2469 = vld [vmem:[%s2462 + $0x18] sm:$0xf]
    %v2470 = vld [vmem:[%s2462 + $0x1c] sm:$0xf]
    %v2471 = vld [vmem:[%s2462 + $0x20] sm:$0xf]
    %v2472 = vld [vmem:[%s2462 + $0x24] sm:$0xf]
    %v2473 = vld [vmem:[%s2462 + $0x28] sm:$0xf]
    %v2474 = vld [vmem:[%s2462 + $0x2c] sm:$0x1]
    %v2475 = vpack.c.bf16 %v2452, %v2450
    %v2476 = vpack.c.bf16 %v2453, %v2451
    %v2477 = vpack.c.bf16 %v2456, %v2454
    %v2478 = vpack.c.bf16 %v2457, %v2455
    %v2479 = vpack.c.bf16 %v2460, %v2458
    %v2480 = vpack.c.bf16 %v2461, %v2459
    %v2493 = vunpack.c.l.b16 %v2463
    %v2494 = vunpack.c.l.b16 %v2464
    %v2495 = vunpack.c.l.b16 %v2465
    %v2496 = vunpack.c.l.b16 %v2466
    %v2497 = vunpack.c.l.b16 %v2467
    %v2498 = vunpack.c.l.b16 %v2468
    %v2499 = vunpack.c.l.b16 %v2469
    %v2500 = vunpack.c.l.b16 %v2470
    %v2501 = vunpack.c.l.b16 %v2471
    %v2502 = vunpack.c.l.b16 %v2472
    %v2503 = vunpack.c.l.b16 %v2473
    %v2504 = vunpack.c.l.b16 %v2474
    %v2505 = vpack.c.b16 %v2494, %v2493
    %v2506 = vpack.c.b16 %v2496, %v2495
    %v2507 = vpack.c.b16 %v2498, %v2497
    %v2508 = vpack.c.b16 %v2500, %v2499
    %v2509 = vpack.c.b16 %v2502, %v2501
    %v2510 = vpack.c.b16 %v2504, %v2503
    %vm2511 = vcmask 359424
    %v2513 = vsel %vm2511, %v2505, 0
    %v2516 = vsel %vm2511, %v2506, 0
    %v2519 = vsel %vm2511, %v2507, 0
    %v2522 = vsel %vm2511, %v2508, 0
    %v2525 = vsel %vm2511, %v2509, 0
    %v2528 = vsel %vm2511, %v2510, 0
    %vm2530 = vcmask 1045504
    %v2532 = vsel %vm2530, %v2479, 0
    %v2535 = vsel %vm2530, %v2480, 0
    %2537 = vmatprep.subr.bf16.mxu0 0
    %2538 = vmatpush1.bf16.msra.mxu0 0
    %2539 = vmatprep.subr.bf16.mxu0 0
    %2540 = vmatpush1.bf16.msra.mxu0 0
    %2541 = vmatprep.subr.bf16.mxu0 0
    %2542 = vmatpush1.bf16.msra.mxu0 0
    %2543 = vmatprep.subr.bf16.mxu0 0
    %2544 = vmatpush1.bf16.msra.mxu0 0
    %2545 = vmatprep.subr.bf16.mxu0 0
    %2546 = vmatpush1.bf16.msra.mxu0 0
    %2547 = vmatprep.subr.bf16.mxu0 %v2535
    %2548 = vmatpush1.bf16.msra.mxu0 %v2532
    %2549 = vmatprep.subr.bf16.mxu0 %v2478
    %2550 = vmatpush1.bf16.msra.mxu0 %v2477
    %2551 = vmatprep.subr.bf16.mxu0 %v2476
    %2552 = vmatpush1.bf16.msra.mxu0 %v2475
    %2553 = vmatprep.subr.bf16.mxu0 0
    %2554 = vmatpush2.bf16.msra.mxu0 0
    %2555 = vmatprep.subr.bf16.mxu0 0
    %2556 = vmatpush2.bf16.msra.mxu0 0
    %2557 = vmatprep.subr.bf16.mxu0 0
    %2558 = vmatpush2.bf16.msra.mxu0 0
    %2559 = vmatprep.subr.bf16.mxu0 0
    %2560 = vmatpush2.bf16.msra.mxu0 0
    %2561 = vmatprep.subr.bf16.mxu0 0
    %2562 = vmatpush2.bf16.msra.mxu0 0
    %2563 = vmatprep.subr.bf16.mxu0 0
    %2564 = vmatpush2.bf16.msra.mxu0 0
    %2565 = vmatprep.subr.bf16.mxu0 0
    %2566 = vmatpush2.bf16.msra.mxu0 0
    %2567 = vmatprep.subr.bf16.mxu0 0
    %2568 = vmatpush2.bf16.msra.mxu0 0
    %2569 = vmatprep.mubr.bf16.mxu0 0
    %2570 = vmatmul.mubr.bf16.gmra.mxu0 %v2513
    %v2571 = vpop.f32.mrf.mxu0
    %v2572 = vadd.f32 0.0, %v2571
    %v2573 = vpop.f32.mrf.mxu0
    %v2574 = vadd.f32 0.0, %v2573
    %v2575 = vpop.f32.mrf.mxu0
    %v2576 = vadd.f32 0.0, %v2575
    %v2577 = vpop.f32.mrf.mxu0
    %v2578 = vadd.f32 0.0, %v2577
    %2579 = vmatprep.mubr.bf16.mxu0 0
    %2580 = vmatmul.mubr.bf16.gmra.mxu0 %v2516
    %v2581 = vpop.f32.mrf.mxu0
    %v2582 = vadd.f32 0.0, %v2581
    %v2583 = vpop.f32.mrf.mxu0
    %v2584 = vadd.f32 0.0, %v2583
    %v2585 = vpop.f32.mrf.mxu0
    %v2586 = vadd.f32 0.0, %v2585
    %v2587 = vpop.f32.mrf.mxu0
    %v2588 = vadd.f32 0.0, %v2587
    %2589 = vmatprep.mubr.bf16.mxu0 0
    %2590 = vmatmul.mubr.bf16.gmra.mxu0 %v2519
    %v2591 = vpop.f32.mrf.mxu0
    %v2592 = vadd.f32 0.0, %v2591
    %v2593 = vpop.f32.mrf.mxu0
    %v2594 = vadd.f32 0.0, %v2593
    %v2595 = vpop.f32.mrf.mxu0
    %v2596 = vadd.f32 0.0, %v2595
    %v2597 = vpop.f32.mrf.mxu0
    %v2598 = vadd.f32 0.0, %v2597
    %2599 = vmatprep.mubr.bf16.mxu0 0
    %2600 = vmatmul.mubr.bf16.gmra.mxu0 %v2522
    %v2601 = vpop.f32.mrf.mxu0
    %v2602 = vadd.f32 0.0, %v2601
    %v2603 = vpop.f32.mrf.mxu0
    %v2604 = vadd.f32 0.0, %v2603
    %v2605 = vpop.f32.mrf.mxu0
    %v2606 = vadd.f32 0.0, %v2605
    %v2607 = vpop.f32.mrf.mxu0
    %v2608 = vadd.f32 0.0, %v2607
    %2609 = vmatprep.mubr.bf16.mxu0 0
    %2610 = vmatmul.mubr.bf16.gmra.mxu0 %v2525
    %v2611 = vpop.f32.mrf.mxu0
    %v2612 = vadd.f32 0.0, %v2611
    %v2613 = vpop.f32.mrf.mxu0
    %v2614 = vadd.f32 0.0, %v2613
    %v2615 = vpop.f32.mrf.mxu0
    %v2616 = vadd.f32 0.0, %v2615
    %v2617 = vpop.f32.mrf.mxu0
    %v2618 = vadd.f32 0.0, %v2617
    %2619 = vmatprep.mubr.bf16.mxu0 0
    %2620 = vmatmul.mubr.bf16.gmra.mxu0 %v2528
    %v2621 = vpop.f32.mrf.mxu0
    %v2622 = vadd.f32 0.0, %v2621
    %v2623 = vpop.f32.mrf.mxu0
    %v2624 = vadd.f32 0.0, %v2623
    %v2625 = vpop.f32.mrf.mxu0
    %v2626 = vadd.f32 0.0, %v2625
    %v2627 = vpop.f32.mrf.mxu0
    %v2628 = vadd.f32 0.0, %v2627
    %2629 = vdwg.mxu0
    %v2642 = vunpack.c.l.b16 %v2407
    %v2643 = vunpack.c.l.b16 %v2408
    %v2644 = vunpack.c.l.b16 %v2409
    %v2645 = vunpack.c.l.b16 %v2410
    %v2646 = vunpack.c.l.b16 %v2411
    %v2647 = vunpack.c.l.b16 %v2412
    %v2648 = vunpack.c.l.b16 %v2413
    %v2649 = vunpack.c.l.b16 %v2414
    %v2650 = vunpack.c.l.b16 %v2415
    %v2651 = vunpack.c.l.b16 %v2416
    %v2652 = vunpack.c.l.b16 %v2417
    %v2653 = vunpack.c.l.b16 %v2418
    %v2654 = vpack.c.b16 %v2643, %v2642
    %v2655 = vpack.c.b16 %v2645, %v2644
    %v2656 = vpack.c.b16 %v2647, %v2646
    %v2657 = vpack.c.b16 %v2649, %v2648
    %v2658 = vpack.c.b16 %v2651, %v2650
    %v2659 = vpack.c.b16 %v2653, %v2652
    %v2661 = vsel %vm2511, %v2654, 0
    %v2664 = vsel %vm2511, %v2655, 0
    %v2667 = vsel %vm2511, %v2656, 0
    %v2670 = vsel %vm2511, %v2657, 0
    %v2673 = vsel %vm2511, %v2658, 0
    %v2676 = vsel %vm2511, %v2659, 0
    %v2679 = vsel %vm2530, %v2423, 0
    %v2682 = vsel %vm2530, %v2424, 0
    %2684 = vmatprep.subr.bf16.mxu0 0
    %2685 = vmatpush1.bf16.msra.mxu0 0
    %2686 = vmatprep.subr.bf16.mxu0 0
    %2687 = vmatpush1.bf16.msra.mxu0 0
    %2688 = vmatprep.subr.bf16.mxu0 0
    %2689 = vmatpush1.bf16.msra.mxu0 0
    %2690 = vmatprep.subr.bf16.mxu0 0
    %2691 = vmatpush1.bf16.msra.mxu0 0
    %2692 = vmatprep.subr.bf16.mxu0 0
    %2693 = vmatpush1.bf16.msra.mxu0 0
    %2694 = vmatprep.subr.bf16.mxu0 %v2682
    %2695 = vmatpush1.bf16.msra.mxu0 %v2679
    %2696 = vmatprep.subr.bf16.mxu0 %v2422
    %2697 = vmatpush1.bf16.msra.mxu0 %v2421
    %2698 = vmatprep.subr.bf16.mxu0 %v2420
    %2699 = vmatpush1.bf16.msra.mxu0 %v2419
    %2700 = vmatprep.subr.bf16.mxu0 0
    %2701 = vmatpush2.bf16.msra.mxu0 0
    %2702 = vmatprep.subr.bf16.mxu0 0
    %2703 = vmatpush2.bf16.msra.mxu0 0
    %2704 = vmatprep.subr.bf16.mxu0 0
    %2705 = vmatpush2.bf16.msra.mxu0 0
    %2706 = vmatprep.subr.bf16.mxu0 0
    %2707 = vmatpush2.bf16.msra.mxu0 0
    %2708 = vmatprep.subr.bf16.mxu0 0
    %2709 = vmatpush2.bf16.msra.mxu0 0
    %2710 = vmatprep.subr.bf16.mxu0 0
    %2711 = vmatpush2.bf16.msra.mxu0 0
    %2712 = vmatprep.subr.bf16.mxu0 0
    %2713 = vmatpush2.bf16.msra.mxu0 0
    %2714 = vmatprep.subr.bf16.mxu0 0
    %2715 = vmatpush2.bf16.msra.mxu0 0
    %2716 = vmatprep.mubr.bf16.mxu0 0
    %2717 = vmatmul.mubr.bf16.gmra.mxu0 %v2661
    %v2718 = vpop.f32.mrf.mxu0
    %v2719 = vadd.f32 %v2572, %v2718
    %v2720 = vpop.f32.mrf.mxu0
    %v2721 = vadd.f32 %v2574, %v2720
    %v2722 = vpop.f32.mrf.mxu0
    %v2723 = vadd.f32 %v2576, %v2722
    %v2724 = vpop.f32.mrf.mxu0
    %v2725 = vadd.f32 %v2578, %v2724
    %2726 = vmatprep.mubr.bf16.mxu0 0
    %2727 = vmatmul.mubr.bf16.gmra.mxu0 %v2664
    %v2728 = vpop.f32.mrf.mxu0
    %v2729 = vadd.f32 %v2582, %v2728
    %v2730 = vpop.f32.mrf.mxu0
    %v2731 = vadd.f32 %v2584, %v2730
    %v2732 = vpop.f32.mrf.mxu0
    %v2733 = vadd.f32 %v2586, %v2732
    %v2734 = vpop.f32.mrf.mxu0
    %v2735 = vadd.f32 %v2588, %v2734
    %2736 = vmatprep.mubr.bf16.mxu0 0
    %2737 = vmatmul.mubr.bf16.gmra.mxu0 %v2667
    %v2738 = vpop.f32.mrf.mxu0
    %v2739 = vadd.f32 %v2592, %v2738
    %v2740 = vpop.f32.mrf.mxu0
    %v2741 = vadd.f32 %v2594, %v2740
    %v2742 = vpop.f32.mrf.mxu0
    %v2743 = vadd.f32 %v2596, %v2742
    %v2744 = vpop.f32.mrf.mxu0
    %v2745 = vadd.f32 %v2598, %v2744
    %2746 = vmatprep.mubr.bf16.mxu0 0
    %2747 = vmatmul.mubr.bf16.gmra.mxu0 %v2670
    %v2748 = vpop.f32.mrf.mxu0
    %v2749 = vadd.f32 %v2602, %v2748
    %v2750 = vpop.f32.mrf.mxu0
    %v2751 = vadd.f32 %v2604, %v2750
    %v2752 = vpop.f32.mrf.mxu0
    %v2753 = vadd.f32 %v2606, %v2752
    %v2754 = vpop.f32.mrf.mxu0
    %v2755 = vadd.f32 %v2608, %v2754
    %2756 = vmatprep.mubr.bf16.mxu0 0
    %2757 = vmatmul.mubr.bf16.gmra.mxu0 %v2673
    %v2758 = vpop.f32.mrf.mxu0
    %v2759 = vadd.f32 %v2612, %v2758
    %v2760 = vpop.f32.mrf.mxu0
    %v2761 = vadd.f32 %v2614, %v2760
    %v2762 = vpop.f32.mrf.mxu0
    %v2763 = vadd.f32 %v2616, %v2762
    %v2764 = vpop.f32.mrf.mxu0
    %v2765 = vadd.f32 %v2618, %v2764
    %2766 = vmatprep.mubr.bf16.mxu0 0
    %2767 = vmatmul.mubr.bf16.gmra.mxu0 %v2676
    %v2768 = vpop.f32.mrf.mxu0
    %v2769 = vadd.f32 %v2622, %v2768
    %v2770 = vpop.f32.mrf.mxu0
    %v2771 = vadd.f32 %v2624, %v2770
    %v2772 = vpop.f32.mrf.mxu0
    %v2773 = vadd.f32 %v2626, %v2772
    %v2774 = vpop.f32.mrf.mxu0
    %v2775 = vadd.f32 %v2628, %v2774
    %2776 = vdwg.mxu0
    %2777 = vst [vmem:[#allocation4] sm:$0xff] %v2719
    %2778 = vst [vmem:[#allocation4 + $0x8] sm:$0xff] %v2721
    %2779 = vst [vmem:[#allocation4 + $0x10] sm:$0xff] %v2723
    %2780 = vst [vmem:[#allocation4 + $0x18] sm:$0xff] %v2725
    %2781 = vst [vmem:[#allocation4 + $0x20] sm:$0xff] %v2729
    %2782 = vst [vmem:[#allocation4 + $0x28] sm:$0xff] %v2731
    %2783 = vst [vmem:[#allocation4 + $0x30] sm:$0xff] %v2733
    %2784 = vst [vmem:[#allocation4 + $0x38] sm:$0xff] %v2735
    %2785 = vst [vmem:[#allocation4 + $0x40] sm:$0xff] %v2739
    %2786 = vst [vmem:[#allocation4 + $0x48] sm:$0xff] %v2741
    %2787 = vst [vmem:[#allocation4 + $0x50] sm:$0xff] %v2743
    %2788 = vst [vmem:[#allocation4 + $0x58] sm:$0xff] %v2745
    %2789 = vst [vmem:[#allocation4 + $0x60] sm:$0xff] %v2749
    %2790 = vst [vmem:[#allocation4 + $0x68] sm:$0xff] %v2751
    %2791 = vst [vmem:[#allocation4 + $0x70] sm:$0xff] %v2753
    %2792 = vst [vmem:[#allocation4 + $0x78] sm:$0xff] %v2755
    %2793 = vst [vmem:[#allocation4 + $0x80] sm:$0xff] %v2759
    %2794 = vst [vmem:[#allocation4 + $0x88] sm:$0xff] %v2761
    %2795 = vst [vmem:[#allocation4 + $0x90] sm:$0xff] %v2763
    %2796 = vst [vmem:[#allocation4 + $0x98] sm:$0xff] %v2765
    %2797 = vst [vmem:[#allocation4 + $0xa0] sm:$0xff] %v2769
    %2798 = vst [vmem:[#allocation4 + $0xa8] sm:$0xff] %v2771
    %2799 = vst [vmem:[#allocation4 + $0xb0] sm:$0x3] %v2773
    %2800 = vst [vmem:[#allocation4 + $0xb8] sm:$0x3] %v2775
    %v2801 = vld [vmem:[#allocation4] sm:$0xff]
    %v2802 = vld [vmem:[#allocation4 + $0x8] sm:$0xff]
    %v2803 = vld [vmem:[#allocation4 + $0x10] sm:$0xff]
    %v2804 = vld [vmem:[#allocation4 + $0x18] sm:$0xff]
    %v2805 = vld [vmem:[#allocation4 + $0x20] sm:$0xff]
    %v2806 = vld [vmem:[#allocation4 + $0x28] sm:$0xff]
    %v2807 = vld [vmem:[#allocation4 + $0x30] sm:$0xff]
    %v2808 = vld [vmem:[#allocation4 + $0x38] sm:$0xff]
    %v2809 = vld [vmem:[#allocation4 + $0x40] sm:$0xff]
    %v2810 = vld [vmem:[#allocation4 + $0x48] sm:$0xff]
    %v2811 = vld [vmem:[#allocation4 + $0x50] sm:$0xff]
    %v2812 = vld [vmem:[#allocation4 + $0x58] sm:$0xff]
    %v2813 = vld [vmem:[#allocation4 + $0x60] sm:$0xff]
    %v2814 = vld [vmem:[#allocation4 + $0x68] sm:$0xff]
    %v2815 = vld [vmem:[#allocation4 + $0x70] sm:$0xff]
    %v2816 = vld [vmem:[#allocation4 + $0x78] sm:$0xff]
    %v2817 = vld [vmem:[#allocation4 + $0x80] sm:$0xff]
    %v2818 = vld [vmem:[#allocation4 + $0x88] sm:$0xff]
    %v2819 = vld [vmem:[#allocation4 + $0x90] sm:$0xff]
    %v2820 = vld [vmem:[#allocation4 + $0x98] sm:$0xff]
    %v2821 = vld [vmem:[#allocation4 + $0xa0] sm:$0xf]
    %v2822 = vld [vmem:[#allocation4 + $0xa8] sm:$0xf]
    %v2823 = vpack.c.bf16 %v2803, %v2801
    %v2824 = vpack.c.bf16 %v2804, %v2802
    %v2825 = vpack.c.bf16 %v2807, %v2805
    %v2826 = vpack.c.bf16 %v2808, %v2806
    %v2827 = vpack.c.bf16 %v2811, %v2809
    %v2828 = vpack.c.bf16 %v2812, %v2810
    %v2829 = vpack.c.bf16 %v2815, %v2813
    %v2830 = vpack.c.bf16 %v2816, %v2814
    %v2831 = vpack.c.bf16 %v2819, %v2817
    %v2832 = vpack.c.bf16 %v2820, %v2818
    %v2833 = vpack.c.bf16 %v2821, %v2821
    %v2834 = vpack.c.bf16 %v2822, %v2822
    %v2835 = vld [vmem:[#allocation17] sm:$0xff]
    %v2836 = vld [vmem:[#allocation17 + $0x8] sm:$0xf]
    %v2837 = vld [vmem:[#allocation17 + $0xc] sm:$0xff]
    %v2838 = vld [vmem:[#allocation17 + $0x14] sm:$0xf]
    %v2839 = vld [vmem:[#allocation17 + $0x18] sm:$0xff]
    %v2840 = vld [vmem:[#allocation17 + $0x20] sm:$0xf]
    %v2841 = vld [vmem:[#allocation17 + $0x24] sm:$0xff]
    %v2842 = vld [vmem:[#allocation17 + $0x2c] sm:$0xf]
    %v2843 = vld [vmem:[#allocation17 + $0x30] sm:$0xff]
    %v2844 = vld [vmem:[#allocation17 + $0x38] sm:$0xf]
    %v2845 = vld [vmem:[#allocation17 + $0x3c] sm:$0xff]
    %v2846 = vld [vmem:[#allocation17 + $0x44] sm:$0xf]
    %v2847 = vld [vmem:[#allocation17 + $0x48] sm:$0xff]
    %v2848 = vld [vmem:[#allocation17 + $0x50] sm:$0xf]
    %v2849 = vld [vmem:[#allocation17 + $0x54] sm:$0xff]
    %v2850 = vld [vmem:[#allocation17 + $0x5c] sm:$0xf]
    %v2851 = vld [vmem:[#allocation17 + $0x60] sm:$0xff]
    %v2852 = vld [vmem:[#allocation17 + $0x68] sm:$0xf]
    %v2853 = vld [vmem:[#allocation17 + $0x6c] sm:$0xff]
    %v2854 = vld [vmem:[#allocation17 + $0x74] sm:$0xf]
    %v2855 = vld [vmem:[#allocation17 + $0x78] sm:$0xff]
    %v2856 = vld [vmem:[#allocation17 + $0x80] sm:$0xf]
    %v2857 = vld [vmem:[#allocation17 + $0x84] sm:$0xff]
    %v2858 = vld [vmem:[#allocation17 + $0x8c] sm:$0xf]
    %v2859 = vld [vmem:[#allocation17 + $0x90] sm:$0xff]
    %v2860 = vld [vmem:[#allocation17 + $0x98] sm:$0xf]
    %v2861 = vld [vmem:[#allocation17 + $0x9c] sm:$0xff]
    %v2862 = vld [vmem:[#allocation17 + $0xa4] sm:$0xf]
    %v2863 = vld [vmem:[#allocation17 + $0xa8] sm:$0xff]
    %v2864 = vld [vmem:[#allocation17 + $0xb0] sm:$0xf]
    %v2865 = vld [vmem:[#allocation17 + $0xb4] sm:$0xff]
    %v2866 = vld [vmem:[#allocation17 + $0xbc] sm:$0xf]
    %v2867 = vld [vmem:[#allocation17 + $0xc0] sm:$0xff]
    %v2868 = vld [vmem:[#allocation17 + $0xc8] sm:$0xf]
    %v2869 = vld [vmem:[#allocation17 + $0xcc] sm:$0xff]
    %v2870 = vld [vmem:[#allocation17 + $0xd4] sm:$0xf]
    %v2871 = vld [vmem:[#allocation17 + $0xd8] sm:$0xff]
    %v2872 = vld [vmem:[#allocation17 + $0xe0] sm:$0xf]
    %v2873 = vld [vmem:[#allocation17 + $0xe4] sm:$0xff]
    %v2874 = vld [vmem:[#allocation17 + $0xec] sm:$0xf]
    %v2875 = vld [vmem:[#allocation17 + $0xf0] sm:$0xff]
    %v2876 = vld [vmem:[#allocation17 + $0xf8] sm:$0xf]
    %v2877 = vld [vmem:[#allocation17 + $0xfc] sm:$0xff]
    %v2878 = vld [vmem:[#allocation17 + $0x104] sm:$0xf]
    %v2879 = vld [vmem:[#allocation17 + $0x108] sm:$0xff]
    %v2880 = vld [vmem:[#allocation17 + $0x110] sm:$0xf]
    %v2881 = vld [vmem:[#allocation17 + $0x114] sm:$0xff]
    %v2882 = vld [vmem:[#allocation17 + $0x11c] sm:$0xf]
    %v2883 = vld [vmem:[#allocation17 + $0x120] sm:$0xff]
    %v2884 = vld [vmem:[#allocation17 + $0x128] sm:$0xf]
    %v2885 = vld [vmem:[#allocation17 + $0x12c] sm:$0xff]
    %v2886 = vld [vmem:[#allocation17 + $0x134] sm:$0xf]
    %v2887 = vld [vmem:[#allocation17 + $0x138] sm:$0xff]
    %v2888 = vld [vmem:[#allocation17 + $0x140] sm:$0xf]
    %v2889 = vld [vmem:[#allocation17 + $0x144] sm:$0xff]
    %v2890 = vld [vmem:[#allocation17 + $0x14c] sm:$0xf]
    %v2891 = vld [vmem:[#allocation17 + $0x150] sm:$0xff]
    %v2892 = vld [vmem:[#allocation17 + $0x158] sm:$0xf]
    %v2893 = vld [vmem:[#allocation17 + $0x15c] sm:$0xff]
    %v2894 = vld [vmem:[#allocation17 + $0x164] sm:$0xf]
    %v2895 = vld [vmem:[#allocation17 + $0x168] sm:$0xff]
    %v2896 = vld [vmem:[#allocation17 + $0x170] sm:$0xf]
    %v2897 = vld [vmem:[#allocation17 + $0x174] sm:$0xff]
    %v2898 = vld [vmem:[#allocation17 + $0x17c] sm:$0xf]
    %v2899 = vld [vmem:[#allocation4] sm:$0xfe]
    %v2900 = vld [vmem:[#allocation4 + $0x8] sm:$0xfe]
    %v2901 = vld [vmem:[#allocation4 + $0xa0] sm:$0x1f]
    %v2902 = vld [vmem:[#allocation4 + $0xa8] sm:$0x1f]
    %v2903 = vpack.c.bf16 %v2803, %v2899
    %v2904 = vpack.c.bf16 %v2804, %v2900
    %v2905 = vpack.c.bf16 %v2901, %v2901
    %v2906 = vpack.c.bf16 %v2902, %v2902
    %s2907 = scalar_lea.vmem [#allocation17], 384
    %v2908 = vld [vmem:[%s2907] sm:$0xff]
    %v2909 = vld [vmem:[%s2907 + $0x8] sm:$0xf]
    %v2910 = vld [vmem:[%s2907 + $0xc] sm:$0xff]
    %v2911 = vld [vmem:[%s2907 + $0x14] sm:$0xf]
    %v2912 = vld [vmem:[%s2907 + $0x18] sm:$0xff]
    %v2913 = vld [vmem:[%s2907 + $0x20] sm:$0xf]
    %v2914 = vld [vmem:[%s2907 + $0x24] sm:$0xff]
    %v2915 = vld [vmem:[%s2907 + $0x2c] sm:$0xf]
    %v2916 = vld [vmem:[%s2907 + $0x30] sm:$0xff]
    %v2917 = vld [vmem:[%s2907 + $0x38] sm:$0xf]
    %v2918 = vld [vmem:[%s2907 + $0x3c] sm:$0xff]
    %v2919 = vld [vmem:[%s2907 + $0x44] sm:$0xf]
    %v2920 = vld [vmem:[%s2907 + $0x48] sm:$0xff]
    %v2921 = vld [vmem:[%s2907 + $0x50] sm:$0xf]
    %v2922 = vld [vmem:[%s2907 + $0x54] sm:$0xff]
    %v2923 = vld [vmem:[%s2907 + $0x5c] sm:$0xf]
    %v2924 = vld [vmem:[%s2907 + $0x60] sm:$0xff]
    %v2925 = vld [vmem:[%s2907 + $0x68] sm:$0xf]
    %v2926 = vld [vmem:[%s2907 + $0x6c] sm:$0xff]
    %v2927 = vld [vmem:[%s2907 + $0x74] sm:$0xf]
    %v2928 = vld [vmem:[%s2907 + $0x78] sm:$0xff]
    %v2929 = vld [vmem:[%s2907 + $0x80] sm:$0xf]
    %v2930 = vld [vmem:[%s2907 + $0x84] sm:$0xff]
    %v2931 = vld [vmem:[%s2907 + $0x8c] sm:$0xf]
    %v2932 = vld [vmem:[%s2907 + $0x90] sm:$0xff]
    %v2933 = vld [vmem:[%s2907 + $0x98] sm:$0xf]
    %v2934 = vld [vmem:[%s2907 + $0x9c] sm:$0xff]
    %v2935 = vld [vmem:[%s2907 + $0xa4] sm:$0xf]
    %v2936 = vld [vmem:[%s2907 + $0xa8] sm:$0xff]
    %v2937 = vld [vmem:[%s2907 + $0xb0] sm:$0xf]
    %v2938 = vld [vmem:[%s2907 + $0xb4] sm:$0xff]
    %v2939 = vld [vmem:[%s2907 + $0xbc] sm:$0xf]
    %v2940 = vld [vmem:[%s2907 + $0xc0] sm:$0xff]
    %v2941 = vld [vmem:[%s2907 + $0xc8] sm:$0xf]
    %v2942 = vld [vmem:[%s2907 + $0xcc] sm:$0xff]
    %v2943 = vld [vmem:[%s2907 + $0xd4] sm:$0xf]
    %v2944 = vld [vmem:[%s2907 + $0xd8] sm:$0xff]
    %v2945 = vld [vmem:[%s2907 + $0xe0] sm:$0xf]
    %v2946 = vld [vmem:[%s2907 + $0xe4] sm:$0xff]
    %v2947 = vld [vmem:[%s2907 + $0xec] sm:$0xf]
    %v2948 = vld [vmem:[%s2907 + $0xf0] sm:$0xff]
    %v2949 = vld [vmem:[%s2907 + $0xf8] sm:$0xf]
    %v2950 = vld [vmem:[%s2907 + $0xfc] sm:$0xff]
    %v2951 = vld [vmem:[%s2907 + $0x104] sm:$0xf]
    %v2952 = vld [vmem:[%s2907 + $0x108] sm:$0xff]
    %v2953 = vld [vmem:[%s2907 + $0x110] sm:$0xf]
    %v2954 = vld [vmem:[%s2907 + $0x114] sm:$0xff]
    %v2955 = vld [vmem:[%s2907 + $0x11c] sm:$0xf]
    %v2956 = vld [vmem:[%s2907 + $0x120] sm:$0xff]
    %v2957 = vld [vmem:[%s2907 + $0x128] sm:$0xf]
    %v2958 = vld [vmem:[%s2907 + $0x12c] sm:$0xff]
    %v2959 = vld [vmem:[%s2907 + $0x134] sm:$0xf]
    %v2960 = vld [vmem:[%s2907 + $0x138] sm:$0xff]
    %v2961 = vld [vmem:[%s2907 + $0x140] sm:$0xf]
    %v2962 = vld [vmem:[%s2907 + $0x144] sm:$0xff]
    %v2963 = vld [vmem:[%s2907 + $0x14c] sm:$0xf]
    %v2964 = vld [vmem:[%s2907 + $0x150] sm:$0xff]
    %v2965 = vld [vmem:[%s2907 + $0x158] sm:$0xf]
    %v2966 = vld [vmem:[%s2907 + $0x15c] sm:$0xff]
    %v2967 = vld [vmem:[%s2907 + $0x164] sm:$0xf]
    %v2968 = vld [vmem:[%s2907 + $0x168] sm:$0xff]
    %v2969 = vld [vmem:[%s2907 + $0x170] sm:$0xf]
    %v2970 = vld [vmem:[%s2907 + $0x174] sm:$0xff]
    %v2971 = vld [vmem:[%s2907 + $0x17c] sm:$0xf]
    %vm2972 = vsmask.f32 7424
    %v2974 = vshrl.u32 %v2903, 16
    %v2976 = vshll.u32 %v2903, 16
    %v2978 = vrot.slane %v2976, 1
    %v2979 = vor.u32 %v2974, %v2978
    %v2981 = vshll.u32 %v2825, 16
    %v2983 = vrot.slane %v2981, 1
    %v2984 = vsel %vm2972, %v2979, %v2983
    %v2986 = vshrl.u32 %v2904, 16
    %v2988 = vshll.u32 %v2904, 16
    %v2990 = vrot.slane %v2988, 1
    %v2991 = vor.u32 %v2986, %v2990
    %v2993 = vshll.u32 %v2826, 16
    %v2995 = vrot.slane %v2993, 1
    %v2996 = vsel %vm2972, %v2991, %v2995
    %v2997 = vshrl.u32 %v2825, 16
    %v2999 = vor.u32 %v2997, %v2983
    %v3001 = vshll.u32 %v2827, 16
    %v3003 = vrot.slane %v3001, 1
    %v3004 = vsel %vm2972, %v2999, %v3003
    %v3005 = vshrl.u32 %v2826, 16
    %v3007 = vor.u32 %v3005, %v2995
    %v3009 = vshll.u32 %v2828, 16
    %v3011 = vrot.slane %v3009, 1
    %v3012 = vsel %vm2972, %v3007, %v3011
    %v3013 = vshrl.u32 %v2827, 16
    %v3015 = vor.u32 %v3013, %v3003
    %v3017 = vshll.u32 %v2829, 16
    %v3019 = vrot.slane %v3017, 1
    %v3020 = vsel %vm2972, %v3015, %v3019
    %v3021 = vshrl.u32 %v2828, 16
    %v3023 = vor.u32 %v3021, %v3011
    %v3025 = vshll.u32 %v2830, 16
    %v3027 = vrot.slane %v3025, 1
    %v3028 = vsel %vm2972, %v3023, %v3027
    %v3029 = vshrl.u32 %v2829, 16
    %v3031 = vor.u32 %v3029, %v3019
    %v3033 = vshll.u32 %v2831, 16
    %v3035 = vrot.slane %v3033, 1
    %v3036 = vsel %vm2972, %v3031, %v3035
    %v3037 = vshrl.u32 %v2830, 16
    %v3039 = vor.u32 %v3037, %v3027
    %v3041 = vshll.u32 %v2832, 16
    %v3043 = vrot.slane %v3041, 1
    %v3044 = vsel %vm2972, %v3039, %v3043
    %v3045 = vshrl.u32 %v2831, 16
    %v3047 = vor.u32 %v3045, %v3035
    %v3049 = vshll.u32 %v2905, 16
    %v3051 = vrot.slane %v3049, 1
    %v3052 = vsel %vm2972, %v3047, %v3051
    %v3053 = vshrl.u32 %v2832, 16
    %v3055 = vor.u32 %v3053, %v3043
    %v3057 = vshll.u32 %v2906, 16
    %v3059 = vrot.slane %v3057, 1
    %v3060 = vsel %vm2972, %v3055, %v3059
    %v3061 = vshrl.u32 %v2905, 16
    %v3063 = vor.u32 %v3061, %v3051
    %v3064 = vshrl.u32 %v2906, 16
    %v3066 = vor.u32 %v3064, %v3059
    %v3143 = vunpack.c.l.b16 %v2908
    %v3144 = vunpack.c.h.b16 %v2908
    %v3145 = vunpack.c.l.b16 %v2909
    %v3146 = vunpack.c.l.b16 %v2910
    %v3147 = vunpack.c.h.b16 %v2910
    %v3148 = vunpack.c.l.b16 %v2911
    %v3149 = vunpack.c.l.b16 %v2912
    %v3150 = vunpack.c.h.b16 %v2912
    %v3151 = vunpack.c.l.b16 %v2913
    %v3152 = vunpack.c.l.b16 %v2914
    %v3153 = vunpack.c.h.b16 %v2914
    %v3154 = vunpack.c.l.b16 %v2915
    %v3155 = vunpack.c.l.b16 %v2916
    %v3156 = vunpack.c.h.b16 %v2916
    %v3157 = vunpack.c.l.b16 %v2917
    %v3158 = vunpack.c.l.b16 %v2918
    %v3159 = vunpack.c.h.b16 %v2918
    %v3160 = vunpack.c.l.b16 %v2919
    %v3161 = vunpack.c.l.b16 %v2920
    %v3162 = vunpack.c.h.b16 %v2920
    %v3163 = vunpack.c.l.b16 %v2921
    %v3164 = vunpack.c.l.b16 %v2922
    %v3165 = vunpack.c.h.b16 %v2922
    %v3166 = vunpack.c.l.b16 %v2923
    %v3167 = vunpack.c.l.b16 %v2924
    %v3168 = vunpack.c.h.b16 %v2924
    %v3169 = vunpack.c.l.b16 %v2925
    %v3170 = vunpack.c.l.b16 %v2926
    %v3171 = vunpack.c.h.b16 %v2926
    %v3172 = vunpack.c.l.b16 %v2927
    %v3173 = vunpack.c.l.b16 %v2928
    %v3174 = vunpack.c.h.b16 %v2928
    %v3175 = vunpack.c.l.b16 %v2929
    %v3176 = vunpack.c.l.b16 %v2930
    %v3177 = vunpack.c.h.b16 %v2930
    %v3178 = vunpack.c.l.b16 %v2931
    %v3179 = vunpack.c.l.b16 %v2932
    %v3180 = vunpack.c.h.b16 %v2932
    %v3181 = vunpack.c.l.b16 %v2933
    %v3182 = vunpack.c.l.b16 %v2934
    %v3183 = vunpack.c.h.b16 %v2934
    %v3184 = vunpack.c.l.b16 %v2935
    %v3185 = vunpack.c.l.b16 %v2936
    %v3186 = vunpack.c.h.b16 %v2936
    %v3187 = vunpack.c.l.b16 %v2937
    %v3188 = vunpack.c.l.b16 %v2938
    %v3189 = vunpack.c.h.b16 %v2938
    %v3190 = vunpack.c.l.b16 %v2939
    %v3191 = vunpack.c.l.b16 %v2940
    %v3192 = vunpack.c.h.b16 %v2940
    %v3193 = vunpack.c.l.b16 %v2941
    %v3194 = vunpack.c.l.b16 %v2942
    %v3195 = vunpack.c.h.b16 %v2942
    %v3196 = vunpack.c.l.b16 %v2943
    %v3197 = vunpack.c.l.b16 %v2944
    %v3198 = vunpack.c.h.b16 %v2944
    %v3199 = vunpack.c.l.b16 %v2945
    %v3200 = vunpack.c.l.b16 %v2946
    %v3201 = vunpack.c.h.b16 %v2946
    %v3202 = vunpack.c.l.b16 %v2947
    %v3203 = vunpack.c.l.b16 %v2948
    %v3204 = vunpack.c.h.b16 %v2948
    %v3205 = vunpack.c.l.b16 %v2949
    %v3206 = vunpack.c.l.b16 %v2950
    %v3207 = vunpack.c.h.b16 %v2950
    %v3208 = vunpack.c.l.b16 %v2951
    %v3209 = vunpack.c.l.b16 %v2952
    %v3210 = vunpack.c.h.b16 %v2952
    %v3211 = vunpack.c.l.b16 %v2953
    %v3212 = vunpack.c.l.b16 %v2954
    %v3213 = vunpack.c.h.b16 %v2954
    %v3214 = vunpack.c.l.b16 %v2955
    %v3215 = vunpack.c.l.b16 %v2956
    %v3216 = vunpack.c.h.b16 %v2956
    %v3217 = vunpack.c.l.b16 %v2957
    %v3218 = vunpack.c.l.b16 %v2958
    %v3219 = vunpack.c.h.b16 %v2958
    %v3220 = vunpack.c.l.b16 %v2959
    %v3221 = vunpack.c.l.b16 %v2960
    %v3222 = vunpack.c.h.b16 %v2960
    %v3223 = vunpack.c.l.b16 %v2961
    %v3224 = vunpack.c.l.b16 %v2962
    %v3225 = vunpack.c.h.b16 %v2962
    %v3226 = vunpack.c.l.b16 %v2963
    %v3227 = vunpack.c.l.b16 %v2964
    %v3228 = vunpack.c.h.b16 %v2964
    %v3229 = vunpack.c.l.b16 %v2965
    %v3230 = vunpack.c.l.b16 %v2966
    %v3231 = vunpack.c.h.b16 %v2966
    %v3232 = vunpack.c.l.b16 %v2967
    %v3233 = vunpack.c.l.b16 %v2968
    %v3234 = vunpack.c.h.b16 %v2968
    %v3235 = vunpack.c.l.b16 %v2969
    %v3236 = vunpack.c.l.b16 %v2970
    %v3237 = vunpack.c.h.b16 %v2970
    %v3238 = vunpack.c.l.b16 %v2971
    %v3239 = vpack.c.b16 %v3146, %v3143
    %v3240 = vpack.c.b16 %v3147, %v3144
    %v3241 = vpack.c.b16 %v3148, %v3145
    %v3242 = vpack.c.b16 %v3152, %v3149
    %v3243 = vpack.c.b16 %v3153, %v3150
    %v3244 = vpack.c.b16 %v3154, %v3151
    %v3245 = vpack.c.b16 %v3158, %v3155
    %v3246 = vpack.c.b16 %v3159, %v3156
    %v3247 = vpack.c.b16 %v3160, %v3157
    %v3248 = vpack.c.b16 %v3164, %v3161
    %v3249 = vpack.c.b16 %v3165, %v3162
    %v3250 = vpack.c.b16 %v3166, %v3163
    %v3251 = vpack.c.b16 %v3170, %v3167
    %v3252 = vpack.c.b16 %v3171, %v3168
    %v3253 = vpack.c.b16 %v3172, %v3169
    %v3254 = vpack.c.b16 %v3176, %v3173
    %v3255 = vpack.c.b16 %v3177, %v3174
    %v3256 = vpack.c.b16 %v3178, %v3175
    %v3257 = vpack.c.b16 %v3182, %v3179
    %v3258 = vpack.c.b16 %v3183, %v3180
    %v3259 = vpack.c.b16 %v3184, %v3181
    %v3260 = vpack.c.b16 %v3188, %v3185
    %v3261 = vpack.c.b16 %v3189, %v3186
    %v3262 = vpack.c.b16 %v3190, %v3187
    %v3263 = vpack.c.b16 %v3194, %v3191
    %v3264 = vpack.c.b16 %v3195, %v3192
    %v3265 = vpack.c.b16 %v3196, %v3193
    %v3266 = vpack.c.b16 %v3200, %v3197
    %v3267 = vpack.c.b16 %v3201, %v3198
    %v3268 = vpack.c.b16 %v3202, %v3199
    %v3269 = vpack.c.b16 %v3206, %v3203
    %v3270 = vpack.c.b16 %v3207, %v3204
    %v3271 = vpack.c.b16 %v3208, %v3205
    %v3272 = vpack.c.b16 %v3212, %v3209
    %v3273 = vpack.c.b16 %v3213, %v3210
    %v3274 = vpack.c.b16 %v3214, %v3211
    %v3275 = vpack.c.b16 %v3218, %v3215
    %v3276 = vpack.c.b16 %v3219, %v3216
    %v3277 = vpack.c.b16 %v3220, %v3217
    %v3278 = vpack.c.b16 %v3224, %v3221
    %v3279 = vpack.c.b16 %v3225, %v3222
    %v3280 = vpack.c.b16 %v3226, %v3223
    %v3281 = vpack.c.b16 %v3230, %v3227
    %v3282 = vpack.c.b16 %v3231, %v3228
    %v3283 = vpack.c.b16 %v3232, %v3229
    %v3284 = vpack.c.b16 %v3236, %v3233
    %v3285 = vpack.c.b16 %v3237, %v3234
    %v3286 = vpack.c.b16 %v3238, %v3235
    %3335 = vmatprep.subr.bf16.mxu0 %v3261
    %3336 = vmatpush1.bf16.msra.mxu0 %v3260
    %3337 = vmatprep.subr.bf16.mxu0 %v3258
    %3338 = vmatpush1.bf16.msra.mxu0 %v3257
    %3339 = vmatprep.subr.bf16.mxu0 %v3255
    %3340 = vmatpush1.bf16.msra.mxu0 %v3254
    %3341 = vmatprep.subr.bf16.mxu0 %v3252
    %3342 = vmatpush1.bf16.msra.mxu0 %v3251
    %3343 = vmatprep.subr.bf16.mxu0 %v3249
    %3344 = vmatpush1.bf16.msra.mxu0 %v3248
    %3345 = vmatprep.subr.bf16.mxu0 %v3246
    %3346 = vmatpush1.bf16.msra.mxu0 %v3245
    %3347 = vmatprep.subr.bf16.mxu0 %v3243
    %3348 = vmatpush1.bf16.msra.mxu0 %v3242
    %3349 = vmatprep.subr.bf16.mxu0 %v3240
    %3350 = vmatpush1.bf16.msra.mxu0 %v3239
    %3351 = vmatprep.subr.bf16.mxu0 %v3285
    %3352 = vmatpush2.bf16.msra.mxu0 %v3284
    %3353 = vmatprep.subr.bf16.mxu0 %v3282
    %3354 = vmatpush2.bf16.msra.mxu0 %v3281
    %3355 = vmatprep.subr.bf16.mxu0 %v3279
    %3356 = vmatpush2.bf16.msra.mxu0 %v3278
    %3357 = vmatprep.subr.bf16.mxu0 %v3276
    %3358 = vmatpush2.bf16.msra.mxu0 %v3275
    %3359 = vmatprep.subr.bf16.mxu0 %v3273
    %3360 = vmatpush2.bf16.msra.mxu0 %v3272
    %3361 = vmatprep.subr.bf16.mxu0 %v3270
    %3362 = vmatpush2.bf16.msra.mxu0 %v3269
    %3363 = vmatprep.subr.bf16.mxu0 %v3267
    %3364 = vmatpush2.bf16.msra.mxu0 %v3266
    %3365 = vmatprep.subr.bf16.mxu0 %v3264
    %3366 = vmatpush2.bf16.msra.mxu0 %v3263
    %3367 = vmatprep.mubr.bf16.mxu0 %v2996
    %3368 = vmatmul.mubr.bf16.gmra.mxu0 %v2984
    %v3369 = vpop.f32.mrf.mxu0
    %v3370 = vadd.f32 0.0, %v3369
    %v3371 = vpop.f32.mrf.mxu0
    %v3372 = vadd.f32 0.0, %v3371
    %v3373 = vpop.f32.mrf.mxu0
    %v3374 = vadd.f32 0.0, %v3373
    %v3375 = vpop.f32.mrf.mxu0
    %v3376 = vadd.f32 0.0, %v3375
    %3377 = vmatprep.mubr.bf16.mxu0 %v3012
    %3378 = vmatmul.mubr.bf16.gmra.mxu0 %v3004
    %v3379 = vpop.f32.mrf.mxu0
    %v3380 = vadd.f32 0.0, %v3379
    %v3381 = vpop.f32.mrf.mxu0
    %v3382 = vadd.f32 0.0, %v3381
    %v3383 = vpop.f32.mrf.mxu0
    %v3384 = vadd.f32 0.0, %v3383
    %v3385 = vpop.f32.mrf.mxu0
    %v3386 = vadd.f32 0.0, %v3385
    %3387 = vmatprep.mubr.bf16.mxu0 %v3028
    %3388 = vmatmul.mubr.bf16.gmra.mxu0 %v3020
    %v3389 = vpop.f32.mrf.mxu0
    %v3390 = vadd.f32 0.0, %v3389
    %v3391 = vpop.f32.mrf.mxu0
    %v3392 = vadd.f32 0.0, %v3391
    %v3393 = vpop.f32.mrf.mxu0
    %v3394 = vadd.f32 0.0, %v3393
    %v3395 = vpop.f32.mrf.mxu0
    %v3396 = vadd.f32 0.0, %v3395
    %3397 = vmatprep.mubr.bf16.mxu0 %v3044
    %3398 = vmatmul.mubr.bf16.gmra.mxu0 %v3036
    %v3399 = vpop.f32.mrf.mxu0
    %v3400 = vadd.f32 0.0, %v3399
    %v3401 = vpop.f32.mrf.mxu0
    %v3402 = vadd.f32 0.0, %v3401
    %v3403 = vpop.f32.mrf.mxu0
    %v3404 = vadd.f32 0.0, %v3403
    %v3405 = vpop.f32.mrf.mxu0
    %v3406 = vadd.f32 0.0, %v3405
    %3407 = vmatprep.mubr.bf16.mxu0 %v3060
    %3408 = vmatmul.mubr.bf16.gmra.mxu0 %v3052
    %v3409 = vpop.f32.mrf.mxu0
    %v3410 = vadd.f32 0.0, %v3409
    %v3411 = vpop.f32.mrf.mxu0
    %v3412 = vadd.f32 0.0, %v3411
    %v3413 = vpop.f32.mrf.mxu0
    %v3414 = vadd.f32 0.0, %v3413
    %v3415 = vpop.f32.mrf.mxu0
    %v3416 = vadd.f32 0.0, %v3415
    %3417 = vmatprep.mubr.bf16.mxu0 %v3066
    %3418 = vmatmul.mubr.bf16.gmra.mxu0 %v3063
    %v3419 = vpop.f32.mrf.mxu0
    %v3420 = vadd.f32 0.0, %v3419
    %v3421 = vpop.f32.mrf.mxu0
    %v3422 = vadd.f32 0.0, %v3421
    %v3423 = vpop.f32.mrf.mxu0
    %v3424 = vpop.f32.mrf.mxu0
    %3425 = vdwg.mxu0
    %3426 = vmatprep.subr.bf16.mxu0 0
    %3427 = vmatpush1.bf16.msra.mxu0 %v3262
    %3428 = vmatprep.subr.bf16.mxu0 0
    %3429 = vmatpush1.bf16.msra.mxu0 %v3259
    %3430 = vmatprep.subr.bf16.mxu0 0
    %3431 = vmatpush1.bf16.msra.mxu0 %v3256
    %3432 = vmatprep.subr.bf16.mxu0 0
    %3433 = vmatpush1.bf16.msra.mxu0 %v3253
    %3434 = vmatprep.subr.bf16.mxu0 0
    %3435 = vmatpush1.bf16.msra.mxu0 %v3250
    %3436 = vmatprep.subr.bf16.mxu0 0
    %3437 = vmatpush1.bf16.msra.mxu0 %v3247
    %3438 = vmatprep.subr.bf16.mxu0 0
    %3439 = vmatpush1.bf16.msra.mxu0 %v3244
    %3440 = vmatprep.subr.bf16.mxu0 0
    %3441 = vmatpush1.bf16.msra.mxu0 %v3241
    %3442 = vmatprep.subr.bf16.mxu0 0
    %3443 = vmatpush2.bf16.msra.mxu0 %v3286
    %3444 = vmatprep.subr.bf16.mxu0 0
    %3445 = vmatpush2.bf16.msra.mxu0 %v3283
    %3446 = vmatprep.subr.bf16.mxu0 0
    %3447 = vmatpush2.bf16.msra.mxu0 %v3280
    %3448 = vmatprep.subr.bf16.mxu0 0
    %3449 = vmatpush2.bf16.msra.mxu0 %v3277
    %3450 = vmatprep.subr.bf16.mxu0 0
    %3451 = vmatpush2.bf16.msra.mxu0 %v3274
    %3452 = vmatprep.subr.bf16.mxu0 0
    %3453 = vmatpush2.bf16.msra.mxu0 %v3271
    %3454 = vmatprep.subr.bf16.mxu0 0
    %3455 = vmatpush2.bf16.msra.mxu0 %v3268
    %3456 = vmatprep.subr.bf16.mxu0 0
    %3457 = vmatpush2.bf16.msra.mxu0 %v3265
    %3458 = vmatprep.mubr.bf16.mxu0 %v2996
    %3459 = vmatmul.mubr.bf16.gmra.mxu0 %v2984
    %v3460 = vpop.f32.mrf.mxu0
    %v3461 = vadd.f32 0.0, %v3460
    %v3462 = vpop.f32.mrf.mxu0
    %v3463 = vpop.f32.mrf.mxu0
    %v3464 = vadd.f32 0.0, %v3463
    %v3465 = vpop.f32.mrf.mxu0
    %3466 = vmatprep.mubr.bf16.mxu0 %v3012
    %3467 = vmatmul.mubr.bf16.gmra.mxu0 %v3004
    %v3468 = vpop.f32.mrf.mxu0
    %v3469 = vadd.f32 0.0, %v3468
    %v3470 = vpop.f32.mrf.mxu0
    %v3471 = vpop.f32.mrf.mxu0
    %v3472 = vadd.f32 0.0, %v3471
    %v3473 = vpop.f32.mrf.mxu0
    %3474 = vmatprep.mubr.bf16.mxu0 %v3028
    %3475 = vmatmul.mubr.bf16.gmra.mxu0 %v3020
    %v3476 = vpop.f32.mrf.mxu0
    %v3477 = vadd.f32 0.0, %v3476
    %v3478 = vpop.f32.mrf.mxu0
    %v3479 = vpop.f32.mrf.mxu0
    %v3480 = vadd.f32 0.0, %v3479
    %v3481 = vpop.f32.mrf.mxu0
    %3482 = vmatprep.mubr.bf16.mxu0 %v3044
    %3483 = vmatmul.mubr.bf16.gmra.mxu0 %v3036
    %v3484 = vpop.f32.mrf.mxu0
    %v3485 = vadd.f32 0.0, %v3484
    %v3486 = vpop.f32.mrf.mxu0
    %v3487 = vpop.f32.mrf.mxu0
    %v3488 = vadd.f32 0.0, %v3487
    %v3489 = vpop.f32.mrf.mxu0
    %3490 = vmatprep.mubr.bf16.mxu0 %v3060
    %3491 = vmatmul.mubr.bf16.gmra.mxu0 %v3052
    %v3492 = vpop.f32.mrf.mxu0
    %v3493 = vadd.f32 0.0, %v3492
    %v3494 = vpop.f32.mrf.mxu0
    %v3495 = vpop.f32.mrf.mxu0
    %v3496 = vadd.f32 0.0, %v3495
    %v3497 = vpop.f32.mrf.mxu0
    %3498 = vmatprep.mubr.bf16.mxu0 %v3066
    %3499 = vmatmul.mubr.bf16.gmra.mxu0 %v3063
    %v3500 = vpop.f32.mrf.mxu0
    %v3501 = vadd.f32 0.0, %v3500
    %v3502 = vpop.f32.mrf.mxu0
    %v3503 = vpop.f32.mrf.mxu0
    %v3504 = vpop.f32.mrf.mxu0
    %3505 = vdwg.mxu0
    %v3570 = vunpack.c.l.b16 %v2835
    %v3571 = vunpack.c.h.b16 %v2835
    %v3572 = vunpack.c.l.b16 %v2836
    %v3573 = vunpack.c.l.b16 %v2837
    %v3574 = vunpack.c.h.b16 %v2837
    %v3575 = vunpack.c.l.b16 %v2838
    %v3576 = vunpack.c.l.b16 %v2839
    %v3577 = vunpack.c.h.b16 %v2839
    %v3578 = vunpack.c.l.b16 %v2840
    %v3579 = vunpack.c.l.b16 %v2841
    %v3580 = vunpack.c.h.b16 %v2841
    %v3581 = vunpack.c.l.b16 %v2842
    %v3582 = vunpack.c.l.b16 %v2843
    %v3583 = vunpack.c.h.b16 %v2843
    %v3584 = vunpack.c.l.b16 %v2844
    %v3585 = vunpack.c.l.b16 %v2845
    %v3586 = vunpack.c.h.b16 %v2845
    %v3587 = vunpack.c.l.b16 %v2846
    %v3588 = vunpack.c.l.b16 %v2847
    %v3589 = vunpack.c.h.b16 %v2847
    %v3590 = vunpack.c.l.b16 %v2848
    %v3591 = vunpack.c.l.b16 %v2849
    %v3592 = vunpack.c.h.b16 %v2849
    %v3593 = vunpack.c.l.b16 %v2850
    %v3594 = vunpack.c.l.b16 %v2851
    %v3595 = vunpack.c.h.b16 %v2851
    %v3596 = vunpack.c.l.b16 %v2852
    %v3597 = vunpack.c.l.b16 %v2853
    %v3598 = vunpack.c.h.b16 %v2853
    %v3599 = vunpack.c.l.b16 %v2854
    %v3600 = vunpack.c.l.b16 %v2855
    %v3601 = vunpack.c.h.b16 %v2855
    %v3602 = vunpack.c.l.b16 %v2856
    %v3603 = vunpack.c.l.b16 %v2857
    %v3604 = vunpack.c.h.b16 %v2857
    %v3605 = vunpack.c.l.b16 %v2858
    %v3606 = vunpack.c.l.b16 %v2859
    %v3607 = vunpack.c.h.b16 %v2859
    %v3608 = vunpack.c.l.b16 %v2860
    %v3609 = vunpack.c.l.b16 %v2861
    %v3610 = vunpack.c.h.b16 %v2861
    %v3611 = vunpack.c.l.b16 %v2862
    %v3612 = vunpack.c.l.b16 %v2863
    %v3613 = vunpack.c.h.b16 %v2863
    %v3614 = vunpack.c.l.b16 %v2864
    %v3615 = vunpack.c.l.b16 %v2865
    %v3616 = vunpack.c.h.b16 %v2865
    %v3617 = vunpack.c.l.b16 %v2866
    %v3618 = vunpack.c.l.b16 %v2867
    %v3619 = vunpack.c.h.b16 %v2867
    %v3620 = vunpack.c.l.b16 %v2868
    %v3621 = vunpack.c.l.b16 %v2869
    %v3622 = vunpack.c.h.b16 %v2869
    %v3623 = vunpack.c.l.b16 %v2870
    %v3624 = vunpack.c.l.b16 %v2871
    %v3625 = vunpack.c.h.b16 %v2871
    %v3626 = vunpack.c.l.b16 %v2872
    %v3627 = vunpack.c.l.b16 %v2873
    %v3628 = vunpack.c.h.b16 %v2873
    %v3629 = vunpack.c.l.b16 %v2874
    %v3630 = vunpack.c.l.b16 %v2875
    %v3631 = vunpack.c.h.b16 %v2875
    %v3632 = vunpack.c.l.b16 %v2876
    %v3633 = vunpack.c.l.b16 %v2877
    %v3634 = vunpack.c.h.b16 %v2877
    %v3635 = vunpack.c.l.b16 %v2878
    %v3636 = vunpack.c.l.b16 %v2879
    %v3637 = vunpack.c.h.b16 %v2879
    %v3638 = vunpack.c.l.b16 %v2880
    %v3639 = vunpack.c.l.b16 %v2881
    %v3640 = vunpack.c.h.b16 %v2881
    %v3641 = vunpack.c.l.b16 %v2882
    %v3642 = vunpack.c.l.b16 %v2883
    %v3643 = vunpack.c.h.b16 %v2883
    %v3644 = vunpack.c.l.b16 %v2884
    %v3645 = vunpack.c.l.b16 %v2885
    %v3646 = vunpack.c.h.b16 %v2885
    %v3647 = vunpack.c.l.b16 %v2886
    %v3648 = vunpack.c.l.b16 %v2887
    %v3649 = vunpack.c.h.b16 %v2887
    %v3650 = vunpack.c.l.b16 %v2888
    %v3651 = vunpack.c.l.b16 %v2889
    %v3652 = vunpack.c.h.b16 %v2889
    %v3653 = vunpack.c.l.b16 %v2890
    %v3654 = vunpack.c.l.b16 %v2891
    %v3655 = vunpack.c.h.b16 %v2891
    %v3656 = vunpack.c.l.b16 %v2892
    %v3657 = vunpack.c.l.b16 %v2893
    %v3658 = vunpack.c.h.b16 %v2893
    %v3659 = vunpack.c.l.b16 %v2894
    %v3660 = vunpack.c.l.b16 %v2895
    %v3661 = vunpack.c.h.b16 %v2895
    %v3662 = vunpack.c.l.b16 %v2896
    %v3663 = vunpack.c.l.b16 %v2897
    %v3664 = vunpack.c.h.b16 %v2897
    %v3665 = vunpack.c.l.b16 %v2898
    %v3666 = vpack.c.b16 %v3573, %v3570
    %v3667 = vpack.c.b16 %v3574, %v3571
    %v3668 = vpack.c.b16 %v3575, %v3572
    %v3669 = vpack.c.b16 %v3579, %v3576
    %v3670 = vpack.c.b16 %v3580, %v3577
    %v3671 = vpack.c.b16 %v3581, %v3578
    %v3672 = vpack.c.b16 %v3585, %v3582
    %v3673 = vpack.c.b16 %v3586, %v3583
    %v3674 = vpack.c.b16 %v3587, %v3584
    %v3675 = vpack.c.b16 %v3591, %v3588
    %v3676 = vpack.c.b16 %v3592, %v3589
    %v3677 = vpack.c.b16 %v3593, %v3590
    %v3678 = vpack.c.b16 %v3597, %v3594
    %v3679 = vpack.c.b16 %v3598, %v3595
    %v3680 = vpack.c.b16 %v3599, %v3596
    %v3681 = vpack.c.b16 %v3603, %v3600
    %v3682 = vpack.c.b16 %v3604, %v3601
    %v3683 = vpack.c.b16 %v3605, %v3602
    %v3684 = vpack.c.b16 %v3609, %v3606
    %v3685 = vpack.c.b16 %v3610, %v3607
    %v3686 = vpack.c.b16 %v3611, %v3608
    %v3687 = vpack.c.b16 %v3615, %v3612
    %v3688 = vpack.c.b16 %v3616, %v3613
    %v3689 = vpack.c.b16 %v3617, %v3614
    %v3690 = vpack.c.b16 %v3621, %v3618
    %v3691 = vpack.c.b16 %v3622, %v3619
    %v3692 = vpack.c.b16 %v3623, %v3620
    %v3693 = vpack.c.b16 %v3627, %v3624
    %v3694 = vpack.c.b16 %v3628, %v3625
    %v3695 = vpack.c.b16 %v3629, %v3626
    %v3696 = vpack.c.b16 %v3633, %v3630
    %v3697 = vpack.c.b16 %v3634, %v3631
    %v3698 = vpack.c.b16 %v3635, %v3632
    %v3699 = vpack.c.b16 %v3639, %v3636
    %v3700 = vpack.c.b16 %v3640, %v3637
    %v3701 = vpack.c.b16 %v3641, %v3638
    %v3702 = vpack.c.b16 %v3645, %v3642
    %v3703 = vpack.c.b16 %v3646, %v3643
    %v3704 = vpack.c.b16 %v3647, %v3644
    %v3705 = vpack.c.b16 %v3651, %v3648
    %v3706 = vpack.c.b16 %v3652, %v3649
    %v3707 = vpack.c.b16 %v3653, %v3650
    %v3708 = vpack.c.b16 %v3657, %v3654
    %v3709 = vpack.c.b16 %v3658, %v3655
    %v3710 = vpack.c.b16 %v3659, %v3656
    %v3711 = vpack.c.b16 %v3663, %v3660
    %v3712 = vpack.c.b16 %v3664, %v3661
    %v3713 = vpack.c.b16 %v3665, %v3662
    %3762 = vmatprep.subr.bf16.mxu0 %v3688
    %3763 = vmatpush1.bf16.msra.mxu0 %v3687
    %3764 = vmatprep.subr.bf16.mxu0 %v3685
    %3765 = vmatpush1.bf16.msra.mxu0 %v3684
    %3766 = vmatprep.subr.bf16.mxu0 %v3682
    %3767 = vmatpush1.bf16.msra.mxu0 %v3681
    %3768 = vmatprep.subr.bf16.mxu0 %v3679
    %3769 = vmatpush1.bf16.msra.mxu0 %v3678
    %3770 = vmatprep.subr.bf16.mxu0 %v3676
    %3771 = vmatpush1.bf16.msra.mxu0 %v3675
    %3772 = vmatprep.subr.bf16.mxu0 %v3673
    %3773 = vmatpush1.bf16.msra.mxu0 %v3672
    %3774 = vmatprep.subr.bf16.mxu0 %v3670
    %3775 = vmatpush1.bf16.msra.mxu0 %v3669
    %3776 = vmatprep.subr.bf16.mxu0 %v3667
    %3777 = vmatpush1.bf16.msra.mxu0 %v3666
    %3778 = vmatprep.subr.bf16.mxu0 %v3712
    %3779 = vmatpush2.bf16.msra.mxu0 %v3711
    %3780 = vmatprep.subr.bf16.mxu0 %v3709
    %3781 = vmatpush2.bf16.msra.mxu0 %v3708
    %3782 = vmatprep.subr.bf16.mxu0 %v3706
    %3783 = vmatpush2.bf16.msra.mxu0 %v3705
    %3784 = vmatprep.subr.bf16.mxu0 %v3703
    %3785 = vmatpush2.bf16.msra.mxu0 %v3702
    %3786 = vmatprep.subr.bf16.mxu0 %v3700
    %3787 = vmatpush2.bf16.msra.mxu0 %v3699
    %3788 = vmatprep.subr.bf16.mxu0 %v3697
    %3789 = vmatpush2.bf16.msra.mxu0 %v3696
    %3790 = vmatprep.subr.bf16.mxu0 %v3694
    %3791 = vmatpush2.bf16.msra.mxu0 %v3693
    %3792 = vmatprep.subr.bf16.mxu0 %v3691
    %3793 = vmatpush2.bf16.msra.mxu0 %v3690
    %3794 = vmatprep.mubr.bf16.mxu0 %v2824
    %3795 = vmatmul.mubr.bf16.gmra.mxu0 %v2823
    %v3796 = vpop.f32.mrf.mxu0
    %v3797 = vadd.f32 %v3370, %v3796
    %v3798 = vpop.f32.mrf.mxu0
    %v3799 = vadd.f32 %v3372, %v3798
    %v3800 = vpop.f32.mrf.mxu0
    %v3801 = vadd.f32 %v3374, %v3800
    %v3802 = vpop.f32.mrf.mxu0
    %v3803 = vadd.f32 %v3376, %v3802
    %3804 = vmatprep.mubr.bf16.mxu0 %v2826
    %3805 = vmatmul.mubr.bf16.gmra.mxu0 %v2825
    %v3806 = vpop.f32.mrf.mxu0
    %v3807 = vadd.f32 %v3380, %v3806
    %v3808 = vpop.f32.mrf.mxu0
    %v3809 = vadd.f32 %v3382, %v3808
    %v3810 = vpop.f32.mrf.mxu0
    %v3811 = vadd.f32 %v3384, %v3810
    %v3812 = vpop.f32.mrf.mxu0
    %v3813 = vadd.f32 %v3386, %v3812
    %3814 = vmatprep.mubr.bf16.mxu0 %v2828
    %3815 = vmatmul.mubr.bf16.gmra.mxu0 %v2827
    %v3816 = vpop.f32.mrf.mxu0
    %v3817 = vadd.f32 %v3390, %v3816
    %v3818 = vpop.f32.mrf.mxu0
    %v3819 = vadd.f32 %v3392, %v3818
    %v3820 = vpop.f32.mrf.mxu0
    %v3821 = vadd.f32 %v3394, %v3820
    %v3822 = vpop.f32.mrf.mxu0
    %v3823 = vadd.f32 %v3396, %v3822
    %3824 = vmatprep.mubr.bf16.mxu0 %v2830
    %3825 = vmatmul.mubr.bf16.gmra.mxu0 %v2829
    %v3826 = vpop.f32.mrf.mxu0
    %v3827 = vadd.f32 %v3400, %v3826
    %v3828 = vpop.f32.mrf.mxu0
    %v3829 = vadd.f32 %v3402, %v3828
    %v3830 = vpop.f32.mrf.mxu0
    %v3831 = vadd.f32 %v3404, %v3830
    %v3832 = vpop.f32.mrf.mxu0
    %v3833 = vadd.f32 %v3406, %v3832
    %3834 = vmatprep.mubr.bf16.mxu0 %v2832
    %3835 = vmatmul.mubr.bf16.gmra.mxu0 %v2831
    %v3836 = vpop.f32.mrf.mxu0
    %v3837 = vadd.f32 %v3410, %v3836
    %v3838 = vpop.f32.mrf.mxu0
    %v3839 = vadd.f32 %v3412, %v3838
    %v3840 = vpop.f32.mrf.mxu0
    %v3841 = vadd.f32 %v3414, %v3840
    %v3842 = vpop.f32.mrf.mxu0
    %v3843 = vadd.f32 %v3416, %v3842
    %3844 = vmatprep.mubr.bf16.mxu0 %v2834
    %3845 = vmatmul.mubr.bf16.gmra.mxu0 %v2833
    %v3846 = vpop.f32.mrf.mxu0
    %v3847 = vadd.f32 %v3420, %v3846
    %v3848 = vpop.f32.mrf.mxu0
    %v3849 = vadd.f32 %v3422, %v3848
    %v3850 = vpop.f32.mrf.mxu0
    %v3851 = vpop.f32.mrf.mxu0
    %3852 = vdwg.mxu0
    %3853 = vmatprep.subr.bf16.mxu0 0
    %3854 = vmatpush1.bf16.msra.mxu0 %v3689
    %3855 = vmatprep.subr.bf16.mxu0 0
    %3856 = vmatpush1.bf16.msra.mxu0 %v3686
    %3857 = vmatprep.subr.bf16.mxu0 0
    %3858 = vmatpush1.bf16.msra.mxu0 %v3683
    %3859 = vmatprep.subr.bf16.mxu0 0
    %3860 = vmatpush1.bf16.msra.mxu0 %v3680
    %3861 = vmatprep.subr.bf16.mxu0 0
    %3862 = vmatpush1.bf16.msra.mxu0 %v3677
    %3863 = vmatprep.subr.bf16.mxu0 0
    %3864 = vmatpush1.bf16.msra.mxu0 %v3674
    %3865 = vmatprep.subr.bf16.mxu0 0
    %3866 = vmatpush1.bf16.msra.mxu0 %v3671
    %3867 = vmatprep.subr.bf16.mxu0 0
    %3868 = vmatpush1.bf16.msra.mxu0 %v3668
    %3869 = vmatprep.subr.bf16.mxu0 0
    %3870 = vmatpush2.bf16.msra.mxu0 %v3713
    %3871 = vmatprep.subr.bf16.mxu0 0
    %3872 = vmatpush2.bf16.msra.mxu0 %v3710
    %3873 = vmatprep.subr.bf16.mxu0 0
    %3874 = vmatpush2.bf16.msra.mxu0 %v3707
    %3875 = vmatprep.subr.bf16.mxu0 0
    %3876 = vmatpush2.bf16.msra.mxu0 %v3704
    %3877 = vmatprep.subr.bf16.mxu0 0
    %3878 = vmatpush2.bf16.msra.mxu0 %v3701
    %3879 = vmatprep.subr.bf16.mxu0 0
    %3880 = vmatpush2.bf16.msra.mxu0 %v3698
    %3881 = vmatprep.subr.bf16.mxu0 0
    %3882 = vmatpush2.bf16.msra.mxu0 %v3695
    %3883 = vmatprep.subr.bf16.mxu0 0
    %3884 = vmatpush2.bf16.msra.mxu0 %v3692
    %3885 = vmatprep.mubr.bf16.mxu0 %v2824
    %3886 = vmatmul.mubr.bf16.gmra.mxu0 %v2823
    %v3887 = vpop.f32.mrf.mxu0
    %v3888 = vadd.f32 %v3461, %v3887
    %v3889 = vpop.f32.mrf.mxu0
    %v3890 = vpop.f32.mrf.mxu0
    %v3891 = vadd.f32 %v3464, %v3890
    %v3892 = vpop.f32.mrf.mxu0
    %3893 = vmatprep.mubr.bf16.mxu0 %v2826
    %3894 = vmatmul.mubr.bf16.gmra.mxu0 %v2825
    %v3895 = vpop.f32.mrf.mxu0
    %v3896 = vadd.f32 %v3469, %v3895
    %v3897 = vpop.f32.mrf.mxu0
    %v3898 = vpop.f32.mrf.mxu0
    %v3899 = vadd.f32 %v3472, %v3898
    %v3900 = vpop.f32.mrf.mxu0
    %3901 = vmatprep.mubr.bf16.mxu0 %v2828
    %3902 = vmatmul.mubr.bf16.gmra.mxu0 %v2827
    %v3903 = vpop.f32.mrf.mxu0
    %v3904 = vadd.f32 %v3477, %v3903
    %v3905 = vpop.f32.mrf.mxu0
    %v3906 = vpop.f32.mrf.mxu0
    %v3907 = vadd.f32 %v3480, %v3906
    %v3908 = vpop.f32.mrf.mxu0
    %3909 = vmatprep.mubr.bf16.mxu0 %v2830
    %3910 = vmatmul.mubr.bf16.gmra.mxu0 %v2829
    %v3911 = vpop.f32.mrf.mxu0
    %v3912 = vadd.f32 %v3485, %v3911
    %v3913 = vpop.f32.mrf.mxu0
    %v3914 = vpop.f32.mrf.mxu0
    %v3915 = vadd.f32 %v3488, %v3914
    %v3916 = vpop.f32.mrf.mxu0
    %3917 = vmatprep.mubr.bf16.mxu0 %v2832
    %3918 = vmatmul.mubr.bf16.gmra.mxu0 %v2831
    %v3919 = vpop.f32.mrf.mxu0
    %v3920 = vadd.f32 %v3493, %v3919
    %v3921 = vpop.f32.mrf.mxu0
    %v3922 = vpop.f32.mrf.mxu0
    %v3923 = vadd.f32 %v3496, %v3922
    %v3924 = vpop.f32.mrf.mxu0
    %3925 = vmatprep.mubr.bf16.mxu0 %v2834
    %3926 = vmatmul.mubr.bf16.gmra.mxu0 %v2833
    %v3927 = vpop.f32.mrf.mxu0
    %v3928 = vadd.f32 %v3501, %v3927
    %v3929 = vpop.f32.mrf.mxu0
    %v3930 = vpop.f32.mrf.mxu0
    %v3931 = vpop.f32.mrf.mxu0
    %3932 = vdwg.mxu0
    %v3933 = vld [vmem:[#allocation4] sm:$0xfc]
    %v3934 = vld [vmem:[#allocation4 + $0x8] sm:$0xfc]
    %v3935 = vld [vmem:[#allocation4 + $0xa0] sm:$0x3f]
    %v3936 = vld [vmem:[#allocation4 + $0xa8] sm:$0x3f]
    %v3937 = vpack.c.bf16 %v2803, %v3933
    %v3938 = vpack.c.bf16 %v2804, %v3934
    %v3939 = vpack.c.bf16 %v3935, %v3935
    %v3940 = vpack.c.bf16 %v3936, %v3936
    %s3941 = scalar_lea.vmem [#allocation17], 768
    %v3942 = vld [vmem:[%s3941] sm:$0xff]
    %v3943 = vld [vmem:[%s3941 + $0x8] sm:$0xf]
    %v3944 = vld [vmem:[%s3941 + $0xc] sm:$0xff]
    %v3945 = vld [vmem:[%s3941 + $0x14] sm:$0xf]
    %v3946 = vld [vmem:[%s3941 + $0x18] sm:$0xff]
    %v3947 = vld [vmem:[%s3941 + $0x20] sm:$0xf]
    %v3948 = vld [vmem:[%s3941 + $0x24] sm:$0xff]
    %v3949 = vld [vmem:[%s3941 + $0x2c] sm:$0xf]
    %v3950 = vld [vmem:[%s3941 + $0x30] sm:$0xff]
    %v3951 = vld [vmem:[%s3941 + $0x38] sm:$0xf]
    %v3952 = vld [vmem:[%s3941 + $0x3c] sm:$0xff]
    %v3953 = vld [vmem:[%s3941 + $0x44] sm:$0xf]
    %v3954 = vld [vmem:[%s3941 + $0x48] sm:$0xff]
    %v3955 = vld [vmem:[%s3941 + $0x50] sm:$0xf]
    %v3956 = vld [vmem:[%s3941 + $0x54] sm:$0xff]
    %v3957 = vld [vmem:[%s3941 + $0x5c] sm:$0xf]
    %v3958 = vld [vmem:[%s3941 + $0x60] sm:$0xff]
    %v3959 = vld [vmem:[%s3941 + $0x68] sm:$0xf]
    %v3960 = vld [vmem:[%s3941 + $0x6c] sm:$0xff]
    %v3961 = vld [vmem:[%s3941 + $0x74] sm:$0xf]
    %v3962 = vld [vmem:[%s3941 + $0x78] sm:$0xff]
    %v3963 = vld [vmem:[%s3941 + $0x80] sm:$0xf]
    %v3964 = vld [vmem:[%s3941 + $0x84] sm:$0xff]
    %v3965 = vld [vmem:[%s3941 + $0x8c] sm:$0xf]
    %v3966 = vld [vmem:[%s3941 + $0x90] sm:$0xff]
    %v3967 = vld [vmem:[%s3941 + $0x98] sm:$0xf]
    %v3968 = vld [vmem:[%s3941 + $0x9c] sm:$0xff]
    %v3969 = vld [vmem:[%s3941 + $0xa4] sm:$0xf]
    %v3970 = vld [vmem:[%s3941 + $0xa8] sm:$0xff]
    %v3971 = vld [vmem:[%s3941 + $0xb0] sm:$0xf]
    %v3972 = vld [vmem:[%s3941 + $0xb4] sm:$0xff]
    %v3973 = vld [vmem:[%s3941 + $0xbc] sm:$0xf]
    %v3974 = vld [vmem:[%s3941 + $0xc0] sm:$0xff]
    %v3975 = vld [vmem:[%s3941 + $0xc8] sm:$0xf]
    %v3976 = vld [vmem:[%s3941 + $0xcc] sm:$0xff]
    %v3977 = vld [vmem:[%s3941 + $0xd4] sm:$0xf]
    %v3978 = vld [vmem:[%s3941 + $0xd8] sm:$0xff]
    %v3979 = vld [vmem:[%s3941 + $0xe0] sm:$0xf]
    %v3980 = vld [vmem:[%s3941 + $0xe4] sm:$0xff]
    %v3981 = vld [vmem:[%s3941 + $0xec] sm:$0xf]
    %v3982 = vld [vmem:[%s3941 + $0xf0] sm:$0xff]
    %v3983 = vld [vmem:[%s3941 + $0xf8] sm:$0xf]
    %v3984 = vld [vmem:[%s3941 + $0xfc] sm:$0xff]
    %v3985 = vld [vmem:[%s3941 + $0x104] sm:$0xf]
    %v3986 = vld [vmem:[%s3941 + $0x108] sm:$0xff]
    %v3987 = vld [vmem:[%s3941 + $0x110] sm:$0xf]
    %v3988 = vld [vmem:[%s3941 + $0x114] sm:$0xff]
    %v3989 = vld [vmem:[%s3941 + $0x11c] sm:$0xf]
    %v3990 = vld [vmem:[%s3941 + $0x120] sm:$0xff]
    %v3991 = vld [vmem:[%s3941 + $0x128] sm:$0xf]
    %v3992 = vld [vmem:[%s3941 + $0x12c] sm:$0xff]
    %v3993 = vld [vmem:[%s3941 + $0x134] sm:$0xf]
    %v3994 = vld [vmem:[%s3941 + $0x138] sm:$0xff]
    %v3995 = vld [vmem:[%s3941 + $0x140] sm:$0xf]
    %v3996 = vld [vmem:[%s3941 + $0x144] sm:$0xff]
    %v3997 = vld [vmem:[%s3941 + $0x14c] sm:$0xf]
    %v3998 = vld [vmem:[%s3941 + $0x150] sm:$0xff]
    %v3999 = vld [vmem:[%s3941 + $0x158] sm:$0xf]
    %v4000 = vld [vmem:[%s3941 + $0x15c] sm:$0xff]
    %v4001 = vld [vmem:[%s3941 + $0x164] sm:$0xf]
    %v4002 = vld [vmem:[%s3941 + $0x168] sm:$0xff]
    %v4003 = vld [vmem:[%s3941 + $0x170] sm:$0xf]
    %v4004 = vld [vmem:[%s3941 + $0x174] sm:$0xff]
    %v4005 = vld [vmem:[%s3941 + $0x17c] sm:$0xf]
    %vm4018 = vcmask 1046528
    %v4019 = vrot.slane %v3937, 1
    %v4020 = vrot.slane %v2825, 1
    %v4021 = vsel %vm4018, %v4019, %v4020
    %v4022 = vrot.slane %v3938, 1
    %v4023 = vrot.slane %v2826, 1
    %v4024 = vsel %vm4018, %v4022, %v4023
    %v4025 = vrot.slane %v2827, 1
    %v4026 = vsel %vm4018, %v4020, %v4025
    %v4027 = vrot.slane %v2828, 1
    %v4028 = vsel %vm4018, %v4023, %v4027
    %v4029 = vrot.slane %v2829, 1
    %v4030 = vsel %vm4018, %v4025, %v4029
    %v4031 = vrot.slane %v2830, 1
    %v4032 = vsel %vm4018, %v4027, %v4031
    %v4033 = vrot.slane %v2831, 1
    %v4034 = vsel %vm4018, %v4029, %v4033
    %v4035 = vrot.slane %v2832, 1
    %v4036 = vsel %vm4018, %v4031, %v4035
    %v4037 = vrot.slane %v3939, 1
    %v4038 = vsel %vm4018, %v4033, %v4037
    %v4039 = vrot.slane %v3940, 1
    %v4040 = vsel %vm4018, %v4035, %v4039
    %v4117 = vunpack.c.l.b16 %v3942
    %v4118 = vunpack.c.h.b16 %v3942
    %v4119 = vunpack.c.l.b16 %v3943
    %v4120 = vunpack.c.l.b16 %v3944
    %v4121 = vunpack.c.h.b16 %v3944
    %v4122 = vunpack.c.l.b16 %v3945
    %v4123 = vunpack.c.l.b16 %v3946
    %v4124 = vunpack.c.h.b16 %v3946
    %v4125 = vunpack.c.l.b16 %v3947
    %v4126 = vunpack.c.l.b16 %v3948
    %v4127 = vunpack.c.h.b16 %v3948
    %v4128 = vunpack.c.l.b16 %v3949
    %v4129 = vunpack.c.l.b16 %v3950
    %v4130 = vunpack.c.h.b16 %v3950
    %v4131 = vunpack.c.l.b16 %v3951
    %v4132 = vunpack.c.l.b16 %v3952
    %v4133 = vunpack.c.h.b16 %v3952
    %v4134 = vunpack.c.l.b16 %v3953
    %v4135 = vunpack.c.l.b16 %v3954
    %v4136 = vunpack.c.h.b16 %v3954
    %v4137 = vunpack.c.l.b16 %v3955
    %v4138 = vunpack.c.l.b16 %v3956
    %v4139 = vunpack.c.h.b16 %v3956
    %v4140 = vunpack.c.l.b16 %v3957
    %v4141 = vunpack.c.l.b16 %v3958
    %v4142 = vunpack.c.h.b16 %v3958
    %v4143 = vunpack.c.l.b16 %v3959
    %v4144 = vunpack.c.l.b16 %v3960
    %v4145 = vunpack.c.h.b16 %v3960
    %v4146 = vunpack.c.l.b16 %v3961
    %v4147 = vunpack.c.l.b16 %v3962
    %v4148 = vunpack.c.h.b16 %v3962
    %v4149 = vunpack.c.l.b16 %v3963
    %v4150 = vunpack.c.l.b16 %v3964
    %v4151 = vunpack.c.h.b16 %v3964
    %v4152 = vunpack.c.l.b16 %v3965
    %v4153 = vunpack.c.l.b16 %v3966
    %v4154 = vunpack.c.h.b16 %v3966
    %v4155 = vunpack.c.l.b16 %v3967
    %v4156 = vunpack.c.l.b16 %v3968
    %v4157 = vunpack.c.h.b16 %v3968
    %v4158 = vunpack.c.l.b16 %v3969
    %v4159 = vunpack.c.l.b16 %v3970
    %v4160 = vunpack.c.h.b16 %v3970
    %v4161 = vunpack.c.l.b16 %v3971
    %v4162 = vunpack.c.l.b16 %v3972
    %v4163 = vunpack.c.h.b16 %v3972
    %v4164 = vunpack.c.l.b16 %v3973
    %v4165 = vunpack.c.l.b16 %v3974
    %v4166 = vunpack.c.h.b16 %v3974
    %v4167 = vunpack.c.l.b16 %v3975
    %v4168 = vunpack.c.l.b16 %v3976
    %v4169 = vunpack.c.h.b16 %v3976
    %v4170 = vunpack.c.l.b16 %v3977
    %v4171 = vunpack.c.l.b16 %v3978
    %v4172 = vunpack.c.h.b16 %v3978
    %v4173 = vunpack.c.l.b16 %v3979
    %v4174 = vunpack.c.l.b16 %v3980
    %v4175 = vunpack.c.h.b16 %v3980
    %v4176 = vunpack.c.l.b16 %v3981
    %v4177 = vunpack.c.l.b16 %v3982
    %v4178 = vunpack.c.h.b16 %v3982
    %v4179 = vunpack.c.l.b16 %v3983
    %v4180 = vunpack.c.l.b16 %v3984
    %v4181 = vunpack.c.h.b16 %v3984
    %v4182 = vunpack.c.l.b16 %v3985
    %v4183 = vunpack.c.l.b16 %v3986
    %v4184 = vunpack.c.h.b16 %v3986
    %v4185 = vunpack.c.l.b16 %v3987
    %v4186 = vunpack.c.l.b16 %v3988
    %v4187 = vunpack.c.h.b16 %v3988
    %v4188 = vunpack.c.l.b16 %v3989
    %v4189 = vunpack.c.l.b16 %v3990
    %v4190 = vunpack.c.h.b16 %v3990
    %v4191 = vunpack.c.l.b16 %v3991
    %v4192 = vunpack.c.l.b16 %v3992
    %v4193 = vunpack.c.h.b16 %v3992
    %v4194 = vunpack.c.l.b16 %v3993
    %v4195 = vunpack.c.l.b16 %v3994
    %v4196 = vunpack.c.h.b16 %v3994
    %v4197 = vunpack.c.l.b16 %v3995
    %v4198 = vunpack.c.l.b16 %v3996
    %v4199 = vunpack.c.h.b16 %v3996
    %v4200 = vunpack.c.l.b16 %v3997
    %v4201 = vunpack.c.l.b16 %v3998
    %v4202 = vunpack.c.h.b16 %v3998
    %v4203 = vunpack.c.l.b16 %v3999
    %v4204 = vunpack.c.l.b16 %v4000
    %v4205 = vunpack.c.h.b16 %v4000
    %v4206 = vunpack.c.l.b16 %v4001
    %v4207 = vunpack.c.l.b16 %v4002
    %v4208 = vunpack.c.h.b16 %v4002
    %v4209 = vunpack.c.l.b16 %v4003
    %v4210 = vunpack.c.l.b16 %v4004
    %v4211 = vunpack.c.h.b16 %v4004
    %v4212 = vunpack.c.l.b16 %v4005
    %v4213 = vpack.c.b16 %v4120, %v4117
    %v4214 = vpack.c.b16 %v4121, %v4118
    %v4215 = vpack.c.b16 %v4122, %v4119
    %v4216 = vpack.c.b16 %v4126, %v4123
    %v4217 = vpack.c.b16 %v4127, %v4124
    %v4218 = vpack.c.b16 %v4128, %v4125
    %v4219 = vpack.c.b16 %v4132, %v4129
    %v4220 = vpack.c.b16 %v4133, %v4130
    %v4221 = vpack.c.b16 %v4134, %v4131
    %v4222 = vpack.c.b16 %v4138, %v4135
    %v4223 = vpack.c.b16 %v4139, %v4136
    %v4224 = vpack.c.b16 %v4140, %v4137
    %v4225 = vpack.c.b16 %v4144, %v4141
    %v4226 = vpack.c.b16 %v4145, %v4142
    %v4227 = vpack.c.b16 %v4146, %v4143
    %v4228 = vpack.c.b16 %v4150, %v4147
    %v4229 = vpack.c.b16 %v4151, %v4148
    %v4230 = vpack.c.b16 %v4152, %v4149
    %v4231 = vpack.c.b16 %v4156, %v4153
    %v4232 = vpack.c.b16 %v4157, %v4154
    %v4233 = vpack.c.b16 %v4158, %v4155
    %v4234 = vpack.c.b16 %v4162, %v4159
    %v4235 = vpack.c.b16 %v4163, %v4160
    %v4236 = vpack.c.b16 %v4164, %v4161
    %v4237 = vpack.c.b16 %v4168, %v4165
    %v4238 = vpack.c.b16 %v4169, %v4166
    %v4239 = vpack.c.b16 %v4170, %v4167
    %v4240 = vpack.c.b16 %v4174, %v4171
    %v4241 = vpack.c.b16 %v4175, %v4172
    %v4242 = vpack.c.b16 %v4176, %v4173
    %v4243 = vpack.c.b16 %v4180, %v4177
    %v4244 = vpack.c.b16 %v4181, %v4178
    %v4245 = vpack.c.b16 %v4182, %v4179
    %v4246 = vpack.c.b16 %v4186, %v4183
    %v4247 = vpack.c.b16 %v4187, %v4184
    %v4248 = vpack.c.b16 %v4188, %v4185
    %v4249 = vpack.c.b16 %v4192, %v4189
    %v4250 = vpack.c.b16 %v4193, %v4190
    %v4251 = vpack.c.b16 %v4194, %v4191
    %v4252 = vpack.c.b16 %v4198, %v4195
    %v4253 = vpack.c.b16 %v4199, %v4196
    %v4254 = vpack.c.b16 %v4200, %v4197
    %v4255 = vpack.c.b16 %v4204, %v4201
    %v4256 = vpack.c.b16 %v4205, %v4202
    %v4257 = vpack.c.b16 %v4206, %v4203
    %v4258 = vpack.c.b16 %v4210, %v4207
    %v4259 = vpack.c.b16 %v4211, %v4208
    %v4260 = vpack.c.b16 %v4212, %v4209
    %4309 = vmatprep.subr.bf16.mxu0 %v4235
    %4310 = vmatpush1.bf16.msra.mxu0 %v4234
    %4311 = vmatprep.subr.bf16.mxu0 %v4232
    %4312 = vmatpush1.bf16.msra.mxu0 %v4231
    %4313 = vmatprep.subr.bf16.mxu0 %v4229
    %4314 = vmatpush1.bf16.msra.mxu0 %v4228
    %4315 = vmatprep.subr.bf16.mxu0 %v4226
    %4316 = vmatpush1.bf16.msra.mxu0 %v4225
    %4317 = vmatprep.subr.bf16.mxu0 %v4223
    %4318 = vmatpush1.bf16.msra.mxu0 %v4222
    %4319 = vmatprep.subr.bf16.mxu0 %v4220
    %4320 = vmatpush1.bf16.msra.mxu0 %v4219
    %4321 = vmatprep.subr.bf16.mxu0 %v4217
    %4322 = vmatpush1.bf16.msra.mxu0 %v4216
    %4323 = vmatprep.subr.bf16.mxu0 %v4214
    %4324 = vmatpush1.bf16.msra.mxu0 %v4213
    %4325 = vmatprep.subr.bf16.mxu0 %v4259
    %4326 = vmatpush2.bf16.msra.mxu0 %v4258
    %4327 = vmatprep.subr.bf16.mxu0 %v4256
    %4328 = vmatpush2.bf16.msra.mxu0 %v4255
    %4329 = vmatprep.subr.bf16.mxu0 %v4253
    %4330 = vmatpush2.bf16.msra.mxu0 %v4252
    %4331 = vmatprep.subr.bf16.mxu0 %v4250
    %4332 = vmatpush2.bf16.msra.mxu0 %v4249
    %4333 = vmatprep.subr.bf16.mxu0 %v4247
    %4334 = vmatpush2.bf16.msra.mxu0 %v4246
    %4335 = vmatprep.subr.bf16.mxu0 %v4244
    %4336 = vmatpush2.bf16.msra.mxu0 %v4243
    %4337 = vmatprep.subr.bf16.mxu0 %v4241
    %4338 = vmatpush2.bf16.msra.mxu0 %v4240
    %4339 = vmatprep.subr.bf16.mxu0 %v4238
    %4340 = vmatpush2.bf16.msra.mxu0 %v4237
    %4341 = vmatprep.mubr.bf16.mxu0 %v4024
    %4342 = vmatmul.mubr.bf16.gmra.mxu0 %v4021
    %v4343 = vpop.f32.mrf.mxu0
    %v4344 = vadd.f32 0.0, %v4343
    %v4345 = vpop.f32.mrf.mxu0
    %v4346 = vadd.f32 0.0, %v4345
    %v4347 = vpop.f32.mrf.mxu0
    %v4348 = vadd.f32 0.0, %v4347
    %v4349 = vpop.f32.mrf.mxu0
    %v4350 = vadd.f32 0.0, %v4349
    %4351 = vmatprep.mubr.bf16.mxu0 %v4028
    %4352 = vmatmul.mubr.bf16.gmra.mxu0 %v4026
    %v4353 = vpop.f32.mrf.mxu0
    %v4354 = vadd.f32 0.0, %v4353
    %v4355 = vpop.f32.mrf.mxu0
    %v4356 = vadd.f32 0.0, %v4355
    %v4357 = vpop.f32.mrf.mxu0
    %v4358 = vadd.f32 0.0, %v4357
    %v4359 = vpop.f32.mrf.mxu0
    %v4360 = vadd.f32 0.0, %v4359
    %4361 = vmatprep.mubr.bf16.mxu0 %v4032
    %4362 = vmatmul.mubr.bf16.gmra.mxu0 %v4030
    %v4363 = vpop.f32.mrf.mxu0
    %v4364 = vadd.f32 0.0, %v4363
    %v4365 = vpop.f32.mrf.mxu0
    %v4366 = vadd.f32 0.0, %v4365
    %v4367 = vpop.f32.mrf.mxu0
    %v4368 = vadd.f32 0.0, %v4367
    %v4369 = vpop.f32.mrf.mxu0
    %v4370 = vadd.f32 0.0, %v4369
    %4371 = vmatprep.mubr.bf16.mxu0 %v4036
    %4372 = vmatmul.mubr.bf16.gmra.mxu0 %v4034
    %v4373 = vpop.f32.mrf.mxu0
    %v4374 = vadd.f32 0.0, %v4373
    %v4375 = vpop.f32.mrf.mxu0
    %v4376 = vadd.f32 0.0, %v4375
    %v4377 = vpop.f32.mrf.mxu0
    %v4378 = vadd.f32 0.0, %v4377
    %v4379 = vpop.f32.mrf.mxu0
    %v4380 = vadd.f32 0.0, %v4379
    %4381 = vmatprep.mubr.bf16.mxu0 %v4040
    %4382 = vmatmul.mubr.bf16.gmra.mxu0 %v4038
    %v4383 = vpop.f32.mrf.mxu0
    %v4384 = vadd.f32 0.0, %v4383
    %v4385 = vpop.f32.mrf.mxu0
    %v4386 = vadd.f32 0.0, %v4385
    %v4387 = vpop.f32.mrf.mxu0
    %v4388 = vadd.f32 0.0, %v4387
    %v4389 = vpop.f32.mrf.mxu0
    %v4390 = vadd.f32 0.0, %v4389
    %4391 = vmatprep.mubr.bf16.mxu0 %v4039
    %4392 = vmatmul.mubr.bf16.gmra.mxu0 %v4037
    %v4393 = vpop.f32.mrf.mxu0
    %v4394 = vadd.f32 0.0, %v4393
    %v4395 = vpop.f32.mrf.mxu0
    %v4396 = vadd.f32 0.0, %v4395
    %v4397 = vpop.f32.mrf.mxu0
    %v4398 = vpop.f32.mrf.mxu0
    %4399 = vdwg.mxu0
    %4400 = vmatprep.subr.bf16.mxu0 0
    %4401 = vmatpush1.bf16.msra.mxu0 %v4236
    %4402 = vmatprep.subr.bf16.mxu0 0
    %4403 = vmatpush1.bf16.msra.mxu0 %v4233
    %4404 = vmatprep.subr.bf16.mxu0 0
    %4405 = vmatpush1.bf16.msra.mxu0 %v4230
    %4406 = vmatprep.subr.bf16.mxu0 0
    %4407 = vmatpush1.bf16.msra.mxu0 %v4227
    %4408 = vmatprep.subr.bf16.mxu0 0
    %4409 = vmatpush1.bf16.msra.mxu0 %v4224
    %4410 = vmatprep.subr.bf16.mxu0 0
    %4411 = vmatpush1.bf16.msra.mxu0 %v4221
    %4412 = vmatprep.subr.bf16.mxu0 0
    %4413 = vmatpush1.bf16.msra.mxu0 %v4218
    %4414 = vmatprep.subr.bf16.mxu0 0
    %4415 = vmatpush1.bf16.msra.mxu0 %v4215
    %4416 = vmatprep.subr.bf16.mxu0 0
    %4417 = vmatpush2.bf16.msra.mxu0 %v4260
    %4418 = vmatprep.subr.bf16.mxu0 0
    %4419 = vmatpush2.bf16.msra.mxu0 %v4257
    %4420 = vmatprep.subr.bf16.mxu0 0
    %4421 = vmatpush2.bf16.msra.mxu0 %v4254
    %4422 = vmatprep.subr.bf16.mxu0 0
    %4423 = vmatpush2.bf16.msra.mxu0 %v4251
    %4424 = vmatprep.subr.bf16.mxu0 0
    %4425 = vmatpush2.bf16.msra.mxu0 %v4248
    %4426 = vmatprep.subr.bf16.mxu0 0
    %4427 = vmatpush2.bf16.msra.mxu0 %v4245
    %4428 = vmatprep.subr.bf16.mxu0 0
    %4429 = vmatpush2.bf16.msra.mxu0 %v4242
    %4430 = vmatprep.subr.bf16.mxu0 0
    %4431 = vmatpush2.bf16.msra.mxu0 %v4239
    %4432 = vmatprep.mubr.bf16.mxu0 %v4024
    %4433 = vmatmul.mubr.bf16.gmra.mxu0 %v4021
    %v4434 = vpop.f32.mrf.mxu0
    %v4435 = vadd.f32 0.0, %v4434
    %v4436 = vpop.f32.mrf.mxu0
    %v4437 = vpop.f32.mrf.mxu0
    %v4438 = vadd.f32 0.0, %v4437
    %v4439 = vpop.f32.mrf.mxu0
    %4440 = vmatprep.mubr.bf16.mxu0 %v4028
    %4441 = vmatmul.mubr.bf16.gmra.mxu0 %v4026
    %v4442 = vpop.f32.mrf.mxu0
    %v4443 = vadd.f32 0.0, %v4442
    %v4444 = vpop.f32.mrf.mxu0
    %v4445 = vpop.f32.mrf.mxu0
    %v4446 = vadd.f32 0.0, %v4445
    %v4447 = vpop.f32.mrf.mxu0
    %4448 = vmatprep.mubr.bf16.mxu0 %v4032
    %4449 = vmatmul.mubr.bf16.gmra.mxu0 %v4030
    %v4450 = vpop.f32.mrf.mxu0
    %v4451 = vadd.f32 0.0, %v4450
    %v4452 = vpop.f32.mrf.mxu0
    %v4453 = vpop.f32.mrf.mxu0
    %v4454 = vadd.f32 0.0, %v4453
    %v4455 = vpop.f32.mrf.mxu0
    %4456 = vmatprep.mubr.bf16.mxu0 %v4036
    %4457 = vmatmul.mubr.bf16.gmra.mxu0 %v4034
    %v4458 = vpop.f32.mrf.mxu0
    %v4459 = vadd.f32 0.0, %v4458
    %v4460 = vpop.f32.mrf.mxu0
    %v4461 = vpop.f32.mrf.mxu0
    %v4462 = vadd.f32 0.0, %v4461
    %v4463 = vpop.f32.mrf.mxu0
    %4464 = vmatprep.mubr.bf16.mxu0 %v4040
    %4465 = vmatmul.mubr.bf16.gmra.mxu0 %v4038
    %v4466 = vpop.f32.mrf.mxu0
    %v4467 = vadd.f32 0.0, %v4466
    %v4468 = vpop.f32.mrf.mxu0
    %v4469 = vpop.f32.mrf.mxu0
    %v4470 = vadd.f32 0.0, %v4469
    %v4471 = vpop.f32.mrf.mxu0
    %4472 = vmatprep.mubr.bf16.mxu0 %v4039
    %4473 = vmatmul.mubr.bf16.gmra.mxu0 %v4037
    %v4474 = vpop.f32.mrf.mxu0
    %v4475 = vadd.f32 0.0, %v4474
    %v4476 = vpop.f32.mrf.mxu0
    %v4477 = vpop.f32.mrf.mxu0
    %v4478 = vpop.f32.mrf.mxu0
    %4479 = vdwg.mxu0
    %v4480 = vadd.f32 %v3797, %v4344
    %v4481 = vadd.f32 %v3799, %v4346
    %v4482 = vadd.f32 %v3888, %v4435
    %v4483 = vadd.f32 %v3801, %v4348
    %v4484 = vadd.f32 %v3803, %v4350
    %v4485 = vadd.f32 %v3891, %v4438
    %v4486 = vadd.f32 %v3807, %v4354
    %v4487 = vadd.f32 %v3809, %v4356
    %v4488 = vadd.f32 %v3896, %v4443
    %v4489 = vadd.f32 %v3811, %v4358
    %v4490 = vadd.f32 %v3813, %v4360
    %v4491 = vadd.f32 %v3899, %v4446
    %v4492 = vadd.f32 %v3817, %v4364
    %v4493 = vadd.f32 %v3819, %v4366
    %v4494 = vadd.f32 %v3904, %v4451
    %v4495 = vadd.f32 %v3821, %v4368
    %v4496 = vadd.f32 %v3823, %v4370
    %v4497 = vadd.f32 %v3907, %v4454
    %v4498 = vadd.f32 %v3827, %v4374
    %v4499 = vadd.f32 %v3829, %v4376
    %v4500 = vadd.f32 %v3912, %v4459
    %v4501 = vadd.f32 %v3831, %v4378
    %v4502 = vadd.f32 %v3833, %v4380
    %v4503 = vadd.f32 %v3915, %v4462
    %v4504 = vadd.f32 %v3837, %v4384
    %v4505 = vadd.f32 %v3839, %v4386
    %v4506 = vadd.f32 %v3920, %v4467
    %v4507 = vadd.f32 %v3841, %v4388
    %v4508 = vadd.f32 %v3843, %v4390
    %v4509 = vadd.f32 %v3923, %v4470
    %v4510 = vadd.f32 %v3847, %v4394
    %v4511 = vadd.f32 %v3849, %v4396
    %v4512 = vadd.f32 %v3928, %v4475
    %v4513 = vld [vmem:[#allocation4] sm:$0xf8]
    %v4514 = vld [vmem:[#allocation4 + $0x8] sm:$0xf8]
    %v4515 = vld [vmem:[#allocation4 + $0xa0] sm:$0x7f]
    %v4516 = vld [vmem:[#allocation4 + $0xa8] sm:$0x7f]
    %v4517 = vpack.c.bf16 %v2803, %v4513
    %v4518 = vpack.c.bf16 %v2804, %v4514
    %v4519 = vpack.c.bf16 %v4515, %v4515
    %v4520 = vpack.c.bf16 %v4516, %v4516
    %s4521 = scalar_lea.vmem [#allocation17], 1152
    %v4522 = vld [vmem:[%s4521] sm:$0xff]
    %v4523 = vld [vmem:[%s4521 + $0x8] sm:$0xf]
    %v4524 = vld [vmem:[%s4521 + $0xc] sm:$0xff]
    %v4525 = vld [vmem:[%s4521 + $0x14] sm:$0xf]
    %v4526 = vld [vmem:[%s4521 + $0x18] sm:$0xff]
    %v4527 = vld [vmem:[%s4521 + $0x20] sm:$0xf]
    %v4528 = vld [vmem:[%s4521 + $0x24] sm:$0xff]
    %v4529 = vld [vmem:[%s4521 + $0x2c] sm:$0xf]
    %v4530 = vld [vmem:[%s4521 + $0x30] sm:$0xff]
    %v4531 = vld [vmem:[%s4521 + $0x38] sm:$0xf]
    %v4532 = vld [vmem:[%s4521 + $0x3c] sm:$0xff]
    %v4533 = vld [vmem:[%s4521 + $0x44] sm:$0xf]
    %v4534 = vld [vmem:[%s4521 + $0x48] sm:$0xff]
    %v4535 = vld [vmem:[%s4521 + $0x50] sm:$0xf]
    %v4536 = vld [vmem:[%s4521 + $0x54] sm:$0xff]
    %v4537 = vld [vmem:[%s4521 + $0x5c] sm:$0xf]
    %v4538 = vld [vmem:[%s4521 + $0x60] sm:$0xff]
    %v4539 = vld [vmem:[%s4521 + $0x68] sm:$0xf]
    %v4540 = vld [vmem:[%s4521 + $0x6c] sm:$0xff]
    %v4541 = vld [vmem:[%s4521 + $0x74] sm:$0xf]
    %v4542 = vld [vmem:[%s4521 + $0x78] sm:$0xff]
    %v4543 = vld [vmem:[%s4521 + $0x80] sm:$0xf]
    %v4544 = vld [vmem:[%s4521 + $0x84] sm:$0xff]
    %v4545 = vld [vmem:[%s4521 + $0x8c] sm:$0xf]
    %v4546 = vld [vmem:[%s4521 + $0x90] sm:$0xff]
    %v4547 = vld [vmem:[%s4521 + $0x98] sm:$0xf]
    %v4548 = vld [vmem:[%s4521 + $0x9c] sm:$0xff]
    %v4549 = vld [vmem:[%s4521 + $0xa4] sm:$0xf]
    %v4550 = vld [vmem:[%s4521 + $0xa8] sm:$0xff]
    %v4551 = vld [vmem:[%s4521 + $0xb0] sm:$0xf]
    %v4552 = vld [vmem:[%s4521 + $0xb4] sm:$0xff]
    %v4553 = vld [vmem:[%s4521 + $0xbc] sm:$0xf]
    %v4554 = vld [vmem:[%s4521 + $0xc0] sm:$0xff]
    %v4555 = vld [vmem:[%s4521 + $0xc8] sm:$0xf]
    %v4556 = vld [vmem:[%s4521 + $0xcc] sm:$0xff]
    %v4557 = vld [vmem:[%s4521 + $0xd4] sm:$0xf]
    %v4558 = vld [vmem:[%s4521 + $0xd8] sm:$0xff]
    %v4559 = vld [vmem:[%s4521 + $0xe0] sm:$0xf]
    %v4560 = vld [vmem:[%s4521 + $0xe4] sm:$0xff]
    %v4561 = vld [vmem:[%s4521 + $0xec] sm:$0xf]
    %v4562 = vld [vmem:[%s4521 + $0xf0] sm:$0xff]
    %v4563 = vld [vmem:[%s4521 + $0xf8] sm:$0xf]
    %v4564 = vld [vmem:[%s4521 + $0xfc] sm:$0xff]
    %v4565 = vld [vmem:[%s4521 + $0x104] sm:$0xf]
    %v4566 = vld [vmem:[%s4521 + $0x108] sm:$0xff]
    %v4567 = vld [vmem:[%s4521 + $0x110] sm:$0xf]
    %v4568 = vld [vmem:[%s4521 + $0x114] sm:$0xff]
    %v4569 = vld [vmem:[%s4521 + $0x11c] sm:$0xf]
    %v4570 = vld [vmem:[%s4521 + $0x120] sm:$0xff]
    %v4571 = vld [vmem:[%s4521 + $0x128] sm:$0xf]
    %v4572 = vld [vmem:[%s4521 + $0x12c] sm:$0xff]
    %v4573 = vld [vmem:[%s4521 + $0x134] sm:$0xf]
    %v4574 = vld [vmem:[%s4521 + $0x138] sm:$0xff]
    %v4575 = vld [vmem:[%s4521 + $0x140] sm:$0xf]
    %v4576 = vld [vmem:[%s4521 + $0x144] sm:$0xff]
    %v4577 = vld [vmem:[%s4521 + $0x14c] sm:$0xf]
    %v4578 = vld [vmem:[%s4521 + $0x150] sm:$0xff]
    %v4579 = vld [vmem:[%s4521 + $0x158] sm:$0xf]
    %v4580 = vld [vmem:[%s4521 + $0x15c] sm:$0xff]
    %v4581 = vld [vmem:[%s4521 + $0x164] sm:$0xf]
    %v4582 = vld [vmem:[%s4521 + $0x168] sm:$0xff]
    %v4583 = vld [vmem:[%s4521 + $0x170] sm:$0xf]
    %v4584 = vld [vmem:[%s4521 + $0x174] sm:$0xff]
    %v4585 = vld [vmem:[%s4521 + $0x17c] sm:$0xf]
    %vm4586 = vsmask.f32 6400
    %v4588 = vshrl.u32 %v4517, 16
    %v4590 = vrot.slane %v4588, 1
    %v4591 = vshll.u32 %v4517, 16
    %v4593 = vrot.slane %v4591, 2
    %v4594 = vor.u32 %v4590, %v4593
    %v4595 = vrot.slane %v2997, 1
    %v4596 = vrot.slane %v2981, 2
    %v4597 = vor.u32 %v4595, %v4596
    %v4598 = vsel %vm4586, %v4594, %v4597
    %v4600 = vshrl.u32 %v4518, 16
    %v4602 = vrot.slane %v4600, 1
    %v4603 = vshll.u32 %v4518, 16
    %v4605 = vrot.slane %v4603, 2
    %v4606 = vor.u32 %v4602, %v4605
    %v4607 = vrot.slane %v3005, 1
    %v4608 = vrot.slane %v2993, 2
    %v4609 = vor.u32 %v4607, %v4608
    %v4610 = vsel %vm4586, %v4606, %v4609
    %v4611 = vrot.slane %v3013, 1
    %v4612 = vrot.slane %v3001, 2
    %v4613 = vor.u32 %v4611, %v4612
    %v4614 = vsel %vm4586, %v4597, %v4613
    %v4615 = vrot.slane %v3021, 1
    %v4616 = vrot.slane %v3009, 2
    %v4617 = vor.u32 %v4615, %v4616
    %v4618 = vsel %vm4586, %v4609, %v4617
    %v4619 = vrot.slane %v3029, 1
    %v4620 = vrot.slane %v3017, 2
    %v4621 = vor.u32 %v4619, %v4620
    %v4622 = vsel %vm4586, %v4613, %v4621
    %v4623 = vrot.slane %v3037, 1
    %v4624 = vrot.slane %v3025, 2
    %v4625 = vor.u32 %v4623, %v4624
    %v4626 = vsel %vm4586, %v4617, %v4625
    %v4627 = vrot.slane %v3045, 1
    %v4628 = vrot.slane %v3033, 2
    %v4629 = vor.u32 %v4627, %v4628
    %v4630 = vsel %vm4586, %v4621, %v4629
    %v4631 = vrot.slane %v3053, 1
    %v4632 = vrot.slane %v3041, 2
    %v4633 = vor.u32 %v4631, %v4632
    %v4634 = vsel %vm4586, %v4625, %v4633
    %v4636 = vshrl.u32 %v4519, 16
    %v4638 = vrot.slane %v4636, 1
    %v4639 = vshll.u32 %v4519, 16
    %v4641 = vrot.slane %v4639, 2
    %v4642 = vor.u32 %v4638, %v4641
    %v4643 = vsel %vm4586, %v4629, %v4642
    %v4645 = vshrl.u32 %v4520, 16
    %v4647 = vrot.slane %v4645, 1
    %v4648 = vshll.u32 %v4520, 16
    %v4650 = vrot.slane %v4648, 2
    %v4651 = vor.u32 %v4647, %v4650
    %v4652 = vsel %vm4586, %v4633, %v4651
    %v4729 = vunpack.c.l.b16 %v4522
    %v4730 = vunpack.c.h.b16 %v4522
    %v4731 = vunpack.c.l.b16 %v4523
    %v4732 = vunpack.c.l.b16 %v4524
    %v4733 = vunpack.c.h.b16 %v4524
    %v4734 = vunpack.c.l.b16 %v4525
    %v4735 = vunpack.c.l.b16 %v4526
    %v4736 = vunpack.c.h.b16 %v4526
    %v4737 = vunpack.c.l.b16 %v4527
    %v4738 = vunpack.c.l.b16 %v4528
    %v4739 = vunpack.c.h.b16 %v4528
    %v4740 = vunpack.c.l.b16 %v4529
    %v4741 = vunpack.c.l.b16 %v4530
    %v4742 = vunpack.c.h.b16 %v4530
    %v4743 = vunpack.c.l.b16 %v4531
    %v4744 = vunpack.c.l.b16 %v4532
    %v4745 = vunpack.c.h.b16 %v4532
    %v4746 = vunpack.c.l.b16 %v4533
    %v4747 = vunpack.c.l.b16 %v4534
    %v4748 = vunpack.c.h.b16 %v4534
    %v4749 = vunpack.c.l.b16 %v4535
    %v4750 = vunpack.c.l.b16 %v4536
    %v4751 = vunpack.c.h.b16 %v4536
    %v4752 = vunpack.c.l.b16 %v4537
    %v4753 = vunpack.c.l.b16 %v4538
    %v4754 = vunpack.c.h.b16 %v4538
    %v4755 = vunpack.c.l.b16 %v4539
    %v4756 = vunpack.c.l.b16 %v4540
    %v4757 = vunpack.c.h.b16 %v4540
    %v4758 = vunpack.c.l.b16 %v4541
    %v4759 = vunpack.c.l.b16 %v4542
    %v4760 = vunpack.c.h.b16 %v4542
    %v4761 = vunpack.c.l.b16 %v4543
    %v4762 = vunpack.c.l.b16 %v4544
    %v4763 = vunpack.c.h.b16 %v4544
    %v4764 = vunpack.c.l.b16 %v4545
    %v4765 = vunpack.c.l.b16 %v4546
    %v4766 = vunpack.c.h.b16 %v4546
    %v4767 = vunpack.c.l.b16 %v4547
    %v4768 = vunpack.c.l.b16 %v4548
    %v4769 = vunpack.c.h.b16 %v4548
    %v4770 = vunpack.c.l.b16 %v4549
    %v4771 = vunpack.c.l.b16 %v4550
    %v4772 = vunpack.c.h.b16 %v4550
    %v4773 = vunpack.c.l.b16 %v4551
    %v4774 = vunpack.c.l.b16 %v4552
    %v4775 = vunpack.c.h.b16 %v4552
    %v4776 = vunpack.c.l.b16 %v4553
    %v4777 = vunpack.c.l.b16 %v4554
    %v4778 = vunpack.c.h.b16 %v4554
    %v4779 = vunpack.c.l.b16 %v4555
    %v4780 = vunpack.c.l.b16 %v4556
    %v4781 = vunpack.c.h.b16 %v4556
    %v4782 = vunpack.c.l.b16 %v4557
    %v4783 = vunpack.c.l.b16 %v4558
    %v4784 = vunpack.c.h.b16 %v4558
    %v4785 = vunpack.c.l.b16 %v4559
    %v4786 = vunpack.c.l.b16 %v4560
    %v4787 = vunpack.c.h.b16 %v4560
    %v4788 = vunpack.c.l.b16 %v4561
    %v4789 = vunpack.c.l.b16 %v4562
    %v4790 = vunpack.c.h.b16 %v4562
    %v4791 = vunpack.c.l.b16 %v4563
    %v4792 = vunpack.c.l.b16 %v4564
    %v4793 = vunpack.c.h.b16 %v4564
    %v4794 = vunpack.c.l.b16 %v4565
    %v4795 = vunpack.c.l.b16 %v4566
    %v4796 = vunpack.c.h.b16 %v4566
    %v4797 = vunpack.c.l.b16 %v4567
    %v4798 = vunpack.c.l.b16 %v4568
    %v4799 = vunpack.c.h.b16 %v4568
    %v4800 = vunpack.c.l.b16 %v4569
    %v4801 = vunpack.c.l.b16 %v4570
    %v4802 = vunpack.c.h.b16 %v4570
    %v4803 = vunpack.c.l.b16 %v4571
    %v4804 = vunpack.c.l.b16 %v4572
    %v4805 = vunpack.c.h.b16 %v4572
    %v4806 = vunpack.c.l.b16 %v4573
    %v4807 = vunpack.c.l.b16 %v4574
    %v4808 = vunpack.c.h.b16 %v4574
    %v4809 = vunpack.c.l.b16 %v4575
    %v4810 = vunpack.c.l.b16 %v4576
    %v4811 = vunpack.c.h.b16 %v4576
    %v4812 = vunpack.c.l.b16 %v4577
    %v4813 = vunpack.c.l.b16 %v4578
    %v4814 = vunpack.c.h.b16 %v4578
    %v4815 = vunpack.c.l.b16 %v4579
    %v4816 = vunpack.c.l.b16 %v4580
    %v4817 = vunpack.c.h.b16 %v4580
    %v4818 = vunpack.c.l.b16 %v4581
    %v4819 = vunpack.c.l.b16 %v4582
    %v4820 = vunpack.c.h.b16 %v4582
    %v4821 = vunpack.c.l.b16 %v4583
    %v4822 = vunpack.c.l.b16 %v4584
    %v4823 = vunpack.c.h.b16 %v4584
    %v4824 = vunpack.c.l.b16 %v4585
    %v4825 = vpack.c.b16 %v4732, %v4729
    %v4826 = vpack.c.b16 %v4733, %v4730
    %v4827 = vpack.c.b16 %v4734, %v4731
    %v4828 = vpack.c.b16 %v4738, %v4735
    %v4829 = vpack.c.b16 %v4739, %v4736
    %v4830 = vpack.c.b16 %v4740, %v4737
    %v4831 = vpack.c.b16 %v4744, %v4741
    %v4832 = vpack.c.b16 %v4745, %v4742
    %v4833 = vpack.c.b16 %v4746, %v4743
    %v4834 = vpack.c.b16 %v4750, %v4747
    %v4835 = vpack.c.b16 %v4751, %v4748
    %v4836 = vpack.c.b16 %v4752, %v4749
    %v4837 = vpack.c.b16 %v4756, %v4753
    %v4838 = vpack.c.b16 %v4757, %v4754
    %v4839 = vpack.c.b16 %v4758, %v4755
    %v4840 = vpack.c.b16 %v4762, %v4759
    %v4841 = vpack.c.b16 %v4763, %v4760
    %v4842 = vpack.c.b16 %v4764, %v4761
    %v4843 = vpack.c.b16 %v4768, %v4765
    %v4844 = vpack.c.b16 %v4769, %v4766
    %v4845 = vpack.c.b16 %v4770, %v4767
    %v4846 = vpack.c.b16 %v4774, %v4771
    %v4847 = vpack.c.b16 %v4775, %v4772
    %v4848 = vpack.c.b16 %v4776, %v4773
    %v4849 = vpack.c.b16 %v4780, %v4777
    %v4850 = vpack.c.b16 %v4781, %v4778
    %v4851 = vpack.c.b16 %v4782, %v4779
    %v4852 = vpack.c.b16 %v4786, %v4783
    %v4853 = vpack.c.b16 %v4787, %v4784
    %v4854 = vpack.c.b16 %v4788, %v4785
    %v4855 = vpack.c.b16 %v4792, %v4789
    %v4856 = vpack.c.b16 %v4793, %v4790
    %v4857 = vpack.c.b16 %v4794, %v4791
    %v4858 = vpack.c.b16 %v4798, %v4795
    %v4859 = vpack.c.b16 %v4799, %v4796
    %v4860 = vpack.c.b16 %v4800, %v4797
    %v4861 = vpack.c.b16 %v4804, %v4801
    %v4862 = vpack.c.b16 %v4805, %v4802
    %v4863 = vpack.c.b16 %v4806, %v4803
    %v4864 = vpack.c.b16 %v4810, %v4807
    %v4865 = vpack.c.b16 %v4811, %v4808
    %v4866 = vpack.c.b16 %v4812, %v4809
    %v4867 = vpack.c.b16 %v4816, %v4813
    %v4868 = vpack.c.b16 %v4817, %v4814
    %v4869 = vpack.c.b16 %v4818, %v4815
    %v4870 = vpack.c.b16 %v4822, %v4819
    %v4871 = vpack.c.b16 %v4823, %v4820
    %v4872 = vpack.c.b16 %v4824, %v4821
    %4921 = vmatprep.subr.bf16.mxu0 %v4847
    %4922 = vmatpush1.bf16.msra.mxu0 %v4846
    %4923 = vmatprep.subr.bf16.mxu0 %v4844
    %4924 = vmatpush1.bf16.msra.mxu0 %v4843
    %4925 = vmatprep.subr.bf16.mxu0 %v4841
    %4926 = vmatpush1.bf16.msra.mxu0 %v4840
    %4927 = vmatprep.subr.bf16.mxu0 %v4838
    %4928 = vmatpush1.bf16.msra.mxu0 %v4837
    %4929 = vmatprep.subr.bf16.mxu0 %v4835
    %4930 = vmatpush1.bf16.msra.mxu0 %v4834
    %4931 = vmatprep.subr.bf16.mxu0 %v4832
    %4932 = vmatpush1.bf16.msra.mxu0 %v4831
    %4933 = vmatprep.subr.bf16.mxu0 %v4829
    %4934 = vmatpush1.bf16.msra.mxu0 %v4828
    %4935 = vmatprep.subr.bf16.mxu0 %v4826
    %4936 = vmatpush1.bf16.msra.mxu0 %v4825
    %4937 = vmatprep.subr.bf16.mxu0 %v4871
    %4938 = vmatpush2.bf16.msra.mxu0 %v4870
    %4939 = vmatprep.subr.bf16.mxu0 %v4868
    %4940 = vmatpush2.bf16.msra.mxu0 %v4867
    %4941 = vmatprep.subr.bf16.mxu0 %v4865
    %4942 = vmatpush2.bf16.msra.mxu0 %v4864
    %4943 = vmatprep.subr.bf16.mxu0 %v4862
    %4944 = vmatpush2.bf16.msra.mxu0 %v4861
    %4945 = vmatprep.subr.bf16.mxu0 %v4859
    %4946 = vmatpush2.bf16.msra.mxu0 %v4858
    %4947 = vmatprep.subr.bf16.mxu0 %v4856
    %4948 = vmatpush2.bf16.msra.mxu0 %v4855
    %4949 = vmatprep.subr.bf16.mxu0 %v4853
    %4950 = vmatpush2.bf16.msra.mxu0 %v4852
    %4951 = vmatprep.subr.bf16.mxu0 %v4850
    %4952 = vmatpush2.bf16.msra.mxu0 %v4849
    %4953 = vmatprep.mubr.bf16.mxu0 %v4610
    %4954 = vmatmul.mubr.bf16.gmra.mxu0 %v4598
    %v4955 = vpop.f32.mrf.mxu0
    %v4956 = vadd.f32 0.0, %v4955
    %v4957 = vpop.f32.mrf.mxu0
    %v4958 = vadd.f32 0.0, %v4957
    %v4959 = vpop.f32.mrf.mxu0
    %v4960 = vadd.f32 0.0, %v4959
    %v4961 = vpop.f32.mrf.mxu0
    %v4962 = vadd.f32 0.0, %v4961
    %4963 = vmatprep.mubr.bf16.mxu0 %v4618
    %4964 = vmatmul.mubr.bf16.gmra.mxu0 %v4614
    %v4965 = vpop.f32.mrf.mxu0
    %v4966 = vadd.f32 0.0, %v4965
    %v4967 = vpop.f32.mrf.mxu0
    %v4968 = vadd.f32 0.0, %v4967
    %v4969 = vpop.f32.mrf.mxu0
    %v4970 = vadd.f32 0.0, %v4969
    %v4971 = vpop.f32.mrf.mxu0
    %v4972 = vadd.f32 0.0, %v4971
    %4973 = vmatprep.mubr.bf16.mxu0 %v4626
    %4974 = vmatmul.mubr.bf16.gmra.mxu0 %v4622
    %v4975 = vpop.f32.mrf.mxu0
    %v4976 = vadd.f32 0.0, %v4975
    %v4977 = vpop.f32.mrf.mxu0
    %v4978 = vadd.f32 0.0, %v4977
    %v4979 = vpop.f32.mrf.mxu0
    %v4980 = vadd.f32 0.0, %v4979
    %v4981 = vpop.f32.mrf.mxu0
    %v4982 = vadd.f32 0.0, %v4981
    %4983 = vmatprep.mubr.bf16.mxu0 %v4634
    %4984 = vmatmul.mubr.bf16.gmra.mxu0 %v4630
    %v4985 = vpop.f32.mrf.mxu0
    %v4986 = vadd.f32 0.0, %v4985
    %v4987 = vpop.f32.mrf.mxu0
    %v4988 = vadd.f32 0.0, %v4987
    %v4989 = vpop.f32.mrf.mxu0
    %v4990 = vadd.f32 0.0, %v4989
    %v4991 = vpop.f32.mrf.mxu0
    %v4992 = vadd.f32 0.0, %v4991
    %4993 = vmatprep.mubr.bf16.mxu0 %v4652
    %4994 = vmatmul.mubr.bf16.gmra.mxu0 %v4643
    %v4995 = vpop.f32.mrf.mxu0
    %v4996 = vadd.f32 0.0, %v4995
    %v4997 = vpop.f32.mrf.mxu0
    %v4998 = vadd.f32 0.0, %v4997
    %v4999 = vpop.f32.mrf.mxu0
    %v5000 = vadd.f32 0.0, %v4999
    %v5001 = vpop.f32.mrf.mxu0
    %v5002 = vadd.f32 0.0, %v5001
    %5003 = vmatprep.mubr.bf16.mxu0 %v4651
    %5004 = vmatmul.mubr.bf16.gmra.mxu0 %v4642
    %v5005 = vpop.f32.mrf.mxu0
    %v5006 = vadd.f32 0.0, %v5005
    %v5007 = vpop.f32.mrf.mxu0
    %v5008 = vadd.f32 0.0, %v5007
    %v5009 = vpop.f32.mrf.mxu0
    %v5010 = vpop.f32.mrf.mxu0
    %5011 = vdwg.mxu0
    %5012 = vmatprep.subr.bf16.mxu0 0
    %5013 = vmatpush1.bf16.msra.mxu0 %v4848
    %5014 = vmatprep.subr.bf16.mxu0 0
    %5015 = vmatpush1.bf16.msra.mxu0 %v4845
    %5016 = vmatprep.subr.bf16.mxu0 0
    %5017 = vmatpush1.bf16.msra.mxu0 %v4842
    %5018 = vmatprep.subr.bf16.mxu0 0
    %5019 = vmatpush1.bf16.msra.mxu0 %v4839
    %5020 = vmatprep.subr.bf16.mxu0 0
    %5021 = vmatpush1.bf16.msra.mxu0 %v4836
    %5022 = vmatprep.subr.bf16.mxu0 0
    %5023 = vmatpush1.bf16.msra.mxu0 %v4833
    %5024 = vmatprep.subr.bf16.mxu0 0
    %5025 = vmatpush1.bf16.msra.mxu0 %v4830
    %5026 = vmatprep.subr.bf16.mxu0 0
    %5027 = vmatpush1.bf16.msra.mxu0 %v4827
    %5028 = vmatprep.subr.bf16.mxu0 0
    %5029 = vmatpush2.bf16.msra.mxu0 %v4872
    %5030 = vmatprep.subr.bf16.mxu0 0
    %5031 = vmatpush2.bf16.msra.mxu0 %v4869
    %5032 = vmatprep.subr.bf16.mxu0 0
    %5033 = vmatpush2.bf16.msra.mxu0 %v4866
    %5034 = vmatprep.subr.bf16.mxu0 0
    %5035 = vmatpush2.bf16.msra.mxu0 %v4863
    %5036 = vmatprep.subr.bf16.mxu0 0
    %5037 = vmatpush2.bf16.msra.mxu0 %v4860
    %5038 = vmatprep.subr.bf16.mxu0 0
    %5039 = vmatpush2.bf16.msra.mxu0 %v4857
    %5040 = vmatprep.subr.bf16.mxu0 0
    %5041 = vmatpush2.bf16.msra.mxu0 %v4854
    %5042 = vmatprep.subr.bf16.mxu0 0
    %5043 = vmatpush2.bf16.msra.mxu0 %v4851
    %5044 = vmatprep.mubr.bf16.mxu0 %v4610
    %5045 = vmatmul.mubr.bf16.gmra.mxu0 %v4598
    %v5046 = vpop.f32.mrf.mxu0
    %v5047 = vadd.f32 0.0, %v5046
    %v5048 = vpop.f32.mrf.mxu0
    %v5049 = vpop.f32.mrf.mxu0
    %v5050 = vadd.f32 0.0, %v5049
    %v5051 = vpop.f32.mrf.mxu0
    %5052 = vmatprep.mubr.bf16.mxu0 %v4618
    %5053 = vmatmul.mubr.bf16.gmra.mxu0 %v4614
    %v5054 = vpop.f32.mrf.mxu0
    %v5055 = vadd.f32 0.0, %v5054
    %v5056 = vpop.f32.mrf.mxu0
    %v5057 = vpop.f32.mrf.mxu0
    %v5058 = vadd.f32 0.0, %v5057
    %v5059 = vpop.f32.mrf.mxu0
    %5060 = vmatprep.mubr.bf16.mxu0 %v4626
    %5061 = vmatmul.mubr.bf16.gmra.mxu0 %v4622
    %v5062 = vpop.f32.mrf.mxu0
    %v5063 = vadd.f32 0.0, %v5062
    %v5064 = vpop.f32.mrf.mxu0
    %v5065 = vpop.f32.mrf.mxu0
    %v5066 = vadd.f32 0.0, %v5065
    %v5067 = vpop.f32.mrf.mxu0
    %5068 = vmatprep.mubr.bf16.mxu0 %v4634
    %5069 = vmatmul.mubr.bf16.gmra.mxu0 %v4630
    %v5070 = vpop.f32.mrf.mxu0
    %v5071 = vadd.f32 0.0, %v5070
    %v5072 = vpop.f32.mrf.mxu0
    %v5073 = vpop.f32.mrf.mxu0
    %v5074 = vadd.f32 0.0, %v5073
    %v5075 = vpop.f32.mrf.mxu0
    %5076 = vmatprep.mubr.bf16.mxu0 %v4652
    %5077 = vmatmul.mubr.bf16.gmra.mxu0 %v4643
    %v5078 = vpop.f32.mrf.mxu0
    %v5079 = vadd.f32 0.0, %v5078
    %v5080 = vpop.f32.mrf.mxu0
    %v5081 = vpop.f32.mrf.mxu0
    %v5082 = vadd.f32 0.0, %v5081
    %v5083 = vpop.f32.mrf.mxu0
    %5084 = vmatprep.mubr.bf16.mxu0 %v4651
    %5085 = vmatmul.mubr.bf16.gmra.mxu0 %v4642
    %v5086 = vpop.f32.mrf.mxu0
    %v5087 = vadd.f32 0.0, %v5086
    %v5088 = vpop.f32.mrf.mxu0
    %v5089 = vpop.f32.mrf.mxu0
    %v5090 = vpop.f32.mrf.mxu0
    %5091 = vdwg.mxu0
    %v5092 = vadd.f32 %v4480, %v4956
    %v5093 = vadd.f32 %v4481, %v4958
    %v5094 = vadd.f32 %v4482, %v5047
    %v5095 = vadd.f32 %v4483, %v4960
    %v5096 = vadd.f32 %v4484, %v4962
    %v5097 = vadd.f32 %v4485, %v5050
    %v5098 = vadd.f32 %v4486, %v4966
    %v5099 = vadd.f32 %v4487, %v4968
    %v5100 = vadd.f32 %v4488, %v5055
    %v5101 = vadd.f32 %v4489, %v4970
    %v5102 = vadd.f32 %v4490, %v4972
    %v5103 = vadd.f32 %v4491, %v5058
    %v5104 = vadd.f32 %v4492, %v4976
    %v5105 = vadd.f32 %v4493, %v4978
    %v5106 = vadd.f32 %v4494, %v5063
    %v5107 = vadd.f32 %v4495, %v4980
    %v5108 = vadd.f32 %v4496, %v4982
    %v5109 = vadd.f32 %v4497, %v5066
    %v5110 = vadd.f32 %v4498, %v4986
    %v5111 = vadd.f32 %v4499, %v4988
    %v5112 = vadd.f32 %v4500, %v5071
    %v5113 = vadd.f32 %v4501, %v4990
    %v5114 = vadd.f32 %v4502, %v4992
    %v5115 = vadd.f32 %v4503, %v5074
    %v5116 = vadd.f32 %v4504, %v4996
    %v5117 = vadd.f32 %v4505, %v4998
    %v5118 = vadd.f32 %v4506, %v5079
    %v5119 = vadd.f32 %v4507, %v5000
    %v5120 = vadd.f32 %v4508, %v5002
    %v5121 = vadd.f32 %v4509, %v5082
    %v5122 = vadd.f32 %v4510, %v5006
    %v5123 = vadd.f32 %v4511, %v5008
    %v5124 = vadd.f32 %v4512, %v5087
    %v5125 = vld [vmem:[#allocation4] sm:$0xf0]
    %v5126 = vld [vmem:[#allocation4 + $0x8] sm:$0xf0]
    %v5127 = vld [vmem:[#allocation4 + $0xa0] sm:$0xff]
    %v5128 = vld [vmem:[#allocation4 + $0xa8] sm:$0xff]
    %v5129 = vpack.c.bf16 %v2803, %v5125
    %v5130 = vpack.c.bf16 %v2804, %v5126
    %v5131 = vpack.c.bf16 %v5127, %v5127
    %v5132 = vpack.c.bf16 %v5128, %v5128
    %s5133 = scalar_lea.vmem [#allocation17], 1536
    %v5134 = vld [vmem:[%s5133] sm:$0xff]
    %v5135 = vld [vmem:[%s5133 + $0x8] sm:$0xf]
    %v5136 = vld [vmem:[%s5133 + $0xc] sm:$0xff]
    %v5137 = vld [vmem:[%s5133 + $0x14] sm:$0xf]
    %v5138 = vld [vmem:[%s5133 + $0x18] sm:$0xff]
    %v5139 = vld [vmem:[%s5133 + $0x20] sm:$0xf]
    %v5140 = vld [vmem:[%s5133 + $0x24] sm:$0xff]
    %v5141 = vld [vmem:[%s5133 + $0x2c] sm:$0xf]
    %v5142 = vld [vmem:[%s5133 + $0x30] sm:$0xff]
    %v5143 = vld [vmem:[%s5133 + $0x38] sm:$0xf]
    %v5144 = vld [vmem:[%s5133 + $0x3c] sm:$0xff]
    %v5145 = vld [vmem:[%s5133 + $0x44] sm:$0xf]
    %v5146 = vld [vmem:[%s5133 + $0x48] sm:$0xff]
    %v5147 = vld [vmem:[%s5133 + $0x50] sm:$0xf]
    %v5148 = vld [vmem:[%s5133 + $0x54] sm:$0xff]
    %v5149 = vld [vmem:[%s5133 + $0x5c] sm:$0xf]
    %v5150 = vld [vmem:[%s5133 + $0x60] sm:$0xff]
    %v5151 = vld [vmem:[%s5133 + $0x68] sm:$0xf]
    %v5152 = vld [vmem:[%s5133 + $0x6c] sm:$0xff]
    %v5153 = vld [vmem:[%s5133 + $0x74] sm:$0xf]
    %v5154 = vld [vmem:[%s5133 + $0x78] sm:$0xff]
    %v5155 = vld [vmem:[%s5133 + $0x80] sm:$0xf]
    %v5156 = vld [vmem:[%s5133 + $0x84] sm:$0xff]
    %v5157 = vld [vmem:[%s5133 + $0x8c] sm:$0xf]
    %v5158 = vld [vmem:[%s5133 + $0x90] sm:$0xff]
    %v5159 = vld [vmem:[%s5133 + $0x98] sm:$0xf]
    %v5160 = vld [vmem:[%s5133 + $0x9c] sm:$0xff]
    %v5161 = vld [vmem:[%s5133 + $0xa4] sm:$0xf]
    %v5162 = vld [vmem:[%s5133 + $0xa8] sm:$0xff]
    %v5163 = vld [vmem:[%s5133 + $0xb0] sm:$0xf]
    %v5164 = vld [vmem:[%s5133 + $0xb4] sm:$0xff]
    %v5165 = vld [vmem:[%s5133 + $0xbc] sm:$0xf]
    %v5166 = vld [vmem:[%s5133 + $0xc0] sm:$0xff]
    %v5167 = vld [vmem:[%s5133 + $0xc8] sm:$0xf]
    %v5168 = vld [vmem:[%s5133 + $0xcc] sm:$0xff]
    %v5169 = vld [vmem:[%s5133 + $0xd4] sm:$0xf]
    %v5170 = vld [vmem:[%s5133 + $0xd8] sm:$0xff]
    %v5171 = vld [vmem:[%s5133 + $0xe0] sm:$0xf]
    %v5172 = vld [vmem:[%s5133 + $0xe4] sm:$0xff]
    %v5173 = vld [vmem:[%s5133 + $0xec] sm:$0xf]
    %v5174 = vld [vmem:[%s5133 + $0xf0] sm:$0xff]
    %v5175 = vld [vmem:[%s5133 + $0xf8] sm:$0xf]
    %v5176 = vld [vmem:[%s5133 + $0xfc] sm:$0xff]
    %v5177 = vld [vmem:[%s5133 + $0x104] sm:$0xf]
    %v5178 = vld [vmem:[%s5133 + $0x108] sm:$0xff]
    %v5179 = vld [vmem:[%s5133 + $0x110] sm:$0xf]
    %v5180 = vld [vmem:[%s5133 + $0x114] sm:$0xff]
    %v5181 = vld [vmem:[%s5133 + $0x11c] sm:$0xf]
    %v5182 = vld [vmem:[%s5133 + $0x120] sm:$0xff]
    %v5183 = vld [vmem:[%s5133 + $0x128] sm:$0xf]
    %v5184 = vld [vmem:[%s5133 + $0x12c] sm:$0xff]
    %v5185 = vld [vmem:[%s5133 + $0x134] sm:$0xf]
    %v5186 = vld [vmem:[%s5133 + $0x138] sm:$0xff]
    %v5187 = vld [vmem:[%s5133 + $0x140] sm:$0xf]
    %v5188 = vld [vmem:[%s5133 + $0x144] sm:$0xff]
    %v5189 = vld [vmem:[%s5133 + $0x14c] sm:$0xf]
    %v5190 = vld [vmem:[%s5133 + $0x150] sm:$0xff]
    %v5191 = vld [vmem:[%s5133 + $0x158] sm:$0xf]
    %v5192 = vld [vmem:[%s5133 + $0x15c] sm:$0xff]
    %v5193 = vld [vmem:[%s5133 + $0x164] sm:$0xf]
    %v5194 = vld [vmem:[%s5133 + $0x168] sm:$0xff]
    %v5195 = vld [vmem:[%s5133 + $0x170] sm:$0xf]
    %v5196 = vld [vmem:[%s5133 + $0x174] sm:$0xff]
    %v5197 = vld [vmem:[%s5133 + $0x17c] sm:$0xf]
    %vm5202 = vcmask 1045504
    %v5203 = vrot.slane %v5129, 2
    %v5204 = vrot.slane %v2825, 2
    %v5205 = vsel %vm5202, %v5203, %v5204
    %v5206 = vrot.slane %v5130, 2
    %v5207 = vrot.slane %v2826, 2
    %v5208 = vsel %vm5202, %v5206, %v5207
    %v5209 = vrot.slane %v2827, 2
    %v5210 = vsel %vm5202, %v5204, %v5209
    %v5211 = vrot.slane %v2828, 2
    %v5212 = vsel %vm5202, %v5207, %v5211
    %v5213 = vrot.slane %v2829, 2
    %v5214 = vsel %vm5202, %v5209, %v5213
    %v5215 = vrot.slane %v2830, 2
    %v5216 = vsel %vm5202, %v5211, %v5215
    %v5217 = vrot.slane %v2831, 2
    %v5218 = vsel %vm5202, %v5213, %v5217
    %v5219 = vrot.slane %v2832, 2
    %v5220 = vsel %vm5202, %v5215, %v5219
    %v5221 = vrot.slane %v5131, 2
    %v5222 = vsel %vm5202, %v5217, %v5221
    %v5223 = vrot.slane %v5132, 2
    %v5224 = vsel %vm5202, %v5219, %v5223
    %v5301 = vunpack.c.l.b16 %v5134
    %v5302 = vunpack.c.h.b16 %v5134
    %v5303 = vunpack.c.l.b16 %v5135
    %v5304 = vunpack.c.l.b16 %v5136
    %v5305 = vunpack.c.h.b16 %v5136
    %v5306 = vunpack.c.l.b16 %v5137
    %v5307 = vunpack.c.l.b16 %v5138
    %v5308 = vunpack.c.h.b16 %v5138
    %v5309 = vunpack.c.l.b16 %v5139
    %v5310 = vunpack.c.l.b16 %v5140
    %v5311 = vunpack.c.h.b16 %v5140
    %v5312 = vunpack.c.l.b16 %v5141
    %v5313 = vunpack.c.l.b16 %v5142
    %v5314 = vunpack.c.h.b16 %v5142
    %v5315 = vunpack.c.l.b16 %v5143
    %v5316 = vunpack.c.l.b16 %v5144
    %v5317 = vunpack.c.h.b16 %v5144
    %v5318 = vunpack.c.l.b16 %v5145
    %v5319 = vunpack.c.l.b16 %v5146
    %v5320 = vunpack.c.h.b16 %v5146
    %v5321 = vunpack.c.l.b16 %v5147
    %v5322 = vunpack.c.l.b16 %v5148
    %v5323 = vunpack.c.h.b16 %v5148
    %v5324 = vunpack.c.l.b16 %v5149
    %v5325 = vunpack.c.l.b16 %v5150
    %v5326 = vunpack.c.h.b16 %v5150
    %v5327 = vunpack.c.l.b16 %v5151
    %v5328 = vunpack.c.l.b16 %v5152
    %v5329 = vunpack.c.h.b16 %v5152
    %v5330 = vunpack.c.l.b16 %v5153
    %v5331 = vunpack.c.l.b16 %v5154
    %v5332 = vunpack.c.h.b16 %v5154
    %v5333 = vunpack.c.l.b16 %v5155
    %v5334 = vunpack.c.l.b16 %v5156
    %v5335 = vunpack.c.h.b16 %v5156
    %v5336 = vunpack.c.l.b16 %v5157
    %v5337 = vunpack.c.l.b16 %v5158
    %v5338 = vunpack.c.h.b16 %v5158
    %v5339 = vunpack.c.l.b16 %v5159
    %v5340 = vunpack.c.l.b16 %v5160
    %v5341 = vunpack.c.h.b16 %v5160
    %v5342 = vunpack.c.l.b16 %v5161
    %v5343 = vunpack.c.l.b16 %v5162
    %v5344 = vunpack.c.h.b16 %v5162
    %v5345 = vunpack.c.l.b16 %v5163
    %v5346 = vunpack.c.l.b16 %v5164
    %v5347 = vunpack.c.h.b16 %v5164
    %v5348 = vunpack.c.l.b16 %v5165
    %v5349 = vunpack.c.l.b16 %v5166
    %v5350 = vunpack.c.h.b16 %v5166
    %v5351 = vunpack.c.l.b16 %v5167
    %v5352 = vunpack.c.l.b16 %v5168
    %v5353 = vunpack.c.h.b16 %v5168
    %v5354 = vunpack.c.l.b16 %v5169
    %v5355 = vunpack.c.l.b16 %v5170
    %v5356 = vunpack.c.h.b16 %v5170
    %v5357 = vunpack.c.l.b16 %v5171
    %v5358 = vunpack.c.l.b16 %v5172
    %v5359 = vunpack.c.h.b16 %v5172
    %v5360 = vunpack.c.l.b16 %v5173
    %v5361 = vunpack.c.l.b16 %v5174
    %v5362 = vunpack.c.h.b16 %v5174
    %v5363 = vunpack.c.l.b16 %v5175
    %v5364 = vunpack.c.l.b16 %v5176
    %v5365 = vunpack.c.h.b16 %v5176
    %v5366 = vunpack.c.l.b16 %v5177
    %v5367 = vunpack.c.l.b16 %v5178
    %v5368 = vunpack.c.h.b16 %v5178
    %v5369 = vunpack.c.l.b16 %v5179
    %v5370 = vunpack.c.l.b16 %v5180
    %v5371 = vunpack.c.h.b16 %v5180
    %v5372 = vunpack.c.l.b16 %v5181
    %v5373 = vunpack.c.l.b16 %v5182
    %v5374 = vunpack.c.h.b16 %v5182
    %v5375 = vunpack.c.l.b16 %v5183
    %v5376 = vunpack.c.l.b16 %v5184
    %v5377 = vunpack.c.h.b16 %v5184
    %v5378 = vunpack.c.l.b16 %v5185
    %v5379 = vunpack.c.l.b16 %v5186
    %v5380 = vunpack.c.h.b16 %v5186
    %v5381 = vunpack.c.l.b16 %v5187
    %v5382 = vunpack.c.l.b16 %v5188
    %v5383 = vunpack.c.h.b16 %v5188
    %v5384 = vunpack.c.l.b16 %v5189
    %v5385 = vunpack.c.l.b16 %v5190
    %v5386 = vunpack.c.h.b16 %v5190
    %v5387 = vunpack.c.l.b16 %v5191
    %v5388 = vunpack.c.l.b16 %v5192
    %v5389 = vunpack.c.h.b16 %v5192
    %v5390 = vunpack.c.l.b16 %v5193
    %v5391 = vunpack.c.l.b16 %v5194
    %v5392 = vunpack.c.h.b16 %v5194
    %v5393 = vunpack.c.l.b16 %v5195
    %v5394 = vunpack.c.l.b16 %v5196
    %v5395 = vunpack.c.h.b16 %v5196
    %v5396 = vunpack.c.l.b16 %v5197
    %v5397 = vpack.c.b16 %v5304, %v5301
    %v5398 = vpack.c.b16 %v5305, %v5302
    %v5399 = vpack.c.b16 %v5306, %v5303
    %v5400 = vpack.c.b16 %v5310, %v5307
    %v5401 = vpack.c.b16 %v5311, %v5308
    %v5402 = vpack.c.b16 %v5312, %v5309
    %v5403 = vpack.c.b16 %v5316, %v5313
    %v5404 = vpack.c.b16 %v5317, %v5314
    %v5405 = vpack.c.b16 %v5318, %v5315
    %v5406 = vpack.c.b16 %v5322, %v5319
    %v5407 = vpack.c.b16 %v5323, %v5320
    %v5408 = vpack.c.b16 %v5324, %v5321
    %v5409 = vpack.c.b16 %v5328, %v5325
    %v5410 = vpack.c.b16 %v5329, %v5326
    %v5411 = vpack.c.b16 %v5330, %v5327
    %v5412 = vpack.c.b16 %v5334, %v5331
    %v5413 = vpack.c.b16 %v5335, %v5332
    %v5414 = vpack.c.b16 %v5336, %v5333
    %v5415 = vpack.c.b16 %v5340, %v5337
    %v5416 = vpack.c.b16 %v5341, %v5338
    %v5417 = vpack.c.b16 %v5342, %v5339
    %v5418 = vpack.c.b16 %v5346, %v5343
    %v5419 = vpack.c.b16 %v5347, %v5344
    %v5420 = vpack.c.b16 %v5348, %v5345
    %v5421 = vpack.c.b16 %v5352, %v5349
    %v5422 = vpack.c.b16 %v5353, %v5350
    %v5423 = vpack.c.b16 %v5354, %v5351
    %v5424 = vpack.c.b16 %v5358, %v5355
    %v5425 = vpack.c.b16 %v5359, %v5356
    %v5426 = vpack.c.b16 %v5360, %v5357
    %v5427 = vpack.c.b16 %v5364, %v5361
    %v5428 = vpack.c.b16 %v5365, %v5362
    %v5429 = vpack.c.b16 %v5366, %v5363
    %v5430 = vpack.c.b16 %v5370, %v5367
    %v5431 = vpack.c.b16 %v5371, %v5368
    %v5432 = vpack.c.b16 %v5372, %v5369
    %v5433 = vpack.c.b16 %v5376, %v5373
    %v5434 = vpack.c.b16 %v5377, %v5374
    %v5435 = vpack.c.b16 %v5378, %v5375
    %v5436 = vpack.c.b16 %v5382, %v5379
    %v5437 = vpack.c.b16 %v5383, %v5380
    %v5438 = vpack.c.b16 %v5384, %v5381
    %v5439 = vpack.c.b16 %v5388, %v5385
    %v5440 = vpack.c.b16 %v5389, %v5386
    %v5441 = vpack.c.b16 %v5390, %v5387
    %v5442 = vpack.c.b16 %v5394, %v5391
    %v5443 = vpack.c.b16 %v5395, %v5392
    %v5444 = vpack.c.b16 %v5396, %v5393
    %5493 = vmatprep.subr.bf16.mxu0 %v5419
    %5494 = vmatpush1.bf16.msra.mxu0 %v5418
    %5495 = vmatprep.subr.bf16.mxu0 %v5416
    %5496 = vmatpush1.bf16.msra.mxu0 %v5415
    %5497 = vmatprep.subr.bf16.mxu0 %v5413
    %5498 = vmatpush1.bf16.msra.mxu0 %v5412
    %5499 = vmatprep.subr.bf16.mxu0 %v5410
    %5500 = vmatpush1.bf16.msra.mxu0 %v5409
    %5501 = vmatprep.subr.bf16.mxu0 %v5407
    %5502 = vmatpush1.bf16.msra.mxu0 %v5406
    %5503 = vmatprep.subr.bf16.mxu0 %v5404
    %5504 = vmatpush1.bf16.msra.mxu0 %v5403
    %5505 = vmatprep.subr.bf16.mxu0 %v5401
    %5506 = vmatpush1.bf16.msra.mxu0 %v5400
    %5507 = vmatprep.subr.bf16.mxu0 %v5398
    %5508 = vmatpush1.bf16.msra.mxu0 %v5397
    %5509 = vmatprep.subr.bf16.mxu0 %v5443
    %5510 = vmatpush2.bf16.msra.mxu0 %v5442
    %5511 = vmatprep.subr.bf16.mxu0 %v5440
    %5512 = vmatpush2.bf16.msra.mxu0 %v5439
    %5513 = vmatprep.subr.bf16.mxu0 %v5437
    %5514 = vmatpush2.bf16.msra.mxu0 %v5436
    %5515 = vmatprep.subr.bf16.mxu0 %v5434
    %5516 = vmatpush2.bf16.msra.mxu0 %v5433
    %5517 = vmatprep.subr.bf16.mxu0 %v5431
    %5518 = vmatpush2.bf16.msra.mxu0 %v5430
    %5519 = vmatprep.subr.bf16.mxu0 %v5428
    %5520 = vmatpush2.bf16.msra.mxu0 %v5427
    %5521 = vmatprep.subr.bf16.mxu0 %v5425
    %5522 = vmatpush2.bf16.msra.mxu0 %v5424
    %5523 = vmatprep.subr.bf16.mxu0 %v5422
    %5524 = vmatpush2.bf16.msra.mxu0 %v5421
    %5525 = vmatprep.mubr.bf16.mxu0 %v5208
    %5526 = vmatmul.mubr.bf16.gmra.mxu0 %v5205
    %v5527 = vpop.f32.mrf.mxu0
    %v5528 = vadd.f32 0.0, %v5527
    %v5529 = vpop.f32.mrf.mxu0
    %v5530 = vadd.f32 0.0, %v5529
    %v5531 = vpop.f32.mrf.mxu0
    %v5532 = vadd.f32 0.0, %v5531
    %v5533 = vpop.f32.mrf.mxu0
    %v5534 = vadd.f32 0.0, %v5533
    %5535 = vmatprep.mubr.bf16.mxu0 %v5212
    %5536 = vmatmul.mubr.bf16.gmra.mxu0 %v5210
    %v5537 = vpop.f32.mrf.mxu0
    %v5538 = vadd.f32 0.0, %v5537
    %v5539 = vpop.f32.mrf.mxu0
    %v5540 = vadd.f32 0.0, %v5539
    %v5541 = vpop.f32.mrf.mxu0
    %v5542 = vadd.f32 0.0, %v5541
    %v5543 = vpop.f32.mrf.mxu0
    %v5544 = vadd.f32 0.0, %v5543
    %5545 = vmatprep.mubr.bf16.mxu0 %v5216
    %5546 = vmatmul.mubr.bf16.gmra.mxu0 %v5214
    %v5547 = vpop.f32.mrf.mxu0
    %v5548 = vadd.f32 0.0, %v5547
    %v5549 = vpop.f32.mrf.mxu0
    %v5550 = vadd.f32 0.0, %v5549
    %v5551 = vpop.f32.mrf.mxu0
    %v5552 = vadd.f32 0.0, %v5551
    %v5553 = vpop.f32.mrf.mxu0
    %v5554 = vadd.f32 0.0, %v5553
    %5555 = vmatprep.mubr.bf16.mxu0 %v5220
    %5556 = vmatmul.mubr.bf16.gmra.mxu0 %v5218
    %v5557 = vpop.f32.mrf.mxu0
    %v5558 = vadd.f32 0.0, %v5557
    %v5559 = vpop.f32.mrf.mxu0
    %v5560 = vadd.f32 0.0, %v5559
    %v5561 = vpop.f32.mrf.mxu0
    %v5562 = vadd.f32 0.0, %v5561
    %v5563 = vpop.f32.mrf.mxu0
    %v5564 = vadd.f32 0.0, %v5563
    %5565 = vmatprep.mubr.bf16.mxu0 %v5224
    %5566 = vmatmul.mubr.bf16.gmra.mxu0 %v5222
    %v5567 = vpop.f32.mrf.mxu0
    %v5568 = vadd.f32 0.0, %v5567
    %v5569 = vpop.f32.mrf.mxu0
    %v5570 = vadd.f32 0.0, %v5569
    %v5571 = vpop.f32.mrf.mxu0
    %v5572 = vadd.f32 0.0, %v5571
    %v5573 = vpop.f32.mrf.mxu0
    %v5574 = vadd.f32 0.0, %v5573
    %5575 = vmatprep.mubr.bf16.mxu0 %v5223
    %5576 = vmatmul.mubr.bf16.gmra.mxu0 %v5221
    %v5577 = vpop.f32.mrf.mxu0
    %v5578 = vadd.f32 0.0, %v5577
    %v5579 = vpop.f32.mrf.mxu0
    %v5580 = vadd.f32 0.0, %v5579
    %v5581 = vpop.f32.mrf.mxu0
    %v5582 = vpop.f32.mrf.mxu0
    %5583 = vdwg.mxu0
    %5584 = vmatprep.subr.bf16.mxu0 0
    %5585 = vmatpush1.bf16.msra.mxu0 %v5420
    %5586 = vmatprep.subr.bf16.mxu0 0
    %5587 = vmatpush1.bf16.msra.mxu0 %v5417
    %5588 = vmatprep.subr.bf16.mxu0 0
    %5589 = vmatpush1.bf16.msra.mxu0 %v5414
    %5590 = vmatprep.subr.bf16.mxu0 0
    %5591 = vmatpush1.bf16.msra.mxu0 %v5411
    %5592 = vmatprep.subr.bf16.mxu0 0
    %5593 = vmatpush1.bf16.msra.mxu0 %v5408
    %5594 = vmatprep.subr.bf16.mxu0 0
    %5595 = vmatpush1.bf16.msra.mxu0 %v5405
    %5596 = vmatprep.subr.bf16.mxu0 0
    %5597 = vmatpush1.bf16.msra.mxu0 %v5402
    %5598 = vmatprep.subr.bf16.mxu0 0
    %5599 = vmatpush1.bf16.msra.mxu0 %v5399
    %5600 = vmatprep.subr.bf16.mxu0 0
    %5601 = vmatpush2.bf16.msra.mxu0 %v5444
    %5602 = vmatprep.subr.bf16.mxu0 0
    %5603 = vmatpush2.bf16.msra.mxu0 %v5441
    %5604 = vmatprep.subr.bf16.mxu0 0
    %5605 = vmatpush2.bf16.msra.mxu0 %v5438
    %5606 = vmatprep.subr.bf16.mxu0 0
    %5607 = vmatpush2.bf16.msra.mxu0 %v5435
    %5608 = vmatprep.subr.bf16.mxu0 0
    %5609 = vmatpush2.bf16.msra.mxu0 %v5432
    %5610 = vmatprep.subr.bf16.mxu0 0
    %5611 = vmatpush2.bf16.msra.mxu0 %v5429
    %5612 = vmatprep.subr.bf16.mxu0 0
    %5613 = vmatpush2.bf16.msra.mxu0 %v5426
    %5614 = vmatprep.subr.bf16.mxu0 0
    %5615 = vmatpush2.bf16.msra.mxu0 %v5423
    %5616 = vmatprep.mubr.bf16.mxu0 %v5208
    %5617 = vmatmul.mubr.bf16.gmra.mxu0 %v5205
    %v5618 = vpop.f32.mrf.mxu0
    %v5619 = vadd.f32 0.0, %v5618
    %v5620 = vpop.f32.mrf.mxu0
    %v5621 = vpop.f32.mrf.mxu0
    %v5622 = vadd.f32 0.0, %v5621
    %v5623 = vpop.f32.mrf.mxu0
    %5624 = vmatprep.mubr.bf16.mxu0 %v5212
    %5625 = vmatmul.mubr.bf16.gmra.mxu0 %v5210
    %v5626 = vpop.f32.mrf.mxu0
    %v5627 = vadd.f32 0.0, %v5626
    %v5628 = vpop.f32.mrf.mxu0
    %v5629 = vpop.f32.mrf.mxu0
    %v5630 = vadd.f32 0.0, %v5629
    %v5631 = vpop.f32.mrf.mxu0
    %5632 = vmatprep.mubr.bf16.mxu0 %v5216
    %5633 = vmatmul.mubr.bf16.gmra.mxu0 %v5214
    %v5634 = vpop.f32.mrf.mxu0
    %v5635 = vadd.f32 0.0, %v5634
    %v5636 = vpop.f32.mrf.mxu0
    %v5637 = vpop.f32.mrf.mxu0
    %v5638 = vadd.f32 0.0, %v5637
    %v5639 = vpop.f32.mrf.mxu0
    %5640 = vmatprep.mubr.bf16.mxu0 %v5220
    %5641 = vmatmul.mubr.bf16.gmra.mxu0 %v5218
    %v5642 = vpop.f32.mrf.mxu0
    %v5643 = vadd.f32 0.0, %v5642
    %v5644 = vpop.f32.mrf.mxu0
    %v5645 = vpop.f32.mrf.mxu0
    %v5646 = vadd.f32 0.0, %v5645
    %v5647 = vpop.f32.mrf.mxu0
    %5648 = vmatprep.mubr.bf16.mxu0 %v5224
    %5649 = vmatmul.mubr.bf16.gmra.mxu0 %v5222
    %v5650 = vpop.f32.mrf.mxu0
    %v5651 = vadd.f32 0.0, %v5650
    %v5652 = vpop.f32.mrf.mxu0
    %v5653 = vpop.f32.mrf.mxu0
    %v5654 = vadd.f32 0.0, %v5653
    %v5655 = vpop.f32.mrf.mxu0
    %5656 = vmatprep.mubr.bf16.mxu0 %v5223
    %5657 = vmatmul.mubr.bf16.gmra.mxu0 %v5221
    %v5658 = vpop.f32.mrf.mxu0
    %v5659 = vadd.f32 0.0, %v5658
    %v5660 = vpop.f32.mrf.mxu0
    %v5661 = vpop.f32.mrf.mxu0
    %v5662 = vpop.f32.mrf.mxu0
    %5663 = vdwg.mxu0
    %v5664 = vadd.f32 %v5092, %v5528
    %v5665 = vadd.f32 %v5093, %v5530
    %v5666 = vadd.f32 %v5094, %v5619
    %v5667 = vadd.f32 %v5095, %v5532
    %v5668 = vadd.f32 %v5096, %v5534
    %v5669 = vadd.f32 %v5097, %v5622
    %v5670 = vadd.f32 %v5098, %v5538
    %v5671 = vadd.f32 %v5099, %v5540
    %v5672 = vadd.f32 %v5100, %v5627
    %v5673 = vadd.f32 %v5101, %v5542
    %v5674 = vadd.f32 %v5102, %v5544
    %v5675 = vadd.f32 %v5103, %v5630
    %v5676 = vadd.f32 %v5104, %v5548
    %v5677 = vadd.f32 %v5105, %v5550
    %v5678 = vadd.f32 %v5106, %v5635
    %v5679 = vadd.f32 %v5107, %v5552
    %v5680 = vadd.f32 %v5108, %v5554
    %v5681 = vadd.f32 %v5109, %v5638
    %v5682 = vadd.f32 %v5110, %v5558
    %v5683 = vadd.f32 %v5111, %v5560
    %v5684 = vadd.f32 %v5112, %v5643
    %v5685 = vadd.f32 %v5113, %v5562
    %v5686 = vadd.f32 %v5114, %v5564
    %v5687 = vadd.f32 %v5115, %v5646
    %v5688 = vadd.f32 %v5116, %v5568
    %v5689 = vadd.f32 %v5117, %v5570
    %v5690 = vadd.f32 %v5118, %v5651
    %v5691 = vadd.f32 %v5119, %v5572
    %v5692 = vadd.f32 %v5120, %v5574
    %v5693 = vadd.f32 %v5121, %v5654
    %v5694 = vadd.f32 %v5122, %v5578
    %v5695 = vadd.f32 %v5123, %v5580
    %v5696 = vadd.f32 %v5124, %v5659
    %v5697 = vld [vmem:[#allocation4] sm:$0xe0]
    %v5698 = vld [vmem:[#allocation4 + $0x8] sm:$0xe0]
    %v5699 = vld [vmem:[#allocation4 + $0x10] sm:$0xff]
    %v5700 = vld [vmem:[#allocation4 + $0x18] sm:$0xff]
    %v5701 = vld [vmem:[#allocation4 + $0x20] sm:$0xff]
    %v5702 = vld [vmem:[#allocation4 + $0x28] sm:$0xff]
    %v5703 = vld [vmem:[#allocation4 + $0x30] sm:$0xff]
    %v5704 = vld [vmem:[#allocation4 + $0x38] sm:$0xff]
    %v5705 = vld [vmem:[#allocation4 + $0x40] sm:$0xff]
    %v5706 = vld [vmem:[#allocation4 + $0x48] sm:$0xff]
    %v5707 = vld [vmem:[#allocation4 + $0x50] sm:$0xff]
    %v5708 = vld [vmem:[#allocation4 + $0x58] sm:$0xff]
    %v5709 = vld [vmem:[#allocation4 + $0x60] sm:$0xff]
    %v5710 = vld [vmem:[#allocation4 + $0x68] sm:$0xff]
    %v5711 = vld [vmem:[#allocation4 + $0x70] sm:$0xff]
    %v5712 = vld [vmem:[#allocation4 + $0x78] sm:$0xff]
    %v5713 = vld [vmem:[#allocation4 + $0x80] sm:$0xff]
    %v5714 = vld [vmem:[#allocation4 + $0x88] sm:$0xff]
    %v5715 = vld [vmem:[#allocation4 + $0x90] sm:$0xff]
    %v5716 = vld [vmem:[#allocation4 + $0x98] sm:$0xff]
    %v5717 = vld [vmem:[#allocation4 + $0xa0] sm:$0xff]
    %v5718 = vld [vmem:[#allocation4 + $0xa8] sm:$0xff]
    %v5719 = vld [vmem:[#allocation4 + $0xb0] sm:$0x1]
    %v5720 = vld [vmem:[#allocation4 + $0xb8] sm:$0x1]
    %v5721 = vpack.c.bf16 %v5699, %v5697
    %v5722 = vpack.c.bf16 %v5700, %v5698
    %v5723 = vpack.c.bf16 %v5703, %v5701
    %v5724 = vpack.c.bf16 %v5704, %v5702
    %v5725 = vpack.c.bf16 %v5707, %v5705
    %v5726 = vpack.c.bf16 %v5708, %v5706
    %v5727 = vpack.c.bf16 %v5711, %v5709
    %v5728 = vpack.c.bf16 %v5712, %v5710
    %v5729 = vpack.c.bf16 %v5715, %v5713
    %v5730 = vpack.c.bf16 %v5716, %v5714
    %v5731 = vpack.c.bf16 %v5719, %v5717
    %v5732 = vpack.c.bf16 %v5720, %v5718
    %s5733 = scalar_lea.vmem [#allocation17], 1920
    %v5734 = vld [vmem:[%s5733] sm:$0xff]
    %v5735 = vld [vmem:[%s5733 + $0x8] sm:$0xf]
    %v5736 = vld [vmem:[%s5733 + $0xc] sm:$0xff]
    %v5737 = vld [vmem:[%s5733 + $0x14] sm:$0xf]
    %v5738 = vld [vmem:[%s5733 + $0x18] sm:$0xff]
    %v5739 = vld [vmem:[%s5733 + $0x20] sm:$0xf]
    %v5740 = vld [vmem:[%s5733 + $0x24] sm:$0xff]
    %v5741 = vld [vmem:[%s5733 + $0x2c] sm:$0xf]
    %v5742 = vld [vmem:[%s5733 + $0x30] sm:$0xff]
    %v5743 = vld [vmem:[%s5733 + $0x38] sm:$0xf]
    %v5744 = vld [vmem:[%s5733 + $0x3c] sm:$0xff]
    %v5745 = vld [vmem:[%s5733 + $0x44] sm:$0xf]
    %v5746 = vld [vmem:[%s5733 + $0x48] sm:$0xff]
    %v5747 = vld [vmem:[%s5733 + $0x50] sm:$0xf]
    %v5748 = vld [vmem:[%s5733 + $0x54] sm:$0xff]
    %v5749 = vld [vmem:[%s5733 + $0x5c] sm:$0xf]
    %v5750 = vld [vmem:[%s5733 + $0x60] sm:$0xff]
    %v5751 = vld [vmem:[%s5733 + $0x68] sm:$0xf]
    %v5752 = vld [vmem:[%s5733 + $0x6c] sm:$0xff]
    %v5753 = vld [vmem:[%s5733 + $0x74] sm:$0xf]
    %v5754 = vld [vmem:[%s5733 + $0x78] sm:$0xff]
    %v5755 = vld [vmem:[%s5733 + $0x80] sm:$0xf]
    %v5756 = vld [vmem:[%s5733 + $0x84] sm:$0xff]
    %v5757 = vld [vmem:[%s5733 + $0x8c] sm:$0xf]
    %v5758 = vld [vmem:[%s5733 + $0x90] sm:$0xff]
    %v5759 = vld [vmem:[%s5733 + $0x98] sm:$0xf]
    %v5760 = vld [vmem:[%s5733 + $0x9c] sm:$0xff]
    %v5761 = vld [vmem:[%s5733 + $0xa4] sm:$0xf]
    %v5762 = vld [vmem:[%s5733 + $0xa8] sm:$0xff]
    %v5763 = vld [vmem:[%s5733 + $0xb0] sm:$0xf]
    %v5764 = vld [vmem:[%s5733 + $0xb4] sm:$0xff]
    %v5765 = vld [vmem:[%s5733 + $0xbc] sm:$0xf]
    %v5766 = vld [vmem:[%s5733 + $0xc0] sm:$0xff]
    %v5767 = vld [vmem:[%s5733 + $0xc8] sm:$0xf]
    %v5768 = vld [vmem:[%s5733 + $0xcc] sm:$0xff]
    %v5769 = vld [vmem:[%s5733 + $0xd4] sm:$0xf]
    %v5770 = vld [vmem:[%s5733 + $0xd8] sm:$0xff]
    %v5771 = vld [vmem:[%s5733 + $0xe0] sm:$0xf]
    %v5772 = vld [vmem:[%s5733 + $0xe4] sm:$0xff]
    %v5773 = vld [vmem:[%s5733 + $0xec] sm:$0xf]
    %v5774 = vld [vmem:[%s5733 + $0xf0] sm:$0xff]
    %v5775 = vld [vmem:[%s5733 + $0xf8] sm:$0xf]
    %v5776 = vld [vmem:[%s5733 + $0xfc] sm:$0xff]
    %v5777 = vld [vmem:[%s5733 + $0x104] sm:$0xf]
    %v5778 = vld [vmem:[%s5733 + $0x108] sm:$0xff]
    %v5779 = vld [vmem:[%s5733 + $0x110] sm:$0xf]
    %v5780 = vld [vmem:[%s5733 + $0x114] sm:$0xff]
    %v5781 = vld [vmem:[%s5733 + $0x11c] sm:$0xf]
    %v5782 = vld [vmem:[%s5733 + $0x120] sm:$0xff]
    %v5783 = vld [vmem:[%s5733 + $0x128] sm:$0xf]
    %v5784 = vld [vmem:[%s5733 + $0x12c] sm:$0xff]
    %v5785 = vld [vmem:[%s5733 + $0x134] sm:$0xf]
    %v5786 = vld [vmem:[%s5733 + $0x138] sm:$0xff]
    %v5787 = vld [vmem:[%s5733 + $0x140] sm:$0xf]
    %v5788 = vld [vmem:[%s5733 + $0x144] sm:$0xff]
    %v5789 = vld [vmem:[%s5733 + $0x14c] sm:$0xf]
    %v5790 = vld [vmem:[%s5733 + $0x150] sm:$0xff]
    %v5791 = vld [vmem:[%s5733 + $0x158] sm:$0xf]
    %v5792 = vld [vmem:[%s5733 + $0x15c] sm:$0xff]
    %v5793 = vld [vmem:[%s5733 + $0x164] sm:$0xf]
    %v5794 = vld [vmem:[%s5733 + $0x168] sm:$0xff]
    %v5795 = vld [vmem:[%s5733 + $0x170] sm:$0xf]
    %v5796 = vld [vmem:[%s5733 + $0x174] sm:$0xff]
    %v5797 = vld [vmem:[%s5733 + $0x17c] sm:$0xf]
    %vm5798 = vsmask.f32 5376
    %v5800 = vshrl.u32 %v5721, 16
    %v5802 = vrot.slane %v5800, 2
    %v5803 = vshll.u32 %v5721, 16
    %v5805 = vrot.slane %v5803, 3
    %v5806 = vor.u32 %v5802, %v5805
    %v5808 = vshrl.u32 %v5723, 16
    %v5810 = vrot.slane %v5808, 2
    %v5811 = vshll.u32 %v5723, 16
    %v5813 = vrot.slane %v5811, 3
    %v5814 = vor.u32 %v5810, %v5813
    %v5815 = vsel %vm5798, %v5806, %v5814
    %v5817 = vshrl.u32 %v5722, 16
    %v5819 = vrot.slane %v5817, 2
    %v5820 = vshll.u32 %v5722, 16
    %v5822 = vrot.slane %v5820, 3
    %v5823 = vor.u32 %v5819, %v5822
    %v5825 = vshrl.u32 %v5724, 16
    %v5827 = vrot.slane %v5825, 2
    %v5828 = vshll.u32 %v5724, 16
    %v5830 = vrot.slane %v5828, 3
    %v5831 = vor.u32 %v5827, %v5830
    %v5832 = vsel %vm5798, %v5823, %v5831
    %v5834 = vshrl.u32 %v5725, 16
    %v5836 = vrot.slane %v5834, 2
    %v5837 = vshll.u32 %v5725, 16
    %v5839 = vrot.slane %v5837, 3
    %v5840 = vor.u32 %v5836, %v5839
    %v5841 = vsel %vm5798, %v5814, %v5840
    %v5843 = vshrl.u32 %v5726, 16
    %v5845 = vrot.slane %v5843, 2
    %v5846 = vshll.u32 %v5726, 16
    %v5848 = vrot.slane %v5846, 3
    %v5849 = vor.u32 %v5845, %v5848
    %v5850 = vsel %vm5798, %v5831, %v5849
    %v5852 = vshrl.u32 %v5727, 16
    %v5854 = vrot.slane %v5852, 2
    %v5855 = vshll.u32 %v5727, 16
    %v5857 = vrot.slane %v5855, 3
    %v5858 = vor.u32 %v5854, %v5857
    %v5859 = vsel %vm5798, %v5840, %v5858
    %v5861 = vshrl.u32 %v5728, 16
    %v5863 = vrot.slane %v5861, 2
    %v5864 = vshll.u32 %v5728, 16
    %v5866 = vrot.slane %v5864, 3
    %v5867 = vor.u32 %v5863, %v5866
    %v5868 = vsel %vm5798, %v5849, %v5867
    %v5870 = vshrl.u32 %v5729, 16
    %v5872 = vrot.slane %v5870, 2
    %v5873 = vshll.u32 %v5729, 16
    %v5875 = vrot.slane %v5873, 3
    %v5876 = vor.u32 %v5872, %v5875
    %v5877 = vsel %vm5798, %v5858, %v5876
    %v5879 = vshrl.u32 %v5730, 16
    %v5881 = vrot.slane %v5879, 2
    %v5882 = vshll.u32 %v5730, 16
    %v5884 = vrot.slane %v5882, 3
    %v5885 = vor.u32 %v5881, %v5884
    %v5886 = vsel %vm5798, %v5867, %v5885
    %v5888 = vshrl.u32 %v5731, 16
    %v5890 = vrot.slane %v5888, 2
    %v5891 = vshll.u32 %v5731, 16
    %v5893 = vrot.slane %v5891, 3
    %v5894 = vor.u32 %v5890, %v5893
    %v5895 = vsel %vm5798, %v5876, %v5894
    %v5897 = vshrl.u32 %v5732, 16
    %v5899 = vrot.slane %v5897, 2
    %v5900 = vshll.u32 %v5732, 16
    %v5902 = vrot.slane %v5900, 3
    %v5903 = vor.u32 %v5899, %v5902
    %v5904 = vsel %vm5798, %v5885, %v5903
    %v5981 = vunpack.c.l.b16 %v5734
    %v5982 = vunpack.c.h.b16 %v5734
    %v5983 = vunpack.c.l.b16 %v5735
    %v5984 = vunpack.c.l.b16 %v5736
    %v5985 = vunpack.c.h.b16 %v5736
    %v5986 = vunpack.c.l.b16 %v5737
    %v5987 = vunpack.c.l.b16 %v5738
    %v5988 = vunpack.c.h.b16 %v5738
    %v5989 = vunpack.c.l.b16 %v5739
    %v5990 = vunpack.c.l.b16 %v5740
    %v5991 = vunpack.c.h.b16 %v5740
    %v5992 = vunpack.c.l.b16 %v5741
    %v5993 = vunpack.c.l.b16 %v5742
    %v5994 = vunpack.c.h.b16 %v5742
    %v5995 = vunpack.c.l.b16 %v5743
    %v5996 = vunpack.c.l.b16 %v5744
    %v5997 = vunpack.c.h.b16 %v5744
    %v5998 = vunpack.c.l.b16 %v5745
    %v5999 = vunpack.c.l.b16 %v5746
    %v6000 = vunpack.c.h.b16 %v5746
    %v6001 = vunpack.c.l.b16 %v5747
    %v6002 = vunpack.c.l.b16 %v5748
    %v6003 = vunpack.c.h.b16 %v5748
    %v6004 = vunpack.c.l.b16 %v5749
    %v6005 = vunpack.c.l.b16 %v5750
    %v6006 = vunpack.c.h.b16 %v5750
    %v6007 = vunpack.c.l.b16 %v5751
    %v6008 = vunpack.c.l.b16 %v5752
    %v6009 = vunpack.c.h.b16 %v5752
    %v6010 = vunpack.c.l.b16 %v5753
    %v6011 = vunpack.c.l.b16 %v5754
    %v6012 = vunpack.c.h.b16 %v5754
    %v6013 = vunpack.c.l.b16 %v5755
    %v6014 = vunpack.c.l.b16 %v5756
    %v6015 = vunpack.c.h.b16 %v5756
    %v6016 = vunpack.c.l.b16 %v5757
    %v6017 = vunpack.c.l.b16 %v5758
    %v6018 = vunpack.c.h.b16 %v5758
    %v6019 = vunpack.c.l.b16 %v5759
    %v6020 = vunpack.c.l.b16 %v5760
    %v6021 = vunpack.c.h.b16 %v5760
    %v6022 = vunpack.c.l.b16 %v5761
    %v6023 = vunpack.c.l.b16 %v5762
    %v6024 = vunpack.c.h.b16 %v5762
    %v6025 = vunpack.c.l.b16 %v5763
    %v6026 = vunpack.c.l.b16 %v5764
    %v6027 = vunpack.c.h.b16 %v5764
    %v6028 = vunpack.c.l.b16 %v5765
    %v6029 = vunpack.c.l.b16 %v5766
    %v6030 = vunpack.c.h.b16 %v5766
    %v6031 = vunpack.c.l.b16 %v5767
    %v6032 = vunpack.c.l.b16 %v5768
    %v6033 = vunpack.c.h.b16 %v5768
    %v6034 = vunpack.c.l.b16 %v5769
    %v6035 = vunpack.c.l.b16 %v5770
    %v6036 = vunpack.c.h.b16 %v5770
    %v6037 = vunpack.c.l.b16 %v5771
    %v6038 = vunpack.c.l.b16 %v5772
    %v6039 = vunpack.c.h.b16 %v5772
    %v6040 = vunpack.c.l.b16 %v5773
    %v6041 = vunpack.c.l.b16 %v5774
    %v6042 = vunpack.c.h.b16 %v5774
    %v6043 = vunpack.c.l.b16 %v5775
    %v6044 = vunpack.c.l.b16 %v5776
    %v6045 = vunpack.c.h.b16 %v5776
    %v6046 = vunpack.c.l.b16 %v5777
    %v6047 = vunpack.c.l.b16 %v5778
    %v6048 = vunpack.c.h.b16 %v5778
    %v6049 = vunpack.c.l.b16 %v5779
    %v6050 = vunpack.c.l.b16 %v5780
    %v6051 = vunpack.c.h.b16 %v5780
    %v6052 = vunpack.c.l.b16 %v5781
    %v6053 = vunpack.c.l.b16 %v5782
    %v6054 = vunpack.c.h.b16 %v5782
    %v6055 = vunpack.c.l.b16 %v5783
    %v6056 = vunpack.c.l.b16 %v5784
    %v6057 = vunpack.c.h.b16 %v5784
    %v6058 = vunpack.c.l.b16 %v5785
    %v6059 = vunpack.c.l.b16 %v5786
    %v6060 = vunpack.c.h.b16 %v5786
    %v6061 = vunpack.c.l.b16 %v5787
    %v6062 = vunpack.c.l.b16 %v5788
    %v6063 = vunpack.c.h.b16 %v5788
    %v6064 = vunpack.c.l.b16 %v5789
    %v6065 = vunpack.c.l.b16 %v5790
    %v6066 = vunpack.c.h.b16 %v5790
    %v6067 = vunpack.c.l.b16 %v5791
    %v6068 = vunpack.c.l.b16 %v5792
    %v6069 = vunpack.c.h.b16 %v5792
    %v6070 = vunpack.c.l.b16 %v5793
    %v6071 = vunpack.c.l.b16 %v5794
    %v6072 = vunpack.c.h.b16 %v5794
    %v6073 = vunpack.c.l.b16 %v5795
    %v6074 = vunpack.c.l.b16 %v5796
    %v6075 = vunpack.c.h.b16 %v5796
    %v6076 = vunpack.c.l.b16 %v5797
    %v6077 = vpack.c.b16 %v5984, %v5981
    %v6078 = vpack.c.b16 %v5985, %v5982
    %v6079 = vpack.c.b16 %v5986, %v5983
    %v6080 = vpack.c.b16 %v5990, %v5987
    %v6081 = vpack.c.b16 %v5991, %v5988
    %v6082 = vpack.c.b16 %v5992, %v5989
    %v6083 = vpack.c.b16 %v5996, %v5993
    %v6084 = vpack.c.b16 %v5997, %v5994
    %v6085 = vpack.c.b16 %v5998, %v5995
    %v6086 = vpack.c.b16 %v6002, %v5999
    %v6087 = vpack.c.b16 %v6003, %v6000
    %v6088 = vpack.c.b16 %v6004, %v6001
    %v6089 = vpack.c.b16 %v6008, %v6005
    %v6090 = vpack.c.b16 %v6009, %v6006
    %v6091 = vpack.c.b16 %v6010, %v6007
    %v6092 = vpack.c.b16 %v6014, %v6011
    %v6093 = vpack.c.b16 %v6015, %v6012
    %v6094 = vpack.c.b16 %v6016, %v6013
    %v6095 = vpack.c.b16 %v6020, %v6017
    %v6096 = vpack.c.b16 %v6021, %v6018
    %v6097 = vpack.c.b16 %v6022, %v6019
    %v6098 = vpack.c.b16 %v6026, %v6023
    %v6099 = vpack.c.b16 %v6027, %v6024
    %v6100 = vpack.c.b16 %v6028, %v6025
    %v6101 = vpack.c.b16 %v6032, %v6029
    %v6102 = vpack.c.b16 %v6033, %v6030
    %v6103 = vpack.c.b16 %v6034, %v6031
    %v6104 = vpack.c.b16 %v6038, %v6035
    %v6105 = vpack.c.b16 %v6039, %v6036
    %v6106 = vpack.c.b16 %v6040, %v6037
    %v6107 = vpack.c.b16 %v6044, %v6041
    %v6108 = vpack.c.b16 %v6045, %v6042
    %v6109 = vpack.c.b16 %v6046, %v6043
    %v6110 = vpack.c.b16 %v6050, %v6047
    %v6111 = vpack.c.b16 %v6051, %v6048
    %v6112 = vpack.c.b16 %v6052, %v6049
    %v6113 = vpack.c.b16 %v6056, %v6053
    %v6114 = vpack.c.b16 %v6057, %v6054
    %v6115 = vpack.c.b16 %v6058, %v6055
    %v6116 = vpack.c.b16 %v6062, %v6059
    %v6117 = vpack.c.b16 %v6063, %v6060
    %v6118 = vpack.c.b16 %v6064, %v6061
    %v6119 = vpack.c.b16 %v6068, %v6065
    %v6120 = vpack.c.b16 %v6069, %v6066
    %v6121 = vpack.c.b16 %v6070, %v6067
    %v6122 = vpack.c.b16 %v6074, %v6071
    %v6123 = vpack.c.b16 %v6075, %v6072
    %v6124 = vpack.c.b16 %v6076, %v6073
    %6173 = vmatprep.subr.bf16.mxu0 %v6099
    %6174 = vmatpush1.bf16.msra.mxu0 %v6098
    %6175 = vmatprep.subr.bf16.mxu0 %v6096
    %6176 = vmatpush1.bf16.msra.mxu0 %v6095
    %6177 = vmatprep.subr.bf16.mxu0 %v6093
    %6178 = vmatpush1.bf16.msra.mxu0 %v6092
    %6179 = vmatprep.subr.bf16.mxu0 %v6090
    %6180 = vmatpush1.bf16.msra.mxu0 %v6089
    %6181 = vmatprep.subr.bf16.mxu0 %v6087
    %6182 = vmatpush1.bf16.msra.mxu0 %v6086
    %6183 = vmatprep.subr.bf16.mxu0 %v6084
    %6184 = vmatpush1.bf16.msra.mxu0 %v6083
    %6185 = vmatprep.subr.bf16.mxu0 %v6081
    %6186 = vmatpush1.bf16.msra.mxu0 %v6080
    %6187 = vmatprep.subr.bf16.mxu0 %v6078
    %6188 = vmatpush1.bf16.msra.mxu0 %v6077
    %6189 = vmatprep.subr.bf16.mxu0 %v6123
    %6190 = vmatpush2.bf16.msra.mxu0 %v6122
    %6191 = vmatprep.subr.bf16.mxu0 %v6120
    %6192 = vmatpush2.bf16.msra.mxu0 %v6119
    %6193 = vmatprep.subr.bf16.mxu0 %v6117
    %6194 = vmatpush2.bf16.msra.mxu0 %v6116
    %6195 = vmatprep.subr.bf16.mxu0 %v6114
    %6196 = vmatpush2.bf16.msra.mxu0 %v6113
    %6197 = vmatprep.subr.bf16.mxu0 %v6111
    %6198 = vmatpush2.bf16.msra.mxu0 %v6110
    %6199 = vmatprep.subr.bf16.mxu0 %v6108
    %6200 = vmatpush2.bf16.msra.mxu0 %v6107
    %6201 = vmatprep.subr.bf16.mxu0 %v6105
    %6202 = vmatpush2.bf16.msra.mxu0 %v6104
    %6203 = vmatprep.subr.bf16.mxu0 %v6102
    %6204 = vmatpush2.bf16.msra.mxu0 %v6101
    %6205 = vmatprep.mubr.bf16.mxu0 %v5832
    %6206 = vmatmul.mubr.bf16.gmra.mxu0 %v5815
    %v6207 = vpop.f32.mrf.mxu0
    %v6208 = vadd.f32 0.0, %v6207
    %v6209 = vpop.f32.mrf.mxu0
    %v6210 = vadd.f32 0.0, %v6209
    %v6211 = vpop.f32.mrf.mxu0
    %v6212 = vadd.f32 0.0, %v6211
    %v6213 = vpop.f32.mrf.mxu0
    %v6214 = vadd.f32 0.0, %v6213
    %6215 = vmatprep.mubr.bf16.mxu0 %v5850
    %6216 = vmatmul.mubr.bf16.gmra.mxu0 %v5841
    %v6217 = vpop.f32.mrf.mxu0
    %v6218 = vadd.f32 0.0, %v6217
    %v6219 = vpop.f32.mrf.mxu0
    %v6220 = vadd.f32 0.0, %v6219
    %v6221 = vpop.f32.mrf.mxu0
    %v6222 = vadd.f32 0.0, %v6221
    %v6223 = vpop.f32.mrf.mxu0
    %v6224 = vadd.f32 0.0, %v6223
    %6225 = vmatprep.mubr.bf16.mxu0 %v5868
    %6226 = vmatmul.mubr.bf16.gmra.mxu0 %v5859
    %v6227 = vpop.f32.mrf.mxu0
    %v6228 = vadd.f32 0.0, %v6227
    %v6229 = vpop.f32.mrf.mxu0
    %v6230 = vadd.f32 0.0, %v6229
    %v6231 = vpop.f32.mrf.mxu0
    %v6232 = vadd.f32 0.0, %v6231
    %v6233 = vpop.f32.mrf.mxu0
    %v6234 = vadd.f32 0.0, %v6233
    %6235 = vmatprep.mubr.bf16.mxu0 %v5886
    %6236 = vmatmul.mubr.bf16.gmra.mxu0 %v5877
    %v6237 = vpop.f32.mrf.mxu0
    %v6238 = vadd.f32 0.0, %v6237
    %v6239 = vpop.f32.mrf.mxu0
    %v6240 = vadd.f32 0.0, %v6239
    %v6241 = vpop.f32.mrf.mxu0
    %v6242 = vadd.f32 0.0, %v6241
    %v6243 = vpop.f32.mrf.mxu0
    %v6244 = vadd.f32 0.0, %v6243
    %6245 = vmatprep.mubr.bf16.mxu0 %v5904
    %6246 = vmatmul.mubr.bf16.gmra.mxu0 %v5895
    %v6247 = vpop.f32.mrf.mxu0
    %v6248 = vadd.f32 0.0, %v6247
    %v6249 = vpop.f32.mrf.mxu0
    %v6250 = vadd.f32 0.0, %v6249
    %v6251 = vpop.f32.mrf.mxu0
    %v6252 = vadd.f32 0.0, %v6251
    %v6253 = vpop.f32.mrf.mxu0
    %v6254 = vadd.f32 0.0, %v6253
    %6255 = vmatprep.mubr.bf16.mxu0 %v5903
    %6256 = vmatmul.mubr.bf16.gmra.mxu0 %v5894
    %v6257 = vpop.f32.mrf.mxu0
    %v6258 = vadd.f32 0.0, %v6257
    %v6259 = vpop.f32.mrf.mxu0
    %v6260 = vadd.f32 0.0, %v6259
    %v6261 = vpop.f32.mrf.mxu0
    %v6262 = vpop.f32.mrf.mxu0
    %6263 = vdwg.mxu0
    %6264 = vmatprep.subr.bf16.mxu0 0
    %6265 = vmatpush1.bf16.msra.mxu0 %v6100
    %6266 = vmatprep.subr.bf16.mxu0 0
    %6267 = vmatpush1.bf16.msra.mxu0 %v6097
    %6268 = vmatprep.subr.bf16.mxu0 0
    %6269 = vmatpush1.bf16.msra.mxu0 %v6094
    %6270 = vmatprep.subr.bf16.mxu0 0
    %6271 = vmatpush1.bf16.msra.mxu0 %v6091
    %6272 = vmatprep.subr.bf16.mxu0 0
    %6273 = vmatpush1.bf16.msra.mxu0 %v6088
    %6274 = vmatprep.subr.bf16.mxu0 0
    %6275 = vmatpush1.bf16.msra.mxu0 %v6085
    %6276 = vmatprep.subr.bf16.mxu0 0
    %6277 = vmatpush1.bf16.msra.mxu0 %v6082
    %6278 = vmatprep.subr.bf16.mxu0 0
    %6279 = vmatpush1.bf16.msra.mxu0 %v6079
    %6280 = vmatprep.subr.bf16.mxu0 0
    %6281 = vmatpush2.bf16.msra.mxu0 %v6124
    %6282 = vmatprep.subr.bf16.mxu0 0
    %6283 = vmatpush2.bf16.msra.mxu0 %v6121
    %6284 = vmatprep.subr.bf16.mxu0 0
    %6285 = vmatpush2.bf16.msra.mxu0 %v6118
    %6286 = vmatprep.subr.bf16.mxu0 0
    %6287 = vmatpush2.bf16.msra.mxu0 %v6115
    %6288 = vmatprep.subr.bf16.mxu0 0
    %6289 = vmatpush2.bf16.msra.mxu0 %v6112
    %6290 = vmatprep.subr.bf16.mxu0 0
    %6291 = vmatpush2.bf16.msra.mxu0 %v6109
    %6292 = vmatprep.subr.bf16.mxu0 0
    %6293 = vmatpush2.bf16.msra.mxu0 %v6106
    %6294 = vmatprep.subr.bf16.mxu0 0
    %6295 = vmatpush2.bf16.msra.mxu0 %v6103
    %6296 = vmatprep.mubr.bf16.mxu0 %v5832
    %6297 = vmatmul.mubr.bf16.gmra.mxu0 %v5815
    %v6298 = vpop.f32.mrf.mxu0
    %v6299 = vadd.f32 0.0, %v6298
    %v6300 = vpop.f32.mrf.mxu0
    %v6301 = vpop.f32.mrf.mxu0
    %v6302 = vadd.f32 0.0, %v6301
    %v6303 = vpop.f32.mrf.mxu0
    %6304 = vmatprep.mubr.bf16.mxu0 %v5850
    %6305 = vmatmul.mubr.bf16.gmra.mxu0 %v5841
    %v6306 = vpop.f32.mrf.mxu0
    %v6307 = vadd.f32 0.0, %v6306
    %v6308 = vpop.f32.mrf.mxu0
    %v6309 = vpop.f32.mrf.mxu0
    %v6310 = vadd.f32 0.0, %v6309
    %v6311 = vpop.f32.mrf.mxu0
    %6312 = vmatprep.mubr.bf16.mxu0 %v5868
    %6313 = vmatmul.mubr.bf16.gmra.mxu0 %v5859
    %v6314 = vpop.f32.mrf.mxu0
    %v6315 = vadd.f32 0.0, %v6314
    %v6316 = vpop.f32.mrf.mxu0
    %v6317 = vpop.f32.mrf.mxu0
    %v6318 = vadd.f32 0.0, %v6317
    %v6319 = vpop.f32.mrf.mxu0
    %6320 = vmatprep.mubr.bf16.mxu0 %v5886
    %6321 = vmatmul.mubr.bf16.gmra.mxu0 %v5877
    %v6322 = vpop.f32.mrf.mxu0
    %v6323 = vadd.f32 0.0, %v6322
    %v6324 = vpop.f32.mrf.mxu0
    %v6325 = vpop.f32.mrf.mxu0
    %v6326 = vadd.f32 0.0, %v6325
    %v6327 = vpop.f32.mrf.mxu0
    %6328 = vmatprep.mubr.bf16.mxu0 %v5904
    %6329 = vmatmul.mubr.bf16.gmra.mxu0 %v5895
    %v6330 = vpop.f32.mrf.mxu0
    %v6331 = vadd.f32 0.0, %v6330
    %v6332 = vpop.f32.mrf.mxu0
    %v6333 = vpop.f32.mrf.mxu0
    %v6334 = vadd.f32 0.0, %v6333
    %v6335 = vpop.f32.mrf.mxu0
    %6336 = vmatprep.mubr.bf16.mxu0 %v5903
    %6337 = vmatmul.mubr.bf16.gmra.mxu0 %v5894
    %v6338 = vpop.f32.mrf.mxu0
    %v6339 = vadd.f32 0.0, %v6338
    %v6340 = vpop.f32.mrf.mxu0
    %v6341 = vpop.f32.mrf.mxu0
    %v6342 = vpop.f32.mrf.mxu0
    %6343 = vdwg.mxu0
    %v6344 = vadd.f32 %v5664, %v6208
    %v6345 = vadd.f32 %v5665, %v6210
    %v6346 = vadd.f32 %v5666, %v6299
    %v6347 = vadd.f32 %v5667, %v6212
    %v6348 = vadd.f32 %v5668, %v6214
    %v6349 = vadd.f32 %v5669, %v6302
    %v6350 = vadd.f32 %v5670, %v6218
    %v6351 = vadd.f32 %v5671, %v6220
    %v6352 = vadd.f32 %v5672, %v6307
    %v6353 = vadd.f32 %v5673, %v6222
    %v6354 = vadd.f32 %v5674, %v6224
    %v6355 = vadd.f32 %v5675, %v6310
    %v6356 = vadd.f32 %v5676, %v6228
    %v6357 = vadd.f32 %v5677, %v6230
    %v6358 = vadd.f32 %v5678, %v6315
    %v6359 = vadd.f32 %v5679, %v6232
    %v6360 = vadd.f32 %v5680, %v6234
    %v6361 = vadd.f32 %v5681, %v6318
    %v6362 = vadd.f32 %v5682, %v6238
    %v6363 = vadd.f32 %v5683, %v6240
    %v6364 = vadd.f32 %v5684, %v6323
    %v6365 = vadd.f32 %v5685, %v6242
    %v6366 = vadd.f32 %v5686, %v6244
    %v6367 = vadd.f32 %v5687, %v6326
    %v6368 = vadd.f32 %v5688, %v6248
    %v6369 = vadd.f32 %v5689, %v6250
    %v6370 = vadd.f32 %v5690, %v6331
    %v6371 = vadd.f32 %v5691, %v6252
    %v6372 = vadd.f32 %v5692, %v6254
    %v6373 = vadd.f32 %v5693, %v6334
    %v6374 = vadd.f32 %v5694, %v6258
    %v6375 = vadd.f32 %v5695, %v6260
    %v6376 = vadd.f32 %v5696, %v6339
    %v6377 = vld [vmem:[#allocation4] sm:$0xc0]
    %v6378 = vld [vmem:[#allocation4 + $0x8] sm:$0xc0]
    %v6379 = vld [vmem:[#allocation4 + $0xb0] sm:$0x3]
    %v6380 = vld [vmem:[#allocation4 + $0xb8] sm:$0x3]
    %v6381 = vpack.c.bf16 %v5699, %v6377
    %v6382 = vpack.c.bf16 %v5700, %v6378
    %v6383 = vpack.c.bf16 %v6379, %v5717
    %v6384 = vpack.c.bf16 %v6380, %v5718
    %s6385 = scalar_lea.vmem [#allocation17], 2304
    %v6386 = vld [vmem:[%s6385] sm:$0xff]
    %v6387 = vld [vmem:[%s6385 + $0x8] sm:$0xf]
    %v6388 = vld [vmem:[%s6385 + $0xc] sm:$0xff]
    %v6389 = vld [vmem:[%s6385 + $0x14] sm:$0xf]
    %v6390 = vld [vmem:[%s6385 + $0x18] sm:$0xff]
    %v6391 = vld [vmem:[%s6385 + $0x20] sm:$0xf]
    %v6392 = vld [vmem:[%s6385 + $0x24] sm:$0xff]
    %v6393 = vld [vmem:[%s6385 + $0x2c] sm:$0xf]
    %v6394 = vld [vmem:[%s6385 + $0x30] sm:$0xff]
    %v6395 = vld [vmem:[%s6385 + $0x38] sm:$0xf]
    %v6396 = vld [vmem:[%s6385 + $0x3c] sm:$0xff]
    %v6397 = vld [vmem:[%s6385 + $0x44] sm:$0xf]
    %v6398 = vld [vmem:[%s6385 + $0x48] sm:$0xff]
    %v6399 = vld [vmem:[%s6385 + $0x50] sm:$0xf]
    %v6400 = vld [vmem:[%s6385 + $0x54] sm:$0xff]
    %v6401 = vld [vmem:[%s6385 + $0x5c] sm:$0xf]
    %v6402 = vld [vmem:[%s6385 + $0x60] sm:$0xff]
    %v6403 = vld [vmem:[%s6385 + $0x68] sm:$0xf]
    %v6404 = vld [vmem:[%s6385 + $0x6c] sm:$0xff]
    %v6405 = vld [vmem:[%s6385 + $0x74] sm:$0xf]
    %v6406 = vld [vmem:[%s6385 + $0x78] sm:$0xff]
    %v6407 = vld [vmem:[%s6385 + $0x80] sm:$0xf]
    %v6408 = vld [vmem:[%s6385 + $0x84] sm:$0xff]
    %v6409 = vld [vmem:[%s6385 + $0x8c] sm:$0xf]
    %v6410 = vld [vmem:[%s6385 + $0x90] sm:$0xff]
    %v6411 = vld [vmem:[%s6385 + $0x98] sm:$0xf]
    %v6412 = vld [vmem:[%s6385 + $0x9c] sm:$0xff]
    %v6413 = vld [vmem:[%s6385 + $0xa4] sm:$0xf]
    %v6414 = vld [vmem:[%s6385 + $0xa8] sm:$0xff]
    %v6415 = vld [vmem:[%s6385 + $0xb0] sm:$0xf]
    %v6416 = vld [vmem:[%s6385 + $0xb4] sm:$0xff]
    %v6417 = vld [vmem:[%s6385 + $0xbc] sm:$0xf]
    %v6418 = vld [vmem:[%s6385 + $0xc0] sm:$0xff]
    %v6419 = vld [vmem:[%s6385 + $0xc8] sm:$0xf]
    %v6420 = vld [vmem:[%s6385 + $0xcc] sm:$0xff]
    %v6421 = vld [vmem:[%s6385 + $0xd4] sm:$0xf]
    %v6422 = vld [vmem:[%s6385 + $0xd8] sm:$0xff]
    %v6423 = vld [vmem:[%s6385 + $0xe0] sm:$0xf]
    %v6424 = vld [vmem:[%s6385 + $0xe4] sm:$0xff]
    %v6425 = vld [vmem:[%s6385 + $0xec] sm:$0xf]
    %v6426 = vld [vmem:[%s6385 + $0xf0] sm:$0xff]
    %v6427 = vld [vmem:[%s6385 + $0xf8] sm:$0xf]
    %v6428 = vld [vmem:[%s6385 + $0xfc] sm:$0xff]
    %v6429 = vld [vmem:[%s6385 + $0x104] sm:$0xf]
    %v6430 = vld [vmem:[%s6385 + $0x108] sm:$0xff]
    %v6431 = vld [vmem:[%s6385 + $0x110] sm:$0xf]
    %v6432 = vld [vmem:[%s6385 + $0x114] sm:$0xff]
    %v6433 = vld [vmem:[%s6385 + $0x11c] sm:$0xf]
    %v6434 = vld [vmem:[%s6385 + $0x120] sm:$0xff]
    %v6435 = vld [vmem:[%s6385 + $0x128] sm:$0xf]
    %v6436 = vld [vmem:[%s6385 + $0x12c] sm:$0xff]
    %v6437 = vld [vmem:[%s6385 + $0x134] sm:$0xf]
    %v6438 = vld [vmem:[%s6385 + $0x138] sm:$0xff]
    %v6439 = vld [vmem:[%s6385 + $0x140] sm:$0xf]
    %v6440 = vld [vmem:[%s6385 + $0x144] sm:$0xff]
    %v6441 = vld [vmem:[%s6385 + $0x14c] sm:$0xf]
    %v6442 = vld [vmem:[%s6385 + $0x150] sm:$0xff]
    %v6443 = vld [vmem:[%s6385 + $0x158] sm:$0xf]
    %v6444 = vld [vmem:[%s6385 + $0x15c] sm:$0xff]
    %v6445 = vld [vmem:[%s6385 + $0x164] sm:$0xf]
    %v6446 = vld [vmem:[%s6385 + $0x168] sm:$0xff]
    %v6447 = vld [vmem:[%s6385 + $0x170] sm:$0xf]
    %v6448 = vld [vmem:[%s6385 + $0x174] sm:$0xff]
    %v6449 = vld [vmem:[%s6385 + $0x17c] sm:$0xf]
    %vm6462 = vcmask 1044480
    %v6463 = vrot.slane %v6381, 3
    %v6464 = vrot.slane %v5723, 3
    %v6465 = vsel %vm6462, %v6463, %v6464
    %v6466 = vrot.slane %v6382, 3
    %v6467 = vrot.slane %v5724, 3
    %v6468 = vsel %vm6462, %v6466, %v6467
    %v6469 = vrot.slane %v5725, 3
    %v6470 = vsel %vm6462, %v6464, %v6469
    %v6471 = vrot.slane %v5726, 3
    %v6472 = vsel %vm6462, %v6467, %v6471
    %v6473 = vrot.slane %v5727, 3
    %v6474 = vsel %vm6462, %v6469, %v6473
    %v6475 = vrot.slane %v5728, 3
    %v6476 = vsel %vm6462, %v6471, %v6475
    %v6477 = vrot.slane %v5729, 3
    %v6478 = vsel %vm6462, %v6473, %v6477
    %v6479 = vrot.slane %v5730, 3
    %v6480 = vsel %vm6462, %v6475, %v6479
    %v6481 = vrot.slane %v6383, 3
    %v6482 = vsel %vm6462, %v6477, %v6481
    %v6483 = vrot.slane %v6384, 3
    %v6484 = vsel %vm6462, %v6479, %v6483
    %v6561 = vunpack.c.l.b16 %v6386
    %v6562 = vunpack.c.h.b16 %v6386
    %v6563 = vunpack.c.l.b16 %v6387
    %v6564 = vunpack.c.l.b16 %v6388
    %v6565 = vunpack.c.h.b16 %v6388
    %v6566 = vunpack.c.l.b16 %v6389
    %v6567 = vunpack.c.l.b16 %v6390
    %v6568 = vunpack.c.h.b16 %v6390
    %v6569 = vunpack.c.l.b16 %v6391
    %v6570 = vunpack.c.l.b16 %v6392
    %v6571 = vunpack.c.h.b16 %v6392
    %v6572 = vunpack.c.l.b16 %v6393
    %v6573 = vunpack.c.l.b16 %v6394
    %v6574 = vunpack.c.h.b16 %v6394
    %v6575 = vunpack.c.l.b16 %v6395
    %v6576 = vunpack.c.l.b16 %v6396
    %v6577 = vunpack.c.h.b16 %v6396
    %v6578 = vunpack.c.l.b16 %v6397
    %v6579 = vunpack.c.l.b16 %v6398
    %v6580 = vunpack.c.h.b16 %v6398
    %v6581 = vunpack.c.l.b16 %v6399
    %v6582 = vunpack.c.l.b16 %v6400
    %v6583 = vunpack.c.h.b16 %v6400
    %v6584 = vunpack.c.l.b16 %v6401
    %v6585 = vunpack.c.l.b16 %v6402
    %v6586 = vunpack.c.h.b16 %v6402
    %v6587 = vunpack.c.l.b16 %v6403
    %v6588 = vunpack.c.l.b16 %v6404
    %v6589 = vunpack.c.h.b16 %v6404
    %v6590 = vunpack.c.l.b16 %v6405
    %v6591 = vunpack.c.l.b16 %v6406
    %v6592 = vunpack.c.h.b16 %v6406
    %v6593 = vunpack.c.l.b16 %v6407
    %v6594 = vunpack.c.l.b16 %v6408
    %v6595 = vunpack.c.h.b16 %v6408
    %v6596 = vunpack.c.l.b16 %v6409
    %v6597 = vunpack.c.l.b16 %v6410
    %v6598 = vunpack.c.h.b16 %v6410
    %v6599 = vunpack.c.l.b16 %v6411
    %v6600 = vunpack.c.l.b16 %v6412
    %v6601 = vunpack.c.h.b16 %v6412
    %v6602 = vunpack.c.l.b16 %v6413
    %v6603 = vunpack.c.l.b16 %v6414
    %v6604 = vunpack.c.h.b16 %v6414
    %v6605 = vunpack.c.l.b16 %v6415
    %v6606 = vunpack.c.l.b16 %v6416
    %v6607 = vunpack.c.h.b16 %v6416
    %v6608 = vunpack.c.l.b16 %v6417
    %v6609 = vunpack.c.l.b16 %v6418
    %v6610 = vunpack.c.h.b16 %v6418
    %v6611 = vunpack.c.l.b16 %v6419
    %v6612 = vunpack.c.l.b16 %v6420
    %v6613 = vunpack.c.h.b16 %v6420
    %v6614 = vunpack.c.l.b16 %v6421
    %v6615 = vunpack.c.l.b16 %v6422
    %v6616 = vunpack.c.h.b16 %v6422
    %v6617 = vunpack.c.l.b16 %v6423
    %v6618 = vunpack.c.l.b16 %v6424
    %v6619 = vunpack.c.h.b16 %v6424
    %v6620 = vunpack.c.l.b16 %v6425
    %v6621 = vunpack.c.l.b16 %v6426
    %v6622 = vunpack.c.h.b16 %v6426
    %v6623 = vunpack.c.l.b16 %v6427
    %v6624 = vunpack.c.l.b16 %v6428
    %v6625 = vunpack.c.h.b16 %v6428
    %v6626 = vunpack.c.l.b16 %v6429
    %v6627 = vunpack.c.l.b16 %v6430
    %v6628 = vunpack.c.h.b16 %v6430
    %v6629 = vunpack.c.l.b16 %v6431
    %v6630 = vunpack.c.l.b16 %v6432
    %v6631 = vunpack.c.h.b16 %v6432
    %v6632 = vunpack.c.l.b16 %v6433
    %v6633 = vunpack.c.l.b16 %v6434
    %v6634 = vunpack.c.h.b16 %v6434
    %v6635 = vunpack.c.l.b16 %v6435
    %v6636 = vunpack.c.l.b16 %v6436
    %v6637 = vunpack.c.h.b16 %v6436
    %v6638 = vunpack.c.l.b16 %v6437
    %v6639 = vunpack.c.l.b16 %v6438
    %v6640 = vunpack.c.h.b16 %v6438
    %v6641 = vunpack.c.l.b16 %v6439
    %v6642 = vunpack.c.l.b16 %v6440
    %v6643 = vunpack.c.h.b16 %v6440
    %v6644 = vunpack.c.l.b16 %v6441
    %v6645 = vunpack.c.l.b16 %v6442
    %v6646 = vunpack.c.h.b16 %v6442
    %v6647 = vunpack.c.l.b16 %v6443
    %v6648 = vunpack.c.l.b16 %v6444
    %v6649 = vunpack.c.h.b16 %v6444
    %v6650 = vunpack.c.l.b16 %v6445
    %v6651 = vunpack.c.l.b16 %v6446
    %v6652 = vunpack.c.h.b16 %v6446
    %v6653 = vunpack.c.l.b16 %v6447
    %v6654 = vunpack.c.l.b16 %v6448
    %v6655 = vunpack.c.h.b16 %v6448
    %v6656 = vunpack.c.l.b16 %v6449
    %v6657 = vpack.c.b16 %v6564, %v6561
    %v6658 = vpack.c.b16 %v6565, %v6562
    %v6659 = vpack.c.b16 %v6566, %v6563
    %v6660 = vpack.c.b16 %v6570, %v6567
    %v6661 = vpack.c.b16 %v6571, %v6568
    %v6662 = vpack.c.b16 %v6572, %v6569
    %v6663 = vpack.c.b16 %v6576, %v6573
    %v6664 = vpack.c.b16 %v6577, %v6574
    %v6665 = vpack.c.b16 %v6578, %v6575
    %v6666 = vpack.c.b16 %v6582, %v6579
    %v6667 = vpack.c.b16 %v6583, %v6580
    %v6668 = vpack.c.b16 %v6584, %v6581
    %v6669 = vpack.c.b16 %v6588, %v6585
    %v6670 = vpack.c.b16 %v6589, %v6586
    %v6671 = vpack.c.b16 %v6590, %v6587
    %v6672 = vpack.c.b16 %v6594, %v6591
    %v6673 = vpack.c.b16 %v6595, %v6592
    %v6674 = vpack.c.b16 %v6596, %v6593
    %v6675 = vpack.c.b16 %v6600, %v6597
    %v6676 = vpack.c.b16 %v6601, %v6598
    %v6677 = vpack.c.b16 %v6602, %v6599
    %v6678 = vpack.c.b16 %v6606, %v6603
    %v6679 = vpack.c.b16 %v6607, %v6604
    %v6680 = vpack.c.b16 %v6608, %v6605
    %v6681 = vpack.c.b16 %v6612, %v6609
    %v6682 = vpack.c.b16 %v6613, %v6610
    %v6683 = vpack.c.b16 %v6614, %v6611
    %v6684 = vpack.c.b16 %v6618, %v6615
    %v6685 = vpack.c.b16 %v6619, %v6616
    %v6686 = vpack.c.b16 %v6620, %v6617
    %v6687 = vpack.c.b16 %v6624, %v6621
    %v6688 = vpack.c.b16 %v6625, %v6622
    %v6689 = vpack.c.b16 %v6626, %v6623
    %v6690 = vpack.c.b16 %v6630, %v6627
    %v6691 = vpack.c.b16 %v6631, %v6628
    %v6692 = vpack.c.b16 %v6632, %v6629
    %v6693 = vpack.c.b16 %v6636, %v6633
    %v6694 = vpack.c.b16 %v6637, %v6634
    %v6695 = vpack.c.b16 %v6638, %v6635
    %v6696 = vpack.c.b16 %v6642, %v6639
    %v6697 = vpack.c.b16 %v6643, %v6640
    %v6698 = vpack.c.b16 %v6644, %v6641
    %v6699 = vpack.c.b16 %v6648, %v6645
    %v6700 = vpack.c.b16 %v6649, %v6646
    %v6701 = vpack.c.b16 %v6650, %v6647
    %v6702 = vpack.c.b16 %v6654, %v6651
    %v6703 = vpack.c.b16 %v6655, %v6652
    %v6704 = vpack.c.b16 %v6656, %v6653
    %6753 = vmatprep.subr.bf16.mxu0 %v6679
    %6754 = vmatpush1.bf16.msra.mxu0 %v6678
    %6755 = vmatprep.subr.bf16.mxu0 %v6676
    %6756 = vmatpush1.bf16.msra.mxu0 %v6675
    %6757 = vmatprep.subr.bf16.mxu0 %v6673
    %6758 = vmatpush1.bf16.msra.mxu0 %v6672
    %6759 = vmatprep.subr.bf16.mxu0 %v6670
    %6760 = vmatpush1.bf16.msra.mxu0 %v6669
    %6761 = vmatprep.subr.bf16.mxu0 %v6667
    %6762 = vmatpush1.bf16.msra.mxu0 %v6666
    %6763 = vmatprep.subr.bf16.mxu0 %v6664
    %6764 = vmatpush1.bf16.msra.mxu0 %v6663
    %6765 = vmatprep.subr.bf16.mxu0 %v6661
    %6766 = vmatpush1.bf16.msra.mxu0 %v6660
    %6767 = vmatprep.subr.bf16.mxu0 %v6658
    %6768 = vmatpush1.bf16.msra.mxu0 %v6657
    %6769 = vmatprep.subr.bf16.mxu0 %v6703
    %6770 = vmatpush2.bf16.msra.mxu0 %v6702
    %6771 = vmatprep.subr.bf16.mxu0 %v6700
    %6772 = vmatpush2.bf16.msra.mxu0 %v6699
    %6773 = vmatprep.subr.bf16.mxu0 %v6697
    %6774 = vmatpush2.bf16.msra.mxu0 %v6696
    %6775 = vmatprep.subr.bf16.mxu0 %v6694
    %6776 = vmatpush2.bf16.msra.mxu0 %v6693
    %6777 = vmatprep.subr.bf16.mxu0 %v6691
    %6778 = vmatpush2.bf16.msra.mxu0 %v6690
    %6779 = vmatprep.subr.bf16.mxu0 %v6688
    %6780 = vmatpush2.bf16.msra.mxu0 %v6687
    %6781 = vmatprep.subr.bf16.mxu0 %v6685
    %6782 = vmatpush2.bf16.msra.mxu0 %v6684
    %6783 = vmatprep.subr.bf16.mxu0 %v6682
    %6784 = vmatpush2.bf16.msra.mxu0 %v6681
    %6785 = vmatprep.mubr.bf16.mxu0 %v6468
    %6786 = vmatmul.mubr.bf16.gmra.mxu0 %v6465
    %v6787 = vpop.f32.mrf.mxu0
    %v6788 = vadd.f32 0.0, %v6787
    %v6789 = vpop.f32.mrf.mxu0
    %v6790 = vadd.f32 0.0, %v6789
    %v6791 = vpop.f32.mrf.mxu0
    %v6792 = vadd.f32 0.0, %v6791
    %v6793 = vpop.f32.mrf.mxu0
    %v6794 = vadd.f32 0.0, %v6793
    %6795 = vmatprep.mubr.bf16.mxu0 %v6472
    %6796 = vmatmul.mubr.bf16.gmra.mxu0 %v6470
    %v6797 = vpop.f32.mrf.mxu0
    %v6798 = vadd.f32 0.0, %v6797
    %v6799 = vpop.f32.mrf.mxu0
    %v6800 = vadd.f32 0.0, %v6799
    %v6801 = vpop.f32.mrf.mxu0
    %v6802 = vadd.f32 0.0, %v6801
    %v6803 = vpop.f32.mrf.mxu0
    %v6804 = vadd.f32 0.0, %v6803
    %6805 = vmatprep.mubr.bf16.mxu0 %v6476
    %6806 = vmatmul.mubr.bf16.gmra.mxu0 %v6474
    %v6807 = vpop.f32.mrf.mxu0
    %v6808 = vadd.f32 0.0, %v6807
    %v6809 = vpop.f32.mrf.mxu0
    %v6810 = vadd.f32 0.0, %v6809
    %v6811 = vpop.f32.mrf.mxu0
    %v6812 = vadd.f32 0.0, %v6811
    %v6813 = vpop.f32.mrf.mxu0
    %v6814 = vadd.f32 0.0, %v6813
    %6815 = vmatprep.mubr.bf16.mxu0 %v6480
    %6816 = vmatmul.mubr.bf16.gmra.mxu0 %v6478
    %v6817 = vpop.f32.mrf.mxu0
    %v6818 = vadd.f32 0.0, %v6817
    %v6819 = vpop.f32.mrf.mxu0
    %v6820 = vadd.f32 0.0, %v6819
    %v6821 = vpop.f32.mrf.mxu0
    %v6822 = vadd.f32 0.0, %v6821
    %v6823 = vpop.f32.mrf.mxu0
    %v6824 = vadd.f32 0.0, %v6823
    %6825 = vmatprep.mubr.bf16.mxu0 %v6484
    %6826 = vmatmul.mubr.bf16.gmra.mxu0 %v6482
    %v6827 = vpop.f32.mrf.mxu0
    %v6828 = vadd.f32 0.0, %v6827
    %v6829 = vpop.f32.mrf.mxu0
    %v6830 = vadd.f32 0.0, %v6829
    %v6831 = vpop.f32.mrf.mxu0
    %v6832 = vadd.f32 0.0, %v6831
    %v6833 = vpop.f32.mrf.mxu0
    %v6834 = vadd.f32 0.0, %v6833
    %6835 = vmatprep.mubr.bf16.mxu0 %v6483
    %6836 = vmatmul.mubr.bf16.gmra.mxu0 %v6481
    %v6837 = vpop.f32.mrf.mxu0
    %v6838 = vadd.f32 0.0, %v6837
    %v6839 = vpop.f32.mrf.mxu0
    %v6840 = vadd.f32 0.0, %v6839
    %v6841 = vpop.f32.mrf.mxu0
    %v6842 = vpop.f32.mrf.mxu0
    %6843 = vdwg.mxu0
    %6844 = vmatprep.subr.bf16.mxu0 0
    %6845 = vmatpush1.bf16.msra.mxu0 %v6680
    %6846 = vmatprep.subr.bf16.mxu0 0
    %6847 = vmatpush1.bf16.msra.mxu0 %v6677
    %6848 = vmatprep.subr.bf16.mxu0 0
    %6849 = vmatpush1.bf16.msra.mxu0 %v6674
    %6850 = vmatprep.subr.bf16.mxu0 0
    %6851 = vmatpush1.bf16.msra.mxu0 %v6671
    %6852 = vmatprep.subr.bf16.mxu0 0
    %6853 = vmatpush1.bf16.msra.mxu0 %v6668
    %6854 = vmatprep.subr.bf16.mxu0 0
    %6855 = vmatpush1.bf16.msra.mxu0 %v6665
    %6856 = vmatprep.subr.bf16.mxu0 0
    %6857 = vmatpush1.bf16.msra.mxu0 %v6662
    %6858 = vmatprep.subr.bf16.mxu0 0
    %6859 = vmatpush1.bf16.msra.mxu0 %v6659
    %6860 = vmatprep.subr.bf16.mxu0 0
    %6861 = vmatpush2.bf16.msra.mxu0 %v6704
    %6862 = vmatprep.subr.bf16.mxu0 0
    %6863 = vmatpush2.bf16.msra.mxu0 %v6701
    %6864 = vmatprep.subr.bf16.mxu0 0
    %6865 = vmatpush2.bf16.msra.mxu0 %v6698
    %6866 = vmatprep.subr.bf16.mxu0 0
    %6867 = vmatpush2.bf16.msra.mxu0 %v6695
    %6868 = vmatprep.subr.bf16.mxu0 0
    %6869 = vmatpush2.bf16.msra.mxu0 %v6692
    %6870 = vmatprep.subr.bf16.mxu0 0
    %6871 = vmatpush2.bf16.msra.mxu0 %v6689
    %6872 = vmatprep.subr.bf16.mxu0 0
    %6873 = vmatpush2.bf16.msra.mxu0 %v6686
    %6874 = vmatprep.subr.bf16.mxu0 0
    %6875 = vmatpush2.bf16.msra.mxu0 %v6683
    %6876 = vmatprep.mubr.bf16.mxu0 %v6468
    %6877 = vmatmul.mubr.bf16.gmra.mxu0 %v6465
    %v6878 = vpop.f32.mrf.mxu0
    %v6879 = vadd.f32 0.0, %v6878
    %v6880 = vpop.f32.mrf.mxu0
    %v6881 = vpop.f32.mrf.mxu0
    %v6882 = vadd.f32 0.0, %v6881
    %v6883 = vpop.f32.mrf.mxu0
    %6884 = vmatprep.mubr.bf16.mxu0 %v6472
    %6885 = vmatmul.mubr.bf16.gmra.mxu0 %v6470
    %v6886 = vpop.f32.mrf.mxu0
    %v6887 = vadd.f32 0.0, %v6886
    %v6888 = vpop.f32.mrf.mxu0
    %v6889 = vpop.f32.mrf.mxu0
    %v6890 = vadd.f32 0.0, %v6889
    %v6891 = vpop.f32.mrf.mxu0
    %6892 = vmatprep.mubr.bf16.mxu0 %v6476
    %6893 = vmatmul.mubr.bf16.gmra.mxu0 %v6474
    %v6894 = vpop.f32.mrf.mxu0
    %v6895 = vadd.f32 0.0, %v6894
    %v6896 = vpop.f32.mrf.mxu0
    %v6897 = vpop.f32.mrf.mxu0
    %v6898 = vadd.f32 0.0, %v6897
    %v6899 = vpop.f32.mrf.mxu0
    %6900 = vmatprep.mubr.bf16.mxu0 %v6480
    %6901 = vmatmul.mubr.bf16.gmra.mxu0 %v6478
    %v6902 = vpop.f32.mrf.mxu0
    %v6903 = vadd.f32 0.0, %v6902
    %v6904 = vpop.f32.mrf.mxu0
    %v6905 = vpop.f32.mrf.mxu0
    %v6906 = vadd.f32 0.0, %v6905
    %v6907 = vpop.f32.mrf.mxu0
    %6908 = vmatprep.mubr.bf16.mxu0 %v6484
    %6909 = vmatmul.mubr.bf16.gmra.mxu0 %v6482
    %v6910 = vpop.f32.mrf.mxu0
    %v6911 = vadd.f32 0.0, %v6910
    %v6912 = vpop.f32.mrf.mxu0
    %v6913 = vpop.f32.mrf.mxu0
    %v6914 = vadd.f32 0.0, %v6913
    %v6915 = vpop.f32.mrf.mxu0
    %6916 = vmatprep.mubr.bf16.mxu0 %v6483
    %6917 = vmatmul.mubr.bf16.gmra.mxu0 %v6481
    %v6918 = vpop.f32.mrf.mxu0
    %v6919 = vadd.f32 0.0, %v6918
    %v6920 = vpop.f32.mrf.mxu0
    %v6921 = vpop.f32.mrf.mxu0
    %v6922 = vpop.f32.mrf.mxu0
    %6923 = vdwg.mxu0
    %v6924 = vadd.f32 %v6344, %v6788
    %v6925 = vadd.f32 %v6345, %v6790
    %v6926 = vadd.f32 %v6346, %v6879
    %v6927 = vadd.f32 %v6347, %v6792
    %v6928 = vadd.f32 %v6348, %v6794
    %v6929 = vadd.f32 %v6349, %v6882
    %v6930 = vadd.f32 %v6350, %v6798
    %v6931 = vadd.f32 %v6351, %v6800
    %v6932 = vadd.f32 %v6352, %v6887
    %v6933 = vadd.f32 %v6353, %v6802
    %v6934 = vadd.f32 %v6354, %v6804
    %v6935 = vadd.f32 %v6355, %v6890
    %v6936 = vadd.f32 %v6356, %v6808
    %v6937 = vadd.f32 %v6357, %v6810
    %v6938 = vadd.f32 %v6358, %v6895
    %v6939 = vadd.f32 %v6359, %v6812
    %v6940 = vadd.f32 %v6360, %v6814
    %v6941 = vadd.f32 %v6361, %v6898
    %v6942 = vadd.f32 %v6362, %v6818
    %v6943 = vadd.f32 %v6363, %v6820
    %v6944 = vadd.f32 %v6364, %v6903
    %v6945 = vadd.f32 %v6365, %v6822
    %v6946 = vadd.f32 %v6366, %v6824
    %v6947 = vadd.f32 %v6367, %v6906
    %v6948 = vadd.f32 %v6368, %v6828
    %v6949 = vadd.f32 %v6369, %v6830
    %v6950 = vadd.f32 %v6370, %v6911
    %v6951 = vadd.f32 %v6371, %v6832
    %v6952 = vadd.f32 %v6372, %v6834
    %v6953 = vadd.f32 %v6373, %v6914
    %v6954 = vadd.f32 %v6374, %v6838
    %v6955 = vadd.f32 %v6375, %v6840
    %v6956 = vadd.f32 %v6376, %v6919
    %v6957 = vld [vmem:[#allocation19] sm:$0x7]
    %v6959 = vlaneseq
    %v6960 = vshrl.u32 %v6959, 7
    %v6961 = vsub.s32 0, %v6960
    %v6962 = vrot.slane %v6957, %v6961
    %v6963 = vlaneseq
    %v6964 = vshrl.u32 %v6963, 7
    %v6965 = vsub.s32 1, %v6964
    %v6966 = vrot.slane %v6957, %v6965
    %v6967 = vlaneseq
    %v6968 = vshrl.u32 %v6967, 7
    %v6969 = vsub.s32 2, %v6968
    %v6970 = vrot.slane %v6957, %v6969
    %v6974 = vadd.f32 %v6924, %v6962
    %v6975 = vadd.f32 %v6925, %v6966
    %v6976 = vadd.f32 %v6926, %v6970
    %v6977 = vadd.f32 %v6927, %v6962
    %v6978 = vadd.f32 %v6928, %v6966
    %v6979 = vadd.f32 %v6929, %v6970
    %v6980 = vadd.f32 %v6930, %v6962
    %v6981 = vadd.f32 %v6931, %v6966
    %v6982 = vadd.f32 %v6932, %v6970
    %v6983 = vadd.f32 %v6933, %v6962
    %v6984 = vadd.f32 %v6934, %v6966
    %v6985 = vadd.f32 %v6935, %v6970
    %v6986 = vadd.f32 %v6936, %v6962
    %v6987 = vadd.f32 %v6937, %v6966
    %v6988 = vadd.f32 %v6938, %v6970
    %v6989 = vadd.f32 %v6939, %v6962
    %v6990 = vadd.f32 %v6940, %v6966
    %v6991 = vadd.f32 %v6941, %v6970
    %v6992 = vadd.f32 %v6942, %v6962
    %v6993 = vadd.f32 %v6943, %v6966
    %v6994 = vadd.f32 %v6944, %v6970
    %v6995 = vadd.f32 %v6945, %v6962
    %v6996 = vadd.f32 %v6946, %v6966
    %v6997 = vadd.f32 %v6947, %v6970
    %v6998 = vadd.f32 %v6948, %v6962
    %v6999 = vadd.f32 %v6949, %v6966
    %v7000 = vadd.f32 %v6950, %v6970
    %v7001 = vadd.f32 %v6951, %v6962
    %v7002 = vadd.f32 %v6952, %v6966
    %v7003 = vadd.f32 %v6953, %v6970
    %v7004 = vadd.f32 %v6954, %v6962
    %v7005 = vadd.f32 %v6955, %v6966
    %v7006 = vadd.f32 %v6956, %v6970
    %v7007 = vtanh.pop %v6974
    %v7008 = vtanh.pop %v6975
    %v7009 = vtanh.pop %v6976
    %v7010 = vtanh.pop %v6977
    %v7011 = vtanh.pop %v6978
    %v7012 = vtanh.pop %v6979
    %v7013 = vtanh.pop %v6980
    %v7014 = vtanh.pop %v6981
    %v7015 = vtanh.pop %v6982
    %v7016 = vtanh.pop %v6983
    %v7017 = vtanh.pop %v6984
    %v7018 = vtanh.pop %v6985
    %v7019 = vtanh.pop %v6986
    %v7020 = vtanh.pop %v6987
    %v7021 = vtanh.pop %v6988
    %v7022 = vtanh.pop %v6989
    %v7023 = vtanh.pop %v6990
    %v7024 = vtanh.pop %v6991
    %v7025 = vtanh.pop %v6992
    %v7026 = vtanh.pop %v6993
    %v7027 = vtanh.pop %v6994
    %v7028 = vtanh.pop %v6995
    %v7029 = vtanh.pop %v6996
    %v7030 = vtanh.pop %v6997
    %v7031 = vtanh.pop %v6998
    %v7032 = vtanh.pop %v6999
    %v7033 = vtanh.pop %v7000
    %v7034 = vtanh.pop %v7001
    %v7035 = vtanh.pop %v7002
    %v7036 = vtanh.pop %v7003
    %v7037 = vtanh.pop %v7004
    %v7038 = vtanh.pop %v7005
    %v7039 = vtanh.pop %v7006
    %v7040 = vadd.f32 %v7007, 1.0
    %v7041 = vadd.f32 %v7008, 1.0
    %v7042 = vadd.f32 %v7009, 1.0
    %v7043 = vadd.f32 %v7010, 1.0
    %v7044 = vadd.f32 %v7011, 1.0
    %v7045 = vadd.f32 %v7012, 1.0
    %v7046 = vadd.f32 %v7013, 1.0
    %v7047 = vadd.f32 %v7014, 1.0
    %v7048 = vadd.f32 %v7015, 1.0
    %v7049 = vadd.f32 %v7016, 1.0
    %v7050 = vadd.f32 %v7017, 1.0
    %v7051 = vadd.f32 %v7018, 1.0
    %v7052 = vadd.f32 %v7019, 1.0
    %v7053 = vadd.f32 %v7020, 1.0
    %v7054 = vadd.f32 %v7021, 1.0
    %v7055 = vadd.f32 %v7022, 1.0
    %v7056 = vadd.f32 %v7023, 1.0
    %v7057 = vadd.f32 %v7024, 1.0
    %v7058 = vadd.f32 %v7025, 1.0
    %v7059 = vadd.f32 %v7026, 1.0
    %v7060 = vadd.f32 %v7027, 1.0
    %v7061 = vadd.f32 %v7028, 1.0
    %v7062 = vadd.f32 %v7029, 1.0
    %v7063 = vadd.f32 %v7030, 1.0
    %v7064 = vadd.f32 %v7031, 1.0
    %v7065 = vadd.f32 %v7032, 1.0
    %v7066 = vadd.f32 %v7033, 1.0
    %v7067 = vadd.f32 %v7034, 1.0
    %v7068 = vadd.f32 %v7035, 1.0
    %v7069 = vadd.f32 %v7036, 1.0
    %v7070 = vadd.f32 %v7037, 1.0
    %v7071 = vadd.f32 %v7038, 1.0
    %v7072 = vadd.f32 %v7039, 1.0
    %v7073 = vmul.f32 %v7040, 0.5
    %v7074 = vmul.f32 %v7041, 0.5
    %v7075 = vmul.f32 %v7042, 0.5
    %v7076 = vmul.f32 %v7043, 0.5
    %v7077 = vmul.f32 %v7044, 0.5
    %v7078 = vmul.f32 %v7045, 0.5
    %v7079 = vmul.f32 %v7046, 0.5
    %v7080 = vmul.f32 %v7047, 0.5
    %v7081 = vmul.f32 %v7048, 0.5
    %v7082 = vmul.f32 %v7049, 0.5
    %v7083 = vmul.f32 %v7050, 0.5
    %v7084 = vmul.f32 %v7051, 0.5
    %v7085 = vmul.f32 %v7052, 0.5
    %v7086 = vmul.f32 %v7053, 0.5
    %v7087 = vmul.f32 %v7054, 0.5
    %v7088 = vmul.f32 %v7055, 0.5
    %v7089 = vmul.f32 %v7056, 0.5
    %v7090 = vmul.f32 %v7057, 0.5
    %v7091 = vmul.f32 %v7058, 0.5
    %v7092 = vmul.f32 %v7059, 0.5
    %v7093 = vmul.f32 %v7060, 0.5
    %v7094 = vmul.f32 %v7061, 0.5
    %v7095 = vmul.f32 %v7062, 0.5
    %v7096 = vmul.f32 %v7063, 0.5
    %v7097 = vmul.f32 %v7064, 0.5
    %v7098 = vmul.f32 %v7065, 0.5
    %v7099 = vmul.f32 %v7066, 0.5
    %v7100 = vmul.f32 %v7067, 0.5
    %v7101 = vmul.f32 %v7068, 0.5
    %v7102 = vmul.f32 %v7069, 0.5
    %v7103 = vmul.f32 %v7070, 0.5
    %v7104 = vmul.f32 %v7071, 0.5
    %v7105 = vmul.f32 %v7072, 0.5
    %7106 = vst [vmem:[#allocation5] sm:$0xff] %v7073
    %7107 = vst [vmem:[#allocation5 + $0x8] sm:$0xff] %v7074
    %7108 = vst [vmem:[#allocation5 + $0x10] sm:$0xff] %v7075
    %7109 = vst [vmem:[#allocation5 + $0x18] sm:$0xff] %v7076
    %7110 = vst [vmem:[#allocation5 + $0x20] sm:$0xff] %v7077
    %7111 = vst [vmem:[#allocation5 + $0x28] sm:$0xff] %v7078
    %7112 = vst [vmem:[#allocation5 + $0x30] sm:$0xff] %v7079
    %7113 = vst [vmem:[#allocation5 + $0x38] sm:$0xff] %v7080
    %7114 = vst [vmem:[#allocation5 + $0x40] sm:$0xff] %v7081
    %7115 = vst [vmem:[#allocation5 + $0x48] sm:$0xff] %v7082
    %7116 = vst [vmem:[#allocation5 + $0x50] sm:$0xff] %v7083
    %7117 = vst [vmem:[#allocation5 + $0x58] sm:$0xff] %v7084
    %7118 = vst [vmem:[#allocation5 + $0x60] sm:$0xff] %v7085
    %7119 = vst [vmem:[#allocation5 + $0x68] sm:$0xff] %v7086
    %7120 = vst [vmem:[#allocation5 + $0x70] sm:$0xff] %v7087
    %7121 = vst [vmem:[#allocation5 + $0x78] sm:$0xff] %v7088
    %7122 = vst [vmem:[#allocation5 + $0x80] sm:$0xff] %v7089
    %7123 = vst [vmem:[#allocation5 + $0x88] sm:$0xff] %v7090
    %7124 = vst [vmem:[#allocation5 + $0x90] sm:$0xff] %v7091
    %7125 = vst [vmem:[#allocation5 + $0x98] sm:$0xff] %v7092
    %7126 = vst [vmem:[#allocation5 + $0xa0] sm:$0xff] %v7093
    %7127 = vst [vmem:[#allocation5 + $0xa8] sm:$0xff] %v7094
    %7128 = vst [vmem:[#allocation5 + $0xb0] sm:$0xff] %v7095
    %7129 = vst [vmem:[#allocation5 + $0xb8] sm:$0xff] %v7096
    %7130 = vst [vmem:[#allocation5 + $0xc0] sm:$0xff] %v7097
    %7131 = vst [vmem:[#allocation5 + $0xc8] sm:$0xff] %v7098
    %7132 = vst [vmem:[#allocation5 + $0xd0] sm:$0xff] %v7099
    %7133 = vst [vmem:[#allocation5 + $0xd8] sm:$0xff] %v7100
    %7134 = vst [vmem:[#allocation5 + $0xe0] sm:$0xff] %v7101
    %7135 = vst [vmem:[#allocation5 + $0xe8] sm:$0xff] %v7102
    %7136 = vst [vmem:[#allocation5 + $0xf0] sm:$0xf] %v7103
    %7137 = vst [vmem:[#allocation5 + $0xf8] sm:$0xf] %v7104
    %7138 = vst [vmem:[#allocation5 + $0x100] sm:$0xf] %v7105
    %v7139 = vld [vmem:[#allocation5] sm:$0xff]
    %v7140 = vld [vmem:[#allocation5 + $0x8] sm:$0xff]
    %v7141 = vld [vmem:[#allocation5 + $0x10] sm:$0xff]
    %v7142 = vld [vmem:[#allocation5 + $0x18] sm:$0xff]
    %v7143 = vld [vmem:[#allocation5 + $0x20] sm:$0xff]
    %v7144 = vld [vmem:[#allocation5 + $0x28] sm:$0xff]
    %v7145 = vld [vmem:[#allocation5 + $0x30] sm:$0xff]
    %v7146 = vld [vmem:[#allocation5 + $0x38] sm:$0xff]
    %v7147 = vld [vmem:[#allocation5 + $0x40] sm:$0xff]
    %v7148 = vld [vmem:[#allocation5 + $0x48] sm:$0xff]
    %v7149 = vld [vmem:[#allocation5 + $0x50] sm:$0xff]
    %v7150 = vld [vmem:[#allocation5 + $0x58] sm:$0xff]
    %v7151 = vld [vmem:[#allocation5 + $0x60] sm:$0xf]
    %v7152 = vld [vmem:[#allocation5 + $0x68] sm:$0xf]
    %v7153 = vld [vmem:[#allocation5 + $0x70] sm:$0xf]
    %7154 = vst [vmem:[%s12] sm:$0xff] %v7139
    %7155 = vst [vmem:[%s12 + $0x8] sm:$0xff] %v7140
    %7156 = vst [vmem:[%s12 + $0x10] sm:$0xff] %v7141
    %7157 = vst [vmem:[%s12 + $0x18] sm:$0xff] %v7142
    %7158 = vst [vmem:[%s12 + $0x20] sm:$0xff] %v7143
    %7159 = vst [vmem:[%s12 + $0x28] sm:$0xff] %v7144
    %7160 = vst [vmem:[%s12 + $0x30] sm:$0xff] %v7145
    %7161 = vst [vmem:[%s12 + $0x38] sm:$0xff] %v7146
    %7162 = vst [vmem:[%s12 + $0x40] sm:$0xff] %v7147
    %7163 = vst [vmem:[%s12 + $0x48] sm:$0xff] %v7148
    %7164 = vst [vmem:[%s12 + $0x50] sm:$0xff] %v7149
    %7165 = vst [vmem:[%s12 + $0x58] sm:$0xff] %v7150
    %7166 = vst [vmem:[%s12 + $0x60] sm:$0xf] %v7151
    %7167 = vst [vmem:[%s12 + $0x68] sm:$0xf] %v7152
    %7168 = vst [vmem:[%s12 + $0x70] sm:$0xf] %v7153
    %v7169 = vld [vmem:[#allocation5 + $0x78] sm:$0xfc]
    %v7170 = vld [vmem:[#allocation5 + $0x80] sm:$0xfc]
    %v7171 = vld [vmem:[#allocation5 + $0x88] sm:$0xfc]
    %v7172 = vld [vmem:[#allocation5 + $0x90] sm:$0xff]
    %v7173 = vld [vmem:[#allocation5 + $0x98] sm:$0xff]
    %v7174 = vld [vmem:[#allocation5 + $0xa0] sm:$0xff]
    %v7175 = vld [vmem:[#allocation5 + $0xa8] sm:$0xff]
    %v7176 = vld [vmem:[#allocation5 + $0xb0] sm:$0xff]
    %v7177 = vld [vmem:[#allocation5 + $0xb8] sm:$0xff]
    %v7178 = vld [vmem:[#allocation5 + $0xc0] sm:$0xff]
    %v7179 = vld [vmem:[#allocation5 + $0xc8] sm:$0xff]
    %v7180 = vld [vmem:[#allocation5 + $0xd0] sm:$0xff]
    %v7181 = vld [vmem:[#allocation5 + $0xd8] sm:$0x3f]
    %v7182 = vld [vmem:[#allocation5 + $0xe0] sm:$0x3f]
    %v7183 = vld [vmem:[#allocation5 + $0xe8] sm:$0x3f]
    %v7199 = vrot.slane %v7169, 2
    %v7200 = vrot.slane %v7172, 2
    %v7201 = vsel %vm2530, %v7199, %v7200
    %v7202 = vrot.slane %v7170, 2
    %v7203 = vrot.slane %v7173, 2
    %v7204 = vsel %vm2530, %v7202, %v7203
    %v7205 = vrot.slane %v7171, 2
    %v7206 = vrot.slane %v7174, 2
    %v7207 = vsel %vm2530, %v7205, %v7206
    %v7208 = vrot.slane %v7175, 2
    %v7209 = vsel %vm2530, %v7200, %v7208
    %v7210 = vrot.slane %v7176, 2
    %v7211 = vsel %vm2530, %v7203, %v7210
    %v7212 = vrot.slane %v7177, 2
    %v7213 = vsel %vm2530, %v7206, %v7212
    %v7214 = vrot.slane %v7178, 2
    %v7215 = vsel %vm2530, %v7208, %v7214
    %v7216 = vrot.slane %v7179, 2
    %v7217 = vsel %vm2530, %v7210, %v7216
    %v7218 = vrot.slane %v7180, 2
    %v7219 = vsel %vm2530, %v7212, %v7218
    %v7220 = vrot.slane %v7181, 2
    %v7221 = vsel %vm2530, %v7214, %v7220
    %v7222 = vrot.slane %v7182, 2
    %v7223 = vsel %vm2530, %v7216, %v7222
    %v7224 = vrot.slane %v7183, 2
    %v7225 = vsel %vm2530, %v7218, %v7224
    %s7241 = scalar_lea.vmem %s12, 120
    %7242 = vst [vmem:[%s7241] sm:$0xff] %v7201
    %7243 = vst [vmem:[%s7241 + $0x8] sm:$0xff] %v7204
    %7244 = vst [vmem:[%s7241 + $0x10] sm:$0xff] %v7207
    %7245 = vst [vmem:[%s7241 + $0x18] sm:$0xff] %v7209
    %7246 = vst [vmem:[%s7241 + $0x20] sm:$0xff] %v7211
    %7247 = vst [vmem:[%s7241 + $0x28] sm:$0xff] %v7213
    %7248 = vst [vmem:[%s7241 + $0x30] sm:$0xff] %v7215
    %7249 = vst [vmem:[%s7241 + $0x38] sm:$0xff] %v7217
    %7250 = vst [vmem:[%s7241 + $0x40] sm:$0xff] %v7219
    %7251 = vst [vmem:[%s7241 + $0x48] sm:$0xff] %v7221
    %7252 = vst [vmem:[%s7241 + $0x50] sm:$0xff] %v7223
    %7253 = vst [vmem:[%s7241 + $0x58] sm:$0xff] %v7225
    %7254 = vst [vmem:[%s7241 + $0x60] sm:$0xf] %v7220
    %7255 = vst [vmem:[%s7241 + $0x68] sm:$0xf] %v7222
    %7256 = vst [vmem:[%s7241 + $0x70] sm:$0xf] %v7224
    // Predicated region
    $region86: #{decoder_forward.1} parent=1 // pred_check
      _
    $region87: #{decoder_forward.1} parent=1 // pred_check_branch
      %7258 = sbr.rel (0) target = $region89
    $region88: #{decoder_forward.1} parent=1 // pred_region
      _
    $region89: #{decoder_forward.1} parent=1 // pred_fallthru
      _
    // Predicated region
    $region90: #{decoder_forward.1} parent=1 // pred_check
      _
    $region91: #{decoder_forward.1} parent=1 // pred_check_branch
      %7260 = sbr.rel (0) target = $region93
    $region92: #{decoder_forward.1} parent=1 // pred_region
      _
    $region93: #{decoder_forward.1} parent=1 // pred_fallthru
      _
    %7261 = vsyncpa [#allocation7], 1
    %7262 = vsyncpa [#allocation9], 1
    %7263 = vsyncpa [#allocation12], 1
    %7264 = vsyncpa [#allocation15], 1
    %7265 = vsyncpa [#allocation18], 1

</llo_original>
